<compile_context>
chip_gen: v7x
topology: tpu7x:2x2x1
jax: 0.10.0
libtpu: 0.0.40
codegen_flags: <defaults>
</compile_context>

<pallas_src>
import math
import functools

import jax
import jax.numpy as jnp
from jax.experimental import pallas as pl
from jax.experimental.pallas import tpu as pltpu

BN_EPS = 1e-5


def _round_up(x, m):
    return (x + m - 1) // m * m


def _pick_tile(dim, candidates):
    for c in candidates:
        if dim % c == 0:
            return c
    return dim


# ----------------------------------------------------------------------------
# Pallas kernel: tiled matmul (bf16 -> f32 acc) + per-column shift (+ ReLU)
# ----------------------------------------------------------------------------
def _fused_matmul_kernel(x_ref, w_ref, shift_ref, o_ref, acc_ref, *, relu):
    @pl.when(pl.program_id(2) == 0)
    def _():
        acc_ref[...] = jnp.zeros_like(acc_ref)

    acc_ref[...] += jnp.dot(x_ref[...], w_ref[...],
                            preferred_element_type=jnp.float32)

    @pl.when(pl.program_id(2) == pl.num_programs(2) - 1)
    def _():
        y = acc_ref[...] + shift_ref[...]
        if relu:
            y = jnp.maximum(y, 0.0)
        o_ref[...] = y.astype(o_ref.dtype)


def fused_linear_pallas(x, w, shift, *, relu):
    """y = relu?((x @ w) + shift).  x:(M,K) bf16, w:(K,N) bf16, shift:(1,N) f32.

    K and N must be multiples of 128 (guaranteed by prepare_params).  M is
    padded to a sublane multiple internally and sliced back.
    """
    M, K = x.shape
    Kw, N = w.shape
    assert K == Kw and K % 128 == 0 and N % 128 == 0

    # Pad M to a multiple of 8 (sublanes), then to a multiple of the M tile.
    Mp = _round_up(M, 8)
    tm = Mp if Mp <= 256 else 256
    Mp = _round_up(Mp, tm)
    if Mp != M:
        x = jnp.pad(x, ((0, Mp - M), (0, 0)))

    tn = _pick_tile(N, (512, 256, 128))
    tk = _pick_tile(K, (512, 384, 256, 128))

    kernel = functools.partial(_fused_matmul_kernel, relu=relu)
    out = pl.pallas_call(
        kernel,
        out_shape=jax.ShapeDtypeStruct((Mp, N), jnp.float32),
        grid=(Mp // tm, N // tn, K // tk),
        in_specs=[
            pl.BlockSpec((tm, tk), lambda i, j, k: (i, k)),
            pl.BlockSpec((tk, tn), lambda i, j, k: (k, j)),
            pl.BlockSpec((1, tn), lambda i, j, k: (0, j)),
        ],
        out_specs=pl.BlockSpec((tm, tn), lambda i, j, k: (i, j)),
        scratch_shapes=[pltpu.VMEM((tm, tn), jnp.float32)],
        compiler_params=pltpu.CompilerParams(
            dimension_semantics=("parallel", "parallel", "arbitrary")),
    )(x, w, shift)
    return out[:M]


def fused_linear_ref(x, w, shift, *, relu):
    y = jnp.dot(x, w, preferred_element_type=jnp.float32) + shift
    return jnp.maximum(y, 0.0) if relu else y


# ----------------------------------------------------------------------------
# Pallas kernel: fused fc1 -> fc2 -> fc3 -> final_fc (VMEM-resident weights)
# ----------------------------------------------------------------------------
def _fc_stack_kernel(x_ref, w1, s1, w2, s2, w3, s3, w4, s4, o_ref):
    h = jnp.dot(x_ref[...], w1[...], preferred_element_type=jnp.float32) + s1[...]
    h = jnp.maximum(h, 0.0)
    h = jnp.dot(h.astype(jnp.bfloat16), w2[...],
                preferred_element_type=jnp.float32) + s2[...]
    h = jnp.maximum(h, 0.0)
    h = jnp.dot(h.astype(jnp.bfloat16), w3[...],
                preferred_element_type=jnp.float32) + s3[...]
    h = jnp.maximum(h, 0.0)
    o_ref[...] = jnp.dot(h.astype(jnp.bfloat16), w4[...],
                         preferred_element_type=jnp.float32) + s4[...]


_FC_FUSE_WEIGHT_BYTES = 6 * 1024 * 1024  # stay well inside v5e's 16 MiB scoped VMEM


def fc_stack_pallas(x, layers):
    """x:(B, flat) bf16; layers: 4 dicts with pre-padded bf16 'w' and f32 'shift'."""
    total_w_bytes = sum(int(l["w"].size) * 2 for l in layers)
    if total_w_bytes > _FC_FUSE_WEIGHT_BYTES:
        # Large config (e.g. big im_size): weights would not fit VMEM -> use the
        # tiled per-layer kernel instead of the single fused call.
        h = x
        for i, l in enumerate(layers):
            K = l["w"].shape[0]
            if h.shape[1] < K:
                h = jnp.pad(h, ((0, 0), (0, K - h.shape[1])))
            h = fused_linear_pallas(h.astype(jnp.bfloat16), l["w"], l["shift"],
                                    relu=(i < len(layers) - 1))
        return h

    M = x.shape[0]
    K0 = layers[0]["w"].shape[0]
    if x.shape[1] < K0:
        x = jnp.pad(x, ((0, 0), (0, K0 - x.shape[1])))
    Mp = _round_up(M, 8)
    if Mp != M:
        x = jnp.pad(x, ((0, Mp - M), (0, 0)))
    N_out = layers[-1]["w"].shape[1]

    operands = [x]
    in_specs = [pl.BlockSpec((Mp, K0), lambda i: (0, 0))]
    for l in layers:
        operands += [l["w"], l["shift"]]
        in_specs += [pl.BlockSpec(l["w"].shape, lambda i: (0, 0)),
                     pl.BlockSpec(l["shift"].shape, lambda i: (0, 0))]

    out = pl.pallas_call(
        _fc_stack_kernel,
        out_shape=jax.ShapeDtypeStruct((Mp, N_out), jnp.float32),
        grid=(1,),
        in_specs=in_specs,
        out_specs=pl.BlockSpec((Mp, N_out), lambda i: (0, 0)),
        compiler_params=pltpu.CompilerParams(dimension_semantics=("arbitrary",)),
    )(*operands)
    return out[:M]


def fc_stack_ref(x, layers):
    K0 = layers[0]["w"].shape[0]
    if x.shape[1] < K0:
        x = jnp.pad(x, ((0, 0), (0, K0 - x.shape[1])))
    h = x.astype(jnp.bfloat16)
    y = None
    for i, l in enumerate(layers):
        y = jnp.dot(h, l["w"], preferred_element_type=jnp.float32) + l["shift"]
        if i < len(layers) - 1:
            y = jnp.maximum(y, 0.0)
        h = y.astype(jnp.bfloat16)
    return y


# ----------------------------------------------------------------------------
# im2col glue (layout only; the matmul is the hot path and lives in Pallas)
# ----------------------------------------------------------------------------
def im2col(x_nhwc, ksize=5, stride=2, pad=2):
    B, H, W, C = x_nhwc.shape
    Ho = (H + 2 * pad - ksize) // stride + 1
    Wo = (W + 2 * pad - ksize) // stride + 1
    xp = jnp.pad(x_nhwc, ((0, 0), (pad, pad), (pad, pad), (0, 0)))
    taps = []
    for kh in range(ksize):
        for kw in range(ksize):
            taps.append(
                xp[:, kh:kh + stride * (Ho - 1) + 1:stride,
                      kw:kw + stride * (Wo - 1) + 1:stride, :]
            )
    # rows ordered (b, ho, wo); features ordered (tap, cin)
    p = jnp.stack(taps, axis=3)
    return p.reshape(B * Ho * Wo, ksize * ksize * C), (B, Ho, Wo)


# ----------------------------------------------------------------------------
# Parameter preparation: fold BN, transpose, pad (lane-dense), cast bf16. Done
# once, outside the forward pass.
# ----------------------------------------------------------------------------
def prepare_params(raw):
    prep = {}
    for cname, bname in (("conv1", "bn1"), ("conv2", "bn2"), ("conv3", "bn3")):
        conv_p, bn_p = raw[cname], raw[bname]
        w = conv_p["w"]                                        # (Cout, Cin, 5, 5)
        cout = w.shape[0]
        w2 = jnp.transpose(w, (2, 3, 1, 0)).reshape(-1, cout)  # (K, Cout), K=(kh,kw,cin)
        inv_std = 1.0 / jnp.sqrt(bn_p["var"] + BN_EPS)
        scale = bn_p["gamma"] * inv_std
        shift = bn_p["beta"] + (conv_p["b"] - bn_p["mean"]) * scale
        wf = w2 * scale[None, :]                               # fold BN scale into W
        K = wf.shape[0]
        Kp = _round_up(K, 256)                                 # 256-wide K tiles (v6e/v7x MXU)
        Np = _round_up(cout, 128)                              # lane-dense output
        wf = jnp.pad(wf, ((0, Kp - K), (0, Np - cout))).astype(jnp.bfloat16)
        shift = jnp.pad(shift, (0, Np - cout)).reshape(1, Np).astype(jnp.float32)
        prep[cname] = {"w": wf, "shift": shift, "n": cout}

    for lname in ("fc1", "fc2", "fc3", "final_fc"):
        lp = raw[lname]
        fout, fin = lp["w"].shape
        wt = lp["w"].T                                          # (in, out)
        Kp = _round_up(fin, 128)
        Np = _round_up(fout, 128)
        wt = jnp.pad(wt, ((0, Kp - fin), (0, Np - fout))).astype(jnp.bfloat16)
        b = jnp.pad(lp["b"], (0, Np - fout)).reshape(1, Np).astype(jnp.float32)
        prep[lname] = {"w": wt, "shift": b, "n": fout}
    return prep


# ----------------------------------------------------------------------------
# Forward pass (SimpleEncoder + final_fc)
# ----------------------------------------------------------------------------
def _forward(prep, imgs_nchw, matmul_fn, fc_fn):
    x = jnp.transpose(imgs_nchw, (0, 2, 3, 1)).astype(jnp.float32)   # NCHW -> NHWC
    for name in ("conv1", "conv2", "conv3"):
        layer = prep[name]
        patches, (B, Ho, Wo) = im2col(x.astype(jnp.bfloat16))
        Kp = layer["w"].shape[0]
        if patches.shape[1] < Kp:
            patches = jnp.pad(patches, ((0, 0), (0, Kp - patches.shape[1])))
        y = matmul_fn(patches, layer["w"], layer["shift"], relu=True)
        x = y[:, : layer["n"]].reshape(B, Ho, Wo, layer["n"])
    B = x.shape[0]
    # match PyTorch x.view(B, -1), which flattens in NCHW order
    x = jnp.transpose(x, (0, 3, 1, 2)).reshape(B, -1)
    fc_layers = [prep["fc1"], prep["fc2"], prep["fc3"], prep["final_fc"]]
    out = fc_fn(x.astype(jnp.bfloat16), fc_layers)
    return out[:, : prep["final_fc"]["n"]]


def iencoder_forward(prep, imgs_nchw):
    return _forward(prep, imgs_nchw, fused_linear_pallas, fc_stack_pallas)


def iencoder_forward_ref(prep, imgs_nchw):
    return _forward(prep, imgs_nchw, fused_linear_ref, fc_stack_ref)


# ----------------------------------------------------------------------------
# Deterministic parameter init (shapes follow SimpleEncoder / IEncoder __init__)
# ----------------------------------------------------------------------------
def init_params(key, cfg):
    f_dim = cfg["Reconstruction"]["f_dim"]
    im_size = cfg["input_size"]
    z_dim = cfg["NormalGan"]["G"]["z_dim"]
    dim1, dim2 = 64, 1024
    dims = [dim1, dim1 * 2, dim1 * 4, dim2, dim2]

    keys = iter(jax.random.split(key, 32))

    def unif(shape, bound):
        return jax.random.uniform(next(keys), shape, jnp.float32, -bound, bound)

    def conv(cin, cout, k=5):
        bound = 1.0 / math.sqrt(cin * k * k)
        return {"w": unif((cout, cin, k, k), bound), "b": unif((cout,), bound)}

    def bn(c):
        return {
            "gamma": 1.0 + 0.1 * jax.random.normal(next(keys), (c,), jnp.float32),
            "beta": 0.1 * jax.random.normal(next(keys), (c,), jnp.float32),
            "mean": jnp.zeros((c,), jnp.float32),
            "var": jnp.ones((c,), jnp.float32),
        }

    def lin(fin, fout):
        bound = 1.0 / math.sqrt(fin)
        return {"w": unif((fout, fin), bound), "b": unif((fout,), bound)}

    p = {}
    p["conv1"], p["bn1"] = conv(3, dims[0]), bn(dims[0])
    p["conv2"], p["bn2"] = conv(dims[0], dims[1]), bn(dims[1])
    p["conv3"], p["bn3"] = conv(dims[1], dims[2]), bn(dims[2])
    flat = dims[2] * math.ceil(im_size / 8) ** 2
    p["fc1"] = lin(flat, dims[3])
    p["fc2"] = lin(dims[3], dims[4])
    p["fc3"] = lin(dims[4], f_dim)
    p["final_fc"] = lin(f_dim, z_dim)
    return p


# ----------------------------------------------------------------------------
if __name__ == "__main__":
    cfg = {
        "Reconstruction": {"f_dim": 128, "encoder_type": "simple"},
        "input_size": 16,
        "NormalGan": {"G": {"z_dim": 32}},
    }
    key = jax.random.PRNGKey(0)
    pkey, xkey = jax.random.split(key)
    raw_params = init_params(pkey, cfg)
    prep = prepare_params(raw_params)

    # NCHW input, like the PyTorch module: (batch=2, channels=3, H=16, W=16)
    imgs = jax.random.uniform(xkey, (2, 3, 16, 16), jnp.float32)

    fwd = jax.jit(lambda im: iencoder_forward(prep, im))
    out = jax.block_until_ready(fwd(imgs))
    assert out.shape == (2, cfg["NormalGan"]["G"]["z_dim"]), out.shape

    ref_fwd = jax.jit(lambda im: iencoder_forward_ref(prep, im))
    ref = jax.block_until_ready(ref_fwd(imgs))

    max_err = float(jnp.max(jnp.abs(out - ref)))
    denom = float(jnp.max(jnp.abs(ref))) + 1e-6
    if max_err > 5e-2 and max_err / denom > 2e-2:
        raise AssertionError(
            f"Pallas output mismatch vs reference, max_err={max_err}")

    print("KERNEL_OK")
</pallas_src>

<mosaic_0001>
module attributes {stable_mosaic.version = 11 : i64} {
  func.func @_fused_matmul_kernel(%arg0: i32, %arg1: i32, %arg2: i32, %arg3: memref<128x256xbf16, #tpu.memory_space<vmem>>, %arg4: memref<256x128xbf16, #tpu.memory_space<vmem>>, %arg5: memref<1x128xf32, #tpu.memory_space<vmem>>, %arg6: memref<128x128xf32, #tpu.memory_space<vmem>>, %arg7: memref<128x128xf32, #tpu.memory_space<vmem>>) attributes {dimension_semantics = [#tpu.dimension_semantics<parallel>, #tpu.dimension_semantics<parallel>, #tpu.dimension_semantics<arbitrary>], iteration_bounds = array<i64: 1, 1, 1>, scalar_prefetch = 0 : i64, scratch_operands = 1 : i64, tpu.core_type = #tpu.core_type<tc>, window_params = [{transform_indices = @transform_0, window_bounds = array<i64: 128, 256>}, {transform_indices = @transform_1, window_bounds = array<i64: 256, 128>}, {transform_indices = @transform_2, window_bounds = array<i64: 1, 128>}, {transform_indices = @transform_3, window_bounds = array<i64: 128, 128>}]} {
    %c0_i32 = arith.constant 0 : i32
    %0 = arith.cmpi eq, %arg2, %c0_i32 : i32
    %1 = arith.extui %0 : i1 to i32
    %c0_i32_0 = arith.constant 0 : i32
    %2 = arith.cmpi ne, %1, %c0_i32_0 : i32
    scf.if %2 {
      %cst_10 = arith.constant 0.000000e+00 : f32
      %12 = vector.broadcast %cst_10 : f32 to vector<128x128xf32>
      %c0_11 = arith.constant 0 : index
      %c0_12 = arith.constant 0 : index
      %13 = vector.load %arg7[%c0_11, %c0_12] : memref<128x128xf32, #tpu.memory_space<vmem>>, vector<128x128xf32>
      tpu.vector_store %arg7[%c0_11, %c0_12], %12 {strides = array<i32>} : memref<128x128xf32, #tpu.memory_space<vmem>>, vector<128x128xf32>,
    } else {
    }
    %c0 = arith.constant 0 : index
    %c0_1 = arith.constant 0 : index
    %3 = vector.load %arg7[%c0, %c0_1] : memref<128x128xf32, #tpu.memory_space<vmem>>, vector<128x128xf32>
    %c0_2 = arith.constant 0 : index
    %c0_3 = arith.constant 0 : index
    %4 = vector.load %arg3[%c0_2, %c0_3] : memref<128x256xbf16, #tpu.memory_space<vmem>>, vector<128x256xbf16>
    %c0_4 = arith.constant 0 : index
    %c0_5 = arith.constant 0 : index
    %5 = vector.load %arg4[%c0_4, %c0_5] : memref<256x128xbf16, #tpu.memory_space<vmem>>, vector<256x128xbf16>
    %cst = arith.constant dense<0.000000e+00> : vector<128x128xf32>
    %6 = tpu.matmul %4, %5, %cst {dimension_numbers = #tpu.dot_dimension_numbers<[1], [0], [0], [1], [0, 0, 1, 1], [], []>} : vector<128x256xbf16>, vector<256x128xbf16>, vector<128x128xf32> -> vector<128x128xf32>
    %7 = arith.addf %3, %6 : vector<128x128xf32>
    %c0_6 = arith.constant 0 : index
    %c0_7 = arith.constant 0 : index
    %8 = vector.load %arg7[%c0_6, %c0_7] : memref<128x128xf32, #tpu.memory_space<vmem>>, vector<128x128xf32>
    tpu.vector_store %arg7[%c0_6, %c0_7], %7 {strides = array<i32>} : memref<128x128xf32, #tpu.memory_space<vmem>>, vector<128x128xf32>,
    %c0_i32_8 = arith.constant 0 : i32
    %9 = arith.cmpi eq, %arg2, %c0_i32_8 : i32
    %10 = arith.extui %9 : i1 to i32
    %c0_i32_9 = arith.constant 0 : i32
    %11 = arith.cmpi ne, %10, %c0_i32_9 : i32
    scf.if %11 {
      %c0_10 = arith.constant 0 : index
      %c0_11 = arith.constant 0 : index
      %12 = vector.load %arg7[%c0_10, %c0_11] : memref<128x128xf32, #tpu.memory_space<vmem>>, vector<128x128xf32>
      %c0_12 = arith.constant 0 : index
      %c0_13 = arith.constant 0 : index
      %13 = vector.load %arg5[%c0_12, %c0_13] : memref<1x128xf32, #tpu.memory_space<vmem>>, vector<1x128xf32>
      %14 = vector.broadcast %13 : vector<1x128xf32> to vector<128x128xf32>
      %15 = arith.addf %12, %14 : vector<128x128xf32>
      %cst_14 = arith.constant 0.000000e+00 : f32
      %16 = vector.broadcast %cst_14 : f32 to vector<128x128xf32>
      %17 = arith.maximumf %15, %16 : vector<128x128xf32>
      %c0_15 = arith.constant 0 : index
      %c0_16 = arith.constant 0 : index
      %18 = vector.load %arg6[%c0_15, %c0_16] : memref<128x128xf32, #tpu.memory_space<vmem>>, vector<128x128xf32>
      tpu.vector_store %arg6[%c0_15, %c0_16], %17 {strides = array<i32>} : memref<128x128xf32, #tpu.memory_space<vmem>>, vector<128x128xf32>,
    } else {
    }
    return
  }
  func.func @transform_0(%arg0: i32, %arg1: i32, %arg2: i32) -> (i32, i32) {
    %c0_i32 = arith.constant 0 : i32
    return %arg0, %arg2 : i32, i32
  }
  func.func @transform_1(%arg0: i32, %arg1: i32, %arg2: i32) -> (i32, i32) {
    %c0_i32 = arith.constant 0 : i32
    return %arg2, %arg1 : i32, i32
  }
  func.func @transform_2(%arg0: i32, %arg1: i32, %arg2: i32) -> (i32, i32) {
    %c0_i32 = arith.constant 0 : i32
    %c0_i32_0 = arith.constant 0 : i32
    return %c0_i32, %arg1 : i32, i32
  }
  func.func @transform_3(%arg0: i32, %arg1: i32, %arg2: i32) -> (i32, i32) {
    %c0_i32 = arith.constant 0 : i32
    return %arg0, %arg1 : i32, i32
  }
}

module attributes {stable_mosaic.version = 11 : i64} {
  func.func @_fused_matmul_kernel(%arg0: i32, %arg1: i32, %arg2: i32, %arg3: memref<32x256xbf16, #tpu.memory_space<vmem>>, %arg4: memref<256x128xbf16, #tpu.memory_space<vmem>>, %arg5: memref<1x128xf32, #tpu.memory_space<vmem>>, %arg6: memref<32x128xf32, #tpu.memory_space<vmem>>, %arg7: memref<32x128xf32, #tpu.memory_space<vmem>>) attributes {dimension_semantics = [#tpu.dimension_semantics<parallel>, #tpu.dimension_semantics<parallel>, #tpu.dimension_semantics<arbitrary>], iteration_bounds = array<i64: 1, 1, 7>, scalar_prefetch = 0 : i64, scratch_operands = 1 : i64, tpu.core_type = #tpu.core_type<tc>, window_params = [{transform_indices = @transform_0, window_bounds = array<i64: 32, 256>}, {transform_indices = @transform_1, window_bounds = array<i64: 256, 128>}, {transform_indices = @transform_2, window_bounds = array<i64: 1, 128>}, {transform_indices = @transform_3, window_bounds = array<i64: 32, 128>}]} {
    %c0_i32 = arith.constant 0 : i32
    %0 = arith.cmpi eq, %arg2, %c0_i32 : i32
    %1 = arith.extui %0 : i1 to i32
    %c0_i32_0 = arith.constant 0 : i32
    %2 = arith.cmpi ne, %1, %c0_i32_0 : i32
    scf.if %2 {
      %cst_9 = arith.constant 0.000000e+00 : f32
      %12 = vector.broadcast %cst_9 : f32 to vector<32x128xf32>
      %c0_10 = arith.constant 0 : index
      %c0_11 = arith.constant 0 : index
      %13 = vector.load %arg7[%c0_10, %c0_11] : memref<32x128xf32, #tpu.memory_space<vmem>>, vector<32x128xf32>
      tpu.vector_store %arg7[%c0_10, %c0_11], %12 {strides = array<i32>} : memref<32x128xf32, #tpu.memory_space<vmem>>, vector<32x128xf32>,
    } else {
    }
    %c0 = arith.constant 0 : index
    %c0_1 = arith.constant 0 : index
    %3 = vector.load %arg7[%c0, %c0_1] : memref<32x128xf32, #tpu.memory_space<vmem>>, vector<32x128xf32>
    %c0_2 = arith.constant 0 : index
    %c0_3 = arith.constant 0 : index
    %4 = vector.load %arg3[%c0_2, %c0_3] : memref<32x256xbf16, #tpu.memory_space<vmem>>, vector<32x256xbf16>
    %c0_4 = arith.constant 0 : index
    %c0_5 = arith.constant 0 : index
    %5 = vector.load %arg4[%c0_4, %c0_5] : memref<256x128xbf16, #tpu.memory_space<vmem>>, vector<256x128xbf16>
    %cst = arith.constant dense<0.000000e+00> : vector<32x128xf32>
    %6 = tpu.matmul %4, %5, %cst {dimension_numbers = #tpu.dot_dimension_numbers<[1], [0], [0], [1], [0, 0, 1, 1], [], []>} : vector<32x256xbf16>, vector<256x128xbf16>, vector<32x128xf32> -> vector<32x128xf32>
    %7 = arith.addf %3, %6 : vector<32x128xf32>
    %c0_6 = arith.constant 0 : index
    %c0_7 = arith.constant 0 : index
    %8 = vector.load %arg7[%c0_6, %c0_7] : memref<32x128xf32, #tpu.memory_space<vmem>>, vector<32x128xf32>
    tpu.vector_store %arg7[%c0_6, %c0_7], %7 {strides = array<i32>} : memref<32x128xf32, #tpu.memory_space<vmem>>, vector<32x128xf32>,
    %c6_i32 = arith.constant 6 : i32
    %9 = arith.cmpi eq, %arg2, %c6_i32 : i32
    %10 = arith.extui %9 : i1 to i32
    %c0_i32_8 = arith.constant 0 : i32
    %11 = arith.cmpi ne, %10, %c0_i32_8 : i32
    scf.if %11 {
      %c0_9 = arith.constant 0 : index
      %c0_10 = arith.constant 0 : index
      %12 = vector.load %arg7[%c0_9, %c0_10] : memref<32x128xf32, #tpu.memory_space<vmem>>, vector<32x128xf32>
      %c0_11 = arith.constant 0 : index
      %c0_12 = arith.constant 0 : index
      %13 = vector.load %arg5[%c0_11, %c0_12] : memref<1x128xf32, #tpu.memory_space<vmem>>, vector<1x128xf32>
      %14 = vector.broadcast %13 : vector<1x128xf32> to vector<32x128xf32>
      %15 = arith.addf %12, %14 : vector<32x128xf32>
      %cst_13 = arith.constant 0.000000e+00 : f32
      %16 = vector.broadcast %cst_13 : f32 to vector<32x128xf32>
      %17 = arith.maximumf %15, %16 : vector<32x128xf32>
      %c0_14 = arith.constant 0 : index
      %c0_15 = arith.constant 0 : index
      %18 = vector.load %arg6[%c0_14, %c0_15] : memref<32x128xf32, #tpu.memory_space<vmem>>, vector<32x128xf32>
      tpu.vector_store %arg6[%c0_14, %c0_15], %17 {strides = array<i32>} : memref<32x128xf32, #tpu.memory_space<vmem>>, vector<32x128xf32>,
    } else {
    }
    return
  }
  func.func @transform_0(%arg0: i32, %arg1: i32, %arg2: i32) -> (i32, i32) {
    %c0_i32 = arith.constant 0 : i32
    return %arg0, %arg2 : i32, i32
  }
  func.func @transform_1(%arg0: i32, %arg1: i32, %arg2: i32) -> (i32, i32) {
    %c0_i32 = arith.constant 0 : i32
    return %arg2, %arg1 : i32, i32
  }
  func.func @transform_2(%arg0: i32, %arg1: i32, %arg2: i32) -> (i32, i32) {
    %c0_i32 = arith.constant 0 : i32
    %c0_i32_0 = arith.constant 0 : i32
    return %c0_i32, %arg1 : i32, i32
  }
  func.func @transform_3(%arg0: i32, %arg1: i32, %arg2: i32) -> (i32, i32) {
    %c0_i32 = arith.constant 0 : i32
    return %arg0, %arg1 : i32, i32
  }
}

module attributes {stable_mosaic.version = 11 : i64} {
  func.func @_fused_matmul_kernel(%arg0: i32, %arg1: i32, %arg2: i32, %arg3: memref<8x256xbf16, #tpu.memory_space<vmem>>, %arg4: memref<256x256xbf16, #tpu.memory_space<vmem>>, %arg5: memref<1x256xf32, #tpu.memory_space<vmem>>, %arg6: memref<8x256xf32, #tpu.memory_space<vmem>>, %arg7: memref<8x256xf32, #tpu.memory_space<vmem>>) attributes {dimension_semantics = [#tpu.dimension_semantics<parallel>, #tpu.dimension_semantics<parallel>, #tpu.dimension_semantics<arbitrary>], iteration_bounds = array<i64: 1, 1, 13>, scalar_prefetch = 0 : i64, scratch_operands = 1 : i64, tpu.core_type = #tpu.core_type<tc>, window_params = [{transform_indices = @transform_0, window_bounds = array<i64: 8, 256>}, {transform_indices = @transform_1, window_bounds = array<i64: 256, 256>}, {transform_indices = @transform_2, window_bounds = array<i64: 1, 256>}, {transform_indices = @transform_3, window_bounds = array<i64: 8, 256>}]} {
    %c0_i32 = arith.constant 0 : i32
    %0 = arith.cmpi eq, %arg2, %c0_i32 : i32
    %1 = arith.extui %0 : i1 to i32
    %c0_i32_0 = arith.constant 0 : i32
    %2 = arith.cmpi ne, %1, %c0_i32_0 : i32
    scf.if %2 {
      %cst_9 = arith.constant 0.000000e+00 : f32
      %12 = vector.broadcast %cst_9 : f32 to vector<8x256xf32>
      %c0_10 = arith.constant 0 : index
      %c0_11 = arith.constant 0 : index
      %13 = vector.load %arg7[%c0_10, %c0_11] : memref<8x256xf32, #tpu.memory_space<vmem>>, vector<8x256xf32>
      tpu.vector_store %arg7[%c0_10, %c0_11], %12 {strides = array<i32>} : memref<8x256xf32, #tpu.memory_space<vmem>>, vector<8x256xf32>,
    } else {
    }
    %c0 = arith.constant 0 : index
    %c0_1 = arith.constant 0 : index
    %3 = vector.load %arg7[%c0, %c0_1] : memref<8x256xf32, #tpu.memory_space<vmem>>, vector<8x256xf32>
    %c0_2 = arith.constant 0 : index
    %c0_3 = arith.constant 0 : index
    %4 = vector.load %arg3[%c0_2, %c0_3] : memref<8x256xbf16, #tpu.memory_space<vmem>>, vector<8x256xbf16>
    %c0_4 = arith.constant 0 : index
    %c0_5 = arith.constant 0 : index
    %5 = vector.load %arg4[%c0_4, %c0_5] : memref<256x256xbf16, #tpu.memory_space<vmem>>, vector<256x256xbf16>
    %cst = arith.constant dense<0.000000e+00> : vector<8x256xf32>
    %6 = tpu.matmul %4, %5, %cst {dimension_numbers = #tpu.dot_dimension_numbers<[1], [0], [0], [1], [0, 0, 1, 1], [], []>} : vector<8x256xbf16>, vector<256x256xbf16>, vector<8x256xf32> -> vector<8x256xf32>
    %7 = arith.addf %3, %6 : vector<8x256xf32>
    %c0_6 = arith.constant 0 : index
    %c0_7 = arith.constant 0 : index
    %8 = vector.load %arg7[%c0_6, %c0_7] : memref<8x256xf32, #tpu.memory_space<vmem>>, vector<8x256xf32>
    tpu.vector_store %arg7[%c0_6, %c0_7], %7 {strides = array<i32>} : memref<8x256xf32, #tpu.memory_space<vmem>>, vector<8x256xf32>,
    %c12_i32 = arith.constant 12 : i32
    %9 = arith.cmpi eq, %arg2, %c12_i32 : i32
    %10 = arith.extui %9 : i1 to i32
    %c0_i32_8 = arith.constant 0 : i32
    %11 = arith.cmpi ne, %10, %c0_i32_8 : i32
    scf.if %11 {
      %c0_9 = arith.constant 0 : index
      %c0_10 = arith.constant 0 : index
      %12 = vector.load %arg7[%c0_9, %c0_10] : memref<8x256xf32, #tpu.memory_space<vmem>>, vector<8x256xf32>
      %c0_11 = arith.constant 0 : index
      %c0_12 = arith.constant 0 : index
      %13 = vector.load %arg5[%c0_11, %c0_12] : memref<1x256xf32, #tpu.memory_space<vmem>>, vector<1x256xf32>
      %14 = vector.broadcast %13 : vector<1x256xf32> to vector<8x256xf32>
      %15 = arith.addf %12, %14 : vector<8x256xf32>
      %cst_13 = arith.constant 0.000000e+00 : f32
      %16 = vector.broadcast %cst_13 : f32 to vector<8x256xf32>
      %17 = arith.maximumf %15, %16 : vector<8x256xf32>
      %c0_14 = arith.constant 0 : index
      %c0_15 = arith.constant 0 : index
      %18 = vector.load %arg6[%c0_14, %c0_15] : memref<8x256xf32, #tpu.memory_space<vmem>>, vector<8x256xf32>
      tpu.vector_store %arg6[%c0_14, %c0_15], %17 {strides = array<i32>} : memref<8x256xf32, #tpu.memory_space<vmem>>, vector<8x256xf32>,
    } else {
    }
    return
  }
  func.func @transform_0(%arg0: i32, %arg1: i32, %arg2: i32) -> (i32, i32) {
    %c0_i32 = arith.constant 0 : i32
    return %arg0, %arg2 : i32, i32
  }
  func.func @transform_1(%arg0: i32, %arg1: i32, %arg2: i32) -> (i32, i32) {
    %c0_i32 = arith.constant 0 : i32
    return %arg2, %arg1 : i32, i32
  }
  func.func @transform_2(%arg0: i32, %arg1: i32, %arg2: i32) -> (i32, i32) {
    %c0_i32 = arith.constant 0 : i32
    %c0_i32_0 = arith.constant 0 : i32
    return %c0_i32, %arg1 : i32, i32
  }
  func.func @transform_3(%arg0: i32, %arg1: i32, %arg2: i32) -> (i32, i32) {
    %c0_i32 = arith.constant 0 : i32
    return %arg0, %arg1 : i32, i32
  }
}

module attributes {stable_mosaic.version = 11 : i64} {
  func.func @_fc_stack_kernel(%arg0: i32, %arg1: memref<8x1024xbf16, #tpu.memory_space<vmem>>, %arg2: memref<1024x1024xbf16, #tpu.memory_space<vmem>>, %arg3: memref<1x1024xf32, #tpu.memory_space<vmem>>, %arg4: memref<1024x1024xbf16, #tpu.memory_space<vmem>>, %arg5: memref<1x1024xf32, #tpu.memory_space<vmem>>, %arg6: memref<1024x128xbf16, #tpu.memory_space<vmem>>, %arg7: memref<1x128xf32, #tpu.memory_space<vmem>>, %arg8: memref<128x128xbf16, #tpu.memory_space<vmem>>, %arg9: memref<1x128xf32, #tpu.memory_space<vmem>>, %arg10: memref<8x128xf32, #tpu.memory_space<vmem>>) attributes {dimension_semantics = [#tpu.dimension_semantics<arbitrary>], iteration_bounds = array<i64: 1>, scalar_prefetch = 0 : i64, scratch_operands = 0 : i64, tpu.core_type = #tpu.core_type<tc>, window_params = [{pipeline_mode = #tpu.pipeline_mode<synchronous>, transform_indices = @transform_0, window_bounds = array<i64: 8, 1024>}, {pipeline_mode = #tpu.pipeline_mode<synchronous>, transform_indices = @transform_1, window_bounds = array<i64: 1024, 1024>}, {pipeline_mode = #tpu.pipeline_mode<synchronous>, transform_indices = @transform_2, window_bounds = array<i64: 1, 1024>}, {pipeline_mode = #tpu.pipeline_mode<synchronous>, transform_indices = @transform_3, window_bounds = array<i64: 1024, 1024>}, {pipeline_mode = #tpu.pipeline_mode<synchronous>, transform_indices = @transform_4, window_bounds = array<i64: 1, 1024>}, {pipeline_mode = #tpu.pipeline_mode<synchronous>, transform_indices = @transform_5, window_bounds = array<i64: 1024, 128>}, {pipeline_mode = #tpu.pipeline_mode<synchronous>, transform_indices = @transform_6, window_bounds = array<i64: 1, 128>}, {pipeline_mode = #tpu.pipeline_mode<synchronous>, transform_indices = @transform_7, window_bounds = array<i64: 128, 128>}, {pipeline_mode = #tpu.pipeline_mode<synchronous>, transform_indices = @transform_8, window_bounds = array<i64: 1, 128>}, {pipeline_mode = #tpu.pipeline_mode<synchronous>, transform_indices = @transform_9, window_bounds = array<i64: 8, 128>}]} {
    %c0 = arith.constant 0 : index
    %c0_0 = arith.constant 0 : index
    %0 = vector.load %arg1[%c0, %c0_0] : memref<8x1024xbf16, #tpu.memory_space<vmem>>, vector<8x1024xbf16>
    %c0_1 = arith.constant 0 : index
    %c0_2 = arith.constant 0 : index
    %1 = vector.load %arg2[%c0_1, %c0_2] : memref<1024x1024xbf16, #tpu.memory_space<vmem>>, vector<1024x1024xbf16>
    %cst = arith.constant dense<0.000000e+00> : vector<8x1024xf32>
    %2 = tpu.matmul %0, %1, %cst {dimension_numbers = #tpu.dot_dimension_numbers<[1], [0], [0], [1], [0, 0, 1, 1], [], []>} : vector<8x1024xbf16>, vector<1024x1024xbf16>, vector<8x1024xf32> -> vector<8x1024xf32>
    %c0_3 = arith.constant 0 : index
    %c0_4 = arith.constant 0 : index
    %3 = vector.load %arg3[%c0_3, %c0_4] : memref<1x1024xf32, #tpu.memory_space<vmem>>, vector<1x1024xf32>
    %4 = vector.broadcast %3 : vector<1x1024xf32> to vector<8x1024xf32>
    %5 = arith.addf %2, %4 : vector<8x1024xf32>
    %cst_5 = arith.constant 0.000000e+00 : f32
    %6 = vector.broadcast %cst_5 : f32 to vector<8x1024xf32>
    %7 = arith.maximumf %5, %6 : vector<8x1024xf32>
    %8 = arith.truncf %7 : vector<8x1024xf32> to vector<8x1024xbf16>
    %c0_6 = arith.constant 0 : index
    %c0_7 = arith.constant 0 : index
    %9 = vector.load %arg4[%c0_6, %c0_7] : memref<1024x1024xbf16, #tpu.memory_space<vmem>>, vector<1024x1024xbf16>
    %cst_8 = arith.constant dense<0.000000e+00> : vector<8x1024xf32>
    %10 = tpu.matmul %8, %9, %cst_8 {dimension_numbers = #tpu.dot_dimension_numbers<[1], [0], [0], [1], [0, 0, 1, 1], [], []>} : vector<8x1024xbf16>, vector<1024x1024xbf16>, vector<8x1024xf32> -> vector<8x1024xf32>
    %c0_9 = arith.constant 0 : index
    %c0_10 = arith.constant 0 : index
    %11 = vector.load %arg5[%c0_9, %c0_10] : memref<1x1024xf32, #tpu.memory_space<vmem>>, vector<1x1024xf32>
    %12 = vector.broadcast %11 : vector<1x1024xf32> to vector<8x1024xf32>
    %13 = arith.addf %10, %12 : vector<8x1024xf32>
    %cst_11 = arith.constant 0.000000e+00 : f32
    %14 = vector.broadcast %cst_11 : f32 to vector<8x1024xf32>
    %15 = arith.maximumf %13, %14 : vector<8x1024xf32>
    %16 = arith.truncf %15 : vector<8x1024xf32> to vector<8x1024xbf16>
    %c0_12 = arith.constant 0 : index
    %c0_13 = arith.constant 0 : index
    %17 = vector.load %arg6[%c0_12, %c0_13] : memref<1024x128xbf16, #tpu.memory_space<vmem>>, vector<1024x128xbf16>
    %cst_14 = arith.constant dense<0.000000e+00> : vector<8x128xf32>
    %18 = tpu.matmul %16, %17, %cst_14 {dimension_numbers = #tpu.dot_dimension_numbers<[1], [0], [0], [1], [0, 0, 1, 1], [], []>} : vector<8x1024xbf16>, vector<1024x128xbf16>, vector<8x128xf32> -> vector<8x128xf32>
    %c0_15 = arith.constant 0 : index
    %c0_16 = arith.constant 0 : index
    %19 = vector.load %arg7[%c0_15, %c0_16] : memref<1x128xf32, #tpu.memory_space<vmem>>, vector<1x128xf32>
    %20 = vector.broadcast %19 : vector<1x128xf32> to vector<8x128xf32>
    %21 = arith.addf %18, %20 : vector<8x128xf32>
    %cst_17 = arith.constant 0.000000e+00 : f32
    %22 = vector.broadcast %cst_17 : f32 to vector<8x128xf32>
    %23 = arith.maximumf %21, %22 : vector<8x128xf32>
    %24 = arith.truncf %23 : vector<8x128xf32> to vector<8x128xbf16>
    %c0_18 = arith.constant 0 : index
    %c0_19 = arith.constant 0 : index
    %25 = vector.load %arg8[%c0_18, %c0_19] : memref<128x128xbf16, #tpu.memory_space<vmem>>, vector<128x128xbf16>
    %cst_20 = arith.constant dense<0.000000e+00> : vector<8x128xf32>
    %26 = tpu.matmul %24, %25, %cst_20 {dimension_numbers = #tpu.dot_dimension_numbers<[1], [0], [0], [1], [0, 0, 1, 1], [], []>} : vector<8x128xbf16>, vector<128x128xbf16>, vector<8x128xf32> -> vector<8x128xf32>
    %c0_21 = arith.constant 0 : index
    %c0_22 = arith.constant 0 : index
    %27 = vector.load %arg9[%c0_21, %c0_22] : memref<1x128xf32, #tpu.memory_space<vmem>>, vector<1x128xf32>
    %28 = vector.broadcast %27 : vector<1x128xf32> to vector<8x128xf32>
    %29 = arith.addf %26, %28 : vector<8x128xf32>
    %c0_23 = arith.constant 0 : index
    %c0_24 = arith.constant 0 : index
    %30 = vector.load %arg10[%c0_23, %c0_24] : memref<8x128xf32, #tpu.memory_space<vmem>>, vector<8x128xf32>
    tpu.vector_store %arg10[%c0_23, %c0_24], %29 {strides = array<i32>} : memref<8x128xf32, #tpu.memory_space<vmem>>, vector<8x128xf32>,
    return
  }
  func.func @transform_0(%arg0: i32) -> (i32, i32) {
    %c0_i32 = arith.constant 0 : i32
    %c0_i32_0 = arith.constant 0 : i32
    %c0_i32_1 = arith.constant 0 : i32
    return %c0_i32, %c0_i32_0 : i32, i32
  }
  func.func @transform_1(%arg0: i32) -> (i32, i32) {
    %c0_i32 = arith.constant 0 : i32
    %c0_i32_0 = arith.constant 0 : i32
    %c0_i32_1 = arith.constant 0 : i32
    return %c0_i32, %c0_i32_0 : i32, i32
  }
  func.func @transform_2(%arg0: i32) -> (i32, i32) {
    %c0_i32 = arith.constant 0 : i32
    %c0_i32_0 = arith.constant 0 : i32
    %c0_i32_1 = arith.constant 0 : i32
    return %c0_i32, %c0_i32_0 : i32, i32
  }
  func.func @transform_3(%arg0: i32) -> (i32, i32) {
    %c0_i32 = arith.constant 0 : i32
    %c0_i32_0 = arith.constant 0 : i32
    %c0_i32_1 = arith.constant 0 : i32
    return %c0_i32, %c0_i32_0 : i32, i32
  }
  func.func @transform_4(%arg0: i32) -> (i32, i32) {
    %c0_i32 = arith.constant 0 : i32
    %c0_i32_0 = arith.constant 0 : i32
    %c0_i32_1 = arith.constant 0 : i32
    return %c0_i32, %c0_i32_0 : i32, i32
  }
  func.func @transform_5(%arg0: i32) -> (i32, i32) {
    %c0_i32 = arith.constant 0 : i32
    %c0_i32_0 = arith.constant 0 : i32
    %c0_i32_1 = arith.constant 0 : i32
    return %c0_i32, %c0_i32_0 : i32, i32
  }
  func.func @transform_6(%arg0: i32) -> (i32, i32) {
    %c0_i32 = arith.constant 0 : i32
    %c0_i32_0 = arith.constant 0 : i32
    %c0_i32_1 = arith.constant 0 : i32
    return %c0_i32, %c0_i32_0 : i32, i32
  }
  func.func @transform_7(%arg0: i32) -> (i32, i32) {
    %c0_i32 = arith.constant 0 : i32
    %c0_i32_0 = arith.constant 0 : i32
    %c0_i32_1 = arith.constant 0 : i32
    return %c0_i32, %c0_i32_0 : i32, i32
  }
  func.func @transform_8(%arg0: i32) -> (i32, i32) {
    %c0_i32 = arith.constant 0 : i32
    %c0_i32_0 = arith.constant 0 : i32
    %c0_i32_1 = arith.constant 0 : i32
    return %c0_i32, %c0_i32_0 : i32, i32
  }
  func.func @transform_9(%arg0: i32) -> (i32, i32) {
    %c0_i32 = arith.constant 0 : i32
    %c0_i32_0 = arith.constant 0 : i32
    %c0_i32_1 = arith.constant 0 : i32
    return %c0_i32, %c0_i32_0 : i32, i32
  }
}

</mosaic_0001>

<llo_original>
// kernel: _lambda_.4
$region0: #{_lambda_.4}
  #allocation0 [shape = 'u32[]', space=smem, size = 0x4, offset = 0x4, fixed_abs, tag = 'smem constant byte address 0x4 - core index']
  #allocation1 [shape = 'u32[144,128]{1,0:T(1,128)}', space=vmem, size = 0x12000, scoped, tag = 'internal scratch']
  #allocation2 [shape = 'f32[128,128]{1,0:T(8,128)}', space=vmem, size = 0x10000, scoped, tag = 'scratch operand']
  %s0 = inlined_call_operand.vmem [shape: bf16[128,256], index: 0, kind: input, shape index: {}]
  %s1 = inlined_call_operand.vmem [shape: bf16[256,128], index: 1, kind: input, shape index: {}]
  %s2 = inlined_call_operand.vmem [shape: f32[1,128], index: 2, kind: input, shape index: {}]
  %s3 = inlined_call_operand.vmem [shape: f32[128,128], index: 3, kind: output, shape index: {}]
  %s4 = sld [smem:[#allocation0]]
  $region30: #{_lambda_.4} parent=0
    _
  %s6 = ssub.s32 1, %s4
  %s7 = scalar_select 0, %s6, %s4
  // Predicated region
  $region2: #{_lambda_.4} parent=0 // pred_check
    _
  $region3: #{_lambda_.4} parent=0 // pred_check_branch
    %9 = sbr.rel (0) target = $region5
  $region4: #{_lambda_.4} parent=0 // pred_region
    _
  $region5: #{_lambda_.4} parent=0 // pred_fallthru
    _
  // Predicated region
  $region6: #{_lambda_.4} parent=0 // pred_check
    _
  $region7: #{_lambda_.4} parent=0 // pred_check_branch
    %11 = sbr.rel (0) target = $region9
  $region8: #{_lambda_.4} parent=0 // pred_region
    _
  $region9: #{_lambda_.4} parent=0 // pred_fallthru
    _
  // Predicated region
  $region10: #{_lambda_.4} parent=0 // pred_check
    _
  $region11: #{_lambda_.4} parent=0 // pred_check_branch
    %13 = sbr.rel (0) target = $region13
  $region12: #{_lambda_.4} parent=0 // pred_region
    _
  $region13: #{_lambda_.4} parent=0 // pred_fallthru
    _
  %p15 = scmp.eq.s32.totalorder 0, 0
  // Predicated region
  $region14: #{_lambda_.4} parent=0 // pred_check
    %p16 = pneg %p15
  $region15: #{_lambda_.4} parent=0 // pred_check_branch
    %18 = sbr.rel (%p16) target = $region17
  $region16: #{_lambda_.4} parent=0 // pred_region
    %19 = vst [vmem:[#allocation2] sm:$0xff] 0.0
    %20 = vst [vmem:[#allocation2 + $0x8] sm:$0xff] 0.0
    %21 = vst [vmem:[#allocation2 + $0x10] sm:$0xff] 0.0
    %22 = vst [vmem:[#allocation2 + $0x18] sm:$0xff] 0.0
    %23 = vst [vmem:[#allocation2 + $0x20] sm:$0xff] 0.0
    %24 = vst [vmem:[#allocation2 + $0x28] sm:$0xff] 0.0
    %25 = vst [vmem:[#allocation2 + $0x30] sm:$0xff] 0.0
    %26 = vst [vmem:[#allocation2 + $0x38] sm:$0xff] 0.0
    %27 = vst [vmem:[#allocation2 + $0x40] sm:$0xff] 0.0
    %28 = vst [vmem:[#allocation2 + $0x48] sm:$0xff] 0.0
    %29 = vst [vmem:[#allocation2 + $0x50] sm:$0xff] 0.0
    %30 = vst [vmem:[#allocation2 + $0x58] sm:$0xff] 0.0
    %31 = vst [vmem:[#allocation2 + $0x60] sm:$0xff] 0.0
    %32 = vst [vmem:[#allocation2 + $0x68] sm:$0xff] 0.0
    %33 = vst [vmem:[#allocation2 + $0x70] sm:$0xff] 0.0
    %34 = vst [vmem:[#allocation2 + $0x78] sm:$0xff] 0.0
  $region17: #{_lambda_.4} parent=0 // pred_fallthru
    _
  %v35 = vld [vmem:[#allocation2] sm:$0xff]
  %v36 = vld [vmem:[#allocation2 + $0x8] sm:$0xff]
  %v37 = vld [vmem:[#allocation2 + $0x10] sm:$0xff]
  %v38 = vld [vmem:[#allocation2 + $0x18] sm:$0xff]
  %v39 = vld [vmem:[#allocation2 + $0x20] sm:$0xff]
  %v40 = vld [vmem:[#allocation2 + $0x28] sm:$0xff]
  %v41 = vld [vmem:[#allocation2 + $0x30] sm:$0xff]
  %v42 = vld [vmem:[#allocation2 + $0x38] sm:$0xff]
  %v43 = vld [vmem:[#allocation2 + $0x40] sm:$0xff]
  %v44 = vld [vmem:[#allocation2 + $0x48] sm:$0xff]
  %v45 = vld [vmem:[#allocation2 + $0x50] sm:$0xff]
  %v46 = vld [vmem:[#allocation2 + $0x58] sm:$0xff]
  %v47 = vld [vmem:[#allocation2 + $0x60] sm:$0xff]
  %v48 = vld [vmem:[#allocation2 + $0x68] sm:$0xff]
  %v49 = vld [vmem:[#allocation2 + $0x70] sm:$0xff]
  %v50 = vld [vmem:[#allocation2 + $0x78] sm:$0xff]
  %v51 = vld [vmem:[%s0] sm:$0xff]
  %v52 = vld [vmem:[%s0 + $0x8] sm:$0xff]
  %v53 = vld [vmem:[%s0 + $0x10] sm:$0xff]
  %v54 = vld [vmem:[%s0 + $0x18] sm:$0xff]
  %v55 = vld [vmem:[%s0 + $0x20] sm:$0xff]
  %v56 = vld [vmem:[%s0 + $0x28] sm:$0xff]
  %v57 = vld [vmem:[%s0 + $0x30] sm:$0xff]
  %v58 = vld [vmem:[%s0 + $0x38] sm:$0xff]
  %v59 = vld [vmem:[%s0 + $0x40] sm:$0xff]
  %v60 = vld [vmem:[%s0 + $0x48] sm:$0xff]
  %v61 = vld [vmem:[%s0 + $0x50] sm:$0xff]
  %v62 = vld [vmem:[%s0 + $0x58] sm:$0xff]
  %v63 = vld [vmem:[%s0 + $0x60] sm:$0xff]
  %v64 = vld [vmem:[%s0 + $0x68] sm:$0xff]
  %v65 = vld [vmem:[%s0 + $0x70] sm:$0xff]
  %v66 = vld [vmem:[%s0 + $0x78] sm:$0xff]
  %v67 = vld [vmem:[%s1] sm:$0xf]
  %v68 = vld [vmem:[%s1 + $0x4] sm:$0xf]
  %v69 = vld [vmem:[%s1 + $0x8] sm:$0xf]
  %v70 = vld [vmem:[%s1 + $0xc] sm:$0xf]
  %v71 = vld [vmem:[%s1 + $0x10] sm:$0xf]
  %v72 = vld [vmem:[%s1 + $0x14] sm:$0xf]
  %v73 = vld [vmem:[%s1 + $0x18] sm:$0xf]
  %v74 = vld [vmem:[%s1 + $0x1c] sm:$0xf]
  %v75 = vld [vmem:[%s1 + $0x20] sm:$0xf]
  %v76 = vld [vmem:[%s1 + $0x24] sm:$0xf]
  %v77 = vld [vmem:[%s1 + $0x28] sm:$0xf]
  %v78 = vld [vmem:[%s1 + $0x2c] sm:$0xf]
  %v79 = vld [vmem:[%s1 + $0x30] sm:$0xf]
  %v80 = vld [vmem:[%s1 + $0x34] sm:$0xf]
  %v81 = vld [vmem:[%s1 + $0x38] sm:$0xf]
  %v82 = vld [vmem:[%s1 + $0x3c] sm:$0xf]
  %v83 = vld [vmem:[%s1 + $0x40] sm:$0xf]
  %v84 = vld [vmem:[%s1 + $0x44] sm:$0xf]
  %v85 = vld [vmem:[%s1 + $0x48] sm:$0xf]
  %v86 = vld [vmem:[%s1 + $0x4c] sm:$0xf]
  %v87 = vld [vmem:[%s1 + $0x50] sm:$0xf]
  %v88 = vld [vmem:[%s1 + $0x54] sm:$0xf]
  %v89 = vld [vmem:[%s1 + $0x58] sm:$0xf]
  %v90 = vld [vmem:[%s1 + $0x5c] sm:$0xf]
  %v91 = vld [vmem:[%s1 + $0x60] sm:$0xf]
  %v92 = vld [vmem:[%s1 + $0x64] sm:$0xf]
  %v93 = vld [vmem:[%s1 + $0x68] sm:$0xf]
  %v94 = vld [vmem:[%s1 + $0x6c] sm:$0xf]
  %v95 = vld [vmem:[%s1 + $0x70] sm:$0xf]
  %v96 = vld [vmem:[%s1 + $0x74] sm:$0xf]
  %v97 = vld [vmem:[%s1 + $0x78] sm:$0xf]
  %v98 = vld [vmem:[%s1 + $0x7c] sm:$0xf]
  %v115 = vunpack.c.l.b16 %v51
  %v116 = vunpack.c.h.b16 %v51
  %v117 = vunpack.c.l.b16 %v52
  %v118 = vunpack.c.h.b16 %v52
  %v119 = vunpack.c.l.b16 %v53
  %v120 = vunpack.c.h.b16 %v53
  %v121 = vunpack.c.l.b16 %v54
  %v122 = vunpack.c.h.b16 %v54
  %v123 = vunpack.c.l.b16 %v55
  %v124 = vunpack.c.h.b16 %v55
  %v125 = vunpack.c.l.b16 %v56
  %v126 = vunpack.c.h.b16 %v56
  %v127 = vunpack.c.l.b16 %v57
  %v128 = vunpack.c.h.b16 %v57
  %v129 = vunpack.c.l.b16 %v58
  %v130 = vunpack.c.h.b16 %v58
  %v131 = vunpack.c.l.b16 %v59
  %v132 = vunpack.c.h.b16 %v59
  %v133 = vunpack.c.l.b16 %v60
  %v134 = vunpack.c.h.b16 %v60
  %v135 = vunpack.c.l.b16 %v61
  %v136 = vunpack.c.h.b16 %v61
  %v137 = vunpack.c.l.b16 %v62
  %v138 = vunpack.c.h.b16 %v62
  %v139 = vunpack.c.l.b16 %v63
  %v140 = vunpack.c.h.b16 %v63
  %v141 = vunpack.c.l.b16 %v64
  %v142 = vunpack.c.h.b16 %v64
  %v143 = vunpack.c.l.b16 %v65
  %v144 = vunpack.c.h.b16 %v65
  %v145 = vunpack.c.l.b16 %v66
  %v146 = vunpack.c.h.b16 %v66
  %v147 = vpack.c.b16 %v117, %v115
  %v148 = vpack.c.b16 %v118, %v116
  %v149 = vpack.c.b16 %v121, %v119
  %v150 = vpack.c.b16 %v122, %v120
  %v151 = vpack.c.b16 %v125, %v123
  %v152 = vpack.c.b16 %v126, %v124
  %v153 = vpack.c.b16 %v129, %v127
  %v154 = vpack.c.b16 %v130, %v128
  %v155 = vpack.c.b16 %v133, %v131
  %v156 = vpack.c.b16 %v134, %v132
  %v157 = vpack.c.b16 %v137, %v135
  %v158 = vpack.c.b16 %v138, %v136
  %v159 = vpack.c.b16 %v141, %v139
  %v160 = vpack.c.b16 %v142, %v140
  %v161 = vpack.c.b16 %v145, %v143
  %v162 = vpack.c.b16 %v146, %v144
  %v211 = vunpack.c.l.b16 %v67
  %v212 = vunpack.c.l.b16 %v68
  %v213 = vunpack.c.l.b16 %v69
  %v214 = vunpack.c.l.b16 %v70
  %v215 = vunpack.c.l.b16 %v71
  %v216 = vunpack.c.l.b16 %v72
  %v217 = vunpack.c.l.b16 %v73
  %v218 = vunpack.c.l.b16 %v74
  %v219 = vunpack.c.l.b16 %v75
  %v220 = vunpack.c.l.b16 %v76
  %v221 = vunpack.c.l.b16 %v77
  %v222 = vunpack.c.l.b16 %v78
  %v223 = vunpack.c.l.b16 %v79
  %v224 = vunpack.c.l.b16 %v80
  %v225 = vunpack.c.l.b16 %v81
  %v226 = vunpack.c.l.b16 %v82
  %v227 = vunpack.c.l.b16 %v83
  %v228 = vunpack.c.l.b16 %v84
  %v229 = vunpack.c.l.b16 %v85
  %v230 = vunpack.c.l.b16 %v86
  %v231 = vunpack.c.l.b16 %v87
  %v232 = vunpack.c.l.b16 %v88
  %v233 = vunpack.c.l.b16 %v89
  %v234 = vunpack.c.l.b16 %v90
  %v235 = vunpack.c.l.b16 %v91
  %v236 = vunpack.c.l.b16 %v92
  %v237 = vunpack.c.l.b16 %v93
  %v238 = vunpack.c.l.b16 %v94
  %v239 = vunpack.c.l.b16 %v95
  %v240 = vunpack.c.l.b16 %v96
  %v241 = vunpack.c.l.b16 %v97
  %v242 = vunpack.c.l.b16 %v98
  %v243 = vpack.c.b16 %v212, %v211
  %v244 = vpack.c.b16 %v214, %v213
  %v245 = vpack.c.b16 %v216, %v215
  %v246 = vpack.c.b16 %v218, %v217
  %v247 = vpack.c.b16 %v220, %v219
  %v248 = vpack.c.b16 %v222, %v221
  %v249 = vpack.c.b16 %v224, %v223
  %v250 = vpack.c.b16 %v226, %v225
  %v251 = vpack.c.b16 %v228, %v227
  %v252 = vpack.c.b16 %v230, %v229
  %v253 = vpack.c.b16 %v232, %v231
  %v254 = vpack.c.b16 %v234, %v233
  %v255 = vpack.c.b16 %v236, %v235
  %v256 = vpack.c.b16 %v238, %v237
  %v257 = vpack.c.b16 %v240, %v239
  %v258 = vpack.c.b16 %v242, %v241
  %275 = vmatprep.subr.bf16.mxu0 0
  %276 = vmatpush1.bf16.msra.mxu0 %v243
  %277 = vmatprep.subr.bf16.mxu0 0
  %278 = vmatpush1.bf16.msra.mxu0 %v244
  %279 = vmatprep.subr.bf16.mxu0 0
  %280 = vmatpush1.bf16.msra.mxu0 %v245
  %281 = vmatprep.subr.bf16.mxu0 0
  %282 = vmatpush1.bf16.msra.mxu0 %v246
  %283 = vmatprep.subr.bf16.mxu0 0
  %284 = vmatpush1.bf16.msra.mxu0 %v247
  %285 = vmatprep.subr.bf16.mxu0 0
  %286 = vmatpush1.bf16.msra.mxu0 %v248
  %287 = vmatprep.subr.bf16.mxu0 0
  %288 = vmatpush1.bf16.msra.mxu0 %v249
  %289 = vmatprep.subr.bf16.mxu0 0
  %290 = vmatpush1.bf16.msra.mxu0 %v250
  %291 = vmatprep.subr.bf16.mxu0 0
  %292 = vmatpush1.bf16.msra.mxu0 %v251
  %293 = vmatprep.subr.bf16.mxu0 0
  %294 = vmatpush1.bf16.msra.mxu0 %v252
  %295 = vmatprep.subr.bf16.mxu0 0
  %296 = vmatpush1.bf16.msra.mxu0 %v253
  %297 = vmatprep.subr.bf16.mxu0 0
  %298 = vmatpush1.bf16.msra.mxu0 %v254
  %299 = vmatprep.subr.bf16.mxu0 0
  %300 = vmatpush1.bf16.msra.mxu0 %v255
  %301 = vmatprep.subr.bf16.mxu0 0
  %302 = vmatpush1.bf16.msra.mxu0 %v256
  %303 = vmatprep.subr.bf16.mxu0 0
  %304 = vmatpush1.bf16.msra.mxu0 %v257
  %305 = vmatprep.subr.bf16.mxu0 0
  %306 = vmatpush1.bf16.msra.mxu0 %v258
  %307 = vmatprep.mubr.bf16.mxu0 %v148
  %308 = vmatmul.mubr.bf16.gmra.mrb[0].mxu0 %v147
  %v309 = vpop.f32.mrb[0].mxu0
  %v310 = vadd.f32 0.0, %v309
  %v311 = vpop.f32.mrb[0].mxu0
  %v312 = vpop.f32.mrb[0].mxu0
  %v313 = vadd.f32 0.0, %v312
  %v314 = vpop.f32.mrb[0].mxu0
  %315 = vmatprep.mubr.bf16.mxu0 %v150
  %316 = vmatmul.mubr.bf16.gmra.mrb[0].mxu0 %v149
  %v317 = vpop.f32.mrb[0].mxu0
  %v318 = vadd.f32 0.0, %v317
  %v319 = vpop.f32.mrb[0].mxu0
  %v320 = vpop.f32.mrb[0].mxu0
  %v321 = vadd.f32 0.0, %v320
  %v322 = vpop.f32.mrb[0].mxu0
  %323 = vmatprep.mubr.bf16.mxu0 %v152
  %324 = vmatmul.mubr.bf16.gmra.mrb[0].mxu0 %v151
  %v325 = vpop.f32.mrb[0].mxu0
  %v326 = vadd.f32 0.0, %v325
  %v327 = vpop.f32.mrb[0].mxu0
  %v328 = vpop.f32.mrb[0].mxu0
  %v329 = vadd.f32 0.0, %v328
  %v330 = vpop.f32.mrb[0].mxu0
  %331 = vmatprep.mubr.bf16.mxu0 %v154
  %332 = vmatmul.mubr.bf16.gmra.mrb[0].mxu0 %v153
  %v333 = vpop.f32.mrb[0].mxu0
  %v334 = vadd.f32 0.0, %v333
  %v335 = vpop.f32.mrb[0].mxu0
  %v336 = vpop.f32.mrb[0].mxu0
  %v337 = vadd.f32 0.0, %v336
  %v338 = vpop.f32.mrb[0].mxu0
  %339 = vmatprep.mubr.bf16.mxu0 %v156
  %340 = vmatmul.mubr.bf16.gmra.mrb[0].mxu0 %v155
  %v341 = vpop.f32.mrb[0].mxu0
  %v342 = vadd.f32 0.0, %v341
  %v343 = vpop.f32.mrb[0].mxu0
  %v344 = vpop.f32.mrb[0].mxu0
  %v345 = vadd.f32 0.0, %v344
  %v346 = vpop.f32.mrb[0].mxu0
  %347 = vmatprep.mubr.bf16.mxu0 %v158
  %348 = vmatmul.mubr.bf16.gmra.mrb[0].mxu0 %v157
  %v349 = vpop.f32.mrb[0].mxu0
  %v350 = vadd.f32 0.0, %v349
  %v351 = vpop.f32.mrb[0].mxu0
  %v352 = vpop.f32.mrb[0].mxu0
  %v353 = vadd.f32 0.0, %v352
  %v354 = vpop.f32.mrb[0].mxu0
  %355 = vmatprep.mubr.bf16.mxu0 %v160
  %356 = vmatmul.mubr.bf16.gmra.mrb[0].mxu0 %v159
  %v357 = vpop.f32.mrb[0].mxu0
  %v358 = vadd.f32 0.0, %v357
  %v359 = vpop.f32.mrb[0].mxu0
  %v360 = vpop.f32.mrb[0].mxu0
  %v361 = vadd.f32 0.0, %v360
  %v362 = vpop.f32.mrb[0].mxu0
  %363 = vmatprep.mubr.bf16.mxu0 %v162
  %364 = vmatmul.mubr.bf16.gmra.mrb[0].mxu0 %v161
  %v365 = vpop.f32.mrb[0].mxu0
  %v366 = vadd.f32 0.0, %v365
  %v367 = vpop.f32.mrb[0].mxu0
  %v368 = vpop.f32.mrb[0].mxu0
  %v369 = vadd.f32 0.0, %v368
  %v370 = vpop.f32.mrb[0].mxu0
  %371 = vdwg.mxu0
  %v372 = vadd.f32 %v35, %v310
  %v373 = vadd.f32 %v36, %v313
  %v374 = vadd.f32 %v37, %v318
  %v375 = vadd.f32 %v38, %v321
  %v376 = vadd.f32 %v39, %v326
  %v377 = vadd.f32 %v40, %v329
  %v378 = vadd.f32 %v41, %v334
  %v379 = vadd.f32 %v42, %v337
  %v380 = vadd.f32 %v43, %v342
  %v381 = vadd.f32 %v44, %v345
  %v382 = vadd.f32 %v45, %v350
  %v383 = vadd.f32 %v46, %v353
  %v384 = vadd.f32 %v47, %v358
  %v385 = vadd.f32 %v48, %v361
  %v386 = vadd.f32 %v49, %v366
  %v387 = vadd.f32 %v50, %v369
  %388 = vst [vmem:[#allocation2] sm:$0xff] %v372
  %389 = vst [vmem:[#allocation2 + $0x8] sm:$0xff] %v373
  %390 = vst [vmem:[#allocation2 + $0x10] sm:$0xff] %v374
  %391 = vst [vmem:[#allocation2 + $0x18] sm:$0xff] %v375
  %392 = vst [vmem:[#allocation2 + $0x20] sm:$0xff] %v376
  %393 = vst [vmem:[#allocation2 + $0x28] sm:$0xff] %v377
  %394 = vst [vmem:[#allocation2 + $0x30] sm:$0xff] %v378
  %395 = vst [vmem:[#allocation2 + $0x38] sm:$0xff] %v379
  %396 = vst [vmem:[#allocation2 + $0x40] sm:$0xff] %v380
  %397 = vst [vmem:[#allocation2 + $0x48] sm:$0xff] %v381
  %398 = vst [vmem:[#allocation2 + $0x50] sm:$0xff] %v382
  %399 = vst [vmem:[#allocation2 + $0x58] sm:$0xff] %v383
  %400 = vst [vmem:[#allocation2 + $0x60] sm:$0xff] %v384
  %401 = vst [vmem:[#allocation2 + $0x68] sm:$0xff] %v385
  %402 = vst [vmem:[#allocation2 + $0x70] sm:$0xff] %v386
  %403 = vst [vmem:[#allocation2 + $0x78] sm:$0xff] %v387
  // Predicated region
  $region18: #{_lambda_.4} parent=0 // pred_check
    %p404 = pneg %p15
  $region19: #{_lambda_.4} parent=0 // pred_check_branch
    %406 = sbr.rel (%p404) target = $region21
  $region20: #{_lambda_.4} parent=0 // pred_region
    %v407 = vld [vmem:[#allocation2] sm:$0xff]
    %v408 = vld [vmem:[#allocation2 + $0x8] sm:$0xff]
    %v409 = vld [vmem:[#allocation2 + $0x10] sm:$0xff]
    %v410 = vld [vmem:[#allocation2 + $0x18] sm:$0xff]
    %v411 = vld [vmem:[#allocation2 + $0x20] sm:$0xff]
    %v412 = vld [vmem:[#allocation2 + $0x28] sm:$0xff]
    %v413 = vld [vmem:[#allocation2 + $0x30] sm:$0xff]
    %v414 = vld [vmem:[#allocation2 + $0x38] sm:$0xff]
    %v415 = vld [vmem:[#allocation2 + $0x40] sm:$0xff]
    %v416 = vld [vmem:[#allocation2 + $0x48] sm:$0xff]
    %v417 = vld [vmem:[#allocation2 + $0x50] sm:$0xff]
    %v418 = vld [vmem:[#allocation2 + $0x58] sm:$0xff]
    %v419 = vld [vmem:[#allocation2 + $0x60] sm:$0xff]
    %v420 = vld [vmem:[#allocation2 + $0x68] sm:$0xff]
    %v421 = vld [vmem:[#allocation2 + $0x70] sm:$0xff]
    %v422 = vld [vmem:[#allocation2 + $0x78] sm:$0xff]
    %v423 = vld [vmem:[%s2] sm:$0x1]
    %v425 = vlaneseq
    %v426 = vshrl.u32 %v425, 7
    %v427 = vsub.s32 0, %v426
    %v428 = vrot.slane %v423, %v427
    %v430 = vadd.f32 %v407, %v428
    %v431 = vadd.f32 %v408, %v428
    %v432 = vadd.f32 %v409, %v428
    %v433 = vadd.f32 %v410, %v428
    %v434 = vadd.f32 %v411, %v428
    %v435 = vadd.f32 %v412, %v428
    %v436 = vadd.f32 %v413, %v428
    %v437 = vadd.f32 %v414, %v428
    %v438 = vadd.f32 %v415, %v428
    %v439 = vadd.f32 %v416, %v428
    %v440 = vadd.f32 %v417, %v428
    %v441 = vadd.f32 %v418, %v428
    %v442 = vadd.f32 %v419, %v428
    %v443 = vadd.f32 %v420, %v428
    %v444 = vadd.f32 %v421, %v428
    %v445 = vadd.f32 %v422, %v428
    %v446 = vmax.f32 %v430, 0.0
    %v447 = vmax.f32 %v431, 0.0
    %v448 = vmax.f32 %v432, 0.0
    %v449 = vmax.f32 %v433, 0.0
    %v450 = vmax.f32 %v434, 0.0
    %v451 = vmax.f32 %v435, 0.0
    %v452 = vmax.f32 %v436, 0.0
    %v453 = vmax.f32 %v437, 0.0
    %v454 = vmax.f32 %v438, 0.0
    %v455 = vmax.f32 %v439, 0.0
    %v456 = vmax.f32 %v440, 0.0
    %v457 = vmax.f32 %v441, 0.0
    %v458 = vmax.f32 %v442, 0.0
    %v459 = vmax.f32 %v443, 0.0
    %v460 = vmax.f32 %v444, 0.0
    %v461 = vmax.f32 %v445, 0.0
    %462 = vst [vmem:[%s3] sm:$0xff] %v446
    %463 = vst [vmem:[%s3 + $0x8] sm:$0xff] %v447
    %464 = vst [vmem:[%s3 + $0x10] sm:$0xff] %v448
    %465 = vst [vmem:[%s3 + $0x18] sm:$0xff] %v449
    %466 = vst [vmem:[%s3 + $0x20] sm:$0xff] %v450
    %467 = vst [vmem:[%s3 + $0x28] sm:$0xff] %v451
    %468 = vst [vmem:[%s3 + $0x30] sm:$0xff] %v452
    %469 = vst [vmem:[%s3 + $0x38] sm:$0xff] %v453
    %470 = vst [vmem:[%s3 + $0x40] sm:$0xff] %v454
    %471 = vst [vmem:[%s3 + $0x48] sm:$0xff] %v455
    %472 = vst [vmem:[%s3 + $0x50] sm:$0xff] %v456
    %473 = vst [vmem:[%s3 + $0x58] sm:$0xff] %v457
    %474 = vst [vmem:[%s3 + $0x60] sm:$0xff] %v458
    %475 = vst [vmem:[%s3 + $0x68] sm:$0xff] %v459
    %476 = vst [vmem:[%s3 + $0x70] sm:$0xff] %v460
    %477 = vst [vmem:[%s3 + $0x78] sm:$0xff] %v461
  $region21: #{_lambda_.4} parent=0 // pred_fallthru
    _
  // Predicated region
  $region22: #{_lambda_.4} parent=0 // pred_check
    _
  $region23: #{_lambda_.4} parent=0 // pred_check_branch
    %479 = sbr.rel (0) target = $region25
  $region24: #{_lambda_.4} parent=0 // pred_region
    _
  $region25: #{_lambda_.4} parent=0 // pred_fallthru
    _
  // Predicated region
  $region26: #{_lambda_.4} parent=0 // pred_check
    _
  $region27: #{_lambda_.4} parent=0 // pred_check_branch
    %481 = sbr.rel (0) target = $region29
  $region28: #{_lambda_.4} parent=0 // pred_region
    _
  $region29: #{_lambda_.4} parent=0 // pred_fallthru
    _

// kernel: _lambda_.5
$region0: #{_lambda_.5}
  #allocation0 [shape = 'u32[]', space=smem, size = 0x4, offset = 0x4, fixed_abs, tag = 'smem constant byte address 0x4 - core index']
  #allocation1 [shape = 'u32[144,128]{1,0:T(1,128)}', space=vmem, size = 0x12000, scoped, tag = 'internal scratch']
  #allocation2 [shape = 'f32[32,128]{1,0:T(8,128)}', space=vmem, size = 0x4000, scoped, tag = 'scratch operand']
  %s0 = inlined_call_operand.vmem [shape: bf16[32,1792], index: 0, kind: input, shape index: {}]
  %s1 = inlined_call_operand.vmem [shape: bf16[1792,128], index: 1, kind: input, shape index: {}]
  %s2 = inlined_call_operand.vmem [shape: f32[1,128], index: 2, kind: input, shape index: {}]
  %s3 = inlined_call_operand.vmem [shape: f32[32,128], index: 3, kind: output, shape index: {}]
  %s4 = sld [smem:[#allocation0]]
  $region91: #{_lambda_.5} parent=0
    _
  %s6 = ssub.s32 1, %s4
  %s7 = scalar_select 0, %s6, %s4
  $region1: #{_lambda_.5} parent=0
    #allocation3 [shape = 'u8[32768]{0}', space=vmem, size = 0x8000, scoped, tag = 'input window, operand 0']
    loop: start=0, step=1, limit=9
    $region2: #{_lambda_.5} parent=1 // loop_pre_header
      _
    $region3: #{_lambda_.5} parent=1 // loop_header
      %s9 = sphi 0, %s13
      %p10 = scmp.ge.s32.totalorder %s9, 9
      %s16 = sphi 0, %s35
      %s17 = sphi 0, %s31
      %s18 = sphi 0, %s27
      %s19 = sphi 0, %s16
      %s20 = sphi 0, %s17
      %s21 = sphi 0, %s18
      %s22 = sphi 0, %s19
      %s23 = sphi 0, %s20
      %s24 = sphi 0, %s21
      %s40 = sphi 0, %s42
      %s43 = sphi 0, %s40
      %s44 = sphi 0, %s43
      %s60 = sphi 0, %s44
      %s68 = sphi 0, %s70
      %s71 = sphi 0, %s68
      %s72 = sphi 0, %s71
      %s88 = sphi 0, %s72
      %s94 = sphi 0, %s96
      %s97 = sphi 0, %s94
      %s98 = sphi 0, %s97
      %s114 = sphi 0, %s98
      %s122 = sphi 0, %s124
      %s125 = sphi 0, %s122
      %s126 = sphi 0, %s125
      %s142 = sphi 0, %s126
    $region4: #{_lambda_.5} parent=1 // loop_header_branch
      %12 = sbr.rel (%p10) target = $region8
    $region5: #{_lambda_.5} parent=1 // loop_body
      %s14 = ssub.s32 %s9, 1
      %s15 = ssub.s32 %s9, 2
      %s25 = sadd.s32 1, %s18
      %p26 = scmp.ge.s32.totalorder %s25, 7
      %s27 = scalar_select %p26, 0, %s25
      %s28 = sadd.s32 1, %s17
      %s29 = scalar_select %p26, %s28, %s17
      %p30 = scmp.ge.s32.totalorder %s29, 1
      %s31 = scalar_select %p30, 0, %s29
      %s32 = sadd.s32 1, %s16
      %s33 = scalar_select %p30, %s32, %s16
      %p34 = scmp.ge.s32.totalorder %s33, 1
      %s35 = scalar_select %p34, 0, %s33
      %s36 = ssub.s32 %s16, %s35
      %s37 = ssub.s32 %s18, %s27
      %s38 = sor.u32 %s36, %s37
      %p39 = scmp.eq.s32.totalorder %s38, 0
      %s41 = sadd.s32 %s40, 1
      %s42 = scalar_select %p39, %s40, %s41
      %p45 = pneg %p39
      %p46 = scmp.eq.s32.totalorder %s9, 6
      %p47 = por %p45, %p46
      %p48 = scmp.ne.s32.totalorder %s40, %s43
      %p49 = scmp.eq.s32.totalorder %s9, 0
      %p50 = por %p48, %p49
      %p51 = scmp.ne.s32.totalorder %s40, %s43
      %p52 = scmp.eq.s32.totalorder %s14, 6
      %p53 = por %p51, %p52
      %p54 = scmp.ne.s32.totalorder %s43, %s44
      %p55 = scmp.eq.s32.totalorder %s14, 0
      %p56 = por %p54, %p55
      %p57 = scmp.ne.s32.totalorder %s43, %s44
      %p58 = scmp.eq.s32.totalorder %s15, 6
      %p59 = por %p57, %p58
      %p61 = scmp.ne.s32.totalorder %s44, %s60
      %p62 = scmp.eq.s32.totalorder %s15, 0
      %p63 = por %p61, %p62
      %s64 = ssub.s32 %s18, %s27
      %s65 = ssub.s32 %s17, %s31
      %s66 = sor.u32 %s64, %s65
      %p67 = scmp.eq.s32.totalorder %s66, 0
      %s69 = sadd.s32 %s68, 1
      %s70 = scalar_select %p67, %s68, %s69
      %p73 = pneg %p67
      %p74 = scmp.eq.s32.totalorder %s9, 6
      %p75 = por %p73, %p74
      %p76 = scmp.ne.s32.totalorder %s68, %s71
      %p77 = scmp.eq.s32.totalorder %s9, 0
      %p78 = por %p76, %p77
      %p79 = scmp.ne.s32.totalorder %s68, %s71
      %p80 = scmp.eq.s32.totalorder %s14, 6
      %p81 = por %p79, %p80
      %p82 = scmp.ne.s32.totalorder %s71, %s72
      %p83 = scmp.eq.s32.totalorder %s14, 0
      %p84 = por %p82, %p83
      %p85 = scmp.ne.s32.totalorder %s71, %s72
      %p86 = scmp.eq.s32.totalorder %s15, 6
      %p87 = por %p85, %p86
      %p89 = scmp.ne.s32.totalorder %s72, %s88
      %p90 = scmp.eq.s32.totalorder %s15, 0
      %p91 = por %p89, %p90
      %s92 = ssub.s32 %s17, %s31
      %p93 = scmp.eq.s32.totalorder %s92, 0
      %s95 = sadd.s32 %s94, 1
      %s96 = scalar_select %p93, %s94, %s95
      %p99 = pneg %p93
      %p100 = scmp.eq.s32.totalorder %s9, 6
      %p101 = por %p99, %p100
      %p102 = scmp.ne.s32.totalorder %s94, %s97
      %p103 = scmp.eq.s32.totalorder %s9, 0
      %p104 = por %p102, %p103
      %p105 = scmp.ne.s32.totalorder %s94, %s97
      %p106 = scmp.eq.s32.totalorder %s14, 6
      %p107 = por %p105, %p106
      %p108 = scmp.ne.s32.totalorder %s97, %s98
      %p109 = scmp.eq.s32.totalorder %s14, 0
      %p110 = por %p108, %p109
      %p111 = scmp.ne.s32.totalorder %s97, %s98
      %p112 = scmp.eq.s32.totalorder %s15, 6
      %p113 = por %p111, %p112
      %p115 = scmp.ne.s32.totalorder %s98, %s114
      %p116 = scmp.eq.s32.totalorder %s15, 0
      %p117 = por %p115, %p116
      %s118 = ssub.s32 %s16, %s35
      %s119 = ssub.s32 %s17, %s31
      %s120 = sor.u32 %s118, %s119
      %p121 = scmp.eq.s32.totalorder %s120, 0
      %s123 = sadd.s32 %s122, 1
      %s124 = scalar_select %p121, %s122, %s123
      %p127 = pneg %p121
      %p128 = scmp.eq.s32.totalorder %s9, 6
      %p129 = por %p127, %p128
      %p130 = scmp.ne.s32.totalorder %s122, %s125
      %p131 = scmp.eq.s32.totalorder %s9, 0
      %p132 = por %p130, %p131
      %p133 = scmp.ne.s32.totalorder %s122, %s125
      %p134 = scmp.eq.s32.totalorder %s14, 6
      %p135 = por %p133, %p134
      %p136 = scmp.ne.s32.totalorder %s125, %s126
      %p137 = scmp.eq.s32.totalorder %s14, 0
      %p138 = por %p136, %p137
      %p139 = scmp.ne.s32.totalorder %s125, %s126
      %p140 = scmp.eq.s32.totalorder %s15, 6
      %p141 = por %p139, %p140
      %p143 = scmp.ne.s32.totalorder %s126, %s142
      %p144 = scmp.eq.s32.totalorder %s15, 0
      %p145 = por %p143, %p144
      %p146 = scmp.le.s32.totalorder 1, %s9
      %p147 = scmp.lt.s32.totalorder %s9, 8
      %p148 = pnand %p146, %p147
      %p149 = pneg %p148
      // Predicated region
      $region9: #{_lambda_.5} parent=5 // pred_check
        _
      $region10: #{_lambda_.5} parent=5 // pred_check_branch
        %151 = sbr.rel (%p148) target = $region12
      $region11: #{_lambda_.5} parent=5 // pred_region
        %s152 = ssub.s32 %s9, 1
        // Predicated region
        $region13: #{_lambda_.5} parent=11 // pred_check
          %p153 = pneg %p110
        $region14: #{_lambda_.5} parent=11 // pred_check_branch
          %155 = sbr.rel (%p153) target = $region16
        $region15: #{_lambda_.5} parent=11 // pred_region
          %p156 = scmp.lt.s32.totalorder %s20, 0
          %s157 = scalar_select %p156, %s20, 0
          %s158 = scalar_lea.vmem %s2, %s157
        $region16: #{_lambda_.5} parent=11 // pred_fallthru
          _
      $region12: #{_lambda_.5} parent=5 // pred_fallthru
        _
      %p159 = scmp.lt.s32.totalorder %s9, 7
      // Predicated region
      $region17: #{_lambda_.5} parent=5 // pred_check
        %p160 = pneg %p159
      $region18: #{_lambda_.5} parent=5 // pred_check_branch
        %162 = sbr.rel (%p160) target = $region20
      $region19: #{_lambda_.5} parent=5 // pred_region
        // Predicated region
        $region21: #{_lambda_.5} parent=19 // pred_check
          %p163 = pneg %p50
        $region22: #{_lambda_.5} parent=19 // pred_check_branch
          %165 = sbr.rel (%p163) target = $region24
        $region23: #{_lambda_.5} parent=19 // pred_region
          %s166 = sand.u32 %s40, 1
          %s167 = sand.u32 %s40, 1
          %s168 = smul.addr %s167, 32
          %s169 = scalar_lea.vmem [#allocation3], %s168
          %s170 = smul.u32 4, %s16
          %s171 = smul.u32 2, %s18
          %s172 = smul.addr %s170, 14
          %s173 = sadd.s32 %s171, %s172
          %s174 = smul.addr %s173, 4
          %s175 = scalar_lea.vmem %s0, %s174
          // Predicated region
          $region25: #{_lambda_.5} parent=23 // pred_check
            _
          $region26: #{_lambda_.5} parent=23 // pred_check_branch
            %177 = sbr.rel (0) target = $region28
          $region27: #{_lambda_.5} parent=23 // pred_region
            // Predicated region
            $region29: #{_lambda_.5} parent=27 // pred_check
              _
            $region30: #{_lambda_.5} parent=27 // pred_check_branch
              %179 = sbr.rel (0) target = $region32
            $region31: #{_lambda_.5} parent=27 // pred_region
              // Predicated region
              $region44: #{_lambda_.5} parent=31 // pred_check
                _
              $region45: #{_lambda_.5} parent=31 // pred_check_branch
                %200 = sbr.rel (0) target = $region47
              $region46: #{_lambda_.5} parent=31 // pred_region
                loop: start=0, step=1, limit=1
                $region48: #{_lambda_.5} parent=46 // loop_pre_header
                  _
                $region49: #{_lambda_.5} parent=46 // loop_header
                  %s202 = sphi 0, %s206
                  %p203 = scmp.ge.s32.totalorder %s202, 1
                  %s207 = sphi %s175, %s175
                  %s208 = sphi %s169, %s169
                $region50: #{_lambda_.5} parent=46 // loop_header_branch
                  %205 = sbr.rel (%p203) target = $region54
                $region51: #{_lambda_.5} parent=46 // loop_body
                  %v209 = vld [vmem:[%s207] sm:$0xff]
                  %210 = vst [vmem:[%s208] sm:$0xff] %v209
                  %v211 = vld [vmem:[%s207 + $0x38] sm:$0xff]
                  %212 = vst [vmem:[%s208 + $0x8] sm:$0xff] %v211
                  %v213 = vld [vmem:[%s207 + $0x70] sm:$0xff]
                  %214 = vst [vmem:[%s208 + $0x10] sm:$0xff] %v213
                  %v215 = vld [vmem:[%s207 + $0xa8] sm:$0xff]
                  %216 = vst [vmem:[%s208 + $0x18] sm:$0xff] %v215
                $region52: #{_lambda_.5} parent=46 // loop_footer
                  %s206 = sadd.s32 1, %s202
                $region53: #{_lambda_.5} parent=46 // loop_footer_branch
                  %201 = sbr.rel target = $region49
                $region54: #{_lambda_.5} parent=46 // loop_exit
                  _
              $region47: #{_lambda_.5} parent=31 // pred_fallthru
                _
              // Predicated region
              $region55: #{_lambda_.5} parent=31 // pred_check
                _
              $region56: #{_lambda_.5} parent=31 // pred_check_branch
                %218 = sbr.rel target = $region58
              $region57: #{_lambda_.5} parent=31 // pred_region
                _
              $region58: #{_lambda_.5} parent=31 // pred_fallthru
                _
            $region32: #{_lambda_.5} parent=27 // pred_fallthru
              _
            // Predicated region
            $region33: #{_lambda_.5} parent=27 // pred_check
              _
            $region34: #{_lambda_.5} parent=27 // pred_check_branch
              %181 = sbr.rel target = $region36
            $region35: #{_lambda_.5} parent=27 // pred_region
              loop: start=0, step=1, limit=1
              $region37: #{_lambda_.5} parent=35 // loop_pre_header
                _
              $region38: #{_lambda_.5} parent=35 // loop_header
                %s184 = sphi 0, %s188
                %p185 = scmp.ge.s32.totalorder %s184, 1
                %s189 = sphi %s175, %s175
                %s190 = sphi %s169, %s169
              $region39: #{_lambda_.5} parent=35 // loop_header_branch
                %187 = sbr.rel (%p185) target = $region43
              $region40: #{_lambda_.5} parent=35 // loop_body
                %v191 = vld [vmem:[%s189] sm:$0xff]
                %192 = vst [vmem:[%s190] sm:$0xff] %v191
                %v193 = vld [vmem:[%s189 + $0x38] sm:$0xff]
                %194 = vst [vmem:[%s190 + $0x8] sm:$0xff] %v193
                %v195 = vld [vmem:[%s189 + $0x70] sm:$0xff]
                %196 = vst [vmem:[%s190 + $0x10] sm:$0xff] %v195
                %v197 = vld [vmem:[%s189 + $0xa8] sm:$0xff]
                %198 = vst [vmem:[%s190 + $0x18] sm:$0xff] %v197
              $region41: #{_lambda_.5} parent=35 // loop_footer
                %s188 = sadd.s32 1, %s184
              $region42: #{_lambda_.5} parent=35 // loop_footer_branch
                %183 = sbr.rel target = $region38
              $region43: #{_lambda_.5} parent=35 // loop_exit
                _
            $region36: #{_lambda_.5} parent=27 // pred_fallthru
              _
          $region28: #{_lambda_.5} parent=23 // pred_fallthru
            _
          %219 = vnop
        $region24: #{_lambda_.5} parent=19 // pred_fallthru
          _
        // Predicated region
        $region59: #{_lambda_.5} parent=19 // pred_check
          %p220 = pneg %p78
        $region60: #{_lambda_.5} parent=19 // pred_check_branch
          %222 = sbr.rel (%p220) target = $region62
        $region61: #{_lambda_.5} parent=19 // pred_region
          %s223 = smul.u32 32, %s18
          %p224 = scmp.lt.s32.totalorder %s223, 223
          %s225 = scalar_select %p224, %s223, 223
          %p226 = scmp.lt.s32.totalorder %s17, 0
          %s227 = scalar_select %p226, %s17, 0
          %s228 = sadd.s32 %s227, %s225
          %s229 = smul.addr %s228, 4
          %s230 = scalar_lea.vmem %s1, %s229
          %s231 = smul.u32 32, %s18
        $region62: #{_lambda_.5} parent=19 // pred_fallthru
          _
      $region20: #{_lambda_.5} parent=5 // pred_fallthru
        _
      %p232 = scmp.le.s32.totalorder 1, %s9
      %p233 = scmp.lt.s32.totalorder %s9, 8
      %p234 = pnand %p232, %p233
      %p235 = pneg %p234
      // Predicated region
      $region63: #{_lambda_.5} parent=5 // pred_check
        _
      $region64: #{_lambda_.5} parent=5 // pred_check_branch
        %237 = sbr.rel (%p234) target = $region66
      $region65: #{_lambda_.5} parent=5 // pred_region
        %s238 = ssub.s32 %s9, 1
        %s239 = sand.u32 %s43, 1
        %s240 = sand.u32 %s43, 1
        %s241 = smul.addr %s240, 32
        %s242 = scalar_lea.vmem [#allocation3], %s241
        // Predicated region
        $region67: #{_lambda_.5} parent=65 // pred_check
          %p243 = pneg %p56
        $region68: #{_lambda_.5} parent=65 // pred_check_branch
          %245 = sbr.rel (%p243) target = $region70
        $region69: #{_lambda_.5} parent=65 // pred_region
          _
        $region70: #{_lambda_.5} parent=65 // pred_fallthru
          _
        %s246 = sand.u32 %s43, 1
        %s247 = sand.u32 %s43, 1
        %s248 = smul.addr %s247, 32
        %s249 = scalar_lea.vmem [#allocation3], %s248
        %p250 = pneg %p56
        %p251 = pneg %p53
        %s252 = smul.u32 32, %s21
        %p253 = scmp.lt.s32.totalorder %s252, 223
        %s254 = scalar_select %p253, %s252, 223
        %p255 = scmp.lt.s32.totalorder %s20, 0
        %s256 = scalar_select %p255, %s20, 0
        %s257 = sadd.s32 %s256, %s254
        %s258 = smul.addr %s257, 4
        %s259 = scalar_lea.vmem %s1, %s258
        %p260 = pneg %p84
        %p261 = pneg %p81
        %p262 = scmp.lt.s32.totalorder %s20, 0
        %s263 = scalar_select %p262, %s20, 0
        %s264 = scalar_lea.vmem %s2, %s263
        %p265 = pneg %p110
        %p266 = pneg %p107
        %p267 = pneg %p138
        %p268 = pneg %p135
        %s269 = smul.u32 4, %s19
        %p270 = scmp.lt.s32.totalorder %s269, 3
        %s271 = scalar_select %p270, %s269, 3
        %p272 = scmp.lt.s32.totalorder %s20, 0
        %s273 = scalar_select %p272, %s20, 0
        %s274 = sadd.s32 %s273, %s271
        %s275 = smul.addr %s274, 8
        %s276 = scalar_lea.vmem %s3, %s275
        %s277 = smul.u32 4, %s19
        %s278 = smul.u32 2, %s21
        %s279 = smul.u32 32, %s21
        %p280 = scmp.lt.s32.totalorder %s279, 223
        %s281 = scalar_select %p280, %s279, 223
        %p282 = scmp.lt.s32.totalorder %s20, 0
        %s283 = scalar_select %p282, %s20, 0
        %s284 = sadd.s32 %s283, %s281
        %s285 = smul.addr %s284, 4
        %s286 = scalar_lea.vmem %s1, %s285
        %s287 = smul.u32 32, %s21
        %p288 = scmp.lt.s32.totalorder %s20, 0
        %s289 = scalar_select %p288, %s20, 0
        %s290 = scalar_lea.vmem %s2, %s289
        %s291 = smul.u32 4, %s19
        %p292 = scmp.lt.s32.totalorder %s291, 3
        %s293 = scalar_select %p292, %s291, 3
        %p294 = scmp.lt.s32.totalorder %s20, 0
        %s295 = scalar_select %p294, %s20, 0
        %s296 = sadd.s32 %s295, %s293
        %s297 = smul.addr %s296, 8
        %s298 = scalar_lea.vmem %s3, %s297
        %s299 = smul.u32 4, %s19
        %p301 = scmp.eq.s32.totalorder %s21, 0
        // Predicated region
        $region71: #{_lambda_.5} parent=65 // pred_check
          %p302 = pneg %p301
        $region72: #{_lambda_.5} parent=65 // pred_check_branch
          %304 = sbr.rel (%p302) target = $region74
        $region73: #{_lambda_.5} parent=65 // pred_region
          %305 = vst [vmem:[#allocation2] sm:$0xff] 0.0
          %306 = vst [vmem:[#allocation2 + $0x8] sm:$0xff] 0.0
          %307 = vst [vmem:[#allocation2 + $0x10] sm:$0xff] 0.0
          %308 = vst [vmem:[#allocation2 + $0x18] sm:$0xff] 0.0
        $region74: #{_lambda_.5} parent=65 // pred_fallthru
          _
        %v309 = vld [vmem:[#allocation2] sm:$0xff]
        %v310 = vld [vmem:[#allocation2 + $0x8] sm:$0xff]
        %v311 = vld [vmem:[#allocation2 + $0x10] sm:$0xff]
        %v312 = vld [vmem:[#allocation2 + $0x18] sm:$0xff]
        %v313 = vld [vmem:[%s242] sm:$0xff]
        %v314 = vld [vmem:[%s242 + $0x8] sm:$0xff]
        %v315 = vld [vmem:[%s242 + $0x10] sm:$0xff]
        %v316 = vld [vmem:[%s242 + $0x18] sm:$0xff]
        %v317 = vld [vmem:[%s286] sm:$0xf]
        %v318 = vld [vmem:[%s286 + $0x4] sm:$0xf]
        %v319 = vld [vmem:[%s286 + $0x8] sm:$0xf]
        %v320 = vld [vmem:[%s286 + $0xc] sm:$0xf]
        %v321 = vld [vmem:[%s286 + $0x10] sm:$0xf]
        %v322 = vld [vmem:[%s286 + $0x14] sm:$0xf]
        %v323 = vld [vmem:[%s286 + $0x18] sm:$0xf]
        %v324 = vld [vmem:[%s286 + $0x1c] sm:$0xf]
        %v325 = vld [vmem:[%s286 + $0x20] sm:$0xf]
        %v326 = vld [vmem:[%s286 + $0x24] sm:$0xf]
        %v327 = vld [vmem:[%s286 + $0x28] sm:$0xf]
        %v328 = vld [vmem:[%s286 + $0x2c] sm:$0xf]
        %v329 = vld [vmem:[%s286 + $0x30] sm:$0xf]
        %v330 = vld [vmem:[%s286 + $0x34] sm:$0xf]
        %v331 = vld [vmem:[%s286 + $0x38] sm:$0xf]
        %v332 = vld [vmem:[%s286 + $0x3c] sm:$0xf]
        %v333 = vld [vmem:[%s286 + $0x40] sm:$0xf]
        %v334 = vld [vmem:[%s286 + $0x44] sm:$0xf]
        %v335 = vld [vmem:[%s286 + $0x48] sm:$0xf]
        %v336 = vld [vmem:[%s286 + $0x4c] sm:$0xf]
        %v337 = vld [vmem:[%s286 + $0x50] sm:$0xf]
        %v338 = vld [vmem:[%s286 + $0x54] sm:$0xf]
        %v339 = vld [vmem:[%s286 + $0x58] sm:$0xf]
        %v340 = vld [vmem:[%s286 + $0x5c] sm:$0xf]
        %v341 = vld [vmem:[%s286 + $0x60] sm:$0xf]
        %v342 = vld [vmem:[%s286 + $0x64] sm:$0xf]
        %v343 = vld [vmem:[%s286 + $0x68] sm:$0xf]
        %v344 = vld [vmem:[%s286 + $0x6c] sm:$0xf]
        %v345 = vld [vmem:[%s286 + $0x70] sm:$0xf]
        %v346 = vld [vmem:[%s286 + $0x74] sm:$0xf]
        %v347 = vld [vmem:[%s286 + $0x78] sm:$0xf]
        %v348 = vld [vmem:[%s286 + $0x7c] sm:$0xf]
        %v353 = vunpack.c.l.b16 %v313
        %v354 = vunpack.c.h.b16 %v313
        %v355 = vunpack.c.l.b16 %v314
        %v356 = vunpack.c.h.b16 %v314
        %v357 = vunpack.c.l.b16 %v315
        %v358 = vunpack.c.h.b16 %v315
        %v359 = vunpack.c.l.b16 %v316
        %v360 = vunpack.c.h.b16 %v316
        %v361 = vpack.c.b16 %v355, %v353
        %v362 = vpack.c.b16 %v356, %v354
        %v363 = vpack.c.b16 %v359, %v357
        %v364 = vpack.c.b16 %v360, %v358
        %v401 = vunpack.c.l.b16 %v317
        %v402 = vunpack.c.l.b16 %v318
        %v403 = vunpack.c.l.b16 %v319
        %v404 = vunpack.c.l.b16 %v320
        %v405 = vunpack.c.l.b16 %v321
        %v406 = vunpack.c.l.b16 %v322
        %v407 = vunpack.c.l.b16 %v323
        %v408 = vunpack.c.l.b16 %v324
        %v409 = vunpack.c.l.b16 %v325
        %v410 = vunpack.c.l.b16 %v326
        %v411 = vunpack.c.l.b16 %v327
        %v412 = vunpack.c.l.b16 %v328
        %v413 = vunpack.c.l.b16 %v329
        %v414 = vunpack.c.l.b16 %v330
        %v415 = vunpack.c.l.b16 %v331
        %v416 = vunpack.c.l.b16 %v332
        %v417 = vunpack.c.l.b16 %v333
        %v418 = vunpack.c.l.b16 %v334
        %v419 = vunpack.c.l.b16 %v335
        %v420 = vunpack.c.l.b16 %v336
        %v421 = vunpack.c.l.b16 %v337
        %v422 = vunpack.c.l.b16 %v338
        %v423 = vunpack.c.l.b16 %v339
        %v424 = vunpack.c.l.b16 %v340
        %v425 = vunpack.c.l.b16 %v341
        %v426 = vunpack.c.l.b16 %v342
        %v427 = vunpack.c.l.b16 %v343
        %v428 = vunpack.c.l.b16 %v344
        %v429 = vunpack.c.l.b16 %v345
        %v430 = vunpack.c.l.b16 %v346
        %v431 = vunpack.c.l.b16 %v347
        %v432 = vunpack.c.l.b16 %v348
        %v433 = vpack.c.b16 %v402, %v401
        %v434 = vpack.c.b16 %v404, %v403
        %v435 = vpack.c.b16 %v406, %v405
        %v436 = vpack.c.b16 %v408, %v407
        %v437 = vpack.c.b16 %v410, %v409
        %v438 = vpack.c.b16 %v412, %v411
        %v439 = vpack.c.b16 %v414, %v413
        %v440 = vpack.c.b16 %v416, %v415
        %v441 = vpack.c.b16 %v418, %v417
        %v442 = vpack.c.b16 %v420, %v419
        %v443 = vpack.c.b16 %v422, %v421
        %v444 = vpack.c.b16 %v424, %v423
        %v445 = vpack.c.b16 %v426, %v425
        %v446 = vpack.c.b16 %v428, %v427
        %v447 = vpack.c.b16 %v430, %v429
        %v448 = vpack.c.b16 %v432, %v431
        %465 = vmatprep.subr.bf16.mxu0 0
        %466 = vmatpush1.bf16.msra.mxu0 %v433
        %467 = vmatprep.subr.bf16.mxu0 0
        %468 = vmatpush1.bf16.msra.mxu0 %v434
        %469 = vmatprep.subr.bf16.mxu0 0
        %470 = vmatpush1.bf16.msra.mxu0 %v435
        %471 = vmatprep.subr.bf16.mxu0 0
        %472 = vmatpush1.bf16.msra.mxu0 %v436
        %473 = vmatprep.subr.bf16.mxu0 0
        %474 = vmatpush1.bf16.msra.mxu0 %v437
        %475 = vmatprep.subr.bf16.mxu0 0
        %476 = vmatpush1.bf16.msra.mxu0 %v438
        %477 = vmatprep.subr.bf16.mxu0 0
        %478 = vmatpush1.bf16.msra.mxu0 %v439
        %479 = vmatprep.subr.bf16.mxu0 0
        %480 = vmatpush1.bf16.msra.mxu0 %v440
        %481 = vmatprep.subr.bf16.mxu0 0
        %482 = vmatpush1.bf16.msra.mxu0 %v441
        %483 = vmatprep.subr.bf16.mxu0 0
        %484 = vmatpush1.bf16.msra.mxu0 %v442
        %485 = vmatprep.subr.bf16.mxu0 0
        %486 = vmatpush1.bf16.msra.mxu0 %v443
        %487 = vmatprep.subr.bf16.mxu0 0
        %488 = vmatpush1.bf16.msra.mxu0 %v444
        %489 = vmatprep.subr.bf16.mxu0 0
        %490 = vmatpush1.bf16.msra.mxu0 %v445
        %491 = vmatprep.subr.bf16.mxu0 0
        %492 = vmatpush1.bf16.msra.mxu0 %v446
        %493 = vmatprep.subr.bf16.mxu0 0
        %494 = vmatpush1.bf16.msra.mxu0 %v447
        %495 = vmatprep.subr.bf16.mxu0 0
        %496 = vmatpush1.bf16.msra.mxu0 %v448
        %497 = vmatprep.mubr.bf16.mxu0 %v362
        %498 = vmatmul.mubr.bf16.gmra.mrb[0].mxu0 %v361
        %v499 = vpop.f32.mrb[0].mxu0
        %v500 = vadd.f32 0.0, %v499
        %v501 = vpop.f32.mrb[0].mxu0
        %v502 = vpop.f32.mrb[0].mxu0
        %v503 = vadd.f32 0.0, %v502
        %v504 = vpop.f32.mrb[0].mxu0
        %505 = vmatprep.mubr.bf16.mxu0 %v364
        %506 = vmatmul.mubr.bf16.gmra.mrb[0].mxu0 %v363
        %v507 = vpop.f32.mrb[0].mxu0
        %v508 = vadd.f32 0.0, %v507
        %v509 = vpop.f32.mrb[0].mxu0
        %v510 = vpop.f32.mrb[0].mxu0
        %v511 = vadd.f32 0.0, %v510
        %v512 = vpop.f32.mrb[0].mxu0
        %513 = vdwg.mxu0
        %v514 = vadd.f32 %v309, %v500
        %v515 = vadd.f32 %v310, %v503
        %v516 = vadd.f32 %v311, %v508
        %v517 = vadd.f32 %v312, %v511
        %518 = vst [vmem:[#allocation2] sm:$0xff] %v514
        %519 = vst [vmem:[#allocation2 + $0x8] sm:$0xff] %v515
        %520 = vst [vmem:[#allocation2 + $0x10] sm:$0xff] %v516
        %521 = vst [vmem:[#allocation2 + $0x18] sm:$0xff] %v517
        %p522 = scmp.eq.s32.totalorder %s21, 6
        // Predicated region
        $region75: #{_lambda_.5} parent=65 // pred_check
          %p523 = pneg %p522
        $region76: #{_lambda_.5} parent=65 // pred_check_branch
          %525 = sbr.rel (%p523) target = $region78
        $region77: #{_lambda_.5} parent=65 // pred_region
          %v526 = vld [vmem:[#allocation2] sm:$0xff]
          %v527 = vld [vmem:[#allocation2 + $0x8] sm:$0xff]
          %v528 = vld [vmem:[#allocation2 + $0x10] sm:$0xff]
          %v529 = vld [vmem:[#allocation2 + $0x18] sm:$0xff]
          %v530 = vld [vmem:[%s290] sm:$0x1]
          %v532 = vlaneseq
          %v533 = vshrl.u32 %v532, 7
          %v534 = vsub.s32 0, %v533
          %v535 = vrot.slane %v530, %v534
          %v537 = vadd.f32 %v526, %v535
          %v538 = vadd.f32 %v527, %v535
          %v539 = vadd.f32 %v528, %v535
          %v540 = vadd.f32 %v529, %v535
          %v541 = vmax.f32 %v537, 0.0
          %v542 = vmax.f32 %v538, 0.0
          %v543 = vmax.f32 %v539, 0.0
          %v544 = vmax.f32 %v540, 0.0
          %545 = vst [vmem:[%s298] sm:$0xff] %v541
          %546 = vst [vmem:[%s298 + $0x8] sm:$0xff] %v542
          %547 = vst [vmem:[%s298 + $0x10] sm:$0xff] %v543
          %548 = vst [vmem:[%s298 + $0x18] sm:$0xff] %v544
        $region78: #{_lambda_.5} parent=65 // pred_fallthru
          _
        %s549 = smul.u32 4, %s19
        %p550 = scmp.lt.s32.totalorder %s549, 3
        %s551 = scalar_select %p550, %s549, 3
        %p552 = scmp.lt.s32.totalorder %s20, 0
        %s553 = scalar_select %p552, %s20, 0
        %s554 = sadd.s32 %s553, %s551
        %s555 = smul.addr %s554, 8
        %s556 = scalar_lea.vmem %s3, %s555
        // Predicated region
        $region79: #{_lambda_.5} parent=65 // pred_check
          %p557 = pneg %p135
        $region80: #{_lambda_.5} parent=65 // pred_check_branch
          %559 = sbr.rel (%p557) target = $region82
        $region81: #{_lambda_.5} parent=65 // pred_region
          %s560 = smul.u32 4, %s19
        $region82: #{_lambda_.5} parent=65 // pred_fallthru
          _
        // Predicated region
        $region83: #{_lambda_.5} parent=65 // pred_check
          %p561 = pneg %p135
        $region84: #{_lambda_.5} parent=65 // pred_check_branch
          %563 = sbr.rel (%p561) target = $region86
        $region85: #{_lambda_.5} parent=65 // pred_region
          %s564 = smul.u32 4, %s19
          %p565 = scmp.lt.s32.totalorder %s564, 3
          %s566 = scalar_select %p565, %s564, 3
          %p567 = scmp.lt.s32.totalorder %s20, 0
          %s568 = scalar_select %p567, %s20, 0
          %s569 = sadd.s32 %s568, %s566
          %s570 = smul.addr %s569, 8
          %s571 = scalar_lea.vmem %s3, %s570
        $region86: #{_lambda_.5} parent=65 // pred_fallthru
          _
      $region66: #{_lambda_.5} parent=5 // pred_fallthru
        _
      %p572 = scmp.le.s32.totalorder 2, %s9
      // Predicated region
      $region87: #{_lambda_.5} parent=5 // pred_check
        %p573 = pneg %p572
      $region88: #{_lambda_.5} parent=5 // pred_check_branch
        %575 = sbr.rel (%p573) target = $region90
      $region89: #{_lambda_.5} parent=5 // pred_region
        %s576 = ssub.s32 %s9, 2
      $region90: #{_lambda_.5} parent=5 // pred_fallthru
        _
    $region6: #{_lambda_.5} parent=1 // loop_footer
      %s13 = sadd.s32 1, %s9
    $region7: #{_lambda_.5} parent=1 // loop_footer_branch
      %8 = sbr.rel target = $region3
    $region8: #{_lambda_.5} parent=1 // loop_exit
      _

// kernel: _lambda_.6
$region0: #{_lambda_.6}
  #allocation0 [shape = 'u32[]', space=smem, size = 0x4, offset = 0x4, fixed_abs, tag = 'smem constant byte address 0x4 - core index']
  #allocation1 [shape = 'u32[144,128]{1,0:T(1,128)}', space=vmem, size = 0x12000, scoped, tag = 'internal scratch']
  #allocation2 [shape = 'f32[8,256]{1,0:T(8,128)}', space=vmem, size = 0x2000, scoped, tag = 'scratch operand']
  %s0 = inlined_call_operand.vmem [shape: bf16[8,3328], index: 0, kind: input, shape index: {}]
  %s1 = inlined_call_operand.vmem [shape: bf16[3328,256], index: 1, kind: input, shape index: {}]
  %s2 = inlined_call_operand.vmem [shape: f32[1,256], index: 2, kind: input, shape index: {}]
  %s3 = inlined_call_operand.vmem [shape: f32[8,256], index: 3, kind: output, shape index: {}]
  %s4 = sld [smem:[#allocation0]]
  $region53: #{_lambda_.6} parent=0
    _
  %s6 = ssub.s32 1, %s4
  %s7 = scalar_select 0, %s6, %s4
  loop: start=0, step=1, limit=15
  $region2: #{_lambda_.6} parent=0 // loop_pre_header
    _
  $region3: #{_lambda_.6} parent=0 // loop_header
    %s9 = sphi 0, %s13
    %p10 = scmp.ge.s32.totalorder %s9, 15
    %s16 = sphi 0, %s35
    %s17 = sphi 0, %s31
    %s18 = sphi 0, %s27
    %s19 = sphi 0, %s16
    %s20 = sphi 0, %s17
    %s21 = sphi 0, %s18
    %s22 = sphi 0, %s19
    %s23 = sphi 0, %s20
    %s24 = sphi 0, %s21
    %s40 = sphi 0, %s42
    %s43 = sphi 0, %s40
    %s44 = sphi 0, %s43
    %s60 = sphi 0, %s44
    %s68 = sphi 0, %s70
    %s71 = sphi 0, %s68
    %s72 = sphi 0, %s71
    %s88 = sphi 0, %s72
    %s94 = sphi 0, %s96
    %s97 = sphi 0, %s94
    %s98 = sphi 0, %s97
    %s114 = sphi 0, %s98
    %s122 = sphi 0, %s124
    %s125 = sphi 0, %s122
    %s126 = sphi 0, %s125
    %s142 = sphi 0, %s126
  $region4: #{_lambda_.6} parent=0 // loop_header_branch
    %12 = sbr.rel (%p10) target = $region8
  $region5: #{_lambda_.6} parent=0 // loop_body
    %s14 = ssub.s32 %s9, 1
    %s15 = ssub.s32 %s9, 2
    %s25 = sadd.s32 1, %s18
    %p26 = scmp.ge.s32.totalorder %s25, 13
    %s27 = scalar_select %p26, 0, %s25
    %s28 = sadd.s32 1, %s17
    %s29 = scalar_select %p26, %s28, %s17
    %p30 = scmp.ge.s32.totalorder %s29, 1
    %s31 = scalar_select %p30, 0, %s29
    %s32 = sadd.s32 1, %s16
    %s33 = scalar_select %p30, %s32, %s16
    %p34 = scmp.ge.s32.totalorder %s33, 1
    %s35 = scalar_select %p34, 0, %s33
    %s36 = ssub.s32 %s16, %s35
    %s37 = ssub.s32 %s18, %s27
    %s38 = sor.u32 %s36, %s37
    %p39 = scmp.eq.s32.totalorder %s38, 0
    %s41 = sadd.s32 %s40, 1
    %s42 = scalar_select %p39, %s40, %s41
    %p45 = pneg %p39
    %p46 = scmp.eq.s32.totalorder %s9, 12
    %p47 = por %p45, %p46
    %p48 = scmp.ne.s32.totalorder %s40, %s43
    %p49 = scmp.eq.s32.totalorder %s9, 0
    %p50 = por %p48, %p49
    %p51 = scmp.ne.s32.totalorder %s40, %s43
    %p52 = scmp.eq.s32.totalorder %s14, 12
    %p53 = por %p51, %p52
    %p54 = scmp.ne.s32.totalorder %s43, %s44
    %p55 = scmp.eq.s32.totalorder %s14, 0
    %p56 = por %p54, %p55
    %p57 = scmp.ne.s32.totalorder %s43, %s44
    %p58 = scmp.eq.s32.totalorder %s15, 12
    %p59 = por %p57, %p58
    %p61 = scmp.ne.s32.totalorder %s44, %s60
    %p62 = scmp.eq.s32.totalorder %s15, 0
    %p63 = por %p61, %p62
    %s64 = ssub.s32 %s18, %s27
    %s65 = ssub.s32 %s17, %s31
    %s66 = sor.u32 %s64, %s65
    %p67 = scmp.eq.s32.totalorder %s66, 0
    %s69 = sadd.s32 %s68, 1
    %s70 = scalar_select %p67, %s68, %s69
    %p73 = pneg %p67
    %p74 = scmp.eq.s32.totalorder %s9, 12
    %p75 = por %p73, %p74
    %p76 = scmp.ne.s32.totalorder %s68, %s71
    %p77 = scmp.eq.s32.totalorder %s9, 0
    %p78 = por %p76, %p77
    %p79 = scmp.ne.s32.totalorder %s68, %s71
    %p80 = scmp.eq.s32.totalorder %s14, 12
    %p81 = por %p79, %p80
    %p82 = scmp.ne.s32.totalorder %s71, %s72
    %p83 = scmp.eq.s32.totalorder %s14, 0
    %p84 = por %p82, %p83
    %p85 = scmp.ne.s32.totalorder %s71, %s72
    %p86 = scmp.eq.s32.totalorder %s15, 12
    %p87 = por %p85, %p86
    %p89 = scmp.ne.s32.totalorder %s72, %s88
    %p90 = scmp.eq.s32.totalorder %s15, 0
    %p91 = por %p89, %p90
    %s92 = ssub.s32 %s17, %s31
    %p93 = scmp.eq.s32.totalorder %s92, 0
    %s95 = sadd.s32 %s94, 1
    %s96 = scalar_select %p93, %s94, %s95
    %p99 = pneg %p93
    %p100 = scmp.eq.s32.totalorder %s9, 12
    %p101 = por %p99, %p100
    %p102 = scmp.ne.s32.totalorder %s94, %s97
    %p103 = scmp.eq.s32.totalorder %s9, 0
    %p104 = por %p102, %p103
    %p105 = scmp.ne.s32.totalorder %s94, %s97
    %p106 = scmp.eq.s32.totalorder %s14, 12
    %p107 = por %p105, %p106
    %p108 = scmp.ne.s32.totalorder %s97, %s98
    %p109 = scmp.eq.s32.totalorder %s14, 0
    %p110 = por %p108, %p109
    %p111 = scmp.ne.s32.totalorder %s97, %s98
    %p112 = scmp.eq.s32.totalorder %s15, 12
    %p113 = por %p111, %p112
    %p115 = scmp.ne.s32.totalorder %s98, %s114
    %p116 = scmp.eq.s32.totalorder %s15, 0
    %p117 = por %p115, %p116
    %s118 = ssub.s32 %s16, %s35
    %s119 = ssub.s32 %s17, %s31
    %s120 = sor.u32 %s118, %s119
    %p121 = scmp.eq.s32.totalorder %s120, 0
    %s123 = sadd.s32 %s122, 1
    %s124 = scalar_select %p121, %s122, %s123
    %p127 = pneg %p121
    %p128 = scmp.eq.s32.totalorder %s9, 12
    %p129 = por %p127, %p128
    %p130 = scmp.ne.s32.totalorder %s122, %s125
    %p131 = scmp.eq.s32.totalorder %s9, 0
    %p132 = por %p130, %p131
    %p133 = scmp.ne.s32.totalorder %s122, %s125
    %p134 = scmp.eq.s32.totalorder %s14, 12
    %p135 = por %p133, %p134
    %p136 = scmp.ne.s32.totalorder %s125, %s126
    %p137 = scmp.eq.s32.totalorder %s14, 0
    %p138 = por %p136, %p137
    %p139 = scmp.ne.s32.totalorder %s125, %s126
    %p140 = scmp.eq.s32.totalorder %s15, 12
    %p141 = por %p139, %p140
    %p143 = scmp.ne.s32.totalorder %s126, %s142
    %p144 = scmp.eq.s32.totalorder %s15, 0
    %p145 = por %p143, %p144
    %p146 = scmp.le.s32.totalorder 1, %s9
    %p147 = scmp.lt.s32.totalorder %s9, 14
    %p148 = pnand %p146, %p147
    %p149 = pneg %p148
    // Predicated region
    $region9: #{_lambda_.6} parent=5 // pred_check
      _
    $region10: #{_lambda_.6} parent=5 // pred_check_branch
      %151 = sbr.rel (%p148) target = $region12
    $region11: #{_lambda_.6} parent=5 // pred_region
      %s152 = ssub.s32 %s9, 1
      // Predicated region
      $region13: #{_lambda_.6} parent=11 // pred_check
        %p153 = pneg %p110
      $region14: #{_lambda_.6} parent=11 // pred_check_branch
        %155 = sbr.rel (%p153) target = $region16
      $region15: #{_lambda_.6} parent=11 // pred_region
        %s156 = smul.u32 2, %s20
        %p157 = scmp.lt.s32.totalorder %s156, 1
        %s158 = scalar_select %p157, %s156, 1
        %s159 = scalar_lea.vmem %s2, %s158
        %s160 = smul.u32 2, %s20
      $region16: #{_lambda_.6} parent=11 // pred_fallthru
        _
    $region12: #{_lambda_.6} parent=5 // pred_fallthru
      _
    %p161 = scmp.lt.s32.totalorder %s9, 13
    // Predicated region
    $region17: #{_lambda_.6} parent=5 // pred_check
      %p162 = pneg %p161
    $region18: #{_lambda_.6} parent=5 // pred_check_branch
      %164 = sbr.rel (%p162) target = $region20
    $region19: #{_lambda_.6} parent=5 // pred_region
      // Predicated region
      $region21: #{_lambda_.6} parent=19 // pred_check
        %p165 = pneg %p50
      $region22: #{_lambda_.6} parent=19 // pred_check_branch
        %167 = sbr.rel (%p165) target = $region24
      $region23: #{_lambda_.6} parent=19 // pred_region
        %s168 = smul.u32 2, %s18
        %p169 = scmp.lt.s32.totalorder %s16, 0
        %s170 = scalar_select %p169, %s16, 0
        %p171 = scmp.lt.s32.totalorder %s168, 25
        %s172 = scalar_select %p171, %s168, 25
        %s173 = smul.addr %s170, 26
        %s174 = sadd.s32 %s172, %s173
        %s175 = smul.addr %s174, 4
        %s176 = scalar_lea.vmem %s0, %s175
        %s177 = smul.u32 2, %s18
      $region24: #{_lambda_.6} parent=19 // pred_fallthru
        _
      // Predicated region
      $region25: #{_lambda_.6} parent=19 // pred_check
        %p178 = pneg %p78
      $region26: #{_lambda_.6} parent=19 // pred_check_branch
        %180 = sbr.rel (%p178) target = $region28
      $region27: #{_lambda_.6} parent=19 // pred_region
        %s181 = smul.u32 32, %s18
        %s182 = smul.u32 2, %s17
        %p183 = scmp.lt.s32.totalorder %s181, 415
        %s184 = scalar_select %p183, %s181, 415
        %p185 = scmp.lt.s32.totalorder %s182, 1
        %s186 = scalar_select %p185, %s182, 1
        %s187 = smul.addr %s184, 2
        %s188 = sadd.s32 %s186, %s187
        %s189 = smul.addr %s188, 4
        %s190 = scalar_lea.vmem %s1, %s189
        %s191 = smul.u32 32, %s18
        %s192 = smul.u32 2, %s17
      $region28: #{_lambda_.6} parent=19 // pred_fallthru
        _
    $region20: #{_lambda_.6} parent=5 // pred_fallthru
      _
    %p193 = scmp.le.s32.totalorder 1, %s9
    %p194 = scmp.lt.s32.totalorder %s9, 14
    %p195 = pnand %p193, %p194
    %p196 = pneg %p195
    // Predicated region
    $region29: #{_lambda_.6} parent=5 // pred_check
      _
    $region30: #{_lambda_.6} parent=5 // pred_check_branch
      %198 = sbr.rel (%p195) target = $region32
    $region31: #{_lambda_.6} parent=5 // pred_region
      %s199 = ssub.s32 %s9, 1
      %s200 = smul.u32 2, %s21
      %p201 = scmp.lt.s32.totalorder %s19, 0
      %s202 = scalar_select %p201, %s19, 0
      %p203 = scmp.lt.s32.totalorder %s200, 25
      %s204 = scalar_select %p203, %s200, 25
      %s205 = smul.addr %s202, 26
      %s206 = sadd.s32 %s204, %s205
      %s207 = smul.addr %s206, 4
      %s208 = scalar_lea.vmem %s0, %s207
      %p209 = pneg %p56
      %p210 = pneg %p53
      %s211 = smul.u32 32, %s21
      %s212 = smul.u32 2, %s20
      %p213 = scmp.lt.s32.totalorder %s211, 415
      %s214 = scalar_select %p213, %s211, 415
      %p215 = scmp.lt.s32.totalorder %s212, 1
      %s216 = scalar_select %p215, %s212, 1
      %s217 = smul.addr %s214, 2
      %s218 = sadd.s32 %s216, %s217
      %s219 = smul.addr %s218, 4
      %s220 = scalar_lea.vmem %s1, %s219
      %p221 = pneg %p84
      %p222 = pneg %p81
      %s223 = smul.u32 2, %s20
      %p224 = scmp.lt.s32.totalorder %s223, 1
      %s225 = scalar_select %p224, %s223, 1
      %s226 = scalar_lea.vmem %s2, %s225
      %p227 = pneg %p110
      %p228 = pneg %p107
      %p229 = pneg %p138
      %p230 = pneg %p135
      %s231 = smul.u32 2, %s20
      %p232 = scmp.lt.s32.totalorder %s19, 0
      %s233 = scalar_select %p232, %s19, 0
      %p234 = scmp.lt.s32.totalorder %s231, 1
      %s235 = scalar_select %p234, %s231, 1
      %s236 = smul.addr %s233, 2
      %s237 = sadd.s32 %s235, %s236
      %s238 = smul.addr %s237, 8
      %s239 = scalar_lea.vmem %s3, %s238
      %s240 = smul.u32 2, %s21
      %p241 = scmp.lt.s32.totalorder %s19, 0
      %s242 = scalar_select %p241, %s19, 0
      %p243 = scmp.lt.s32.totalorder %s240, 25
      %s244 = scalar_select %p243, %s240, 25
      %s245 = smul.addr %s242, 26
      %s246 = sadd.s32 %s244, %s245
      %s247 = smul.addr %s246, 4
      %s248 = scalar_lea.vmem %s0, %s247
      %s249 = smul.u32 2, %s21
      %s250 = smul.u32 32, %s21
      %s251 = smul.u32 2, %s20
      %p252 = scmp.lt.s32.totalorder %s250, 415
      %s253 = scalar_select %p252, %s250, 415
      %p254 = scmp.lt.s32.totalorder %s251, 1
      %s255 = scalar_select %p254, %s251, 1
      %s256 = smul.addr %s253, 2
      %s257 = sadd.s32 %s255, %s256
      %s258 = smul.addr %s257, 4
      %s259 = scalar_lea.vmem %s1, %s258
      %s260 = smul.u32 32, %s21
      %s261 = smul.u32 2, %s20
      %s262 = smul.u32 2, %s20
      %p263 = scmp.lt.s32.totalorder %s262, 1
      %s264 = scalar_select %p263, %s262, 1
      %s265 = scalar_lea.vmem %s2, %s264
      %s266 = smul.u32 2, %s20
      %s267 = smul.u32 2, %s20
      %p268 = scmp.lt.s32.totalorder %s19, 0
      %s269 = scalar_select %p268, %s19, 0
      %p270 = scmp.lt.s32.totalorder %s267, 1
      %s271 = scalar_select %p270, %s267, 1
      %s272 = smul.addr %s269, 2
      %s273 = sadd.s32 %s271, %s272
      %s274 = smul.addr %s273, 8
      %s275 = scalar_lea.vmem %s3, %s274
      %s276 = smul.u32 2, %s20
      %p277 = scmp.eq.s32.totalorder %s21, 0
      // Predicated region
      $region33: #{_lambda_.6} parent=31 // pred_check
        %p278 = pneg %p277
      $region34: #{_lambda_.6} parent=31 // pred_check_branch
        %280 = sbr.rel (%p278) target = $region36
      $region35: #{_lambda_.6} parent=31 // pred_region
        %281 = vst [vmem:[#allocation2] sm:$0xff] 0.0
        %282 = vst [vmem:[#allocation2 + $0x8] sm:$0xff] 0.0
      $region36: #{_lambda_.6} parent=31 // pred_fallthru
        _
      %v283 = vld [vmem:[#allocation2] sm:$0xff]
      %v284 = vld [vmem:[#allocation2 + $0x8] sm:$0xff]
      %v285 = vld [vmem:[%s248] sm:$0xff]
      %v286 = vld [vmem:[%s259] sm:$0xff]
      %v287 = vld [vmem:[%s259 + $0x8] sm:$0xff]
      %v288 = vld [vmem:[%s259 + $0x10] sm:$0xff]
      %v289 = vld [vmem:[%s259 + $0x18] sm:$0xff]
      %v290 = vld [vmem:[%s259 + $0x20] sm:$0xff]
      %v291 = vld [vmem:[%s259 + $0x28] sm:$0xff]
      %v292 = vld [vmem:[%s259 + $0x30] sm:$0xff]
      %v293 = vld [vmem:[%s259 + $0x38] sm:$0xff]
      %v294 = vld [vmem:[%s259 + $0x40] sm:$0xff]
      %v295 = vld [vmem:[%s259 + $0x48] sm:$0xff]
      %v296 = vld [vmem:[%s259 + $0x50] sm:$0xff]
      %v297 = vld [vmem:[%s259 + $0x58] sm:$0xff]
      %v298 = vld [vmem:[%s259 + $0x60] sm:$0xff]
      %v299 = vld [vmem:[%s259 + $0x68] sm:$0xff]
      %v300 = vld [vmem:[%s259 + $0x70] sm:$0xff]
      %v301 = vld [vmem:[%s259 + $0x78] sm:$0xff]
      %v302 = vld [vmem:[%s259 + $0x80] sm:$0xff]
      %v303 = vld [vmem:[%s259 + $0x88] sm:$0xff]
      %v304 = vld [vmem:[%s259 + $0x90] sm:$0xff]
      %v305 = vld [vmem:[%s259 + $0x98] sm:$0xff]
      %v306 = vld [vmem:[%s259 + $0xa0] sm:$0xff]
      %v307 = vld [vmem:[%s259 + $0xa8] sm:$0xff]
      %v308 = vld [vmem:[%s259 + $0xb0] sm:$0xff]
      %v309 = vld [vmem:[%s259 + $0xb8] sm:$0xff]
      %v310 = vld [vmem:[%s259 + $0xc0] sm:$0xff]
      %v311 = vld [vmem:[%s259 + $0xc8] sm:$0xff]
      %v312 = vld [vmem:[%s259 + $0xd0] sm:$0xff]
      %v313 = vld [vmem:[%s259 + $0xd8] sm:$0xff]
      %v314 = vld [vmem:[%s259 + $0xe0] sm:$0xff]
      %v315 = vld [vmem:[%s259 + $0xe8] sm:$0xff]
      %v316 = vld [vmem:[%s259 + $0xf0] sm:$0xff]
      %v317 = vld [vmem:[%s259 + $0xf8] sm:$0xff]
      %v319 = vunpack.c.l.b16 %v285
      %v320 = vunpack.c.h.b16 %v285
      %v321 = vpack.c.b16 %v319, %v319
      %v322 = vpack.c.b16 %v320, %v320
      %v357 = vunpack.c.l.b16 %v286
      %v358 = vunpack.c.h.b16 %v286
      %v359 = vunpack.c.l.b16 %v287
      %v360 = vunpack.c.h.b16 %v287
      %v361 = vunpack.c.l.b16 %v288
      %v362 = vunpack.c.h.b16 %v288
      %v363 = vunpack.c.l.b16 %v289
      %v364 = vunpack.c.h.b16 %v289
      %v365 = vunpack.c.l.b16 %v290
      %v366 = vunpack.c.h.b16 %v290
      %v367 = vunpack.c.l.b16 %v291
      %v368 = vunpack.c.h.b16 %v291
      %v369 = vunpack.c.l.b16 %v292
      %v370 = vunpack.c.h.b16 %v292
      %v371 = vunpack.c.l.b16 %v293
      %v372 = vunpack.c.h.b16 %v293
      %v373 = vunpack.c.l.b16 %v294
      %v374 = vunpack.c.h.b16 %v294
      %v375 = vunpack.c.l.b16 %v295
      %v376 = vunpack.c.h.b16 %v295
      %v377 = vunpack.c.l.b16 %v296
      %v378 = vunpack.c.h.b16 %v296
      %v379 = vunpack.c.l.b16 %v297
      %v380 = vunpack.c.h.b16 %v297
      %v381 = vunpack.c.l.b16 %v298
      %v382 = vunpack.c.h.b16 %v298
      %v383 = vunpack.c.l.b16 %v299
      %v384 = vunpack.c.h.b16 %v299
      %v385 = vunpack.c.l.b16 %v300
      %v386 = vunpack.c.h.b16 %v300
      %v387 = vunpack.c.l.b16 %v301
      %v388 = vunpack.c.h.b16 %v301
      %v389 = vunpack.c.l.b16 %v302
      %v390 = vunpack.c.h.b16 %v302
      %v391 = vunpack.c.l.b16 %v303
      %v392 = vunpack.c.h.b16 %v303
      %v393 = vunpack.c.l.b16 %v304
      %v394 = vunpack.c.h.b16 %v304
      %v395 = vunpack.c.l.b16 %v305
      %v396 = vunpack.c.h.b16 %v305
      %v397 = vunpack.c.l.b16 %v306
      %v398 = vunpack.c.h.b16 %v306
      %v399 = vunpack.c.l.b16 %v307
      %v400 = vunpack.c.h.b16 %v307
      %v401 = vunpack.c.l.b16 %v308
      %v402 = vunpack.c.h.b16 %v308
      %v403 = vunpack.c.l.b16 %v309
      %v404 = vunpack.c.h.b16 %v309
      %v405 = vunpack.c.l.b16 %v310
      %v406 = vunpack.c.h.b16 %v310
      %v407 = vunpack.c.l.b16 %v311
      %v408 = vunpack.c.h.b16 %v311
      %v409 = vunpack.c.l.b16 %v312
      %v410 = vunpack.c.h.b16 %v312
      %v411 = vunpack.c.l.b16 %v313
      %v412 = vunpack.c.h.b16 %v313
      %v413 = vunpack.c.l.b16 %v314
      %v414 = vunpack.c.h.b16 %v314
      %v415 = vunpack.c.l.b16 %v315
      %v416 = vunpack.c.h.b16 %v315
      %v417 = vunpack.c.l.b16 %v316
      %v418 = vunpack.c.h.b16 %v316
      %v419 = vunpack.c.l.b16 %v317
      %v420 = vunpack.c.h.b16 %v317
      %v421 = vpack.c.b16 %v359, %v357
      %v422 = vpack.c.b16 %v360, %v358
      %v423 = vpack.c.b16 %v363, %v361
      %v424 = vpack.c.b16 %v364, %v362
      %v425 = vpack.c.b16 %v367, %v365
      %v426 = vpack.c.b16 %v368, %v366
      %v427 = vpack.c.b16 %v371, %v369
      %v428 = vpack.c.b16 %v372, %v370
      %v429 = vpack.c.b16 %v375, %v373
      %v430 = vpack.c.b16 %v376, %v374
      %v431 = vpack.c.b16 %v379, %v377
      %v432 = vpack.c.b16 %v380, %v378
      %v433 = vpack.c.b16 %v383, %v381
      %v434 = vpack.c.b16 %v384, %v382
      %v435 = vpack.c.b16 %v387, %v385
      %v436 = vpack.c.b16 %v388, %v386
      %v437 = vpack.c.b16 %v391, %v389
      %v438 = vpack.c.b16 %v392, %v390
      %v439 = vpack.c.b16 %v395, %v393
      %v440 = vpack.c.b16 %v396, %v394
      %v441 = vpack.c.b16 %v399, %v397
      %v442 = vpack.c.b16 %v400, %v398
      %v443 = vpack.c.b16 %v403, %v401
      %v444 = vpack.c.b16 %v404, %v402
      %v445 = vpack.c.b16 %v407, %v405
      %v446 = vpack.c.b16 %v408, %v406
      %v447 = vpack.c.b16 %v411, %v409
      %v448 = vpack.c.b16 %v412, %v410
      %v449 = vpack.c.b16 %v415, %v413
      %v450 = vpack.c.b16 %v416, %v414
      %v451 = vpack.c.b16 %v419, %v417
      %v452 = vpack.c.b16 %v420, %v418
      %485 = vmatprep.subr.bf16.mxu0 %v422
      %486 = vmatpush1.bf16.msra.mxu0 %v421
      %487 = vmatprep.subr.bf16.mxu0 %v424
      %488 = vmatpush1.bf16.msra.mxu0 %v423
      %489 = vmatprep.subr.bf16.mxu0 %v426
      %490 = vmatpush1.bf16.msra.mxu0 %v425
      %491 = vmatprep.subr.bf16.mxu0 %v428
      %492 = vmatpush1.bf16.msra.mxu0 %v427
      %493 = vmatprep.subr.bf16.mxu0 %v430
      %494 = vmatpush1.bf16.msra.mxu0 %v429
      %495 = vmatprep.subr.bf16.mxu0 %v432
      %496 = vmatpush1.bf16.msra.mxu0 %v431
      %497 = vmatprep.subr.bf16.mxu0 %v434
      %498 = vmatpush1.bf16.msra.mxu0 %v433
      %499 = vmatprep.subr.bf16.mxu0 %v436
      %500 = vmatpush1.bf16.msra.mxu0 %v435
      %501 = vmatprep.subr.bf16.mxu0 %v438
      %502 = vmatpush1.bf16.msra.mxu0 %v437
      %503 = vmatprep.subr.bf16.mxu0 %v440
      %504 = vmatpush1.bf16.msra.mxu0 %v439
      %505 = vmatprep.subr.bf16.mxu0 %v442
      %506 = vmatpush1.bf16.msra.mxu0 %v441
      %507 = vmatprep.subr.bf16.mxu0 %v444
      %508 = vmatpush1.bf16.msra.mxu0 %v443
      %509 = vmatprep.subr.bf16.mxu0 %v446
      %510 = vmatpush1.bf16.msra.mxu0 %v445
      %511 = vmatprep.subr.bf16.mxu0 %v448
      %512 = vmatpush1.bf16.msra.mxu0 %v447
      %513 = vmatprep.subr.bf16.mxu0 %v450
      %514 = vmatpush1.bf16.msra.mxu0 %v449
      %515 = vmatprep.subr.bf16.mxu0 %v452
      %516 = vmatpush1.bf16.msra.mxu0 %v451
      %517 = vmatprep.mubr.bf16.mxu0 %v322
      %518 = vmatmul.mubr.bf16.gmra.mrb[0].mxu0 %v321
      %v519 = vpop.f32.mrb[0].mxu0
      %v520 = vadd.f32 0.0, %v519
      %v521 = vpop.f32.mrb[0].mxu0
      %v522 = vadd.f32 0.0, %v521
      %v523 = vpop.f32.mrb[0].mxu0
      %v524 = vpop.f32.mrb[0].mxu0
      %525 = vdwg.mxu0
      %v526 = vadd.f32 %v283, %v520
      %v527 = vadd.f32 %v284, %v522
      %528 = vst [vmem:[#allocation2] sm:$0xff] %v526
      %529 = vst [vmem:[#allocation2 + $0x8] sm:$0xff] %v527
      %p530 = scmp.eq.s32.totalorder %s21, 12
      // Predicated region
      $region37: #{_lambda_.6} parent=31 // pred_check
        %p531 = pneg %p530
      $region38: #{_lambda_.6} parent=31 // pred_check_branch
        %533 = sbr.rel (%p531) target = $region40
      $region39: #{_lambda_.6} parent=31 // pred_region
        %v534 = vld [vmem:[#allocation2] sm:$0xff]
        %v535 = vld [vmem:[#allocation2 + $0x8] sm:$0xff]
        %v536 = vld [vmem:[%s265] sm:$0x3]
        %v538 = vlaneseq
        %v539 = vshrl.u32 %v538, 7
        %v540 = vsub.s32 0, %v539
        %v541 = vrot.slane %v536, %v540
        %v542 = vlaneseq
        %v543 = vshrl.u32 %v542, 7
        %v544 = vsub.s32 1, %v543
        %v545 = vrot.slane %v536, %v544
        %v548 = vadd.f32 %v534, %v541
        %v549 = vadd.f32 %v535, %v545
        %v550 = vmax.f32 %v548, 0.0
        %v551 = vmax.f32 %v549, 0.0
        %552 = vst [vmem:[%s275] sm:$0xff] %v550
        %553 = vst [vmem:[%s275 + $0x8] sm:$0xff] %v551
      $region40: #{_lambda_.6} parent=31 // pred_fallthru
        _
      %s554 = smul.u32 2, %s20
      %p555 = scmp.lt.s32.totalorder %s19, 0
      %s556 = scalar_select %p555, %s19, 0
      %p557 = scmp.lt.s32.totalorder %s554, 1
      %s558 = scalar_select %p557, %s554, 1
      %s559 = smul.addr %s556, 2
      %s560 = sadd.s32 %s558, %s559
      %s561 = smul.addr %s560, 8
      %s562 = scalar_lea.vmem %s3, %s561
      // Predicated region
      $region41: #{_lambda_.6} parent=31 // pred_check
        %p563 = pneg %p135
      $region42: #{_lambda_.6} parent=31 // pred_check_branch
        %565 = sbr.rel (%p563) target = $region44
      $region43: #{_lambda_.6} parent=31 // pred_region
        %s566 = smul.u32 2, %s20
      $region44: #{_lambda_.6} parent=31 // pred_fallthru
        _
      // Predicated region
      $region45: #{_lambda_.6} parent=31 // pred_check
        %p567 = pneg %p135
      $region46: #{_lambda_.6} parent=31 // pred_check_branch
        %569 = sbr.rel (%p567) target = $region48
      $region47: #{_lambda_.6} parent=31 // pred_region
        %s570 = smul.u32 2, %s20
        %p571 = scmp.lt.s32.totalorder %s19, 0
        %s572 = scalar_select %p571, %s19, 0
        %p573 = scmp.lt.s32.totalorder %s570, 1
        %s574 = scalar_select %p573, %s570, 1
        %s575 = smul.addr %s572, 2
        %s576 = sadd.s32 %s574, %s575
        %s577 = smul.addr %s576, 8
        %s578 = scalar_lea.vmem %s3, %s577
      $region48: #{_lambda_.6} parent=31 // pred_fallthru
        _
    $region32: #{_lambda_.6} parent=5 // pred_fallthru
      _
    %p579 = scmp.le.s32.totalorder 2, %s9
    // Predicated region
    $region49: #{_lambda_.6} parent=5 // pred_check
      %p580 = pneg %p579
    $region50: #{_lambda_.6} parent=5 // pred_check_branch
      %582 = sbr.rel (%p580) target = $region52
    $region51: #{_lambda_.6} parent=5 // pred_region
      %s583 = ssub.s32 %s9, 2
    $region52: #{_lambda_.6} parent=5 // pred_fallthru
      _
  $region6: #{_lambda_.6} parent=0 // loop_footer
    %s13 = sadd.s32 1, %s9
  $region7: #{_lambda_.6} parent=0 // loop_footer_branch
    %8 = sbr.rel target = $region3
  $region8: #{_lambda_.6} parent=0 // loop_exit
    _

// kernel: _lambda_.7
$region0: #{_lambda_.7}
  #allocation0 [shape = 'u32[]', space=smem, size = 0x4, offset = 0x4, fixed_abs, tag = 'smem constant byte address 0x4 - core index']
  #allocation1 [shape = 'u32[144,128]{1,0:T(1,128)}', space=vmem, size = 0x12000, scoped, tag = 'internal scratch']
  %s0 = inlined_call_operand.vmem [shape: bf16[8,1024], index: 0, kind: input, shape index: {}]
  %s1 = inlined_call_operand.vmem [shape: bf16[1024,1024], index: 1, kind: input, shape index: {}]
  %s2 = inlined_call_operand.vmem [shape: f32[1,1024], index: 2, kind: input, shape index: {}]
  %s3 = inlined_call_operand.vmem [shape: bf16[1024,1024], index: 3, kind: input, shape index: {}]
  %s4 = inlined_call_operand.vmem [shape: f32[1,1024], index: 4, kind: input, shape index: {}]
  %s5 = inlined_call_operand.vmem [shape: bf16[1024,128], index: 5, kind: input, shape index: {}]
  %s6 = inlined_call_operand.vmem [shape: f32[1,128], index: 6, kind: input, shape index: {}]
  %s7 = inlined_call_operand.vmem [shape: bf16[128,128], index: 7, kind: input, shape index: {}]
  %s8 = inlined_call_operand.vmem [shape: f32[1,128], index: 8, kind: input, shape index: {}]
  %s9 = inlined_call_operand.vmem [shape: f32[8,128], index: 9, kind: output, shape index: {}]
  %s10 = sld [smem:[#allocation0]]
  $region46: #{_lambda_.7} parent=0
    _
  %s12 = ssub.s32 1, %s10
  %s13 = scalar_select 0, %s12, %s10
  // Predicated region
  $region2: #{_lambda_.7} parent=0 // pred_check
    _
  $region3: #{_lambda_.7} parent=0 // pred_check_branch
    %15 = sbr.rel (0) target = $region5
  $region4: #{_lambda_.7} parent=0 // pred_region
    _
  $region5: #{_lambda_.7} parent=0 // pred_fallthru
    _
  // Predicated region
  $region6: #{_lambda_.7} parent=0 // pred_check
    _
  $region7: #{_lambda_.7} parent=0 // pred_check_branch
    %17 = sbr.rel (0) target = $region9
  $region8: #{_lambda_.7} parent=0 // pred_region
    _
  $region9: #{_lambda_.7} parent=0 // pred_fallthru
    _
  // Predicated region
  $region10: #{_lambda_.7} parent=0 // pred_check
    _
  $region11: #{_lambda_.7} parent=0 // pred_check_branch
    %19 = sbr.rel (0) target = $region13
  $region12: #{_lambda_.7} parent=0 // pred_region
    _
  $region13: #{_lambda_.7} parent=0 // pred_fallthru
    _
  // Predicated region
  $region14: #{_lambda_.7} parent=0 // pred_check
    _
  $region15: #{_lambda_.7} parent=0 // pred_check_branch
    %21 = sbr.rel (0) target = $region17
  $region16: #{_lambda_.7} parent=0 // pred_region
    _
  $region17: #{_lambda_.7} parent=0 // pred_fallthru
    _
  // Predicated region
  $region18: #{_lambda_.7} parent=0 // pred_check
    _
  $region19: #{_lambda_.7} parent=0 // pred_check_branch
    %23 = sbr.rel (0) target = $region21
  $region20: #{_lambda_.7} parent=0 // pred_region
    _
  $region21: #{_lambda_.7} parent=0 // pred_fallthru
    _
  // Predicated region
  $region22: #{_lambda_.7} parent=0 // pred_check
    _
  $region23: #{_lambda_.7} parent=0 // pred_check_branch
    %25 = sbr.rel (0) target = $region25
  $region24: #{_lambda_.7} parent=0 // pred_region
    _
  $region25: #{_lambda_.7} parent=0 // pred_fallthru
    _
  // Predicated region
  $region26: #{_lambda_.7} parent=0 // pred_check
    _
  $region27: #{_lambda_.7} parent=0 // pred_check_branch
    %27 = sbr.rel (0) target = $region29
  $region28: #{_lambda_.7} parent=0 // pred_region
    _
  $region29: #{_lambda_.7} parent=0 // pred_fallthru
    _
  // Predicated region
  $region30: #{_lambda_.7} parent=0 // pred_check
    _
  $region31: #{_lambda_.7} parent=0 // pred_check_branch
    %29 = sbr.rel (0) target = $region33
  $region32: #{_lambda_.7} parent=0 // pred_region
    _
  $region33: #{_lambda_.7} parent=0 // pred_fallthru
    _
  // Predicated region
  $region34: #{_lambda_.7} parent=0 // pred_check
    _
  $region35: #{_lambda_.7} parent=0 // pred_check_branch
    %31 = sbr.rel (0) target = $region37
  $region36: #{_lambda_.7} parent=0 // pred_region
    _
  $region37: #{_lambda_.7} parent=0 // pred_fallthru
    _
  %v33 = vld [vmem:[%s0] sm:$0xff]
  %v34 = vld [vmem:[%s0 + $0x8] sm:$0xff]
  %v35 = vld [vmem:[%s0 + $0x10] sm:$0xff]
  %v36 = vld [vmem:[%s0 + $0x18] sm:$0xff]
  %v37 = vld [vmem:[%s1] sm:$0xff]
  %v38 = vld [vmem:[%s1 + $0x8] sm:$0xff]
  %v39 = vld [vmem:[%s1 + $0x10] sm:$0xff]
  %v40 = vld [vmem:[%s1 + $0x18] sm:$0xff]
  %v41 = vld [vmem:[%s1 + $0x20] sm:$0xff]
  %v42 = vld [vmem:[%s1 + $0x28] sm:$0xff]
  %v43 = vld [vmem:[%s1 + $0x30] sm:$0xff]
  %v44 = vld [vmem:[%s1 + $0x38] sm:$0xff]
  %v45 = vld [vmem:[%s1 + $0x40] sm:$0xff]
  %v46 = vld [vmem:[%s1 + $0x48] sm:$0xff]
  %v47 = vld [vmem:[%s1 + $0x50] sm:$0xff]
  %v48 = vld [vmem:[%s1 + $0x58] sm:$0xff]
  %v49 = vld [vmem:[%s1 + $0x60] sm:$0xff]
  %v50 = vld [vmem:[%s1 + $0x68] sm:$0xff]
  %v51 = vld [vmem:[%s1 + $0x70] sm:$0xff]
  %v52 = vld [vmem:[%s1 + $0x78] sm:$0xff]
  %v53 = vld [vmem:[%s1 + $0x80] sm:$0xff]
  %v54 = vld [vmem:[%s1 + $0x88] sm:$0xff]
  %v55 = vld [vmem:[%s1 + $0x90] sm:$0xff]
  %v56 = vld [vmem:[%s1 + $0x98] sm:$0xff]
  %v57 = vld [vmem:[%s1 + $0xa0] sm:$0xff]
  %v58 = vld [vmem:[%s1 + $0xa8] sm:$0xff]
  %v59 = vld [vmem:[%s1 + $0xb0] sm:$0xff]
  %v60 = vld [vmem:[%s1 + $0xb8] sm:$0xff]
  %v61 = vld [vmem:[%s1 + $0xc0] sm:$0xff]
  %v62 = vld [vmem:[%s1 + $0xc8] sm:$0xff]
  %v63 = vld [vmem:[%s1 + $0xd0] sm:$0xff]
  %v64 = vld [vmem:[%s1 + $0xd8] sm:$0xff]
  %v65 = vld [vmem:[%s1 + $0xe0] sm:$0xff]
  %v66 = vld [vmem:[%s1 + $0xe8] sm:$0xff]
  %v67 = vld [vmem:[%s1 + $0xf0] sm:$0xff]
  %v68 = vld [vmem:[%s1 + $0xf8] sm:$0xff]
  %v69 = vld [vmem:[%s1 + $0x100] sm:$0xff]
  %v70 = vld [vmem:[%s1 + $0x108] sm:$0xff]
  %v71 = vld [vmem:[%s1 + $0x110] sm:$0xff]
  %v72 = vld [vmem:[%s1 + $0x118] sm:$0xff]
  %v73 = vld [vmem:[%s1 + $0x120] sm:$0xff]
  %v74 = vld [vmem:[%s1 + $0x128] sm:$0xff]
  %v75 = vld [vmem:[%s1 + $0x130] sm:$0xff]
  %v76 = vld [vmem:[%s1 + $0x138] sm:$0xff]
  %v77 = vld [vmem:[%s1 + $0x140] sm:$0xff]
  %v78 = vld [vmem:[%s1 + $0x148] sm:$0xff]
  %v79 = vld [vmem:[%s1 + $0x150] sm:$0xff]
  %v80 = vld [vmem:[%s1 + $0x158] sm:$0xff]
  %v81 = vld [vmem:[%s1 + $0x160] sm:$0xff]
  %v82 = vld [vmem:[%s1 + $0x168] sm:$0xff]
  %v83 = vld [vmem:[%s1 + $0x170] sm:$0xff]
  %v84 = vld [vmem:[%s1 + $0x178] sm:$0xff]
  %v85 = vld [vmem:[%s1 + $0x180] sm:$0xff]
  %v86 = vld [vmem:[%s1 + $0x188] sm:$0xff]
  %v87 = vld [vmem:[%s1 + $0x190] sm:$0xff]
  %v88 = vld [vmem:[%s1 + $0x198] sm:$0xff]
  %v89 = vld [vmem:[%s1 + $0x1a0] sm:$0xff]
  %v90 = vld [vmem:[%s1 + $0x1a8] sm:$0xff]
  %v91 = vld [vmem:[%s1 + $0x1b0] sm:$0xff]
  %v92 = vld [vmem:[%s1 + $0x1b8] sm:$0xff]
  %v93 = vld [vmem:[%s1 + $0x1c0] sm:$0xff]
  %v94 = vld [vmem:[%s1 + $0x1c8] sm:$0xff]
  %v95 = vld [vmem:[%s1 + $0x1d0] sm:$0xff]
  %v96 = vld [vmem:[%s1 + $0x1d8] sm:$0xff]
  %v97 = vld [vmem:[%s1 + $0x1e0] sm:$0xff]
  %v98 = vld [vmem:[%s1 + $0x1e8] sm:$0xff]
  %v99 = vld [vmem:[%s1 + $0x1f0] sm:$0xff]
  %v100 = vld [vmem:[%s1 + $0x1f8] sm:$0xff]
  %v101 = vld [vmem:[%s1 + $0x200] sm:$0xff]
  %v102 = vld [vmem:[%s1 + $0x208] sm:$0xff]
  %v103 = vld [vmem:[%s1 + $0x210] sm:$0xff]
  %v104 = vld [vmem:[%s1 + $0x218] sm:$0xff]
  %v105 = vld [vmem:[%s1 + $0x220] sm:$0xff]
  %v106 = vld [vmem:[%s1 + $0x228] sm:$0xff]
  %v107 = vld [vmem:[%s1 + $0x230] sm:$0xff]
  %v108 = vld [vmem:[%s1 + $0x238] sm:$0xff]
  %v109 = vld [vmem:[%s1 + $0x240] sm:$0xff]
  %v110 = vld [vmem:[%s1 + $0x248] sm:$0xff]
  %v111 = vld [vmem:[%s1 + $0x250] sm:$0xff]
  %v112 = vld [vmem:[%s1 + $0x258] sm:$0xff]
  %v113 = vld [vmem:[%s1 + $0x260] sm:$0xff]
  %v114 = vld [vmem:[%s1 + $0x268] sm:$0xff]
  %v115 = vld [vmem:[%s1 + $0x270] sm:$0xff]
  %v116 = vld [vmem:[%s1 + $0x278] sm:$0xff]
  %v117 = vld [vmem:[%s1 + $0x280] sm:$0xff]
  %v118 = vld [vmem:[%s1 + $0x288] sm:$0xff]
  %v119 = vld [vmem:[%s1 + $0x290] sm:$0xff]
  %v120 = vld [vmem:[%s1 + $0x298] sm:$0xff]
  %v121 = vld [vmem:[%s1 + $0x2a0] sm:$0xff]
  %v122 = vld [vmem:[%s1 + $0x2a8] sm:$0xff]
  %v123 = vld [vmem:[%s1 + $0x2b0] sm:$0xff]
  %v124 = vld [vmem:[%s1 + $0x2b8] sm:$0xff]
  %v125 = vld [vmem:[%s1 + $0x2c0] sm:$0xff]
  %v126 = vld [vmem:[%s1 + $0x2c8] sm:$0xff]
  %v127 = vld [vmem:[%s1 + $0x2d0] sm:$0xff]
  %v128 = vld [vmem:[%s1 + $0x2d8] sm:$0xff]
  %v129 = vld [vmem:[%s1 + $0x2e0] sm:$0xff]
  %v130 = vld [vmem:[%s1 + $0x2e8] sm:$0xff]
  %v131 = vld [vmem:[%s1 + $0x2f0] sm:$0xff]
  %v132 = vld [vmem:[%s1 + $0x2f8] sm:$0xff]
  %v133 = vld [vmem:[%s1 + $0x300] sm:$0xff]
  %v134 = vld [vmem:[%s1 + $0x308] sm:$0xff]
  %v135 = vld [vmem:[%s1 + $0x310] sm:$0xff]
  %v136 = vld [vmem:[%s1 + $0x318] sm:$0xff]
  %v137 = vld [vmem:[%s1 + $0x320] sm:$0xff]
  %v138 = vld [vmem:[%s1 + $0x328] sm:$0xff]
  %v139 = vld [vmem:[%s1 + $0x330] sm:$0xff]
  %v140 = vld [vmem:[%s1 + $0x338] sm:$0xff]
  %v141 = vld [vmem:[%s1 + $0x340] sm:$0xff]
  %v142 = vld [vmem:[%s1 + $0x348] sm:$0xff]
  %v143 = vld [vmem:[%s1 + $0x350] sm:$0xff]
  %v144 = vld [vmem:[%s1 + $0x358] sm:$0xff]
  %v145 = vld [vmem:[%s1 + $0x360] sm:$0xff]
  %v146 = vld [vmem:[%s1 + $0x368] sm:$0xff]
  %v147 = vld [vmem:[%s1 + $0x370] sm:$0xff]
  %v148 = vld [vmem:[%s1 + $0x378] sm:$0xff]
  %v149 = vld [vmem:[%s1 + $0x380] sm:$0xff]
  %v150 = vld [vmem:[%s1 + $0x388] sm:$0xff]
  %v151 = vld [vmem:[%s1 + $0x390] sm:$0xff]
  %v152 = vld [vmem:[%s1 + $0x398] sm:$0xff]
  %v153 = vld [vmem:[%s1 + $0x3a0] sm:$0xff]
  %v154 = vld [vmem:[%s1 + $0x3a8] sm:$0xff]
  %v155 = vld [vmem:[%s1 + $0x3b0] sm:$0xff]
  %v156 = vld [vmem:[%s1 + $0x3b8] sm:$0xff]
  %v157 = vld [vmem:[%s1 + $0x3c0] sm:$0xff]
  %v158 = vld [vmem:[%s1 + $0x3c8] sm:$0xff]
  %v159 = vld [vmem:[%s1 + $0x3d0] sm:$0xff]
  %v160 = vld [vmem:[%s1 + $0x3d8] sm:$0xff]
  %v161 = vld [vmem:[%s1 + $0x3e0] sm:$0xff]
  %v162 = vld [vmem:[%s1 + $0x3e8] sm:$0xff]
  %v163 = vld [vmem:[%s1 + $0x3f0] sm:$0xff]
  %v164 = vld [vmem:[%s1 + $0x3f8] sm:$0xff]
  %v165 = vld [vmem:[%s1 + $0x400] sm:$0xff]
  %v166 = vld [vmem:[%s1 + $0x408] sm:$0xff]
  %v167 = vld [vmem:[%s1 + $0x410] sm:$0xff]
  %v168 = vld [vmem:[%s1 + $0x418] sm:$0xff]
  %v169 = vld [vmem:[%s1 + $0x420] sm:$0xff]
  %v170 = vld [vmem:[%s1 + $0x428] sm:$0xff]
  %v171 = vld [vmem:[%s1 + $0x430] sm:$0xff]
  %v172 = vld [vmem:[%s1 + $0x438] sm:$0xff]
  %v173 = vld [vmem:[%s1 + $0x440] sm:$0xff]
  %v174 = vld [vmem:[%s1 + $0x448] sm:$0xff]
  %v175 = vld [vmem:[%s1 + $0x450] sm:$0xff]
  %v176 = vld [vmem:[%s1 + $0x458] sm:$0xff]
  %v177 = vld [vmem:[%s1 + $0x460] sm:$0xff]
  %v178 = vld [vmem:[%s1 + $0x468] sm:$0xff]
  %v179 = vld [vmem:[%s1 + $0x470] sm:$0xff]
  %v180 = vld [vmem:[%s1 + $0x478] sm:$0xff]
  %v181 = vld [vmem:[%s1 + $0x480] sm:$0xff]
  %v182 = vld [vmem:[%s1 + $0x488] sm:$0xff]
  %v183 = vld [vmem:[%s1 + $0x490] sm:$0xff]
  %v184 = vld [vmem:[%s1 + $0x498] sm:$0xff]
  %v185 = vld [vmem:[%s1 + $0x4a0] sm:$0xff]
  %v186 = vld [vmem:[%s1 + $0x4a8] sm:$0xff]
  %v187 = vld [vmem:[%s1 + $0x4b0] sm:$0xff]
  %v188 = vld [vmem:[%s1 + $0x4b8] sm:$0xff]
  %v189 = vld [vmem:[%s1 + $0x4c0] sm:$0xff]
  %v190 = vld [vmem:[%s1 + $0x4c8] sm:$0xff]
  %v191 = vld [vmem:[%s1 + $0x4d0] sm:$0xff]
  %v192 = vld [vmem:[%s1 + $0x4d8] sm:$0xff]
  %v193 = vld [vmem:[%s1 + $0x4e0] sm:$0xff]
  %v194 = vld [vmem:[%s1 + $0x4e8] sm:$0xff]
  %v195 = vld [vmem:[%s1 + $0x4f0] sm:$0xff]
  %v196 = vld [vmem:[%s1 + $0x4f8] sm:$0xff]
  %v197 = vld [vmem:[%s1 + $0x500] sm:$0xff]
  %v198 = vld [vmem:[%s1 + $0x508] sm:$0xff]
  %v199 = vld [vmem:[%s1 + $0x510] sm:$0xff]
  %v200 = vld [vmem:[%s1 + $0x518] sm:$0xff]
  %v201 = vld [vmem:[%s1 + $0x520] sm:$0xff]
  %v202 = vld [vmem:[%s1 + $0x528] sm:$0xff]
  %v203 = vld [vmem:[%s1 + $0x530] sm:$0xff]
  %v204 = vld [vmem:[%s1 + $0x538] sm:$0xff]
  %v205 = vld [vmem:[%s1 + $0x540] sm:$0xff]
  %v206 = vld [vmem:[%s1 + $0x548] sm:$0xff]
  %v207 = vld [vmem:[%s1 + $0x550] sm:$0xff]
  %v208 = vld [vmem:[%s1 + $0x558] sm:$0xff]
  %v209 = vld [vmem:[%s1 + $0x560] sm:$0xff]
  %v210 = vld [vmem:[%s1 + $0x568] sm:$0xff]
  %v211 = vld [vmem:[%s1 + $0x570] sm:$0xff]
  %v212 = vld [vmem:[%s1 + $0x578] sm:$0xff]
  %v213 = vld [vmem:[%s1 + $0x580] sm:$0xff]
  %v214 = vld [vmem:[%s1 + $0x588] sm:$0xff]
  %v215 = vld [vmem:[%s1 + $0x590] sm:$0xff]
  %v216 = vld [vmem:[%s1 + $0x598] sm:$0xff]
  %v217 = vld [vmem:[%s1 + $0x5a0] sm:$0xff]
  %v218 = vld [vmem:[%s1 + $0x5a8] sm:$0xff]
  %v219 = vld [vmem:[%s1 + $0x5b0] sm:$0xff]
  %v220 = vld [vmem:[%s1 + $0x5b8] sm:$0xff]
  %v221 = vld [vmem:[%s1 + $0x5c0] sm:$0xff]
  %v222 = vld [vmem:[%s1 + $0x5c8] sm:$0xff]
  %v223 = vld [vmem:[%s1 + $0x5d0] sm:$0xff]
  %v224 = vld [vmem:[%s1 + $0x5d8] sm:$0xff]
  %v225 = vld [vmem:[%s1 + $0x5e0] sm:$0xff]
  %v226 = vld [vmem:[%s1 + $0x5e8] sm:$0xff]
  %v227 = vld [vmem:[%s1 + $0x5f0] sm:$0xff]
  %v228 = vld [vmem:[%s1 + $0x5f8] sm:$0xff]
  %v229 = vld [vmem:[%s1 + $0x600] sm:$0xff]
  %v230 = vld [vmem:[%s1 + $0x608] sm:$0xff]
  %v231 = vld [vmem:[%s1 + $0x610] sm:$0xff]
  %v232 = vld [vmem:[%s1 + $0x618] sm:$0xff]
  %v233 = vld [vmem:[%s1 + $0x620] sm:$0xff]
  %v234 = vld [vmem:[%s1 + $0x628] sm:$0xff]
  %v235 = vld [vmem:[%s1 + $0x630] sm:$0xff]
  %v236 = vld [vmem:[%s1 + $0x638] sm:$0xff]
  %v237 = vld [vmem:[%s1 + $0x640] sm:$0xff]
  %v238 = vld [vmem:[%s1 + $0x648] sm:$0xff]
  %v239 = vld [vmem:[%s1 + $0x650] sm:$0xff]
  %v240 = vld [vmem:[%s1 + $0x658] sm:$0xff]
  %v241 = vld [vmem:[%s1 + $0x660] sm:$0xff]
  %v242 = vld [vmem:[%s1 + $0x668] sm:$0xff]
  %v243 = vld [vmem:[%s1 + $0x670] sm:$0xff]
  %v244 = vld [vmem:[%s1 + $0x678] sm:$0xff]
  %v245 = vld [vmem:[%s1 + $0x680] sm:$0xff]
  %v246 = vld [vmem:[%s1 + $0x688] sm:$0xff]
  %v247 = vld [vmem:[%s1 + $0x690] sm:$0xff]
  %v248 = vld [vmem:[%s1 + $0x698] sm:$0xff]
  %v249 = vld [vmem:[%s1 + $0x6a0] sm:$0xff]
  %v250 = vld [vmem:[%s1 + $0x6a8] sm:$0xff]
  %v251 = vld [vmem:[%s1 + $0x6b0] sm:$0xff]
  %v252 = vld [vmem:[%s1 + $0x6b8] sm:$0xff]
  %v253 = vld [vmem:[%s1 + $0x6c0] sm:$0xff]
  %v254 = vld [vmem:[%s1 + $0x6c8] sm:$0xff]
  %v255 = vld [vmem:[%s1 + $0x6d0] sm:$0xff]
  %v256 = vld [vmem:[%s1 + $0x6d8] sm:$0xff]
  %v257 = vld [vmem:[%s1 + $0x6e0] sm:$0xff]
  %v258 = vld [vmem:[%s1 + $0x6e8] sm:$0xff]
  %v259 = vld [vmem:[%s1 + $0x6f0] sm:$0xff]
  %v260 = vld [vmem:[%s1 + $0x6f8] sm:$0xff]
  %v261 = vld [vmem:[%s1 + $0x700] sm:$0xff]
  %v262 = vld [vmem:[%s1 + $0x708] sm:$0xff]
  %v263 = vld [vmem:[%s1 + $0x710] sm:$0xff]
  %v264 = vld [vmem:[%s1 + $0x718] sm:$0xff]
  %v265 = vld [vmem:[%s1 + $0x720] sm:$0xff]
  %v266 = vld [vmem:[%s1 + $0x728] sm:$0xff]
  %v267 = vld [vmem:[%s1 + $0x730] sm:$0xff]
  %v268 = vld [vmem:[%s1 + $0x738] sm:$0xff]
  %v269 = vld [vmem:[%s1 + $0x740] sm:$0xff]
  %v270 = vld [vmem:[%s1 + $0x748] sm:$0xff]
  %v271 = vld [vmem:[%s1 + $0x750] sm:$0xff]
  %v272 = vld [vmem:[%s1 + $0x758] sm:$0xff]
  %v273 = vld [vmem:[%s1 + $0x760] sm:$0xff]
  %v274 = vld [vmem:[%s1 + $0x768] sm:$0xff]
  %v275 = vld [vmem:[%s1 + $0x770] sm:$0xff]
  %v276 = vld [vmem:[%s1 + $0x778] sm:$0xff]
  %v277 = vld [vmem:[%s1 + $0x780] sm:$0xff]
  %v278 = vld [vmem:[%s1 + $0x788] sm:$0xff]
  %v279 = vld [vmem:[%s1 + $0x790] sm:$0xff]
  %v280 = vld [vmem:[%s1 + $0x798] sm:$0xff]
  %v281 = vld [vmem:[%s1 + $0x7a0] sm:$0xff]
  %v282 = vld [vmem:[%s1 + $0x7a8] sm:$0xff]
  %v283 = vld [vmem:[%s1 + $0x7b0] sm:$0xff]
  %v284 = vld [vmem:[%s1 + $0x7b8] sm:$0xff]
  %v285 = vld [vmem:[%s1 + $0x7c0] sm:$0xff]
  %v286 = vld [vmem:[%s1 + $0x7c8] sm:$0xff]
  %v287 = vld [vmem:[%s1 + $0x7d0] sm:$0xff]
  %v288 = vld [vmem:[%s1 + $0x7d8] sm:$0xff]
  %v289 = vld [vmem:[%s1 + $0x7e0] sm:$0xff]
  %v290 = vld [vmem:[%s1 + $0x7e8] sm:$0xff]
  %v291 = vld [vmem:[%s1 + $0x7f0] sm:$0xff]
  %v292 = vld [vmem:[%s1 + $0x7f8] sm:$0xff]
  %v293 = vld [vmem:[%s1 + $0x800] sm:$0xff]
  %v294 = vld [vmem:[%s1 + $0x808] sm:$0xff]
  %v295 = vld [vmem:[%s1 + $0x810] sm:$0xff]
  %v296 = vld [vmem:[%s1 + $0x818] sm:$0xff]
  %v297 = vld [vmem:[%s1 + $0x820] sm:$0xff]
  %v298 = vld [vmem:[%s1 + $0x828] sm:$0xff]
  %v299 = vld [vmem:[%s1 + $0x830] sm:$0xff]
  %v300 = vld [vmem:[%s1 + $0x838] sm:$0xff]
  %v301 = vld [vmem:[%s1 + $0x840] sm:$0xff]
  %v302 = vld [vmem:[%s1 + $0x848] sm:$0xff]
  %v303 = vld [vmem:[%s1 + $0x850] sm:$0xff]
  %v304 = vld [vmem:[%s1 + $0x858] sm:$0xff]
  %v305 = vld [vmem:[%s1 + $0x860] sm:$0xff]
  %v306 = vld [vmem:[%s1 + $0x868] sm:$0xff]
  %v307 = vld [vmem:[%s1 + $0x870] sm:$0xff]
  %v308 = vld [vmem:[%s1 + $0x878] sm:$0xff]
  %v309 = vld [vmem:[%s1 + $0x880] sm:$0xff]
  %v310 = vld [vmem:[%s1 + $0x888] sm:$0xff]
  %v311 = vld [vmem:[%s1 + $0x890] sm:$0xff]
  %v312 = vld [vmem:[%s1 + $0x898] sm:$0xff]
  %v313 = vld [vmem:[%s1 + $0x8a0] sm:$0xff]
  %v314 = vld [vmem:[%s1 + $0x8a8] sm:$0xff]
  %v315 = vld [vmem:[%s1 + $0x8b0] sm:$0xff]
  %v316 = vld [vmem:[%s1 + $0x8b8] sm:$0xff]
  %v317 = vld [vmem:[%s1 + $0x8c0] sm:$0xff]
  %v318 = vld [vmem:[%s1 + $0x8c8] sm:$0xff]
  %v319 = vld [vmem:[%s1 + $0x8d0] sm:$0xff]
  %v320 = vld [vmem:[%s1 + $0x8d8] sm:$0xff]
  %v321 = vld [vmem:[%s1 + $0x8e0] sm:$0xff]
  %v322 = vld [vmem:[%s1 + $0x8e8] sm:$0xff]
  %v323 = vld [vmem:[%s1 + $0x8f0] sm:$0xff]
  %v324 = vld [vmem:[%s1 + $0x8f8] sm:$0xff]
  %v325 = vld [vmem:[%s1 + $0x900] sm:$0xff]
  %v326 = vld [vmem:[%s1 + $0x908] sm:$0xff]
  %v327 = vld [vmem:[%s1 + $0x910] sm:$0xff]
  %v328 = vld [vmem:[%s1 + $0x918] sm:$0xff]
  %v329 = vld [vmem:[%s1 + $0x920] sm:$0xff]
  %v330 = vld [vmem:[%s1 + $0x928] sm:$0xff]
  %v331 = vld [vmem:[%s1 + $0x930] sm:$0xff]
  %v332 = vld [vmem:[%s1 + $0x938] sm:$0xff]
  %v333 = vld [vmem:[%s1 + $0x940] sm:$0xff]
  %v334 = vld [vmem:[%s1 + $0x948] sm:$0xff]
  %v335 = vld [vmem:[%s1 + $0x950] sm:$0xff]
  %v336 = vld [vmem:[%s1 + $0x958] sm:$0xff]
  %v337 = vld [vmem:[%s1 + $0x960] sm:$0xff]
  %v338 = vld [vmem:[%s1 + $0x968] sm:$0xff]
  %v339 = vld [vmem:[%s1 + $0x970] sm:$0xff]
  %v340 = vld [vmem:[%s1 + $0x978] sm:$0xff]
  %v341 = vld [vmem:[%s1 + $0x980] sm:$0xff]
  %v342 = vld [vmem:[%s1 + $0x988] sm:$0xff]
  %v343 = vld [vmem:[%s1 + $0x990] sm:$0xff]
  %v344 = vld [vmem:[%s1 + $0x998] sm:$0xff]
  %v345 = vld [vmem:[%s1 + $0x9a0] sm:$0xff]
  %v346 = vld [vmem:[%s1 + $0x9a8] sm:$0xff]
  %v347 = vld [vmem:[%s1 + $0x9b0] sm:$0xff]
  %v348 = vld [vmem:[%s1 + $0x9b8] sm:$0xff]
  %v349 = vld [vmem:[%s1 + $0x9c0] sm:$0xff]
  %v350 = vld [vmem:[%s1 + $0x9c8] sm:$0xff]
  %v351 = vld [vmem:[%s1 + $0x9d0] sm:$0xff]
  %v352 = vld [vmem:[%s1 + $0x9d8] sm:$0xff]
  %v353 = vld [vmem:[%s1 + $0x9e0] sm:$0xff]
  %v354 = vld [vmem:[%s1 + $0x9e8] sm:$0xff]
  %v355 = vld [vmem:[%s1 + $0x9f0] sm:$0xff]
  %v356 = vld [vmem:[%s1 + $0x9f8] sm:$0xff]
  %v357 = vld [vmem:[%s1 + $0xa00] sm:$0xff]
  %v358 = vld [vmem:[%s1 + $0xa08] sm:$0xff]
  %v359 = vld [vmem:[%s1 + $0xa10] sm:$0xff]
  %v360 = vld [vmem:[%s1 + $0xa18] sm:$0xff]
  %v361 = vld [vmem:[%s1 + $0xa20] sm:$0xff]
  %v362 = vld [vmem:[%s1 + $0xa28] sm:$0xff]
  %v363 = vld [vmem:[%s1 + $0xa30] sm:$0xff]
  %v364 = vld [vmem:[%s1 + $0xa38] sm:$0xff]
  %v365 = vld [vmem:[%s1 + $0xa40] sm:$0xff]
  %v366 = vld [vmem:[%s1 + $0xa48] sm:$0xff]
  %v367 = vld [vmem:[%s1 + $0xa50] sm:$0xff]
  %v368 = vld [vmem:[%s1 + $0xa58] sm:$0xff]
  %v369 = vld [vmem:[%s1 + $0xa60] sm:$0xff]
  %v370 = vld [vmem:[%s1 + $0xa68] sm:$0xff]
  %v371 = vld [vmem:[%s1 + $0xa70] sm:$0xff]
  %v372 = vld [vmem:[%s1 + $0xa78] sm:$0xff]
  %v373 = vld [vmem:[%s1 + $0xa80] sm:$0xff]
  %v374 = vld [vmem:[%s1 + $0xa88] sm:$0xff]
  %v375 = vld [vmem:[%s1 + $0xa90] sm:$0xff]
  %v376 = vld [vmem:[%s1 + $0xa98] sm:$0xff]
  %v377 = vld [vmem:[%s1 + $0xaa0] sm:$0xff]
  %v378 = vld [vmem:[%s1 + $0xaa8] sm:$0xff]
  %v379 = vld [vmem:[%s1 + $0xab0] sm:$0xff]
  %v380 = vld [vmem:[%s1 + $0xab8] sm:$0xff]
  %v381 = vld [vmem:[%s1 + $0xac0] sm:$0xff]
  %v382 = vld [vmem:[%s1 + $0xac8] sm:$0xff]
  %v383 = vld [vmem:[%s1 + $0xad0] sm:$0xff]
  %v384 = vld [vmem:[%s1 + $0xad8] sm:$0xff]
  %v385 = vld [vmem:[%s1 + $0xae0] sm:$0xff]
  %v386 = vld [vmem:[%s1 + $0xae8] sm:$0xff]
  %v387 = vld [vmem:[%s1 + $0xaf0] sm:$0xff]
  %v388 = vld [vmem:[%s1 + $0xaf8] sm:$0xff]
  %v389 = vld [vmem:[%s1 + $0xb00] sm:$0xff]
  %v390 = vld [vmem:[%s1 + $0xb08] sm:$0xff]
  %v391 = vld [vmem:[%s1 + $0xb10] sm:$0xff]
  %v392 = vld [vmem:[%s1 + $0xb18] sm:$0xff]
  %v393 = vld [vmem:[%s1 + $0xb20] sm:$0xff]
  %v394 = vld [vmem:[%s1 + $0xb28] sm:$0xff]
  %v395 = vld [vmem:[%s1 + $0xb30] sm:$0xff]
  %v396 = vld [vmem:[%s1 + $0xb38] sm:$0xff]
  %v397 = vld [vmem:[%s1 + $0xb40] sm:$0xff]
  %v398 = vld [vmem:[%s1 + $0xb48] sm:$0xff]
  %v399 = vld [vmem:[%s1 + $0xb50] sm:$0xff]
  %v400 = vld [vmem:[%s1 + $0xb58] sm:$0xff]
  %v401 = vld [vmem:[%s1 + $0xb60] sm:$0xff]
  %v402 = vld [vmem:[%s1 + $0xb68] sm:$0xff]
  %v403 = vld [vmem:[%s1 + $0xb70] sm:$0xff]
  %v404 = vld [vmem:[%s1 + $0xb78] sm:$0xff]
  %v405 = vld [vmem:[%s1 + $0xb80] sm:$0xff]
  %v406 = vld [vmem:[%s1 + $0xb88] sm:$0xff]
  %v407 = vld [vmem:[%s1 + $0xb90] sm:$0xff]
  %v408 = vld [vmem:[%s1 + $0xb98] sm:$0xff]
  %v409 = vld [vmem:[%s1 + $0xba0] sm:$0xff]
  %v410 = vld [vmem:[%s1 + $0xba8] sm:$0xff]
  %v411 = vld [vmem:[%s1 + $0xbb0] sm:$0xff]
  %v412 = vld [vmem:[%s1 + $0xbb8] sm:$0xff]
  %v413 = vld [vmem:[%s1 + $0xbc0] sm:$0xff]
  %v414 = vld [vmem:[%s1 + $0xbc8] sm:$0xff]
  %v415 = vld [vmem:[%s1 + $0xbd0] sm:$0xff]
  %v416 = vld [vmem:[%s1 + $0xbd8] sm:$0xff]
  %v417 = vld [vmem:[%s1 + $0xbe0] sm:$0xff]
  %v418 = vld [vmem:[%s1 + $0xbe8] sm:$0xff]
  %v419 = vld [vmem:[%s1 + $0xbf0] sm:$0xff]
  %v420 = vld [vmem:[%s1 + $0xbf8] sm:$0xff]
  %v421 = vld [vmem:[%s1 + $0xc00] sm:$0xff]
  %v422 = vld [vmem:[%s1 + $0xc08] sm:$0xff]
  %v423 = vld [vmem:[%s1 + $0xc10] sm:$0xff]
  %v424 = vld [vmem:[%s1 + $0xc18] sm:$0xff]
  %v425 = vld [vmem:[%s1 + $0xc20] sm:$0xff]
  %v426 = vld [vmem:[%s1 + $0xc28] sm:$0xff]
  %v427 = vld [vmem:[%s1 + $0xc30] sm:$0xff]
  %v428 = vld [vmem:[%s1 + $0xc38] sm:$0xff]
  %v429 = vld [vmem:[%s1 + $0xc40] sm:$0xff]
  %v430 = vld [vmem:[%s1 + $0xc48] sm:$0xff]
  %v431 = vld [vmem:[%s1 + $0xc50] sm:$0xff]
  %v432 = vld [vmem:[%s1 + $0xc58] sm:$0xff]
  %v433 = vld [vmem:[%s1 + $0xc60] sm:$0xff]
  %v434 = vld [vmem:[%s1 + $0xc68] sm:$0xff]
  %v435 = vld [vmem:[%s1 + $0xc70] sm:$0xff]
  %v436 = vld [vmem:[%s1 + $0xc78] sm:$0xff]
  %v437 = vld [vmem:[%s1 + $0xc80] sm:$0xff]
  %v438 = vld [vmem:[%s1 + $0xc88] sm:$0xff]
  %v439 = vld [vmem:[%s1 + $0xc90] sm:$0xff]
  %v440 = vld [vmem:[%s1 + $0xc98] sm:$0xff]
  %v441 = vld [vmem:[%s1 + $0xca0] sm:$0xff]
  %v442 = vld [vmem:[%s1 + $0xca8] sm:$0xff]
  %v443 = vld [vmem:[%s1 + $0xcb0] sm:$0xff]
  %v444 = vld [vmem:[%s1 + $0xcb8] sm:$0xff]
  %v445 = vld [vmem:[%s1 + $0xcc0] sm:$0xff]
  %v446 = vld [vmem:[%s1 + $0xcc8] sm:$0xff]
  %v447 = vld [vmem:[%s1 + $0xcd0] sm:$0xff]
  %v448 = vld [vmem:[%s1 + $0xcd8] sm:$0xff]
  %v449 = vld [vmem:[%s1 + $0xce0] sm:$0xff]
  %v450 = vld [vmem:[%s1 + $0xce8] sm:$0xff]
  %v451 = vld [vmem:[%s1 + $0xcf0] sm:$0xff]
  %v452 = vld [vmem:[%s1 + $0xcf8] sm:$0xff]
  %v453 = vld [vmem:[%s1 + $0xd00] sm:$0xff]
  %v454 = vld [vmem:[%s1 + $0xd08] sm:$0xff]
  %v455 = vld [vmem:[%s1 + $0xd10] sm:$0xff]
  %v456 = vld [vmem:[%s1 + $0xd18] sm:$0xff]
  %v457 = vld [vmem:[%s1 + $0xd20] sm:$0xff]
  %v458 = vld [vmem:[%s1 + $0xd28] sm:$0xff]
  %v459 = vld [vmem:[%s1 + $0xd30] sm:$0xff]
  %v460 = vld [vmem:[%s1 + $0xd38] sm:$0xff]
  %v461 = vld [vmem:[%s1 + $0xd40] sm:$0xff]
  %v462 = vld [vmem:[%s1 + $0xd48] sm:$0xff]
  %v463 = vld [vmem:[%s1 + $0xd50] sm:$0xff]
  %v464 = vld [vmem:[%s1 + $0xd58] sm:$0xff]
  %v465 = vld [vmem:[%s1 + $0xd60] sm:$0xff]
  %v466 = vld [vmem:[%s1 + $0xd68] sm:$0xff]
  %v467 = vld [vmem:[%s1 + $0xd70] sm:$0xff]
  %v468 = vld [vmem:[%s1 + $0xd78] sm:$0xff]
  %v469 = vld [vmem:[%s1 + $0xd80] sm:$0xff]
  %v470 = vld [vmem:[%s1 + $0xd88] sm:$0xff]
  %v471 = vld [vmem:[%s1 + $0xd90] sm:$0xff]
  %v472 = vld [vmem:[%s1 + $0xd98] sm:$0xff]
  %v473 = vld [vmem:[%s1 + $0xda0] sm:$0xff]
  %v474 = vld [vmem:[%s1 + $0xda8] sm:$0xff]
  %v475 = vld [vmem:[%s1 + $0xdb0] sm:$0xff]
  %v476 = vld [vmem:[%s1 + $0xdb8] sm:$0xff]
  %v477 = vld [vmem:[%s1 + $0xdc0] sm:$0xff]
  %v478 = vld [vmem:[%s1 + $0xdc8] sm:$0xff]
  %v479 = vld [vmem:[%s1 + $0xdd0] sm:$0xff]
  %v480 = vld [vmem:[%s1 + $0xdd8] sm:$0xff]
  %v481 = vld [vmem:[%s1 + $0xde0] sm:$0xff]
  %v482 = vld [vmem:[%s1 + $0xde8] sm:$0xff]
  %v483 = vld [vmem:[%s1 + $0xdf0] sm:$0xff]
  %v484 = vld [vmem:[%s1 + $0xdf8] sm:$0xff]
  %v485 = vld [vmem:[%s1 + $0xe00] sm:$0xff]
  %v486 = vld [vmem:[%s1 + $0xe08] sm:$0xff]
  %v487 = vld [vmem:[%s1 + $0xe10] sm:$0xff]
  %v488 = vld [vmem:[%s1 + $0xe18] sm:$0xff]
  %v489 = vld [vmem:[%s1 + $0xe20] sm:$0xff]
  %v490 = vld [vmem:[%s1 + $0xe28] sm:$0xff]
  %v491 = vld [vmem:[%s1 + $0xe30] sm:$0xff]
  %v492 = vld [vmem:[%s1 + $0xe38] sm:$0xff]
  %v493 = vld [vmem:[%s1 + $0xe40] sm:$0xff]
  %v494 = vld [vmem:[%s1 + $0xe48] sm:$0xff]
  %v495 = vld [vmem:[%s1 + $0xe50] sm:$0xff]
  %v496 = vld [vmem:[%s1 + $0xe58] sm:$0xff]
  %v497 = vld [vmem:[%s1 + $0xe60] sm:$0xff]
  %v498 = vld [vmem:[%s1 + $0xe68] sm:$0xff]
  %v499 = vld [vmem:[%s1 + $0xe70] sm:$0xff]
  %v500 = vld [vmem:[%s1 + $0xe78] sm:$0xff]
  %v501 = vld [vmem:[%s1 + $0xe80] sm:$0xff]
  %v502 = vld [vmem:[%s1 + $0xe88] sm:$0xff]
  %v503 = vld [vmem:[%s1 + $0xe90] sm:$0xff]
  %v504 = vld [vmem:[%s1 + $0xe98] sm:$0xff]
  %v505 = vld [vmem:[%s1 + $0xea0] sm:$0xff]
  %v506 = vld [vmem:[%s1 + $0xea8] sm:$0xff]
  %v507 = vld [vmem:[%s1 + $0xeb0] sm:$0xff]
  %v508 = vld [vmem:[%s1 + $0xeb8] sm:$0xff]
  %v509 = vld [vmem:[%s1 + $0xec0] sm:$0xff]
  %v510 = vld [vmem:[%s1 + $0xec8] sm:$0xff]
  %v511 = vld [vmem:[%s1 + $0xed0] sm:$0xff]
  %v512 = vld [vmem:[%s1 + $0xed8] sm:$0xff]
  %v513 = vld [vmem:[%s1 + $0xee0] sm:$0xff]
  %v514 = vld [vmem:[%s1 + $0xee8] sm:$0xff]
  %v515 = vld [vmem:[%s1 + $0xef0] sm:$0xff]
  %v516 = vld [vmem:[%s1 + $0xef8] sm:$0xff]
  %v517 = vld [vmem:[%s1 + $0xf00] sm:$0xff]
  %v518 = vld [vmem:[%s1 + $0xf08] sm:$0xff]
  %v519 = vld [vmem:[%s1 + $0xf10] sm:$0xff]
  %v520 = vld [vmem:[%s1 + $0xf18] sm:$0xff]
  %v521 = vld [vmem:[%s1 + $0xf20] sm:$0xff]
  %v522 = vld [vmem:[%s1 + $0xf28] sm:$0xff]
  %v523 = vld [vmem:[%s1 + $0xf30] sm:$0xff]
  %v524 = vld [vmem:[%s1 + $0xf38] sm:$0xff]
  %v525 = vld [vmem:[%s1 + $0xf40] sm:$0xff]
  %v526 = vld [vmem:[%s1 + $0xf48] sm:$0xff]
  %v527 = vld [vmem:[%s1 + $0xf50] sm:$0xff]
  %v528 = vld [vmem:[%s1 + $0xf58] sm:$0xff]
  %v529 = vld [vmem:[%s1 + $0xf60] sm:$0xff]
  %v530 = vld [vmem:[%s1 + $0xf68] sm:$0xff]
  %v531 = vld [vmem:[%s1 + $0xf70] sm:$0xff]
  %v532 = vld [vmem:[%s1 + $0xf78] sm:$0xff]
  %v533 = vld [vmem:[%s1 + $0xf80] sm:$0xff]
  %v534 = vld [vmem:[%s1 + $0xf88] sm:$0xff]
  %v535 = vld [vmem:[%s1 + $0xf90] sm:$0xff]
  %v536 = vld [vmem:[%s1 + $0xf98] sm:$0xff]
  %v537 = vld [vmem:[%s1 + $0xfa0] sm:$0xff]
  %v538 = vld [vmem:[%s1 + $0xfa8] sm:$0xff]
  %v539 = vld [vmem:[%s1 + $0xfb0] sm:$0xff]
  %v540 = vld [vmem:[%s1 + $0xfb8] sm:$0xff]
  %v541 = vld [vmem:[%s1 + $0xfc0] sm:$0xff]
  %v542 = vld [vmem:[%s1 + $0xfc8] sm:$0xff]
  %v543 = vld [vmem:[%s1 + $0xfd0] sm:$0xff]
  %v544 = vld [vmem:[%s1 + $0xfd8] sm:$0xff]
  %v545 = vld [vmem:[%s1 + $0xfe0] sm:$0xff]
  %v546 = vld [vmem:[%s1 + $0xfe8] sm:$0xff]
  %v547 = vld [vmem:[%s1 + $0xff0] sm:$0xff]
  %v548 = vld [vmem:[%s1 + $0xff8] sm:$0xff]
  %v549 = vld [vmem:[%s2] sm:$0xff]
  %v551 = vlaneseq
  %v552 = vshrl.u32 %v551, 7
  %v553 = vsub.s32 0, %v552
  %v554 = vrot.slane %v549, %v553
  %v555 = vlaneseq
  %v556 = vshrl.u32 %v555, 7
  %v557 = vsub.s32 1, %v556
  %v558 = vrot.slane %v549, %v557
  %v559 = vlaneseq
  %v560 = vshrl.u32 %v559, 7
  %v561 = vsub.s32 2, %v560
  %v562 = vrot.slane %v549, %v561
  %v563 = vlaneseq
  %v564 = vshrl.u32 %v563, 7
  %v565 = vsub.s32 3, %v564
  %v566 = vrot.slane %v549, %v565
  %v567 = vlaneseq
  %v568 = vshrl.u32 %v567, 7
  %v569 = vsub.s32 4, %v568
  %v570 = vrot.slane %v549, %v569
  %v571 = vlaneseq
  %v572 = vshrl.u32 %v571, 7
  %v573 = vsub.s32 5, %v572
  %v574 = vrot.slane %v549, %v573
  %v575 = vlaneseq
  %v576 = vshrl.u32 %v575, 7
  %v577 = vsub.s32 6, %v576
  %v578 = vrot.slane %v549, %v577
  %v579 = vlaneseq
  %v580 = vshrl.u32 %v579, 7
  %v581 = vsub.s32 7, %v580
  %v582 = vrot.slane %v549, %v581
  %v595 = vunpack.c.l.b16 %v33
  %v596 = vunpack.c.h.b16 %v33
  %v597 = vunpack.c.l.b16 %v34
  %v598 = vunpack.c.h.b16 %v34
  %v599 = vunpack.c.l.b16 %v35
  %v600 = vunpack.c.h.b16 %v35
  %v601 = vunpack.c.l.b16 %v36
  %v602 = vunpack.c.h.b16 %v36
  %v603 = vpack.c.b16 %v595, %v595
  %v604 = vpack.c.b16 %v596, %v596
  %v605 = vpack.c.b16 %v597, %v597
  %v606 = vpack.c.b16 %v598, %v598
  %v607 = vpack.c.b16 %v599, %v599
  %v608 = vpack.c.b16 %v600, %v600
  %v609 = vpack.c.b16 %v601, %v601
  %v610 = vpack.c.b16 %v602, %v602
  %v1131 = vunpack.c.l.b16 %v37
  %v1132 = vunpack.c.h.b16 %v37
  %v1133 = vunpack.c.l.b16 %v38
  %v1134 = vunpack.c.h.b16 %v38
  %v1135 = vunpack.c.l.b16 %v39
  %v1136 = vunpack.c.h.b16 %v39
  %v1137 = vunpack.c.l.b16 %v40
  %v1138 = vunpack.c.h.b16 %v40
  %v1139 = vunpack.c.l.b16 %v41
  %v1140 = vunpack.c.h.b16 %v41
  %v1141 = vunpack.c.l.b16 %v42
  %v1142 = vunpack.c.h.b16 %v42
  %v1143 = vunpack.c.l.b16 %v43
  %v1144 = vunpack.c.h.b16 %v43
  %v1145 = vunpack.c.l.b16 %v44
  %v1146 = vunpack.c.h.b16 %v44
  %v1147 = vunpack.c.l.b16 %v45
  %v1148 = vunpack.c.h.b16 %v45
  %v1149 = vunpack.c.l.b16 %v46
  %v1150 = vunpack.c.h.b16 %v46
  %v1151 = vunpack.c.l.b16 %v47
  %v1152 = vunpack.c.h.b16 %v47
  %v1153 = vunpack.c.l.b16 %v48
  %v1154 = vunpack.c.h.b16 %v48
  %v1155 = vunpack.c.l.b16 %v49
  %v1156 = vunpack.c.h.b16 %v49
  %v1157 = vunpack.c.l.b16 %v50
  %v1158 = vunpack.c.h.b16 %v50
  %v1159 = vunpack.c.l.b16 %v51
  %v1160 = vunpack.c.h.b16 %v51
  %v1161 = vunpack.c.l.b16 %v52
  %v1162 = vunpack.c.h.b16 %v52
  %v1163 = vunpack.c.l.b16 %v53
  %v1164 = vunpack.c.h.b16 %v53
  %v1165 = vunpack.c.l.b16 %v54
  %v1166 = vunpack.c.h.b16 %v54
  %v1167 = vunpack.c.l.b16 %v55
  %v1168 = vunpack.c.h.b16 %v55
  %v1169 = vunpack.c.l.b16 %v56
  %v1170 = vunpack.c.h.b16 %v56
  %v1171 = vunpack.c.l.b16 %v57
  %v1172 = vunpack.c.h.b16 %v57
  %v1173 = vunpack.c.l.b16 %v58
  %v1174 = vunpack.c.h.b16 %v58
  %v1175 = vunpack.c.l.b16 %v59
  %v1176 = vunpack.c.h.b16 %v59
  %v1177 = vunpack.c.l.b16 %v60
  %v1178 = vunpack.c.h.b16 %v60
  %v1179 = vunpack.c.l.b16 %v61
  %v1180 = vunpack.c.h.b16 %v61
  %v1181 = vunpack.c.l.b16 %v62
  %v1182 = vunpack.c.h.b16 %v62
  %v1183 = vunpack.c.l.b16 %v63
  %v1184 = vunpack.c.h.b16 %v63
  %v1185 = vunpack.c.l.b16 %v64
  %v1186 = vunpack.c.h.b16 %v64
  %v1187 = vunpack.c.l.b16 %v65
  %v1188 = vunpack.c.h.b16 %v65
  %v1189 = vunpack.c.l.b16 %v66
  %v1190 = vunpack.c.h.b16 %v66
  %v1191 = vunpack.c.l.b16 %v67
  %v1192 = vunpack.c.h.b16 %v67
  %v1193 = vunpack.c.l.b16 %v68
  %v1194 = vunpack.c.h.b16 %v68
  %v1195 = vunpack.c.l.b16 %v69
  %v1196 = vunpack.c.h.b16 %v69
  %v1197 = vunpack.c.l.b16 %v70
  %v1198 = vunpack.c.h.b16 %v70
  %v1199 = vunpack.c.l.b16 %v71
  %v1200 = vunpack.c.h.b16 %v71
  %v1201 = vunpack.c.l.b16 %v72
  %v1202 = vunpack.c.h.b16 %v72
  %v1203 = vunpack.c.l.b16 %v73
  %v1204 = vunpack.c.h.b16 %v73
  %v1205 = vunpack.c.l.b16 %v74
  %v1206 = vunpack.c.h.b16 %v74
  %v1207 = vunpack.c.l.b16 %v75
  %v1208 = vunpack.c.h.b16 %v75
  %v1209 = vunpack.c.l.b16 %v76
  %v1210 = vunpack.c.h.b16 %v76
  %v1211 = vunpack.c.l.b16 %v77
  %v1212 = vunpack.c.h.b16 %v77
  %v1213 = vunpack.c.l.b16 %v78
  %v1214 = vunpack.c.h.b16 %v78
  %v1215 = vunpack.c.l.b16 %v79
  %v1216 = vunpack.c.h.b16 %v79
  %v1217 = vunpack.c.l.b16 %v80
  %v1218 = vunpack.c.h.b16 %v80
  %v1219 = vunpack.c.l.b16 %v81
  %v1220 = vunpack.c.h.b16 %v81
  %v1221 = vunpack.c.l.b16 %v82
  %v1222 = vunpack.c.h.b16 %v82
  %v1223 = vunpack.c.l.b16 %v83
  %v1224 = vunpack.c.h.b16 %v83
  %v1225 = vunpack.c.l.b16 %v84
  %v1226 = vunpack.c.h.b16 %v84
  %v1227 = vunpack.c.l.b16 %v85
  %v1228 = vunpack.c.h.b16 %v85
  %v1229 = vunpack.c.l.b16 %v86
  %v1230 = vunpack.c.h.b16 %v86
  %v1231 = vunpack.c.l.b16 %v87
  %v1232 = vunpack.c.h.b16 %v87
  %v1233 = vunpack.c.l.b16 %v88
  %v1234 = vunpack.c.h.b16 %v88
  %v1235 = vunpack.c.l.b16 %v89
  %v1236 = vunpack.c.h.b16 %v89
  %v1237 = vunpack.c.l.b16 %v90
  %v1238 = vunpack.c.h.b16 %v90
  %v1239 = vunpack.c.l.b16 %v91
  %v1240 = vunpack.c.h.b16 %v91
  %v1241 = vunpack.c.l.b16 %v92
  %v1242 = vunpack.c.h.b16 %v92
  %v1243 = vunpack.c.l.b16 %v93
  %v1244 = vunpack.c.h.b16 %v93
  %v1245 = vunpack.c.l.b16 %v94
  %v1246 = vunpack.c.h.b16 %v94
  %v1247 = vunpack.c.l.b16 %v95
  %v1248 = vunpack.c.h.b16 %v95
  %v1249 = vunpack.c.l.b16 %v96
  %v1250 = vunpack.c.h.b16 %v96
  %v1251 = vunpack.c.l.b16 %v97
  %v1252 = vunpack.c.h.b16 %v97
  %v1253 = vunpack.c.l.b16 %v98
  %v1254 = vunpack.c.h.b16 %v98
  %v1255 = vunpack.c.l.b16 %v99
  %v1256 = vunpack.c.h.b16 %v99
  %v1257 = vunpack.c.l.b16 %v100
  %v1258 = vunpack.c.h.b16 %v100
  %v1259 = vunpack.c.l.b16 %v101
  %v1260 = vunpack.c.h.b16 %v101
  %v1261 = vunpack.c.l.b16 %v102
  %v1262 = vunpack.c.h.b16 %v102
  %v1263 = vunpack.c.l.b16 %v103
  %v1264 = vunpack.c.h.b16 %v103
  %v1265 = vunpack.c.l.b16 %v104
  %v1266 = vunpack.c.h.b16 %v104
  %v1267 = vunpack.c.l.b16 %v105
  %v1268 = vunpack.c.h.b16 %v105
  %v1269 = vunpack.c.l.b16 %v106
  %v1270 = vunpack.c.h.b16 %v106
  %v1271 = vunpack.c.l.b16 %v107
  %v1272 = vunpack.c.h.b16 %v107
  %v1273 = vunpack.c.l.b16 %v108
  %v1274 = vunpack.c.h.b16 %v108
  %v1275 = vunpack.c.l.b16 %v109
  %v1276 = vunpack.c.h.b16 %v109
  %v1277 = vunpack.c.l.b16 %v110
  %v1278 = vunpack.c.h.b16 %v110
  %v1279 = vunpack.c.l.b16 %v111
  %v1280 = vunpack.c.h.b16 %v111
  %v1281 = vunpack.c.l.b16 %v112
  %v1282 = vunpack.c.h.b16 %v112
  %v1283 = vunpack.c.l.b16 %v113
  %v1284 = vunpack.c.h.b16 %v113
  %v1285 = vunpack.c.l.b16 %v114
  %v1286 = vunpack.c.h.b16 %v114
  %v1287 = vunpack.c.l.b16 %v115
  %v1288 = vunpack.c.h.b16 %v115
  %v1289 = vunpack.c.l.b16 %v116
  %v1290 = vunpack.c.h.b16 %v116
  %v1291 = vunpack.c.l.b16 %v117
  %v1292 = vunpack.c.h.b16 %v117
  %v1293 = vunpack.c.l.b16 %v118
  %v1294 = vunpack.c.h.b16 %v118
  %v1295 = vunpack.c.l.b16 %v119
  %v1296 = vunpack.c.h.b16 %v119
  %v1297 = vunpack.c.l.b16 %v120
  %v1298 = vunpack.c.h.b16 %v120
  %v1299 = vunpack.c.l.b16 %v121
  %v1300 = vunpack.c.h.b16 %v121
  %v1301 = vunpack.c.l.b16 %v122
  %v1302 = vunpack.c.h.b16 %v122
  %v1303 = vunpack.c.l.b16 %v123
  %v1304 = vunpack.c.h.b16 %v123
  %v1305 = vunpack.c.l.b16 %v124
  %v1306 = vunpack.c.h.b16 %v124
  %v1307 = vunpack.c.l.b16 %v125
  %v1308 = vunpack.c.h.b16 %v125
  %v1309 = vunpack.c.l.b16 %v126
  %v1310 = vunpack.c.h.b16 %v126
  %v1311 = vunpack.c.l.b16 %v127
  %v1312 = vunpack.c.h.b16 %v127
  %v1313 = vunpack.c.l.b16 %v128
  %v1314 = vunpack.c.h.b16 %v128
  %v1315 = vunpack.c.l.b16 %v129
  %v1316 = vunpack.c.h.b16 %v129
  %v1317 = vunpack.c.l.b16 %v130
  %v1318 = vunpack.c.h.b16 %v130
  %v1319 = vunpack.c.l.b16 %v131
  %v1320 = vunpack.c.h.b16 %v131
  %v1321 = vunpack.c.l.b16 %v132
  %v1322 = vunpack.c.h.b16 %v132
  %v1323 = vunpack.c.l.b16 %v133
  %v1324 = vunpack.c.h.b16 %v133
  %v1325 = vunpack.c.l.b16 %v134
  %v1326 = vunpack.c.h.b16 %v134
  %v1327 = vunpack.c.l.b16 %v135
  %v1328 = vunpack.c.h.b16 %v135
  %v1329 = vunpack.c.l.b16 %v136
  %v1330 = vunpack.c.h.b16 %v136
  %v1331 = vunpack.c.l.b16 %v137
  %v1332 = vunpack.c.h.b16 %v137
  %v1333 = vunpack.c.l.b16 %v138
  %v1334 = vunpack.c.h.b16 %v138
  %v1335 = vunpack.c.l.b16 %v139
  %v1336 = vunpack.c.h.b16 %v139
  %v1337 = vunpack.c.l.b16 %v140
  %v1338 = vunpack.c.h.b16 %v140
  %v1339 = vunpack.c.l.b16 %v141
  %v1340 = vunpack.c.h.b16 %v141
  %v1341 = vunpack.c.l.b16 %v142
  %v1342 = vunpack.c.h.b16 %v142
  %v1343 = vunpack.c.l.b16 %v143
  %v1344 = vunpack.c.h.b16 %v143
  %v1345 = vunpack.c.l.b16 %v144
  %v1346 = vunpack.c.h.b16 %v144
  %v1347 = vunpack.c.l.b16 %v145
  %v1348 = vunpack.c.h.b16 %v145
  %v1349 = vunpack.c.l.b16 %v146
  %v1350 = vunpack.c.h.b16 %v146
  %v1351 = vunpack.c.l.b16 %v147
  %v1352 = vunpack.c.h.b16 %v147
  %v1353 = vunpack.c.l.b16 %v148
  %v1354 = vunpack.c.h.b16 %v148
  %v1355 = vunpack.c.l.b16 %v149
  %v1356 = vunpack.c.h.b16 %v149
  %v1357 = vunpack.c.l.b16 %v150
  %v1358 = vunpack.c.h.b16 %v150
  %v1359 = vunpack.c.l.b16 %v151
  %v1360 = vunpack.c.h.b16 %v151
  %v1361 = vunpack.c.l.b16 %v152
  %v1362 = vunpack.c.h.b16 %v152
  %v1363 = vunpack.c.l.b16 %v153
  %v1364 = vunpack.c.h.b16 %v153
  %v1365 = vunpack.c.l.b16 %v154
  %v1366 = vunpack.c.h.b16 %v154
  %v1367 = vunpack.c.l.b16 %v155
  %v1368 = vunpack.c.h.b16 %v155
  %v1369 = vunpack.c.l.b16 %v156
  %v1370 = vunpack.c.h.b16 %v156
  %v1371 = vunpack.c.l.b16 %v157
  %v1372 = vunpack.c.h.b16 %v157
  %v1373 = vunpack.c.l.b16 %v158
  %v1374 = vunpack.c.h.b16 %v158
  %v1375 = vunpack.c.l.b16 %v159
  %v1376 = vunpack.c.h.b16 %v159
  %v1377 = vunpack.c.l.b16 %v160
  %v1378 = vunpack.c.h.b16 %v160
  %v1379 = vunpack.c.l.b16 %v161
  %v1380 = vunpack.c.h.b16 %v161
  %v1381 = vunpack.c.l.b16 %v162
  %v1382 = vunpack.c.h.b16 %v162
  %v1383 = vunpack.c.l.b16 %v163
  %v1384 = vunpack.c.h.b16 %v163
  %v1385 = vunpack.c.l.b16 %v164
  %v1386 = vunpack.c.h.b16 %v164
  %v1387 = vunpack.c.l.b16 %v165
  %v1388 = vunpack.c.h.b16 %v165
  %v1389 = vunpack.c.l.b16 %v166
  %v1390 = vunpack.c.h.b16 %v166
  %v1391 = vunpack.c.l.b16 %v167
  %v1392 = vunpack.c.h.b16 %v167
  %v1393 = vunpack.c.l.b16 %v168
  %v1394 = vunpack.c.h.b16 %v168
  %v1395 = vunpack.c.l.b16 %v169
  %v1396 = vunpack.c.h.b16 %v169
  %v1397 = vunpack.c.l.b16 %v170
  %v1398 = vunpack.c.h.b16 %v170
  %v1399 = vunpack.c.l.b16 %v171
  %v1400 = vunpack.c.h.b16 %v171
  %v1401 = vunpack.c.l.b16 %v172
  %v1402 = vunpack.c.h.b16 %v172
  %v1403 = vunpack.c.l.b16 %v173
  %v1404 = vunpack.c.h.b16 %v173
  %v1405 = vunpack.c.l.b16 %v174
  %v1406 = vunpack.c.h.b16 %v174
  %v1407 = vunpack.c.l.b16 %v175
  %v1408 = vunpack.c.h.b16 %v175
  %v1409 = vunpack.c.l.b16 %v176
  %v1410 = vunpack.c.h.b16 %v176
  %v1411 = vunpack.c.l.b16 %v177
  %v1412 = vunpack.c.h.b16 %v177
  %v1413 = vunpack.c.l.b16 %v178
  %v1414 = vunpack.c.h.b16 %v178
  %v1415 = vunpack.c.l.b16 %v179
  %v1416 = vunpack.c.h.b16 %v179
  %v1417 = vunpack.c.l.b16 %v180
  %v1418 = vunpack.c.h.b16 %v180
  %v1419 = vunpack.c.l.b16 %v181
  %v1420 = vunpack.c.h.b16 %v181
  %v1421 = vunpack.c.l.b16 %v182
  %v1422 = vunpack.c.h.b16 %v182
  %v1423 = vunpack.c.l.b16 %v183
  %v1424 = vunpack.c.h.b16 %v183
  %v1425 = vunpack.c.l.b16 %v184
  %v1426 = vunpack.c.h.b16 %v184
  %v1427 = vunpack.c.l.b16 %v185
  %v1428 = vunpack.c.h.b16 %v185
  %v1429 = vunpack.c.l.b16 %v186
  %v1430 = vunpack.c.h.b16 %v186
  %v1431 = vunpack.c.l.b16 %v187
  %v1432 = vunpack.c.h.b16 %v187
  %v1433 = vunpack.c.l.b16 %v188
  %v1434 = vunpack.c.h.b16 %v188
  %v1435 = vunpack.c.l.b16 %v189
  %v1436 = vunpack.c.h.b16 %v189
  %v1437 = vunpack.c.l.b16 %v190
  %v1438 = vunpack.c.h.b16 %v190
  %v1439 = vunpack.c.l.b16 %v191
  %v1440 = vunpack.c.h.b16 %v191
  %v1441 = vunpack.c.l.b16 %v192
  %v1442 = vunpack.c.h.b16 %v192
  %v1443 = vunpack.c.l.b16 %v193
  %v1444 = vunpack.c.h.b16 %v193
  %v1445 = vunpack.c.l.b16 %v194
  %v1446 = vunpack.c.h.b16 %v194
  %v1447 = vunpack.c.l.b16 %v195
  %v1448 = vunpack.c.h.b16 %v195
  %v1449 = vunpack.c.l.b16 %v196
  %v1450 = vunpack.c.h.b16 %v196
  %v1451 = vunpack.c.l.b16 %v197
  %v1452 = vunpack.c.h.b16 %v197
  %v1453 = vunpack.c.l.b16 %v198
  %v1454 = vunpack.c.h.b16 %v198
  %v1455 = vunpack.c.l.b16 %v199
  %v1456 = vunpack.c.h.b16 %v199
  %v1457 = vunpack.c.l.b16 %v200
  %v1458 = vunpack.c.h.b16 %v200
  %v1459 = vunpack.c.l.b16 %v201
  %v1460 = vunpack.c.h.b16 %v201
  %v1461 = vunpack.c.l.b16 %v202
  %v1462 = vunpack.c.h.b16 %v202
  %v1463 = vunpack.c.l.b16 %v203
  %v1464 = vunpack.c.h.b16 %v203
  %v1465 = vunpack.c.l.b16 %v204
  %v1466 = vunpack.c.h.b16 %v204
  %v1467 = vunpack.c.l.b16 %v205
  %v1468 = vunpack.c.h.b16 %v205
  %v1469 = vunpack.c.l.b16 %v206
  %v1470 = vunpack.c.h.b16 %v206
  %v1471 = vunpack.c.l.b16 %v207
  %v1472 = vunpack.c.h.b16 %v207
  %v1473 = vunpack.c.l.b16 %v208
  %v1474 = vunpack.c.h.b16 %v208
  %v1475 = vunpack.c.l.b16 %v209
  %v1476 = vunpack.c.h.b16 %v209
  %v1477 = vunpack.c.l.b16 %v210
  %v1478 = vunpack.c.h.b16 %v210
  %v1479 = vunpack.c.l.b16 %v211
  %v1480 = vunpack.c.h.b16 %v211
  %v1481 = vunpack.c.l.b16 %v212
  %v1482 = vunpack.c.h.b16 %v212
  %v1483 = vunpack.c.l.b16 %v213
  %v1484 = vunpack.c.h.b16 %v213
  %v1485 = vunpack.c.l.b16 %v214
  %v1486 = vunpack.c.h.b16 %v214
  %v1487 = vunpack.c.l.b16 %v215
  %v1488 = vunpack.c.h.b16 %v215
  %v1489 = vunpack.c.l.b16 %v216
  %v1490 = vunpack.c.h.b16 %v216
  %v1491 = vunpack.c.l.b16 %v217
  %v1492 = vunpack.c.h.b16 %v217
  %v1493 = vunpack.c.l.b16 %v218
  %v1494 = vunpack.c.h.b16 %v218
  %v1495 = vunpack.c.l.b16 %v219
  %v1496 = vunpack.c.h.b16 %v219
  %v1497 = vunpack.c.l.b16 %v220
  %v1498 = vunpack.c.h.b16 %v220
  %v1499 = vunpack.c.l.b16 %v221
  %v1500 = vunpack.c.h.b16 %v221
  %v1501 = vunpack.c.l.b16 %v222
  %v1502 = vunpack.c.h.b16 %v222
  %v1503 = vunpack.c.l.b16 %v223
  %v1504 = vunpack.c.h.b16 %v223
  %v1505 = vunpack.c.l.b16 %v224
  %v1506 = vunpack.c.h.b16 %v224
  %v1507 = vunpack.c.l.b16 %v225
  %v1508 = vunpack.c.h.b16 %v225
  %v1509 = vunpack.c.l.b16 %v226
  %v1510 = vunpack.c.h.b16 %v226
  %v1511 = vunpack.c.l.b16 %v227
  %v1512 = vunpack.c.h.b16 %v227
  %v1513 = vunpack.c.l.b16 %v228
  %v1514 = vunpack.c.h.b16 %v228
  %v1515 = vunpack.c.l.b16 %v229
  %v1516 = vunpack.c.h.b16 %v229
  %v1517 = vunpack.c.l.b16 %v230
  %v1518 = vunpack.c.h.b16 %v230
  %v1519 = vunpack.c.l.b16 %v231
  %v1520 = vunpack.c.h.b16 %v231
  %v1521 = vunpack.c.l.b16 %v232
  %v1522 = vunpack.c.h.b16 %v232
  %v1523 = vunpack.c.l.b16 %v233
  %v1524 = vunpack.c.h.b16 %v233
  %v1525 = vunpack.c.l.b16 %v234
  %v1526 = vunpack.c.h.b16 %v234
  %v1527 = vunpack.c.l.b16 %v235
  %v1528 = vunpack.c.h.b16 %v235
  %v1529 = vunpack.c.l.b16 %v236
  %v1530 = vunpack.c.h.b16 %v236
  %v1531 = vunpack.c.l.b16 %v237
  %v1532 = vunpack.c.h.b16 %v237
  %v1533 = vunpack.c.l.b16 %v238
  %v1534 = vunpack.c.h.b16 %v238
  %v1535 = vunpack.c.l.b16 %v239
  %v1536 = vunpack.c.h.b16 %v239
  %v1537 = vunpack.c.l.b16 %v240
  %v1538 = vunpack.c.h.b16 %v240
  %v1539 = vunpack.c.l.b16 %v241
  %v1540 = vunpack.c.h.b16 %v241
  %v1541 = vunpack.c.l.b16 %v242
  %v1542 = vunpack.c.h.b16 %v242
  %v1543 = vunpack.c.l.b16 %v243
  %v1544 = vunpack.c.h.b16 %v243
  %v1545 = vunpack.c.l.b16 %v244
  %v1546 = vunpack.c.h.b16 %v244
  %v1547 = vunpack.c.l.b16 %v245
  %v1548 = vunpack.c.h.b16 %v245
  %v1549 = vunpack.c.l.b16 %v246
  %v1550 = vunpack.c.h.b16 %v246
  %v1551 = vunpack.c.l.b16 %v247
  %v1552 = vunpack.c.h.b16 %v247
  %v1553 = vunpack.c.l.b16 %v248
  %v1554 = vunpack.c.h.b16 %v248
  %v1555 = vunpack.c.l.b16 %v249
  %v1556 = vunpack.c.h.b16 %v249
  %v1557 = vunpack.c.l.b16 %v250
  %v1558 = vunpack.c.h.b16 %v250
  %v1559 = vunpack.c.l.b16 %v251
  %v1560 = vunpack.c.h.b16 %v251
  %v1561 = vunpack.c.l.b16 %v252
  %v1562 = vunpack.c.h.b16 %v252
  %v1563 = vunpack.c.l.b16 %v253
  %v1564 = vunpack.c.h.b16 %v253
  %v1565 = vunpack.c.l.b16 %v254
  %v1566 = vunpack.c.h.b16 %v254
  %v1567 = vunpack.c.l.b16 %v255
  %v1568 = vunpack.c.h.b16 %v255
  %v1569 = vunpack.c.l.b16 %v256
  %v1570 = vunpack.c.h.b16 %v256
  %v1571 = vunpack.c.l.b16 %v257
  %v1572 = vunpack.c.h.b16 %v257
  %v1573 = vunpack.c.l.b16 %v258
  %v1574 = vunpack.c.h.b16 %v258
  %v1575 = vunpack.c.l.b16 %v259
  %v1576 = vunpack.c.h.b16 %v259
  %v1577 = vunpack.c.l.b16 %v260
  %v1578 = vunpack.c.h.b16 %v260
  %v1579 = vunpack.c.l.b16 %v261
  %v1580 = vunpack.c.h.b16 %v261
  %v1581 = vunpack.c.l.b16 %v262
  %v1582 = vunpack.c.h.b16 %v262
  %v1583 = vunpack.c.l.b16 %v263
  %v1584 = vunpack.c.h.b16 %v263
  %v1585 = vunpack.c.l.b16 %v264
  %v1586 = vunpack.c.h.b16 %v264
  %v1587 = vunpack.c.l.b16 %v265
  %v1588 = vunpack.c.h.b16 %v265
  %v1589 = vunpack.c.l.b16 %v266
  %v1590 = vunpack.c.h.b16 %v266
  %v1591 = vunpack.c.l.b16 %v267
  %v1592 = vunpack.c.h.b16 %v267
  %v1593 = vunpack.c.l.b16 %v268
  %v1594 = vunpack.c.h.b16 %v268
  %v1595 = vunpack.c.l.b16 %v269
  %v1596 = vunpack.c.h.b16 %v269
  %v1597 = vunpack.c.l.b16 %v270
  %v1598 = vunpack.c.h.b16 %v270
  %v1599 = vunpack.c.l.b16 %v271
  %v1600 = vunpack.c.h.b16 %v271
  %v1601 = vunpack.c.l.b16 %v272
  %v1602 = vunpack.c.h.b16 %v272
  %v1603 = vunpack.c.l.b16 %v273
  %v1604 = vunpack.c.h.b16 %v273
  %v1605 = vunpack.c.l.b16 %v274
  %v1606 = vunpack.c.h.b16 %v274
  %v1607 = vunpack.c.l.b16 %v275
  %v1608 = vunpack.c.h.b16 %v275
  %v1609 = vunpack.c.l.b16 %v276
  %v1610 = vunpack.c.h.b16 %v276
  %v1611 = vunpack.c.l.b16 %v277
  %v1612 = vunpack.c.h.b16 %v277
  %v1613 = vunpack.c.l.b16 %v278
  %v1614 = vunpack.c.h.b16 %v278
  %v1615 = vunpack.c.l.b16 %v279
  %v1616 = vunpack.c.h.b16 %v279
  %v1617 = vunpack.c.l.b16 %v280
  %v1618 = vunpack.c.h.b16 %v280
  %v1619 = vunpack.c.l.b16 %v281
  %v1620 = vunpack.c.h.b16 %v281
  %v1621 = vunpack.c.l.b16 %v282
  %v1622 = vunpack.c.h.b16 %v282
  %v1623 = vunpack.c.l.b16 %v283
  %v1624 = vunpack.c.h.b16 %v283
  %v1625 = vunpack.c.l.b16 %v284
  %v1626 = vunpack.c.h.b16 %v284
  %v1627 = vunpack.c.l.b16 %v285
  %v1628 = vunpack.c.h.b16 %v285
  %v1629 = vunpack.c.l.b16 %v286
  %v1630 = vunpack.c.h.b16 %v286
  %v1631 = vunpack.c.l.b16 %v287
  %v1632 = vunpack.c.h.b16 %v287
  %v1633 = vunpack.c.l.b16 %v288
  %v1634 = vunpack.c.h.b16 %v288
  %v1635 = vunpack.c.l.b16 %v289
  %v1636 = vunpack.c.h.b16 %v289
  %v1637 = vunpack.c.l.b16 %v290
  %v1638 = vunpack.c.h.b16 %v290
  %v1639 = vunpack.c.l.b16 %v291
  %v1640 = vunpack.c.h.b16 %v291
  %v1641 = vunpack.c.l.b16 %v292
  %v1642 = vunpack.c.h.b16 %v292
  %v1643 = vunpack.c.l.b16 %v293
  %v1644 = vunpack.c.h.b16 %v293
  %v1645 = vunpack.c.l.b16 %v294
  %v1646 = vunpack.c.h.b16 %v294
  %v1647 = vunpack.c.l.b16 %v295
  %v1648 = vunpack.c.h.b16 %v295
  %v1649 = vunpack.c.l.b16 %v296
  %v1650 = vunpack.c.h.b16 %v296
  %v1651 = vunpack.c.l.b16 %v297
  %v1652 = vunpack.c.h.b16 %v297
  %v1653 = vunpack.c.l.b16 %v298
  %v1654 = vunpack.c.h.b16 %v298
  %v1655 = vunpack.c.l.b16 %v299
  %v1656 = vunpack.c.h.b16 %v299
  %v1657 = vunpack.c.l.b16 %v300
  %v1658 = vunpack.c.h.b16 %v300
  %v1659 = vunpack.c.l.b16 %v301
  %v1660 = vunpack.c.h.b16 %v301
  %v1661 = vunpack.c.l.b16 %v302
  %v1662 = vunpack.c.h.b16 %v302
  %v1663 = vunpack.c.l.b16 %v303
  %v1664 = vunpack.c.h.b16 %v303
  %v1665 = vunpack.c.l.b16 %v304
  %v1666 = vunpack.c.h.b16 %v304
  %v1667 = vunpack.c.l.b16 %v305
  %v1668 = vunpack.c.h.b16 %v305
  %v1669 = vunpack.c.l.b16 %v306
  %v1670 = vunpack.c.h.b16 %v306
  %v1671 = vunpack.c.l.b16 %v307
  %v1672 = vunpack.c.h.b16 %v307
  %v1673 = vunpack.c.l.b16 %v308
  %v1674 = vunpack.c.h.b16 %v308
  %v1675 = vunpack.c.l.b16 %v309
  %v1676 = vunpack.c.h.b16 %v309
  %v1677 = vunpack.c.l.b16 %v310
  %v1678 = vunpack.c.h.b16 %v310
  %v1679 = vunpack.c.l.b16 %v311
  %v1680 = vunpack.c.h.b16 %v311
  %v1681 = vunpack.c.l.b16 %v312
  %v1682 = vunpack.c.h.b16 %v312
  %v1683 = vunpack.c.l.b16 %v313
  %v1684 = vunpack.c.h.b16 %v313
  %v1685 = vunpack.c.l.b16 %v314
  %v1686 = vunpack.c.h.b16 %v314
  %v1687 = vunpack.c.l.b16 %v315
  %v1688 = vunpack.c.h.b16 %v315
  %v1689 = vunpack.c.l.b16 %v316
  %v1690 = vunpack.c.h.b16 %v316
  %v1691 = vunpack.c.l.b16 %v317
  %v1692 = vunpack.c.h.b16 %v317
  %v1693 = vunpack.c.l.b16 %v318
  %v1694 = vunpack.c.h.b16 %v318
  %v1695 = vunpack.c.l.b16 %v319
  %v1696 = vunpack.c.h.b16 %v319
  %v1697 = vunpack.c.l.b16 %v320
  %v1698 = vunpack.c.h.b16 %v320
  %v1699 = vunpack.c.l.b16 %v321
  %v1700 = vunpack.c.h.b16 %v321
  %v1701 = vunpack.c.l.b16 %v322
  %v1702 = vunpack.c.h.b16 %v322
  %v1703 = vunpack.c.l.b16 %v323
  %v1704 = vunpack.c.h.b16 %v323
  %v1705 = vunpack.c.l.b16 %v324
  %v1706 = vunpack.c.h.b16 %v324
  %v1707 = vunpack.c.l.b16 %v325
  %v1708 = vunpack.c.h.b16 %v325
  %v1709 = vunpack.c.l.b16 %v326
  %v1710 = vunpack.c.h.b16 %v326
  %v1711 = vunpack.c.l.b16 %v327
  %v1712 = vunpack.c.h.b16 %v327
  %v1713 = vunpack.c.l.b16 %v328
  %v1714 = vunpack.c.h.b16 %v328
  %v1715 = vunpack.c.l.b16 %v329
  %v1716 = vunpack.c.h.b16 %v329
  %v1717 = vunpack.c.l.b16 %v330
  %v1718 = vunpack.c.h.b16 %v330
  %v1719 = vunpack.c.l.b16 %v331
  %v1720 = vunpack.c.h.b16 %v331
  %v1721 = vunpack.c.l.b16 %v332
  %v1722 = vunpack.c.h.b16 %v332
  %v1723 = vunpack.c.l.b16 %v333
  %v1724 = vunpack.c.h.b16 %v333
  %v1725 = vunpack.c.l.b16 %v334
  %v1726 = vunpack.c.h.b16 %v334
  %v1727 = vunpack.c.l.b16 %v335
  %v1728 = vunpack.c.h.b16 %v335
  %v1729 = vunpack.c.l.b16 %v336
  %v1730 = vunpack.c.h.b16 %v336
  %v1731 = vunpack.c.l.b16 %v337
  %v1732 = vunpack.c.h.b16 %v337
  %v1733 = vunpack.c.l.b16 %v338
  %v1734 = vunpack.c.h.b16 %v338
  %v1735 = vunpack.c.l.b16 %v339
  %v1736 = vunpack.c.h.b16 %v339
  %v1737 = vunpack.c.l.b16 %v340
  %v1738 = vunpack.c.h.b16 %v340
  %v1739 = vunpack.c.l.b16 %v341
  %v1740 = vunpack.c.h.b16 %v341
  %v1741 = vunpack.c.l.b16 %v342
  %v1742 = vunpack.c.h.b16 %v342
  %v1743 = vunpack.c.l.b16 %v343
  %v1744 = vunpack.c.h.b16 %v343
  %v1745 = vunpack.c.l.b16 %v344
  %v1746 = vunpack.c.h.b16 %v344
  %v1747 = vunpack.c.l.b16 %v345
  %v1748 = vunpack.c.h.b16 %v345
  %v1749 = vunpack.c.l.b16 %v346
  %v1750 = vunpack.c.h.b16 %v346
  %v1751 = vunpack.c.l.b16 %v347
  %v1752 = vunpack.c.h.b16 %v347
  %v1753 = vunpack.c.l.b16 %v348
  %v1754 = vunpack.c.h.b16 %v348
  %v1755 = vunpack.c.l.b16 %v349
  %v1756 = vunpack.c.h.b16 %v349
  %v1757 = vunpack.c.l.b16 %v350
  %v1758 = vunpack.c.h.b16 %v350
  %v1759 = vunpack.c.l.b16 %v351
  %v1760 = vunpack.c.h.b16 %v351
  %v1761 = vunpack.c.l.b16 %v352
  %v1762 = vunpack.c.h.b16 %v352
  %v1763 = vunpack.c.l.b16 %v353
  %v1764 = vunpack.c.h.b16 %v353
  %v1765 = vunpack.c.l.b16 %v354
  %v1766 = vunpack.c.h.b16 %v354
  %v1767 = vunpack.c.l.b16 %v355
  %v1768 = vunpack.c.h.b16 %v355
  %v1769 = vunpack.c.l.b16 %v356
  %v1770 = vunpack.c.h.b16 %v356
  %v1771 = vunpack.c.l.b16 %v357
  %v1772 = vunpack.c.h.b16 %v357
  %v1773 = vunpack.c.l.b16 %v358
  %v1774 = vunpack.c.h.b16 %v358
  %v1775 = vunpack.c.l.b16 %v359
  %v1776 = vunpack.c.h.b16 %v359
  %v1777 = vunpack.c.l.b16 %v360
  %v1778 = vunpack.c.h.b16 %v360
  %v1779 = vunpack.c.l.b16 %v361
  %v1780 = vunpack.c.h.b16 %v361
  %v1781 = vunpack.c.l.b16 %v362
  %v1782 = vunpack.c.h.b16 %v362
  %v1783 = vunpack.c.l.b16 %v363
  %v1784 = vunpack.c.h.b16 %v363
  %v1785 = vunpack.c.l.b16 %v364
  %v1786 = vunpack.c.h.b16 %v364
  %v1787 = vunpack.c.l.b16 %v365
  %v1788 = vunpack.c.h.b16 %v365
  %v1789 = vunpack.c.l.b16 %v366
  %v1790 = vunpack.c.h.b16 %v366
  %v1791 = vunpack.c.l.b16 %v367
  %v1792 = vunpack.c.h.b16 %v367
  %v1793 = vunpack.c.l.b16 %v368
  %v1794 = vunpack.c.h.b16 %v368
  %v1795 = vunpack.c.l.b16 %v369
  %v1796 = vunpack.c.h.b16 %v369
  %v1797 = vunpack.c.l.b16 %v370
  %v1798 = vunpack.c.h.b16 %v370
  %v1799 = vunpack.c.l.b16 %v371
  %v1800 = vunpack.c.h.b16 %v371
  %v1801 = vunpack.c.l.b16 %v372
  %v1802 = vunpack.c.h.b16 %v372
  %v1803 = vunpack.c.l.b16 %v373
  %v1804 = vunpack.c.h.b16 %v373
  %v1805 = vunpack.c.l.b16 %v374
  %v1806 = vunpack.c.h.b16 %v374
  %v1807 = vunpack.c.l.b16 %v375
  %v1808 = vunpack.c.h.b16 %v375
  %v1809 = vunpack.c.l.b16 %v376
  %v1810 = vunpack.c.h.b16 %v376
  %v1811 = vunpack.c.l.b16 %v377
  %v1812 = vunpack.c.h.b16 %v377
  %v1813 = vunpack.c.l.b16 %v378
  %v1814 = vunpack.c.h.b16 %v378
  %v1815 = vunpack.c.l.b16 %v379
  %v1816 = vunpack.c.h.b16 %v379
  %v1817 = vunpack.c.l.b16 %v380
  %v1818 = vunpack.c.h.b16 %v380
  %v1819 = vunpack.c.l.b16 %v381
  %v1820 = vunpack.c.h.b16 %v381
  %v1821 = vunpack.c.l.b16 %v382
  %v1822 = vunpack.c.h.b16 %v382
  %v1823 = vunpack.c.l.b16 %v383
  %v1824 = vunpack.c.h.b16 %v383
  %v1825 = vunpack.c.l.b16 %v384
  %v1826 = vunpack.c.h.b16 %v384
  %v1827 = vunpack.c.l.b16 %v385
  %v1828 = vunpack.c.h.b16 %v385
  %v1829 = vunpack.c.l.b16 %v386
  %v1830 = vunpack.c.h.b16 %v386
  %v1831 = vunpack.c.l.b16 %v387
  %v1832 = vunpack.c.h.b16 %v387
  %v1833 = vunpack.c.l.b16 %v388
  %v1834 = vunpack.c.h.b16 %v388
  %v1835 = vunpack.c.l.b16 %v389
  %v1836 = vunpack.c.h.b16 %v389
  %v1837 = vunpack.c.l.b16 %v390
  %v1838 = vunpack.c.h.b16 %v390
  %v1839 = vunpack.c.l.b16 %v391
  %v1840 = vunpack.c.h.b16 %v391
  %v1841 = vunpack.c.l.b16 %v392
  %v1842 = vunpack.c.h.b16 %v392
  %v1843 = vunpack.c.l.b16 %v393
  %v1844 = vunpack.c.h.b16 %v393
  %v1845 = vunpack.c.l.b16 %v394
  %v1846 = vunpack.c.h.b16 %v394
  %v1847 = vunpack.c.l.b16 %v395
  %v1848 = vunpack.c.h.b16 %v395
  %v1849 = vunpack.c.l.b16 %v396
  %v1850 = vunpack.c.h.b16 %v396
  %v1851 = vunpack.c.l.b16 %v397
  %v1852 = vunpack.c.h.b16 %v397
  %v1853 = vunpack.c.l.b16 %v398
  %v1854 = vunpack.c.h.b16 %v398
  %v1855 = vunpack.c.l.b16 %v399
  %v1856 = vunpack.c.h.b16 %v399
  %v1857 = vunpack.c.l.b16 %v400
  %v1858 = vunpack.c.h.b16 %v400
  %v1859 = vunpack.c.l.b16 %v401
  %v1860 = vunpack.c.h.b16 %v401
  %v1861 = vunpack.c.l.b16 %v402
  %v1862 = vunpack.c.h.b16 %v402
  %v1863 = vunpack.c.l.b16 %v403
  %v1864 = vunpack.c.h.b16 %v403
  %v1865 = vunpack.c.l.b16 %v404
  %v1866 = vunpack.c.h.b16 %v404
  %v1867 = vunpack.c.l.b16 %v405
  %v1868 = vunpack.c.h.b16 %v405
  %v1869 = vunpack.c.l.b16 %v406
  %v1870 = vunpack.c.h.b16 %v406
  %v1871 = vunpack.c.l.b16 %v407
  %v1872 = vunpack.c.h.b16 %v407
  %v1873 = vunpack.c.l.b16 %v408
  %v1874 = vunpack.c.h.b16 %v408
  %v1875 = vunpack.c.l.b16 %v409
  %v1876 = vunpack.c.h.b16 %v409
  %v1877 = vunpack.c.l.b16 %v410
  %v1878 = vunpack.c.h.b16 %v410
  %v1879 = vunpack.c.l.b16 %v411
  %v1880 = vunpack.c.h.b16 %v411
  %v1881 = vunpack.c.l.b16 %v412
  %v1882 = vunpack.c.h.b16 %v412
  %v1883 = vunpack.c.l.b16 %v413
  %v1884 = vunpack.c.h.b16 %v413
  %v1885 = vunpack.c.l.b16 %v414
  %v1886 = vunpack.c.h.b16 %v414
  %v1887 = vunpack.c.l.b16 %v415
  %v1888 = vunpack.c.h.b16 %v415
  %v1889 = vunpack.c.l.b16 %v416
  %v1890 = vunpack.c.h.b16 %v416
  %v1891 = vunpack.c.l.b16 %v417
  %v1892 = vunpack.c.h.b16 %v417
  %v1893 = vunpack.c.l.b16 %v418
  %v1894 = vunpack.c.h.b16 %v418
  %v1895 = vunpack.c.l.b16 %v419
  %v1896 = vunpack.c.h.b16 %v419
  %v1897 = vunpack.c.l.b16 %v420
  %v1898 = vunpack.c.h.b16 %v420
  %v1899 = vunpack.c.l.b16 %v421
  %v1900 = vunpack.c.h.b16 %v421
  %v1901 = vunpack.c.l.b16 %v422
  %v1902 = vunpack.c.h.b16 %v422
  %v1903 = vunpack.c.l.b16 %v423
  %v1904 = vunpack.c.h.b16 %v423
  %v1905 = vunpack.c.l.b16 %v424
  %v1906 = vunpack.c.h.b16 %v424
  %v1907 = vunpack.c.l.b16 %v425
  %v1908 = vunpack.c.h.b16 %v425
  %v1909 = vunpack.c.l.b16 %v426
  %v1910 = vunpack.c.h.b16 %v426
  %v1911 = vunpack.c.l.b16 %v427
  %v1912 = vunpack.c.h.b16 %v427
  %v1913 = vunpack.c.l.b16 %v428
  %v1914 = vunpack.c.h.b16 %v428
  %v1915 = vunpack.c.l.b16 %v429
  %v1916 = vunpack.c.h.b16 %v429
  %v1917 = vunpack.c.l.b16 %v430
  %v1918 = vunpack.c.h.b16 %v430
  %v1919 = vunpack.c.l.b16 %v431
  %v1920 = vunpack.c.h.b16 %v431
  %v1921 = vunpack.c.l.b16 %v432
  %v1922 = vunpack.c.h.b16 %v432
  %v1923 = vunpack.c.l.b16 %v433
  %v1924 = vunpack.c.h.b16 %v433
  %v1925 = vunpack.c.l.b16 %v434
  %v1926 = vunpack.c.h.b16 %v434
  %v1927 = vunpack.c.l.b16 %v435
  %v1928 = vunpack.c.h.b16 %v435
  %v1929 = vunpack.c.l.b16 %v436
  %v1930 = vunpack.c.h.b16 %v436
  %v1931 = vunpack.c.l.b16 %v437
  %v1932 = vunpack.c.h.b16 %v437
  %v1933 = vunpack.c.l.b16 %v438
  %v1934 = vunpack.c.h.b16 %v438
  %v1935 = vunpack.c.l.b16 %v439
  %v1936 = vunpack.c.h.b16 %v439
  %v1937 = vunpack.c.l.b16 %v440
  %v1938 = vunpack.c.h.b16 %v440
  %v1939 = vunpack.c.l.b16 %v441
  %v1940 = vunpack.c.h.b16 %v441
  %v1941 = vunpack.c.l.b16 %v442
  %v1942 = vunpack.c.h.b16 %v442
  %v1943 = vunpack.c.l.b16 %v443
  %v1944 = vunpack.c.h.b16 %v443
  %v1945 = vunpack.c.l.b16 %v444
  %v1946 = vunpack.c.h.b16 %v444
  %v1947 = vunpack.c.l.b16 %v445
  %v1948 = vunpack.c.h.b16 %v445
  %v1949 = vunpack.c.l.b16 %v446
  %v1950 = vunpack.c.h.b16 %v446
  %v1951 = vunpack.c.l.b16 %v447
  %v1952 = vunpack.c.h.b16 %v447
  %v1953 = vunpack.c.l.b16 %v448
  %v1954 = vunpack.c.h.b16 %v448
  %v1955 = vunpack.c.l.b16 %v449
  %v1956 = vunpack.c.h.b16 %v449
  %v1957 = vunpack.c.l.b16 %v450
  %v1958 = vunpack.c.h.b16 %v450
  %v1959 = vunpack.c.l.b16 %v451
  %v1960 = vunpack.c.h.b16 %v451
  %v1961 = vunpack.c.l.b16 %v452
  %v1962 = vunpack.c.h.b16 %v452
  %v1963 = vunpack.c.l.b16 %v453
  %v1964 = vunpack.c.h.b16 %v453
  %v1965 = vunpack.c.l.b16 %v454
  %v1966 = vunpack.c.h.b16 %v454
  %v1967 = vunpack.c.l.b16 %v455
  %v1968 = vunpack.c.h.b16 %v455
  %v1969 = vunpack.c.l.b16 %v456
  %v1970 = vunpack.c.h.b16 %v456
  %v1971 = vunpack.c.l.b16 %v457
  %v1972 = vunpack.c.h.b16 %v457
  %v1973 = vunpack.c.l.b16 %v458
  %v1974 = vunpack.c.h.b16 %v458
  %v1975 = vunpack.c.l.b16 %v459
  %v1976 = vunpack.c.h.b16 %v459
  %v1977 = vunpack.c.l.b16 %v460
  %v1978 = vunpack.c.h.b16 %v460
  %v1979 = vunpack.c.l.b16 %v461
  %v1980 = vunpack.c.h.b16 %v461
  %v1981 = vunpack.c.l.b16 %v462
  %v1982 = vunpack.c.h.b16 %v462
  %v1983 = vunpack.c.l.b16 %v463
  %v1984 = vunpack.c.h.b16 %v463
  %v1985 = vunpack.c.l.b16 %v464
  %v1986 = vunpack.c.h.b16 %v464
  %v1987 = vunpack.c.l.b16 %v465
  %v1988 = vunpack.c.h.b16 %v465
  %v1989 = vunpack.c.l.b16 %v466
  %v1990 = vunpack.c.h.b16 %v466
  %v1991 = vunpack.c.l.b16 %v467
  %v1992 = vunpack.c.h.b16 %v467
  %v1993 = vunpack.c.l.b16 %v468
  %v1994 = vunpack.c.h.b16 %v468
  %v1995 = vunpack.c.l.b16 %v469
  %v1996 = vunpack.c.h.b16 %v469
  %v1997 = vunpack.c.l.b16 %v470
  %v1998 = vunpack.c.h.b16 %v470
  %v1999 = vunpack.c.l.b16 %v471
  %v2000 = vunpack.c.h.b16 %v471
  %v2001 = vunpack.c.l.b16 %v472
  %v2002 = vunpack.c.h.b16 %v472
  %v2003 = vunpack.c.l.b16 %v473
  %v2004 = vunpack.c.h.b16 %v473
  %v2005 = vunpack.c.l.b16 %v474
  %v2006 = vunpack.c.h.b16 %v474
  %v2007 = vunpack.c.l.b16 %v475
  %v2008 = vunpack.c.h.b16 %v475
  %v2009 = vunpack.c.l.b16 %v476
  %v2010 = vunpack.c.h.b16 %v476
  %v2011 = vunpack.c.l.b16 %v477
  %v2012 = vunpack.c.h.b16 %v477
  %v2013 = vunpack.c.l.b16 %v478
  %v2014 = vunpack.c.h.b16 %v478
  %v2015 = vunpack.c.l.b16 %v479
  %v2016 = vunpack.c.h.b16 %v479
  %v2017 = vunpack.c.l.b16 %v480
  %v2018 = vunpack.c.h.b16 %v480
  %v2019 = vunpack.c.l.b16 %v481
  %v2020 = vunpack.c.h.b16 %v481
  %v2021 = vunpack.c.l.b16 %v482
  %v2022 = vunpack.c.h.b16 %v482
  %v2023 = vunpack.c.l.b16 %v483
  %v2024 = vunpack.c.h.b16 %v483
  %v2025 = vunpack.c.l.b16 %v484
  %v2026 = vunpack.c.h.b16 %v484
  %v2027 = vunpack.c.l.b16 %v485
  %v2028 = vunpack.c.h.b16 %v485
  %v2029 = vunpack.c.l.b16 %v486
  %v2030 = vunpack.c.h.b16 %v486
  %v2031 = vunpack.c.l.b16 %v487
  %v2032 = vunpack.c.h.b16 %v487
  %v2033 = vunpack.c.l.b16 %v488
  %v2034 = vunpack.c.h.b16 %v488
  %v2035 = vunpack.c.l.b16 %v489
  %v2036 = vunpack.c.h.b16 %v489
  %v2037 = vunpack.c.l.b16 %v490
  %v2038 = vunpack.c.h.b16 %v490
  %v2039 = vunpack.c.l.b16 %v491
  %v2040 = vunpack.c.h.b16 %v491
  %v2041 = vunpack.c.l.b16 %v492
  %v2042 = vunpack.c.h.b16 %v492
  %v2043 = vunpack.c.l.b16 %v493
  %v2044 = vunpack.c.h.b16 %v493
  %v2045 = vunpack.c.l.b16 %v494
  %v2046 = vunpack.c.h.b16 %v494
  %v2047 = vunpack.c.l.b16 %v495
  %v2048 = vunpack.c.h.b16 %v495
  %v2049 = vunpack.c.l.b16 %v496
  %v2050 = vunpack.c.h.b16 %v496
  %v2051 = vunpack.c.l.b16 %v497
  %v2052 = vunpack.c.h.b16 %v497
  %v2053 = vunpack.c.l.b16 %v498
  %v2054 = vunpack.c.h.b16 %v498
  %v2055 = vunpack.c.l.b16 %v499
  %v2056 = vunpack.c.h.b16 %v499
  %v2057 = vunpack.c.l.b16 %v500
  %v2058 = vunpack.c.h.b16 %v500
  %v2059 = vunpack.c.l.b16 %v501
  %v2060 = vunpack.c.h.b16 %v501
  %v2061 = vunpack.c.l.b16 %v502
  %v2062 = vunpack.c.h.b16 %v502
  %v2063 = vunpack.c.l.b16 %v503
  %v2064 = vunpack.c.h.b16 %v503
  %v2065 = vunpack.c.l.b16 %v504
  %v2066 = vunpack.c.h.b16 %v504
  %v2067 = vunpack.c.l.b16 %v505
  %v2068 = vunpack.c.h.b16 %v505
  %v2069 = vunpack.c.l.b16 %v506
  %v2070 = vunpack.c.h.b16 %v506
  %v2071 = vunpack.c.l.b16 %v507
  %v2072 = vunpack.c.h.b16 %v507
  %v2073 = vunpack.c.l.b16 %v508
  %v2074 = vunpack.c.h.b16 %v508
  %v2075 = vunpack.c.l.b16 %v509
  %v2076 = vunpack.c.h.b16 %v509
  %v2077 = vunpack.c.l.b16 %v510
  %v2078 = vunpack.c.h.b16 %v510
  %v2079 = vunpack.c.l.b16 %v511
  %v2080 = vunpack.c.h.b16 %v511
  %v2081 = vunpack.c.l.b16 %v512
  %v2082 = vunpack.c.h.b16 %v512
  %v2083 = vunpack.c.l.b16 %v513
  %v2084 = vunpack.c.h.b16 %v513
  %v2085 = vunpack.c.l.b16 %v514
  %v2086 = vunpack.c.h.b16 %v514
  %v2087 = vunpack.c.l.b16 %v515
  %v2088 = vunpack.c.h.b16 %v515
  %v2089 = vunpack.c.l.b16 %v516
  %v2090 = vunpack.c.h.b16 %v516
  %v2091 = vunpack.c.l.b16 %v517
  %v2092 = vunpack.c.h.b16 %v517
  %v2093 = vunpack.c.l.b16 %v518
  %v2094 = vunpack.c.h.b16 %v518
  %v2095 = vunpack.c.l.b16 %v519
  %v2096 = vunpack.c.h.b16 %v519
  %v2097 = vunpack.c.l.b16 %v520
  %v2098 = vunpack.c.h.b16 %v520
  %v2099 = vunpack.c.l.b16 %v521
  %v2100 = vunpack.c.h.b16 %v521
  %v2101 = vunpack.c.l.b16 %v522
  %v2102 = vunpack.c.h.b16 %v522
  %v2103 = vunpack.c.l.b16 %v523
  %v2104 = vunpack.c.h.b16 %v523
  %v2105 = vunpack.c.l.b16 %v524
  %v2106 = vunpack.c.h.b16 %v524
  %v2107 = vunpack.c.l.b16 %v525
  %v2108 = vunpack.c.h.b16 %v525
  %v2109 = vunpack.c.l.b16 %v526
  %v2110 = vunpack.c.h.b16 %v526
  %v2111 = vunpack.c.l.b16 %v527
  %v2112 = vunpack.c.h.b16 %v527
  %v2113 = vunpack.c.l.b16 %v528
  %v2114 = vunpack.c.h.b16 %v528
  %v2115 = vunpack.c.l.b16 %v529
  %v2116 = vunpack.c.h.b16 %v529
  %v2117 = vunpack.c.l.b16 %v530
  %v2118 = vunpack.c.h.b16 %v530
  %v2119 = vunpack.c.l.b16 %v531
  %v2120 = vunpack.c.h.b16 %v531
  %v2121 = vunpack.c.l.b16 %v532
  %v2122 = vunpack.c.h.b16 %v532
  %v2123 = vunpack.c.l.b16 %v533
  %v2124 = vunpack.c.h.b16 %v533
  %v2125 = vunpack.c.l.b16 %v534
  %v2126 = vunpack.c.h.b16 %v534
  %v2127 = vunpack.c.l.b16 %v535
  %v2128 = vunpack.c.h.b16 %v535
  %v2129 = vunpack.c.l.b16 %v536
  %v2130 = vunpack.c.h.b16 %v536
  %v2131 = vunpack.c.l.b16 %v537
  %v2132 = vunpack.c.h.b16 %v537
  %v2133 = vunpack.c.l.b16 %v538
  %v2134 = vunpack.c.h.b16 %v538
  %v2135 = vunpack.c.l.b16 %v539
  %v2136 = vunpack.c.h.b16 %v539
  %v2137 = vunpack.c.l.b16 %v540
  %v2138 = vunpack.c.h.b16 %v540
  %v2139 = vunpack.c.l.b16 %v541
  %v2140 = vunpack.c.h.b16 %v541
  %v2141 = vunpack.c.l.b16 %v542
  %v2142 = vunpack.c.h.b16 %v542
  %v2143 = vunpack.c.l.b16 %v543
  %v2144 = vunpack.c.h.b16 %v543
  %v2145 = vunpack.c.l.b16 %v544
  %v2146 = vunpack.c.h.b16 %v544
  %v2147 = vunpack.c.l.b16 %v545
  %v2148 = vunpack.c.h.b16 %v545
  %v2149 = vunpack.c.l.b16 %v546
  %v2150 = vunpack.c.h.b16 %v546
  %v2151 = vunpack.c.l.b16 %v547
  %v2152 = vunpack.c.h.b16 %v547
  %v2153 = vunpack.c.l.b16 %v548
  %v2154 = vunpack.c.h.b16 %v548
  %v2155 = vpack.c.b16 %v1139, %v1131
  %v2156 = vpack.c.b16 %v1140, %v1132
  %v2157 = vpack.c.b16 %v1141, %v1133
  %v2158 = vpack.c.b16 %v1142, %v1134
  %v2159 = vpack.c.b16 %v1143, %v1135
  %v2160 = vpack.c.b16 %v1144, %v1136
  %v2161 = vpack.c.b16 %v1145, %v1137
  %v2162 = vpack.c.b16 %v1146, %v1138
  %v2163 = vpack.c.b16 %v1155, %v1147
  %v2164 = vpack.c.b16 %v1156, %v1148
  %v2165 = vpack.c.b16 %v1157, %v1149
  %v2166 = vpack.c.b16 %v1158, %v1150
  %v2167 = vpack.c.b16 %v1159, %v1151
  %v2168 = vpack.c.b16 %v1160, %v1152
  %v2169 = vpack.c.b16 %v1161, %v1153
  %v2170 = vpack.c.b16 %v1162, %v1154
  %v2171 = vpack.c.b16 %v1171, %v1163
  %v2172 = vpack.c.b16 %v1172, %v1164
  %v2173 = vpack.c.b16 %v1173, %v1165
  %v2174 = vpack.c.b16 %v1174, %v1166
  %v2175 = vpack.c.b16 %v1175, %v1167
  %v2176 = vpack.c.b16 %v1176, %v1168
  %v2177 = vpack.c.b16 %v1177, %v1169
  %v2178 = vpack.c.b16 %v1178, %v1170
  %v2179 = vpack.c.b16 %v1187, %v1179
  %v2180 = vpack.c.b16 %v1188, %v1180
  %v2181 = vpack.c.b16 %v1189, %v1181
  %v2182 = vpack.c.b16 %v1190, %v1182
  %v2183 = vpack.c.b16 %v1191, %v1183
  %v2184 = vpack.c.b16 %v1192, %v1184
  %v2185 = vpack.c.b16 %v1193, %v1185
  %v2186 = vpack.c.b16 %v1194, %v1186
  %v2187 = vpack.c.b16 %v1203, %v1195
  %v2188 = vpack.c.b16 %v1204, %v1196
  %v2189 = vpack.c.b16 %v1205, %v1197
  %v2190 = vpack.c.b16 %v1206, %v1198
  %v2191 = vpack.c.b16 %v1207, %v1199
  %v2192 = vpack.c.b16 %v1208, %v1200
  %v2193 = vpack.c.b16 %v1209, %v1201
  %v2194 = vpack.c.b16 %v1210, %v1202
  %v2195 = vpack.c.b16 %v1219, %v1211
  %v2196 = vpack.c.b16 %v1220, %v1212
  %v2197 = vpack.c.b16 %v1221, %v1213
  %v2198 = vpack.c.b16 %v1222, %v1214
  %v2199 = vpack.c.b16 %v1223, %v1215
  %v2200 = vpack.c.b16 %v1224, %v1216
  %v2201 = vpack.c.b16 %v1225, %v1217
  %v2202 = vpack.c.b16 %v1226, %v1218
  %v2203 = vpack.c.b16 %v1235, %v1227
  %v2204 = vpack.c.b16 %v1236, %v1228
  %v2205 = vpack.c.b16 %v1237, %v1229
  %v2206 = vpack.c.b16 %v1238, %v1230
  %v2207 = vpack.c.b16 %v1239, %v1231
  %v2208 = vpack.c.b16 %v1240, %v1232
  %v2209 = vpack.c.b16 %v1241, %v1233
  %v2210 = vpack.c.b16 %v1242, %v1234
  %v2211 = vpack.c.b16 %v1251, %v1243
  %v2212 = vpack.c.b16 %v1252, %v1244
  %v2213 = vpack.c.b16 %v1253, %v1245
  %v2214 = vpack.c.b16 %v1254, %v1246
  %v2215 = vpack.c.b16 %v1255, %v1247
  %v2216 = vpack.c.b16 %v1256, %v1248
  %v2217 = vpack.c.b16 %v1257, %v1249
  %v2218 = vpack.c.b16 %v1258, %v1250
  %v2219 = vpack.c.b16 %v1267, %v1259
  %v2220 = vpack.c.b16 %v1268, %v1260
  %v2221 = vpack.c.b16 %v1269, %v1261
  %v2222 = vpack.c.b16 %v1270, %v1262
  %v2223 = vpack.c.b16 %v1271, %v1263
  %v2224 = vpack.c.b16 %v1272, %v1264
  %v2225 = vpack.c.b16 %v1273, %v1265
  %v2226 = vpack.c.b16 %v1274, %v1266
  %v2227 = vpack.c.b16 %v1283, %v1275
  %v2228 = vpack.c.b16 %v1284, %v1276
  %v2229 = vpack.c.b16 %v1285, %v1277
  %v2230 = vpack.c.b16 %v1286, %v1278
  %v2231 = vpack.c.b16 %v1287, %v1279
  %v2232 = vpack.c.b16 %v1288, %v1280
  %v2233 = vpack.c.b16 %v1289, %v1281
  %v2234 = vpack.c.b16 %v1290, %v1282
  %v2235 = vpack.c.b16 %v1299, %v1291
  %v2236 = vpack.c.b16 %v1300, %v1292
  %v2237 = vpack.c.b16 %v1301, %v1293
  %v2238 = vpack.c.b16 %v1302, %v1294
  %v2239 = vpack.c.b16 %v1303, %v1295
  %v2240 = vpack.c.b16 %v1304, %v1296
  %v2241 = vpack.c.b16 %v1305, %v1297
  %v2242 = vpack.c.b16 %v1306, %v1298
  %v2243 = vpack.c.b16 %v1315, %v1307
  %v2244 = vpack.c.b16 %v1316, %v1308
  %v2245 = vpack.c.b16 %v1317, %v1309
  %v2246 = vpack.c.b16 %v1318, %v1310
  %v2247 = vpack.c.b16 %v1319, %v1311
  %v2248 = vpack.c.b16 %v1320, %v1312
  %v2249 = vpack.c.b16 %v1321, %v1313
  %v2250 = vpack.c.b16 %v1322, %v1314
  %v2251 = vpack.c.b16 %v1331, %v1323
  %v2252 = vpack.c.b16 %v1332, %v1324
  %v2253 = vpack.c.b16 %v1333, %v1325
  %v2254 = vpack.c.b16 %v1334, %v1326
  %v2255 = vpack.c.b16 %v1335, %v1327
  %v2256 = vpack.c.b16 %v1336, %v1328
  %v2257 = vpack.c.b16 %v1337, %v1329
  %v2258 = vpack.c.b16 %v1338, %v1330
  %v2259 = vpack.c.b16 %v1347, %v1339
  %v2260 = vpack.c.b16 %v1348, %v1340
  %v2261 = vpack.c.b16 %v1349, %v1341
  %v2262 = vpack.c.b16 %v1350, %v1342
  %v2263 = vpack.c.b16 %v1351, %v1343
  %v2264 = vpack.c.b16 %v1352, %v1344
  %v2265 = vpack.c.b16 %v1353, %v1345
  %v2266 = vpack.c.b16 %v1354, %v1346
  %v2267 = vpack.c.b16 %v1363, %v1355
  %v2268 = vpack.c.b16 %v1364, %v1356
  %v2269 = vpack.c.b16 %v1365, %v1357
  %v2270 = vpack.c.b16 %v1366, %v1358
  %v2271 = vpack.c.b16 %v1367, %v1359
  %v2272 = vpack.c.b16 %v1368, %v1360
  %v2273 = vpack.c.b16 %v1369, %v1361
  %v2274 = vpack.c.b16 %v1370, %v1362
  %v2275 = vpack.c.b16 %v1379, %v1371
  %v2276 = vpack.c.b16 %v1380, %v1372
  %v2277 = vpack.c.b16 %v1381, %v1373
  %v2278 = vpack.c.b16 %v1382, %v1374
  %v2279 = vpack.c.b16 %v1383, %v1375
  %v2280 = vpack.c.b16 %v1384, %v1376
  %v2281 = vpack.c.b16 %v1385, %v1377
  %v2282 = vpack.c.b16 %v1386, %v1378
  %v2283 = vpack.c.b16 %v1395, %v1387
  %v2284 = vpack.c.b16 %v1396, %v1388
  %v2285 = vpack.c.b16 %v1397, %v1389
  %v2286 = vpack.c.b16 %v1398, %v1390
  %v2287 = vpack.c.b16 %v1399, %v1391
  %v2288 = vpack.c.b16 %v1400, %v1392
  %v2289 = vpack.c.b16 %v1401, %v1393
  %v2290 = vpack.c.b16 %v1402, %v1394
  %v2291 = vpack.c.b16 %v1411, %v1403
  %v2292 = vpack.c.b16 %v1412, %v1404
  %v2293 = vpack.c.b16 %v1413, %v1405
  %v2294 = vpack.c.b16 %v1414, %v1406
  %v2295 = vpack.c.b16 %v1415, %v1407
  %v2296 = vpack.c.b16 %v1416, %v1408
  %v2297 = vpack.c.b16 %v1417, %v1409
  %v2298 = vpack.c.b16 %v1418, %v1410
  %v2299 = vpack.c.b16 %v1427, %v1419
  %v2300 = vpack.c.b16 %v1428, %v1420
  %v2301 = vpack.c.b16 %v1429, %v1421
  %v2302 = vpack.c.b16 %v1430, %v1422
  %v2303 = vpack.c.b16 %v1431, %v1423
  %v2304 = vpack.c.b16 %v1432, %v1424
  %v2305 = vpack.c.b16 %v1433, %v1425
  %v2306 = vpack.c.b16 %v1434, %v1426
  %v2307 = vpack.c.b16 %v1443, %v1435
  %v2308 = vpack.c.b16 %v1444, %v1436
  %v2309 = vpack.c.b16 %v1445, %v1437
  %v2310 = vpack.c.b16 %v1446, %v1438
  %v2311 = vpack.c.b16 %v1447, %v1439
  %v2312 = vpack.c.b16 %v1448, %v1440
  %v2313 = vpack.c.b16 %v1449, %v1441
  %v2314 = vpack.c.b16 %v1450, %v1442
  %v2315 = vpack.c.b16 %v1459, %v1451
  %v2316 = vpack.c.b16 %v1460, %v1452
  %v2317 = vpack.c.b16 %v1461, %v1453
  %v2318 = vpack.c.b16 %v1462, %v1454
  %v2319 = vpack.c.b16 %v1463, %v1455
  %v2320 = vpack.c.b16 %v1464, %v1456
  %v2321 = vpack.c.b16 %v1465, %v1457
  %v2322 = vpack.c.b16 %v1466, %v1458
  %v2323 = vpack.c.b16 %v1475, %v1467
  %v2324 = vpack.c.b16 %v1476, %v1468
  %v2325 = vpack.c.b16 %v1477, %v1469
  %v2326 = vpack.c.b16 %v1478, %v1470
  %v2327 = vpack.c.b16 %v1479, %v1471
  %v2328 = vpack.c.b16 %v1480, %v1472
  %v2329 = vpack.c.b16 %v1481, %v1473
  %v2330 = vpack.c.b16 %v1482, %v1474
  %v2331 = vpack.c.b16 %v1491, %v1483
  %v2332 = vpack.c.b16 %v1492, %v1484
  %v2333 = vpack.c.b16 %v1493, %v1485
  %v2334 = vpack.c.b16 %v1494, %v1486
  %v2335 = vpack.c.b16 %v1495, %v1487
  %v2336 = vpack.c.b16 %v1496, %v1488
  %v2337 = vpack.c.b16 %v1497, %v1489
  %v2338 = vpack.c.b16 %v1498, %v1490
  %v2339 = vpack.c.b16 %v1507, %v1499
  %v2340 = vpack.c.b16 %v1508, %v1500
  %v2341 = vpack.c.b16 %v1509, %v1501
  %v2342 = vpack.c.b16 %v1510, %v1502
  %v2343 = vpack.c.b16 %v1511, %v1503
  %v2344 = vpack.c.b16 %v1512, %v1504
  %v2345 = vpack.c.b16 %v1513, %v1505
  %v2346 = vpack.c.b16 %v1514, %v1506
  %v2347 = vpack.c.b16 %v1523, %v1515
  %v2348 = vpack.c.b16 %v1524, %v1516
  %v2349 = vpack.c.b16 %v1525, %v1517
  %v2350 = vpack.c.b16 %v1526, %v1518
  %v2351 = vpack.c.b16 %v1527, %v1519
  %v2352 = vpack.c.b16 %v1528, %v1520
  %v2353 = vpack.c.b16 %v1529, %v1521
  %v2354 = vpack.c.b16 %v1530, %v1522
  %v2355 = vpack.c.b16 %v1539, %v1531
  %v2356 = vpack.c.b16 %v1540, %v1532
  %v2357 = vpack.c.b16 %v1541, %v1533
  %v2358 = vpack.c.b16 %v1542, %v1534
  %v2359 = vpack.c.b16 %v1543, %v1535
  %v2360 = vpack.c.b16 %v1544, %v1536
  %v2361 = vpack.c.b16 %v1545, %v1537
  %v2362 = vpack.c.b16 %v1546, %v1538
  %v2363 = vpack.c.b16 %v1555, %v1547
  %v2364 = vpack.c.b16 %v1556, %v1548
  %v2365 = vpack.c.b16 %v1557, %v1549
  %v2366 = vpack.c.b16 %v1558, %v1550
  %v2367 = vpack.c.b16 %v1559, %v1551
  %v2368 = vpack.c.b16 %v1560, %v1552
  %v2369 = vpack.c.b16 %v1561, %v1553
  %v2370 = vpack.c.b16 %v1562, %v1554
  %v2371 = vpack.c.b16 %v1571, %v1563
  %v2372 = vpack.c.b16 %v1572, %v1564
  %v2373 = vpack.c.b16 %v1573, %v1565
  %v2374 = vpack.c.b16 %v1574, %v1566
  %v2375 = vpack.c.b16 %v1575, %v1567
  %v2376 = vpack.c.b16 %v1576, %v1568
  %v2377 = vpack.c.b16 %v1577, %v1569
  %v2378 = vpack.c.b16 %v1578, %v1570
  %v2379 = vpack.c.b16 %v1587, %v1579
  %v2380 = vpack.c.b16 %v1588, %v1580
  %v2381 = vpack.c.b16 %v1589, %v1581
  %v2382 = vpack.c.b16 %v1590, %v1582
  %v2383 = vpack.c.b16 %v1591, %v1583
  %v2384 = vpack.c.b16 %v1592, %v1584
  %v2385 = vpack.c.b16 %v1593, %v1585
  %v2386 = vpack.c.b16 %v1594, %v1586
  %v2387 = vpack.c.b16 %v1603, %v1595
  %v2388 = vpack.c.b16 %v1604, %v1596
  %v2389 = vpack.c.b16 %v1605, %v1597
  %v2390 = vpack.c.b16 %v1606, %v1598
  %v2391 = vpack.c.b16 %v1607, %v1599
  %v2392 = vpack.c.b16 %v1608, %v1600
  %v2393 = vpack.c.b16 %v1609, %v1601
  %v2394 = vpack.c.b16 %v1610, %v1602
  %v2395 = vpack.c.b16 %v1619, %v1611
  %v2396 = vpack.c.b16 %v1620, %v1612
  %v2397 = vpack.c.b16 %v1621, %v1613
  %v2398 = vpack.c.b16 %v1622, %v1614
  %v2399 = vpack.c.b16 %v1623, %v1615
  %v2400 = vpack.c.b16 %v1624, %v1616
  %v2401 = vpack.c.b16 %v1625, %v1617
  %v2402 = vpack.c.b16 %v1626, %v1618
  %v2403 = vpack.c.b16 %v1635, %v1627
  %v2404 = vpack.c.b16 %v1636, %v1628
  %v2405 = vpack.c.b16 %v1637, %v1629
  %v2406 = vpack.c.b16 %v1638, %v1630
  %v2407 = vpack.c.b16 %v1639, %v1631
  %v2408 = vpack.c.b16 %v1640, %v1632
  %v2409 = vpack.c.b16 %v1641, %v1633
  %v2410 = vpack.c.b16 %v1642, %v1634
  %v2411 = vpack.c.b16 %v1651, %v1643
  %v2412 = vpack.c.b16 %v1652, %v1644
  %v2413 = vpack.c.b16 %v1653, %v1645
  %v2414 = vpack.c.b16 %v1654, %v1646
  %v2415 = vpack.c.b16 %v1655, %v1647
  %v2416 = vpack.c.b16 %v1656, %v1648
  %v2417 = vpack.c.b16 %v1657, %v1649
  %v2418 = vpack.c.b16 %v1658, %v1650
  %v2419 = vpack.c.b16 %v1667, %v1659
  %v2420 = vpack.c.b16 %v1668, %v1660
  %v2421 = vpack.c.b16 %v1669, %v1661
  %v2422 = vpack.c.b16 %v1670, %v1662
  %v2423 = vpack.c.b16 %v1671, %v1663
  %v2424 = vpack.c.b16 %v1672, %v1664
  %v2425 = vpack.c.b16 %v1673, %v1665
  %v2426 = vpack.c.b16 %v1674, %v1666
  %v2427 = vpack.c.b16 %v1683, %v1675
  %v2428 = vpack.c.b16 %v1684, %v1676
  %v2429 = vpack.c.b16 %v1685, %v1677
  %v2430 = vpack.c.b16 %v1686, %v1678
  %v2431 = vpack.c.b16 %v1687, %v1679
  %v2432 = vpack.c.b16 %v1688, %v1680
  %v2433 = vpack.c.b16 %v1689, %v1681
  %v2434 = vpack.c.b16 %v1690, %v1682
  %v2435 = vpack.c.b16 %v1699, %v1691
  %v2436 = vpack.c.b16 %v1700, %v1692
  %v2437 = vpack.c.b16 %v1701, %v1693
  %v2438 = vpack.c.b16 %v1702, %v1694
  %v2439 = vpack.c.b16 %v1703, %v1695
  %v2440 = vpack.c.b16 %v1704, %v1696
  %v2441 = vpack.c.b16 %v1705, %v1697
  %v2442 = vpack.c.b16 %v1706, %v1698
  %v2443 = vpack.c.b16 %v1715, %v1707
  %v2444 = vpack.c.b16 %v1716, %v1708
  %v2445 = vpack.c.b16 %v1717, %v1709
  %v2446 = vpack.c.b16 %v1718, %v1710
  %v2447 = vpack.c.b16 %v1719, %v1711
  %v2448 = vpack.c.b16 %v1720, %v1712
  %v2449 = vpack.c.b16 %v1721, %v1713
  %v2450 = vpack.c.b16 %v1722, %v1714
  %v2451 = vpack.c.b16 %v1731, %v1723
  %v2452 = vpack.c.b16 %v1732, %v1724
  %v2453 = vpack.c.b16 %v1733, %v1725
  %v2454 = vpack.c.b16 %v1734, %v1726
  %v2455 = vpack.c.b16 %v1735, %v1727
  %v2456 = vpack.c.b16 %v1736, %v1728
  %v2457 = vpack.c.b16 %v1737, %v1729
  %v2458 = vpack.c.b16 %v1738, %v1730
  %v2459 = vpack.c.b16 %v1747, %v1739
  %v2460 = vpack.c.b16 %v1748, %v1740
  %v2461 = vpack.c.b16 %v1749, %v1741
  %v2462 = vpack.c.b16 %v1750, %v1742
  %v2463 = vpack.c.b16 %v1751, %v1743
  %v2464 = vpack.c.b16 %v1752, %v1744
  %v2465 = vpack.c.b16 %v1753, %v1745
  %v2466 = vpack.c.b16 %v1754, %v1746
  %v2467 = vpack.c.b16 %v1763, %v1755
  %v2468 = vpack.c.b16 %v1764, %v1756
  %v2469 = vpack.c.b16 %v1765, %v1757
  %v2470 = vpack.c.b16 %v1766, %v1758
  %v2471 = vpack.c.b16 %v1767, %v1759
  %v2472 = vpack.c.b16 %v1768, %v1760
  %v2473 = vpack.c.b16 %v1769, %v1761
  %v2474 = vpack.c.b16 %v1770, %v1762
  %v2475 = vpack.c.b16 %v1779, %v1771
  %v2476 = vpack.c.b16 %v1780, %v1772
  %v2477 = vpack.c.b16 %v1781, %v1773
  %v2478 = vpack.c.b16 %v1782, %v1774
  %v2479 = vpack.c.b16 %v1783, %v1775
  %v2480 = vpack.c.b16 %v1784, %v1776
  %v2481 = vpack.c.b16 %v1785, %v1777
  %v2482 = vpack.c.b16 %v1786, %v1778
  %v2483 = vpack.c.b16 %v1795, %v1787
  %v2484 = vpack.c.b16 %v1796, %v1788
  %v2485 = vpack.c.b16 %v1797, %v1789
  %v2486 = vpack.c.b16 %v1798, %v1790
  %v2487 = vpack.c.b16 %v1799, %v1791
  %v2488 = vpack.c.b16 %v1800, %v1792
  %v2489 = vpack.c.b16 %v1801, %v1793
  %v2490 = vpack.c.b16 %v1802, %v1794
  %v2491 = vpack.c.b16 %v1811, %v1803
  %v2492 = vpack.c.b16 %v1812, %v1804
  %v2493 = vpack.c.b16 %v1813, %v1805
  %v2494 = vpack.c.b16 %v1814, %v1806
  %v2495 = vpack.c.b16 %v1815, %v1807
  %v2496 = vpack.c.b16 %v1816, %v1808
  %v2497 = vpack.c.b16 %v1817, %v1809
  %v2498 = vpack.c.b16 %v1818, %v1810
  %v2499 = vpack.c.b16 %v1827, %v1819
  %v2500 = vpack.c.b16 %v1828, %v1820
  %v2501 = vpack.c.b16 %v1829, %v1821
  %v2502 = vpack.c.b16 %v1830, %v1822
  %v2503 = vpack.c.b16 %v1831, %v1823
  %v2504 = vpack.c.b16 %v1832, %v1824
  %v2505 = vpack.c.b16 %v1833, %v1825
  %v2506 = vpack.c.b16 %v1834, %v1826
  %v2507 = vpack.c.b16 %v1843, %v1835
  %v2508 = vpack.c.b16 %v1844, %v1836
  %v2509 = vpack.c.b16 %v1845, %v1837
  %v2510 = vpack.c.b16 %v1846, %v1838
  %v2511 = vpack.c.b16 %v1847, %v1839
  %v2512 = vpack.c.b16 %v1848, %v1840
  %v2513 = vpack.c.b16 %v1849, %v1841
  %v2514 = vpack.c.b16 %v1850, %v1842
  %v2515 = vpack.c.b16 %v1859, %v1851
  %v2516 = vpack.c.b16 %v1860, %v1852
  %v2517 = vpack.c.b16 %v1861, %v1853
  %v2518 = vpack.c.b16 %v1862, %v1854
  %v2519 = vpack.c.b16 %v1863, %v1855
  %v2520 = vpack.c.b16 %v1864, %v1856
  %v2521 = vpack.c.b16 %v1865, %v1857
  %v2522 = vpack.c.b16 %v1866, %v1858
  %v2523 = vpack.c.b16 %v1875, %v1867
  %v2524 = vpack.c.b16 %v1876, %v1868
  %v2525 = vpack.c.b16 %v1877, %v1869
  %v2526 = vpack.c.b16 %v1878, %v1870
  %v2527 = vpack.c.b16 %v1879, %v1871
  %v2528 = vpack.c.b16 %v1880, %v1872
  %v2529 = vpack.c.b16 %v1881, %v1873
  %v2530 = vpack.c.b16 %v1882, %v1874
  %v2531 = vpack.c.b16 %v1891, %v1883
  %v2532 = vpack.c.b16 %v1892, %v1884
  %v2533 = vpack.c.b16 %v1893, %v1885
  %v2534 = vpack.c.b16 %v1894, %v1886
  %v2535 = vpack.c.b16 %v1895, %v1887
  %v2536 = vpack.c.b16 %v1896, %v1888
  %v2537 = vpack.c.b16 %v1897, %v1889
  %v2538 = vpack.c.b16 %v1898, %v1890
  %v2539 = vpack.c.b16 %v1907, %v1899
  %v2540 = vpack.c.b16 %v1908, %v1900
  %v2541 = vpack.c.b16 %v1909, %v1901
  %v2542 = vpack.c.b16 %v1910, %v1902
  %v2543 = vpack.c.b16 %v1911, %v1903
  %v2544 = vpack.c.b16 %v1912, %v1904
  %v2545 = vpack.c.b16 %v1913, %v1905
  %v2546 = vpack.c.b16 %v1914, %v1906
  %v2547 = vpack.c.b16 %v1923, %v1915
  %v2548 = vpack.c.b16 %v1924, %v1916
  %v2549 = vpack.c.b16 %v1925, %v1917
  %v2550 = vpack.c.b16 %v1926, %v1918
  %v2551 = vpack.c.b16 %v1927, %v1919
  %v2552 = vpack.c.b16 %v1928, %v1920
  %v2553 = vpack.c.b16 %v1929, %v1921
  %v2554 = vpack.c.b16 %v1930, %v1922
  %v2555 = vpack.c.b16 %v1939, %v1931
  %v2556 = vpack.c.b16 %v1940, %v1932
  %v2557 = vpack.c.b16 %v1941, %v1933
  %v2558 = vpack.c.b16 %v1942, %v1934
  %v2559 = vpack.c.b16 %v1943, %v1935
  %v2560 = vpack.c.b16 %v1944, %v1936
  %v2561 = vpack.c.b16 %v1945, %v1937
  %v2562 = vpack.c.b16 %v1946, %v1938
  %v2563 = vpack.c.b16 %v1955, %v1947
  %v2564 = vpack.c.b16 %v1956, %v1948
  %v2565 = vpack.c.b16 %v1957, %v1949
  %v2566 = vpack.c.b16 %v1958, %v1950
  %v2567 = vpack.c.b16 %v1959, %v1951
  %v2568 = vpack.c.b16 %v1960, %v1952
  %v2569 = vpack.c.b16 %v1961, %v1953
  %v2570 = vpack.c.b16 %v1962, %v1954
  %v2571 = vpack.c.b16 %v1971, %v1963
  %v2572 = vpack.c.b16 %v1972, %v1964
  %v2573 = vpack.c.b16 %v1973, %v1965
  %v2574 = vpack.c.b16 %v1974, %v1966
  %v2575 = vpack.c.b16 %v1975, %v1967
  %v2576 = vpack.c.b16 %v1976, %v1968
  %v2577 = vpack.c.b16 %v1977, %v1969
  %v2578 = vpack.c.b16 %v1978, %v1970
  %v2579 = vpack.c.b16 %v1987, %v1979
  %v2580 = vpack.c.b16 %v1988, %v1980
  %v2581 = vpack.c.b16 %v1989, %v1981
  %v2582 = vpack.c.b16 %v1990, %v1982
  %v2583 = vpack.c.b16 %v1991, %v1983
  %v2584 = vpack.c.b16 %v1992, %v1984
  %v2585 = vpack.c.b16 %v1993, %v1985
  %v2586 = vpack.c.b16 %v1994, %v1986
  %v2587 = vpack.c.b16 %v2003, %v1995
  %v2588 = vpack.c.b16 %v2004, %v1996
  %v2589 = vpack.c.b16 %v2005, %v1997
  %v2590 = vpack.c.b16 %v2006, %v1998
  %v2591 = vpack.c.b16 %v2007, %v1999
  %v2592 = vpack.c.b16 %v2008, %v2000
  %v2593 = vpack.c.b16 %v2009, %v2001
  %v2594 = vpack.c.b16 %v2010, %v2002
  %v2595 = vpack.c.b16 %v2019, %v2011
  %v2596 = vpack.c.b16 %v2020, %v2012
  %v2597 = vpack.c.b16 %v2021, %v2013
  %v2598 = vpack.c.b16 %v2022, %v2014
  %v2599 = vpack.c.b16 %v2023, %v2015
  %v2600 = vpack.c.b16 %v2024, %v2016
  %v2601 = vpack.c.b16 %v2025, %v2017
  %v2602 = vpack.c.b16 %v2026, %v2018
  %v2603 = vpack.c.b16 %v2035, %v2027
  %v2604 = vpack.c.b16 %v2036, %v2028
  %v2605 = vpack.c.b16 %v2037, %v2029
  %v2606 = vpack.c.b16 %v2038, %v2030
  %v2607 = vpack.c.b16 %v2039, %v2031
  %v2608 = vpack.c.b16 %v2040, %v2032
  %v2609 = vpack.c.b16 %v2041, %v2033
  %v2610 = vpack.c.b16 %v2042, %v2034
  %v2611 = vpack.c.b16 %v2051, %v2043
  %v2612 = vpack.c.b16 %v2052, %v2044
  %v2613 = vpack.c.b16 %v2053, %v2045
  %v2614 = vpack.c.b16 %v2054, %v2046
  %v2615 = vpack.c.b16 %v2055, %v2047
  %v2616 = vpack.c.b16 %v2056, %v2048
  %v2617 = vpack.c.b16 %v2057, %v2049
  %v2618 = vpack.c.b16 %v2058, %v2050
  %v2619 = vpack.c.b16 %v2067, %v2059
  %v2620 = vpack.c.b16 %v2068, %v2060
  %v2621 = vpack.c.b16 %v2069, %v2061
  %v2622 = vpack.c.b16 %v2070, %v2062
  %v2623 = vpack.c.b16 %v2071, %v2063
  %v2624 = vpack.c.b16 %v2072, %v2064
  %v2625 = vpack.c.b16 %v2073, %v2065
  %v2626 = vpack.c.b16 %v2074, %v2066
  %v2627 = vpack.c.b16 %v2083, %v2075
  %v2628 = vpack.c.b16 %v2084, %v2076
  %v2629 = vpack.c.b16 %v2085, %v2077
  %v2630 = vpack.c.b16 %v2086, %v2078
  %v2631 = vpack.c.b16 %v2087, %v2079
  %v2632 = vpack.c.b16 %v2088, %v2080
  %v2633 = vpack.c.b16 %v2089, %v2081
  %v2634 = vpack.c.b16 %v2090, %v2082
  %v2635 = vpack.c.b16 %v2099, %v2091
  %v2636 = vpack.c.b16 %v2100, %v2092
  %v2637 = vpack.c.b16 %v2101, %v2093
  %v2638 = vpack.c.b16 %v2102, %v2094
  %v2639 = vpack.c.b16 %v2103, %v2095
  %v2640 = vpack.c.b16 %v2104, %v2096
  %v2641 = vpack.c.b16 %v2105, %v2097
  %v2642 = vpack.c.b16 %v2106, %v2098
  %v2643 = vpack.c.b16 %v2115, %v2107
  %v2644 = vpack.c.b16 %v2116, %v2108
  %v2645 = vpack.c.b16 %v2117, %v2109
  %v2646 = vpack.c.b16 %v2118, %v2110
  %v2647 = vpack.c.b16 %v2119, %v2111
  %v2648 = vpack.c.b16 %v2120, %v2112
  %v2649 = vpack.c.b16 %v2121, %v2113
  %v2650 = vpack.c.b16 %v2122, %v2114
  %v2651 = vpack.c.b16 %v2131, %v2123
  %v2652 = vpack.c.b16 %v2132, %v2124
  %v2653 = vpack.c.b16 %v2133, %v2125
  %v2654 = vpack.c.b16 %v2134, %v2126
  %v2655 = vpack.c.b16 %v2135, %v2127
  %v2656 = vpack.c.b16 %v2136, %v2128
  %v2657 = vpack.c.b16 %v2137, %v2129
  %v2658 = vpack.c.b16 %v2138, %v2130
  %v2659 = vpack.c.b16 %v2147, %v2139
  %v2660 = vpack.c.b16 %v2148, %v2140
  %v2661 = vpack.c.b16 %v2149, %v2141
  %v2662 = vpack.c.b16 %v2150, %v2142
  %v2663 = vpack.c.b16 %v2151, %v2143
  %v2664 = vpack.c.b16 %v2152, %v2144
  %v2665 = vpack.c.b16 %v2153, %v2145
  %v2666 = vpack.c.b16 %v2154, %v2146
  %3179 = vmatprep.subr.bf16.mxu0 %v2156
  %3180 = vmatpush1.bf16.msra.mxu0 %v2155
  %3181 = vmatprep.subr.bf16.mxu0 %v2164
  %3182 = vmatpush1.bf16.msra.mxu0 %v2163
  %3183 = vmatprep.subr.bf16.mxu0 %v2172
  %3184 = vmatpush1.bf16.msra.mxu0 %v2171
  %3185 = vmatprep.subr.bf16.mxu0 %v2180
  %3186 = vmatpush1.bf16.msra.mxu0 %v2179
  %3187 = vmatprep.subr.bf16.mxu0 %v2188
  %3188 = vmatpush1.bf16.msra.mxu0 %v2187
  %3189 = vmatprep.subr.bf16.mxu0 %v2196
  %3190 = vmatpush1.bf16.msra.mxu0 %v2195
  %3191 = vmatprep.subr.bf16.mxu0 %v2204
  %3192 = vmatpush1.bf16.msra.mxu0 %v2203
  %3193 = vmatprep.subr.bf16.mxu0 %v2212
  %3194 = vmatpush1.bf16.msra.mxu0 %v2211
  %3195 = vmatprep.subr.bf16.mxu0 %v2220
  %3196 = vmatpush1.bf16.msra.mxu0 %v2219
  %3197 = vmatprep.subr.bf16.mxu0 %v2228
  %3198 = vmatpush1.bf16.msra.mxu0 %v2227
  %3199 = vmatprep.subr.bf16.mxu0 %v2236
  %3200 = vmatpush1.bf16.msra.mxu0 %v2235
  %3201 = vmatprep.subr.bf16.mxu0 %v2244
  %3202 = vmatpush1.bf16.msra.mxu0 %v2243
  %3203 = vmatprep.subr.bf16.mxu0 %v2252
  %3204 = vmatpush1.bf16.msra.mxu0 %v2251
  %3205 = vmatprep.subr.bf16.mxu0 %v2260
  %3206 = vmatpush1.bf16.msra.mxu0 %v2259
  %3207 = vmatprep.subr.bf16.mxu0 %v2268
  %3208 = vmatpush1.bf16.msra.mxu0 %v2267
  %3209 = vmatprep.subr.bf16.mxu0 %v2276
  %3210 = vmatpush1.bf16.msra.mxu0 %v2275
  %3211 = vmatprep.mubr.bf16.mxu0 %v604
  %3212 = vmatmul.mubr.bf16.gmra.mrb[0].mxu0 %v603
  %v3213 = vpop.f32.mrb[0].mxu0
  %v3214 = vadd.f32 %v554, %v3213
  %v3215 = vpop.f32.mrb[0].mxu0
  %v3216 = vadd.f32 %v558, %v3215
  %v3217 = vpop.f32.mrb[0].mxu0
  %v3218 = vpop.f32.mrb[0].mxu0
  %3219 = vdwg.mxu0
  %3220 = vmatprep.subr.bf16.mxu0 %v2284
  %3221 = vmatpush1.bf16.msra.mxu0 %v2283
  %3222 = vmatprep.subr.bf16.mxu0 %v2292
  %3223 = vmatpush1.bf16.msra.mxu0 %v2291
  %3224 = vmatprep.subr.bf16.mxu0 %v2300
  %3225 = vmatpush1.bf16.msra.mxu0 %v2299
  %3226 = vmatprep.subr.bf16.mxu0 %v2308
  %3227 = vmatpush1.bf16.msra.mxu0 %v2307
  %3228 = vmatprep.subr.bf16.mxu0 %v2316
  %3229 = vmatpush1.bf16.msra.mxu0 %v2315
  %3230 = vmatprep.subr.bf16.mxu0 %v2324
  %3231 = vmatpush1.bf16.msra.mxu0 %v2323
  %3232 = vmatprep.subr.bf16.mxu0 %v2332
  %3233 = vmatpush1.bf16.msra.mxu0 %v2331
  %3234 = vmatprep.subr.bf16.mxu0 %v2340
  %3235 = vmatpush1.bf16.msra.mxu0 %v2339
  %3236 = vmatprep.subr.bf16.mxu0 %v2348
  %3237 = vmatpush1.bf16.msra.mxu0 %v2347
  %3238 = vmatprep.subr.bf16.mxu0 %v2356
  %3239 = vmatpush1.bf16.msra.mxu0 %v2355
  %3240 = vmatprep.subr.bf16.mxu0 %v2364
  %3241 = vmatpush1.bf16.msra.mxu0 %v2363
  %3242 = vmatprep.subr.bf16.mxu0 %v2372
  %3243 = vmatpush1.bf16.msra.mxu0 %v2371
  %3244 = vmatprep.subr.bf16.mxu0 %v2380
  %3245 = vmatpush1.bf16.msra.mxu0 %v2379
  %3246 = vmatprep.subr.bf16.mxu0 %v2388
  %3247 = vmatpush1.bf16.msra.mxu0 %v2387
  %3248 = vmatprep.subr.bf16.mxu0 %v2396
  %3249 = vmatpush1.bf16.msra.mxu0 %v2395
  %3250 = vmatprep.subr.bf16.mxu0 %v2404
  %3251 = vmatpush1.bf16.msra.mxu0 %v2403
  %3252 = vmatprep.mubr.bf16.mxu0 %v606
  %3253 = vmatmul.mubr.bf16.gmra.mrb[0].mxu0 %v605
  %v3254 = vpop.f32.mrb[0].mxu0
  %v3255 = vadd.f32 %v3214, %v3254
  %v3256 = vpop.f32.mrb[0].mxu0
  %v3257 = vadd.f32 %v3216, %v3256
  %v3258 = vpop.f32.mrb[0].mxu0
  %v3259 = vpop.f32.mrb[0].mxu0
  %3260 = vdwg.mxu0
  %3261 = vmatprep.subr.bf16.mxu0 %v2412
  %3262 = vmatpush1.bf16.msra.mxu0 %v2411
  %3263 = vmatprep.subr.bf16.mxu0 %v2420
  %3264 = vmatpush1.bf16.msra.mxu0 %v2419
  %3265 = vmatprep.subr.bf16.mxu0 %v2428
  %3266 = vmatpush1.bf16.msra.mxu0 %v2427
  %3267 = vmatprep.subr.bf16.mxu0 %v2436
  %3268 = vmatpush1.bf16.msra.mxu0 %v2435
  %3269 = vmatprep.subr.bf16.mxu0 %v2444
  %3270 = vmatpush1.bf16.msra.mxu0 %v2443
  %3271 = vmatprep.subr.bf16.mxu0 %v2452
  %3272 = vmatpush1.bf16.msra.mxu0 %v2451
  %3273 = vmatprep.subr.bf16.mxu0 %v2460
  %3274 = vmatpush1.bf16.msra.mxu0 %v2459
  %3275 = vmatprep.subr.bf16.mxu0 %v2468
  %3276 = vmatpush1.bf16.msra.mxu0 %v2467
  %3277 = vmatprep.subr.bf16.mxu0 %v2476
  %3278 = vmatpush1.bf16.msra.mxu0 %v2475
  %3279 = vmatprep.subr.bf16.mxu0 %v2484
  %3280 = vmatpush1.bf16.msra.mxu0 %v2483
  %3281 = vmatprep.subr.bf16.mxu0 %v2492
  %3282 = vmatpush1.bf16.msra.mxu0 %v2491
  %3283 = vmatprep.subr.bf16.mxu0 %v2500
  %3284 = vmatpush1.bf16.msra.mxu0 %v2499
  %3285 = vmatprep.subr.bf16.mxu0 %v2508
  %3286 = vmatpush1.bf16.msra.mxu0 %v2507
  %3287 = vmatprep.subr.bf16.mxu0 %v2516
  %3288 = vmatpush1.bf16.msra.mxu0 %v2515
  %3289 = vmatprep.subr.bf16.mxu0 %v2524
  %3290 = vmatpush1.bf16.msra.mxu0 %v2523
  %3291 = vmatprep.subr.bf16.mxu0 %v2532
  %3292 = vmatpush1.bf16.msra.mxu0 %v2531
  %3293 = vmatprep.mubr.bf16.mxu0 %v608
  %3294 = vmatmul.mubr.bf16.gmra.mrb[0].mxu0 %v607
  %v3295 = vpop.f32.mrb[0].mxu0
  %v3296 = vadd.f32 %v3255, %v3295
  %v3297 = vpop.f32.mrb[0].mxu0
  %v3298 = vadd.f32 %v3257, %v3297
  %v3299 = vpop.f32.mrb[0].mxu0
  %v3300 = vpop.f32.mrb[0].mxu0
  %3301 = vdwg.mxu0
  %3302 = vmatprep.subr.bf16.mxu0 %v2540
  %3303 = vmatpush1.bf16.msra.mxu0 %v2539
  %3304 = vmatprep.subr.bf16.mxu0 %v2548
  %3305 = vmatpush1.bf16.msra.mxu0 %v2547
  %3306 = vmatprep.subr.bf16.mxu0 %v2556
  %3307 = vmatpush1.bf16.msra.mxu0 %v2555
  %3308 = vmatprep.subr.bf16.mxu0 %v2564
  %3309 = vmatpush1.bf16.msra.mxu0 %v2563
  %3310 = vmatprep.subr.bf16.mxu0 %v2572
  %3311 = vmatpush1.bf16.msra.mxu0 %v2571
  %3312 = vmatprep.subr.bf16.mxu0 %v2580
  %3313 = vmatpush1.bf16.msra.mxu0 %v2579
  %3314 = vmatprep.subr.bf16.mxu0 %v2588
  %3315 = vmatpush1.bf16.msra.mxu0 %v2587
  %3316 = vmatprep.subr.bf16.mxu0 %v2596
  %3317 = vmatpush1.bf16.msra.mxu0 %v2595
  %3318 = vmatprep.subr.bf16.mxu0 %v2604
  %3319 = vmatpush1.bf16.msra.mxu0 %v2603
  %3320 = vmatprep.subr.bf16.mxu0 %v2612
  %3321 = vmatpush1.bf16.msra.mxu0 %v2611
  %3322 = vmatprep.subr.bf16.mxu0 %v2620
  %3323 = vmatpush1.bf16.msra.mxu0 %v2619
  %3324 = vmatprep.subr.bf16.mxu0 %v2628
  %3325 = vmatpush1.bf16.msra.mxu0 %v2627
  %3326 = vmatprep.subr.bf16.mxu0 %v2636
  %3327 = vmatpush1.bf16.msra.mxu0 %v2635
  %3328 = vmatprep.subr.bf16.mxu0 %v2644
  %3329 = vmatpush1.bf16.msra.mxu0 %v2643
  %3330 = vmatprep.subr.bf16.mxu0 %v2652
  %3331 = vmatpush1.bf16.msra.mxu0 %v2651
  %3332 = vmatprep.subr.bf16.mxu0 %v2660
  %3333 = vmatpush1.bf16.msra.mxu0 %v2659
  %3334 = vmatprep.mubr.bf16.mxu0 %v610
  %3335 = vmatmul.mubr.bf16.gmra.mrb[0].mxu0 %v609
  %v3336 = vpop.f32.mrb[0].mxu0
  %v3337 = vadd.f32 %v3296, %v3336
  %v3338 = vpop.f32.mrb[0].mxu0
  %v3339 = vadd.f32 %v3298, %v3338
  %v3340 = vpop.f32.mrb[0].mxu0
  %v3341 = vpop.f32.mrb[0].mxu0
  %3342 = vdwg.mxu0
  %3343 = vmatprep.subr.bf16.mxu0 %v2158
  %3344 = vmatpush1.bf16.msra.mxu0 %v2157
  %3345 = vmatprep.subr.bf16.mxu0 %v2166
  %3346 = vmatpush1.bf16.msra.mxu0 %v2165
  %3347 = vmatprep.subr.bf16.mxu0 %v2174
  %3348 = vmatpush1.bf16.msra.mxu0 %v2173
  %3349 = vmatprep.subr.bf16.mxu0 %v2182
  %3350 = vmatpush1.bf16.msra.mxu0 %v2181
  %3351 = vmatprep.subr.bf16.mxu0 %v2190
  %3352 = vmatpush1.bf16.msra.mxu0 %v2189
  %3353 = vmatprep.subr.bf16.mxu0 %v2198
  %3354 = vmatpush1.bf16.msra.mxu0 %v2197
  %3355 = vmatprep.subr.bf16.mxu0 %v2206
  %3356 = vmatpush1.bf16.msra.mxu0 %v2205
  %3357 = vmatprep.subr.bf16.mxu0 %v2214
  %3358 = vmatpush1.bf16.msra.mxu0 %v2213
  %3359 = vmatprep.subr.bf16.mxu0 %v2222
  %3360 = vmatpush1.bf16.msra.mxu0 %v2221
  %3361 = vmatprep.subr.bf16.mxu0 %v2230
  %3362 = vmatpush1.bf16.msra.mxu0 %v2229
  %3363 = vmatprep.subr.bf16.mxu0 %v2238
  %3364 = vmatpush1.bf16.msra.mxu0 %v2237
  %3365 = vmatprep.subr.bf16.mxu0 %v2246
  %3366 = vmatpush1.bf16.msra.mxu0 %v2245
  %3367 = vmatprep.subr.bf16.mxu0 %v2254
  %3368 = vmatpush1.bf16.msra.mxu0 %v2253
  %3369 = vmatprep.subr.bf16.mxu0 %v2262
  %3370 = vmatpush1.bf16.msra.mxu0 %v2261
  %3371 = vmatprep.subr.bf16.mxu0 %v2270
  %3372 = vmatpush1.bf16.msra.mxu0 %v2269
  %3373 = vmatprep.subr.bf16.mxu0 %v2278
  %3374 = vmatpush1.bf16.msra.mxu0 %v2277
  %3375 = vmatprep.mubr.bf16.mxu0 %v604
  %3376 = vmatmul.mubr.bf16.gmra.mrb[0].mxu0 %v603
  %v3377 = vpop.f32.mrb[0].mxu0
  %v3378 = vadd.f32 %v562, %v3377
  %v3379 = vpop.f32.mrb[0].mxu0
  %v3380 = vadd.f32 %v566, %v3379
  %v3381 = vpop.f32.mrb[0].mxu0
  %v3382 = vpop.f32.mrb[0].mxu0
  %3383 = vdwg.mxu0
  %3384 = vmatprep.subr.bf16.mxu0 %v2286
  %3385 = vmatpush1.bf16.msra.mxu0 %v2285
  %3386 = vmatprep.subr.bf16.mxu0 %v2294
  %3387 = vmatpush1.bf16.msra.mxu0 %v2293
  %3388 = vmatprep.subr.bf16.mxu0 %v2302
  %3389 = vmatpush1.bf16.msra.mxu0 %v2301
  %3390 = vmatprep.subr.bf16.mxu0 %v2310
  %3391 = vmatpush1.bf16.msra.mxu0 %v2309
  %3392 = vmatprep.subr.bf16.mxu0 %v2318
  %3393 = vmatpush1.bf16.msra.mxu0 %v2317
  %3394 = vmatprep.subr.bf16.mxu0 %v2326
  %3395 = vmatpush1.bf16.msra.mxu0 %v2325
  %3396 = vmatprep.subr.bf16.mxu0 %v2334
  %3397 = vmatpush1.bf16.msra.mxu0 %v2333
  %3398 = vmatprep.subr.bf16.mxu0 %v2342
  %3399 = vmatpush1.bf16.msra.mxu0 %v2341
  %3400 = vmatprep.subr.bf16.mxu0 %v2350
  %3401 = vmatpush1.bf16.msra.mxu0 %v2349
  %3402 = vmatprep.subr.bf16.mxu0 %v2358
  %3403 = vmatpush1.bf16.msra.mxu0 %v2357
  %3404 = vmatprep.subr.bf16.mxu0 %v2366
  %3405 = vmatpush1.bf16.msra.mxu0 %v2365
  %3406 = vmatprep.subr.bf16.mxu0 %v2374
  %3407 = vmatpush1.bf16.msra.mxu0 %v2373
  %3408 = vmatprep.subr.bf16.mxu0 %v2382
  %3409 = vmatpush1.bf16.msra.mxu0 %v2381
  %3410 = vmatprep.subr.bf16.mxu0 %v2390
  %3411 = vmatpush1.bf16.msra.mxu0 %v2389
  %3412 = vmatprep.subr.bf16.mxu0 %v2398
  %3413 = vmatpush1.bf16.msra.mxu0 %v2397
  %3414 = vmatprep.subr.bf16.mxu0 %v2406
  %3415 = vmatpush1.bf16.msra.mxu0 %v2405
  %3416 = vmatprep.mubr.bf16.mxu0 %v606
  %3417 = vmatmul.mubr.bf16.gmra.mrb[0].mxu0 %v605
  %v3418 = vpop.f32.mrb[0].mxu0
  %v3419 = vadd.f32 %v3378, %v3418
  %v3420 = vpop.f32.mrb[0].mxu0
  %v3421 = vadd.f32 %v3380, %v3420
  %v3422 = vpop.f32.mrb[0].mxu0
  %v3423 = vpop.f32.mrb[0].mxu0
  %3424 = vdwg.mxu0
  %3425 = vmatprep.subr.bf16.mxu0 %v2414
  %3426 = vmatpush1.bf16.msra.mxu0 %v2413
  %3427 = vmatprep.subr.bf16.mxu0 %v2422
  %3428 = vmatpush1.bf16.msra.mxu0 %v2421
  %3429 = vmatprep.subr.bf16.mxu0 %v2430
  %3430 = vmatpush1.bf16.msra.mxu0 %v2429
  %3431 = vmatprep.subr.bf16.mxu0 %v2438
  %3432 = vmatpush1.bf16.msra.mxu0 %v2437
  %3433 = vmatprep.subr.bf16.mxu0 %v2446
  %3434 = vmatpush1.bf16.msra.mxu0 %v2445
  %3435 = vmatprep.subr.bf16.mxu0 %v2454
  %3436 = vmatpush1.bf16.msra.mxu0 %v2453
  %3437 = vmatprep.subr.bf16.mxu0 %v2462
  %3438 = vmatpush1.bf16.msra.mxu0 %v2461
  %3439 = vmatprep.subr.bf16.mxu0 %v2470
  %3440 = vmatpush1.bf16.msra.mxu0 %v2469
  %3441 = vmatprep.subr.bf16.mxu0 %v2478
  %3442 = vmatpush1.bf16.msra.mxu0 %v2477
  %3443 = vmatprep.subr.bf16.mxu0 %v2486
  %3444 = vmatpush1.bf16.msra.mxu0 %v2485
  %3445 = vmatprep.subr.bf16.mxu0 %v2494
  %3446 = vmatpush1.bf16.msra.mxu0 %v2493
  %3447 = vmatprep.subr.bf16.mxu0 %v2502
  %3448 = vmatpush1.bf16.msra.mxu0 %v2501
  %3449 = vmatprep.subr.bf16.mxu0 %v2510
  %3450 = vmatpush1.bf16.msra.mxu0 %v2509
  %3451 = vmatprep.subr.bf16.mxu0 %v2518
  %3452 = vmatpush1.bf16.msra.mxu0 %v2517
  %3453 = vmatprep.subr.bf16.mxu0 %v2526
  %3454 = vmatpush1.bf16.msra.mxu0 %v2525
  %3455 = vmatprep.subr.bf16.mxu0 %v2534
  %3456 = vmatpush1.bf16.msra.mxu0 %v2533
  %3457 = vmatprep.mubr.bf16.mxu0 %v608
  %3458 = vmatmul.mubr.bf16.gmra.mrb[0].mxu0 %v607
  %v3459 = vpop.f32.mrb[0].mxu0
  %v3460 = vadd.f32 %v3419, %v3459
  %v3461 = vpop.f32.mrb[0].mxu0
  %v3462 = vadd.f32 %v3421, %v3461
  %v3463 = vpop.f32.mrb[0].mxu0
  %v3464 = vpop.f32.mrb[0].mxu0
  %3465 = vdwg.mxu0
  %3466 = vmatprep.subr.bf16.mxu0 %v2542
  %3467 = vmatpush1.bf16.msra.mxu0 %v2541
  %3468 = vmatprep.subr.bf16.mxu0 %v2550
  %3469 = vmatpush1.bf16.msra.mxu0 %v2549
  %3470 = vmatprep.subr.bf16.mxu0 %v2558
  %3471 = vmatpush1.bf16.msra.mxu0 %v2557
  %3472 = vmatprep.subr.bf16.mxu0 %v2566
  %3473 = vmatpush1.bf16.msra.mxu0 %v2565
  %3474 = vmatprep.subr.bf16.mxu0 %v2574
  %3475 = vmatpush1.bf16.msra.mxu0 %v2573
  %3476 = vmatprep.subr.bf16.mxu0 %v2582
  %3477 = vmatpush1.bf16.msra.mxu0 %v2581
  %3478 = vmatprep.subr.bf16.mxu0 %v2590
  %3479 = vmatpush1.bf16.msra.mxu0 %v2589
  %3480 = vmatprep.subr.bf16.mxu0 %v2598
  %3481 = vmatpush1.bf16.msra.mxu0 %v2597
  %3482 = vmatprep.subr.bf16.mxu0 %v2606
  %3483 = vmatpush1.bf16.msra.mxu0 %v2605
  %3484 = vmatprep.subr.bf16.mxu0 %v2614
  %3485 = vmatpush1.bf16.msra.mxu0 %v2613
  %3486 = vmatprep.subr.bf16.mxu0 %v2622
  %3487 = vmatpush1.bf16.msra.mxu0 %v2621
  %3488 = vmatprep.subr.bf16.mxu0 %v2630
  %3489 = vmatpush1.bf16.msra.mxu0 %v2629
  %3490 = vmatprep.subr.bf16.mxu0 %v2638
  %3491 = vmatpush1.bf16.msra.mxu0 %v2637
  %3492 = vmatprep.subr.bf16.mxu0 %v2646
  %3493 = vmatpush1.bf16.msra.mxu0 %v2645
  %3494 = vmatprep.subr.bf16.mxu0 %v2654
  %3495 = vmatpush1.bf16.msra.mxu0 %v2653
  %3496 = vmatprep.subr.bf16.mxu0 %v2662
  %3497 = vmatpush1.bf16.msra.mxu0 %v2661
  %3498 = vmatprep.mubr.bf16.mxu0 %v610
  %3499 = vmatmul.mubr.bf16.gmra.mrb[0].mxu0 %v609
  %v3500 = vpop.f32.mrb[0].mxu0
  %v3501 = vadd.f32 %v3460, %v3500
  %v3502 = vpop.f32.mrb[0].mxu0
  %v3503 = vadd.f32 %v3462, %v3502
  %v3504 = vpop.f32.mrb[0].mxu0
  %v3505 = vpop.f32.mrb[0].mxu0
  %3506 = vdwg.mxu0
  %3507 = vmatprep.subr.bf16.mxu0 %v2160
  %3508 = vmatpush1.bf16.msra.mxu0 %v2159
  %3509 = vmatprep.subr.bf16.mxu0 %v2168
  %3510 = vmatpush1.bf16.msra.mxu0 %v2167
  %3511 = vmatprep.subr.bf16.mxu0 %v2176
  %3512 = vmatpush1.bf16.msra.mxu0 %v2175
  %3513 = vmatprep.subr.bf16.mxu0 %v2184
  %3514 = vmatpush1.bf16.msra.mxu0 %v2183
  %3515 = vmatprep.subr.bf16.mxu0 %v2192
  %3516 = vmatpush1.bf16.msra.mxu0 %v2191
  %3517 = vmatprep.subr.bf16.mxu0 %v2200
  %3518 = vmatpush1.bf16.msra.mxu0 %v2199
  %3519 = vmatprep.subr.bf16.mxu0 %v2208
  %3520 = vmatpush1.bf16.msra.mxu0 %v2207
  %3521 = vmatprep.subr.bf16.mxu0 %v2216
  %3522 = vmatpush1.bf16.msra.mxu0 %v2215
  %3523 = vmatprep.subr.bf16.mxu0 %v2224
  %3524 = vmatpush1.bf16.msra.mxu0 %v2223
  %3525 = vmatprep.subr.bf16.mxu0 %v2232
  %3526 = vmatpush1.bf16.msra.mxu0 %v2231
  %3527 = vmatprep.subr.bf16.mxu0 %v2240
  %3528 = vmatpush1.bf16.msra.mxu0 %v2239
  %3529 = vmatprep.subr.bf16.mxu0 %v2248
  %3530 = vmatpush1.bf16.msra.mxu0 %v2247
  %3531 = vmatprep.subr.bf16.mxu0 %v2256
  %3532 = vmatpush1.bf16.msra.mxu0 %v2255
  %3533 = vmatprep.subr.bf16.mxu0 %v2264
  %3534 = vmatpush1.bf16.msra.mxu0 %v2263
  %3535 = vmatprep.subr.bf16.mxu0 %v2272
  %3536 = vmatpush1.bf16.msra.mxu0 %v2271
  %3537 = vmatprep.subr.bf16.mxu0 %v2280
  %3538 = vmatpush1.bf16.msra.mxu0 %v2279
  %3539 = vmatprep.mubr.bf16.mxu0 %v604
  %3540 = vmatmul.mubr.bf16.gmra.mrb[0].mxu0 %v603
  %v3541 = vpop.f32.mrb[0].mxu0
  %v3542 = vadd.f32 %v570, %v3541
  %v3543 = vpop.f32.mrb[0].mxu0
  %v3544 = vadd.f32 %v574, %v3543
  %v3545 = vpop.f32.mrb[0].mxu0
  %v3546 = vpop.f32.mrb[0].mxu0
  %3547 = vdwg.mxu0
  %3548 = vmatprep.subr.bf16.mxu0 %v2288
  %3549 = vmatpush1.bf16.msra.mxu0 %v2287
  %3550 = vmatprep.subr.bf16.mxu0 %v2296
  %3551 = vmatpush1.bf16.msra.mxu0 %v2295
  %3552 = vmatprep.subr.bf16.mxu0 %v2304
  %3553 = vmatpush1.bf16.msra.mxu0 %v2303
  %3554 = vmatprep.subr.bf16.mxu0 %v2312
  %3555 = vmatpush1.bf16.msra.mxu0 %v2311
  %3556 = vmatprep.subr.bf16.mxu0 %v2320
  %3557 = vmatpush1.bf16.msra.mxu0 %v2319
  %3558 = vmatprep.subr.bf16.mxu0 %v2328
  %3559 = vmatpush1.bf16.msra.mxu0 %v2327
  %3560 = vmatprep.subr.bf16.mxu0 %v2336
  %3561 = vmatpush1.bf16.msra.mxu0 %v2335
  %3562 = vmatprep.subr.bf16.mxu0 %v2344
  %3563 = vmatpush1.bf16.msra.mxu0 %v2343
  %3564 = vmatprep.subr.bf16.mxu0 %v2352
  %3565 = vmatpush1.bf16.msra.mxu0 %v2351
  %3566 = vmatprep.subr.bf16.mxu0 %v2360
  %3567 = vmatpush1.bf16.msra.mxu0 %v2359
  %3568 = vmatprep.subr.bf16.mxu0 %v2368
  %3569 = vmatpush1.bf16.msra.mxu0 %v2367
  %3570 = vmatprep.subr.bf16.mxu0 %v2376
  %3571 = vmatpush1.bf16.msra.mxu0 %v2375
  %3572 = vmatprep.subr.bf16.mxu0 %v2384
  %3573 = vmatpush1.bf16.msra.mxu0 %v2383
  %3574 = vmatprep.subr.bf16.mxu0 %v2392
  %3575 = vmatpush1.bf16.msra.mxu0 %v2391
  %3576 = vmatprep.subr.bf16.mxu0 %v2400
  %3577 = vmatpush1.bf16.msra.mxu0 %v2399
  %3578 = vmatprep.subr.bf16.mxu0 %v2408
  %3579 = vmatpush1.bf16.msra.mxu0 %v2407
  %3580 = vmatprep.mubr.bf16.mxu0 %v606
  %3581 = vmatmul.mubr.bf16.gmra.mrb[0].mxu0 %v605
  %v3582 = vpop.f32.mrb[0].mxu0
  %v3583 = vadd.f32 %v3542, %v3582
  %v3584 = vpop.f32.mrb[0].mxu0
  %v3585 = vadd.f32 %v3544, %v3584
  %v3586 = vpop.f32.mrb[0].mxu0
  %v3587 = vpop.f32.mrb[0].mxu0
  %3588 = vdwg.mxu0
  %3589 = vmatprep.subr.bf16.mxu0 %v2416
  %3590 = vmatpush1.bf16.msra.mxu0 %v2415
  %3591 = vmatprep.subr.bf16.mxu0 %v2424
  %3592 = vmatpush1.bf16.msra.mxu0 %v2423
  %3593 = vmatprep.subr.bf16.mxu0 %v2432
  %3594 = vmatpush1.bf16.msra.mxu0 %v2431
  %3595 = vmatprep.subr.bf16.mxu0 %v2440
  %3596 = vmatpush1.bf16.msra.mxu0 %v2439
  %3597 = vmatprep.subr.bf16.mxu0 %v2448
  %3598 = vmatpush1.bf16.msra.mxu0 %v2447
  %3599 = vmatprep.subr.bf16.mxu0 %v2456
  %3600 = vmatpush1.bf16.msra.mxu0 %v2455
  %3601 = vmatprep.subr.bf16.mxu0 %v2464
  %3602 = vmatpush1.bf16.msra.mxu0 %v2463
  %3603 = vmatprep.subr.bf16.mxu0 %v2472
  %3604 = vmatpush1.bf16.msra.mxu0 %v2471
  %3605 = vmatprep.subr.bf16.mxu0 %v2480
  %3606 = vmatpush1.bf16.msra.mxu0 %v2479
  %3607 = vmatprep.subr.bf16.mxu0 %v2488
  %3608 = vmatpush1.bf16.msra.mxu0 %v2487
  %3609 = vmatprep.subr.bf16.mxu0 %v2496
  %3610 = vmatpush1.bf16.msra.mxu0 %v2495
  %3611 = vmatprep.subr.bf16.mxu0 %v2504
  %3612 = vmatpush1.bf16.msra.mxu0 %v2503
  %3613 = vmatprep.subr.bf16.mxu0 %v2512
  %3614 = vmatpush1.bf16.msra.mxu0 %v2511
  %3615 = vmatprep.subr.bf16.mxu0 %v2520
  %3616 = vmatpush1.bf16.msra.mxu0 %v2519
  %3617 = vmatprep.subr.bf16.mxu0 %v2528
  %3618 = vmatpush1.bf16.msra.mxu0 %v2527
  %3619 = vmatprep.subr.bf16.mxu0 %v2536
  %3620 = vmatpush1.bf16.msra.mxu0 %v2535
  %3621 = vmatprep.mubr.bf16.mxu0 %v608
  %3622 = vmatmul.mubr.bf16.gmra.mrb[0].mxu0 %v607
  %v3623 = vpop.f32.mrb[0].mxu0
  %v3624 = vadd.f32 %v3583, %v3623
  %v3625 = vpop.f32.mrb[0].mxu0
  %v3626 = vadd.f32 %v3585, %v3625
  %v3627 = vpop.f32.mrb[0].mxu0
  %v3628 = vpop.f32.mrb[0].mxu0
  %3629 = vdwg.mxu0
  %3630 = vmatprep.subr.bf16.mxu0 %v2544
  %3631 = vmatpush1.bf16.msra.mxu0 %v2543
  %3632 = vmatprep.subr.bf16.mxu0 %v2552
  %3633 = vmatpush1.bf16.msra.mxu0 %v2551
  %3634 = vmatprep.subr.bf16.mxu0 %v2560
  %3635 = vmatpush1.bf16.msra.mxu0 %v2559
  %3636 = vmatprep.subr.bf16.mxu0 %v2568
  %3637 = vmatpush1.bf16.msra.mxu0 %v2567
  %3638 = vmatprep.subr.bf16.mxu0 %v2576
  %3639 = vmatpush1.bf16.msra.mxu0 %v2575
  %3640 = vmatprep.subr.bf16.mxu0 %v2584
  %3641 = vmatpush1.bf16.msra.mxu0 %v2583
  %3642 = vmatprep.subr.bf16.mxu0 %v2592
  %3643 = vmatpush1.bf16.msra.mxu0 %v2591
  %3644 = vmatprep.subr.bf16.mxu0 %v2600
  %3645 = vmatpush1.bf16.msra.mxu0 %v2599
  %3646 = vmatprep.subr.bf16.mxu0 %v2608
  %3647 = vmatpush1.bf16.msra.mxu0 %v2607
  %3648 = vmatprep.subr.bf16.mxu0 %v2616
  %3649 = vmatpush1.bf16.msra.mxu0 %v2615
  %3650 = vmatprep.subr.bf16.mxu0 %v2624
  %3651 = vmatpush1.bf16.msra.mxu0 %v2623
  %3652 = vmatprep.subr.bf16.mxu0 %v2632
  %3653 = vmatpush1.bf16.msra.mxu0 %v2631
  %3654 = vmatprep.subr.bf16.mxu0 %v2640
  %3655 = vmatpush1.bf16.msra.mxu0 %v2639
  %3656 = vmatprep.subr.bf16.mxu0 %v2648
  %3657 = vmatpush1.bf16.msra.mxu0 %v2647
  %3658 = vmatprep.subr.bf16.mxu0 %v2656
  %3659 = vmatpush1.bf16.msra.mxu0 %v2655
  %3660 = vmatprep.subr.bf16.mxu0 %v2664
  %3661 = vmatpush1.bf16.msra.mxu0 %v2663
  %3662 = vmatprep.mubr.bf16.mxu0 %v610
  %3663 = vmatmul.mubr.bf16.gmra.mrb[0].mxu0 %v609
  %v3664 = vpop.f32.mrb[0].mxu0
  %v3665 = vadd.f32 %v3624, %v3664
  %v3666 = vpop.f32.mrb[0].mxu0
  %v3667 = vadd.f32 %v3626, %v3666
  %v3668 = vpop.f32.mrb[0].mxu0
  %v3669 = vpop.f32.mrb[0].mxu0
  %3670 = vdwg.mxu0
  %3671 = vmatprep.subr.bf16.mxu0 %v2162
  %3672 = vmatpush1.bf16.msra.mxu0 %v2161
  %3673 = vmatprep.subr.bf16.mxu0 %v2170
  %3674 = vmatpush1.bf16.msra.mxu0 %v2169
  %3675 = vmatprep.subr.bf16.mxu0 %v2178
  %3676 = vmatpush1.bf16.msra.mxu0 %v2177
  %3677 = vmatprep.subr.bf16.mxu0 %v2186
  %3678 = vmatpush1.bf16.msra.mxu0 %v2185
  %3679 = vmatprep.subr.bf16.mxu0 %v2194
  %3680 = vmatpush1.bf16.msra.mxu0 %v2193
  %3681 = vmatprep.subr.bf16.mxu0 %v2202
  %3682 = vmatpush1.bf16.msra.mxu0 %v2201
  %3683 = vmatprep.subr.bf16.mxu0 %v2210
  %3684 = vmatpush1.bf16.msra.mxu0 %v2209
  %3685 = vmatprep.subr.bf16.mxu0 %v2218
  %3686 = vmatpush1.bf16.msra.mxu0 %v2217
  %3687 = vmatprep.subr.bf16.mxu0 %v2226
  %3688 = vmatpush1.bf16.msra.mxu0 %v2225
  %3689 = vmatprep.subr.bf16.mxu0 %v2234
  %3690 = vmatpush1.bf16.msra.mxu0 %v2233
  %3691 = vmatprep.subr.bf16.mxu0 %v2242
  %3692 = vmatpush1.bf16.msra.mxu0 %v2241
  %3693 = vmatprep.subr.bf16.mxu0 %v2250
  %3694 = vmatpush1.bf16.msra.mxu0 %v2249
  %3695 = vmatprep.subr.bf16.mxu0 %v2258
  %3696 = vmatpush1.bf16.msra.mxu0 %v2257
  %3697 = vmatprep.subr.bf16.mxu0 %v2266
  %3698 = vmatpush1.bf16.msra.mxu0 %v2265
  %3699 = vmatprep.subr.bf16.mxu0 %v2274
  %3700 = vmatpush1.bf16.msra.mxu0 %v2273
  %3701 = vmatprep.subr.bf16.mxu0 %v2282
  %3702 = vmatpush1.bf16.msra.mxu0 %v2281
  %3703 = vmatprep.mubr.bf16.mxu0 %v604
  %3704 = vmatmul.mubr.bf16.gmra.mrb[0].mxu0 %v603
  %v3705 = vpop.f32.mrb[0].mxu0
  %v3706 = vadd.f32 %v578, %v3705
  %v3707 = vpop.f32.mrb[0].mxu0
  %v3708 = vadd.f32 %v582, %v3707
  %v3709 = vpop.f32.mrb[0].mxu0
  %v3710 = vpop.f32.mrb[0].mxu0
  %3711 = vdwg.mxu0
  %3712 = vmatprep.subr.bf16.mxu0 %v2290
  %3713 = vmatpush1.bf16.msra.mxu0 %v2289
  %3714 = vmatprep.subr.bf16.mxu0 %v2298
  %3715 = vmatpush1.bf16.msra.mxu0 %v2297
  %3716 = vmatprep.subr.bf16.mxu0 %v2306
  %3717 = vmatpush1.bf16.msra.mxu0 %v2305
  %3718 = vmatprep.subr.bf16.mxu0 %v2314
  %3719 = vmatpush1.bf16.msra.mxu0 %v2313
  %3720 = vmatprep.subr.bf16.mxu0 %v2322
  %3721 = vmatpush1.bf16.msra.mxu0 %v2321
  %3722 = vmatprep.subr.bf16.mxu0 %v2330
  %3723 = vmatpush1.bf16.msra.mxu0 %v2329
  %3724 = vmatprep.subr.bf16.mxu0 %v2338
  %3725 = vmatpush1.bf16.msra.mxu0 %v2337
  %3726 = vmatprep.subr.bf16.mxu0 %v2346
  %3727 = vmatpush1.bf16.msra.mxu0 %v2345
  %3728 = vmatprep.subr.bf16.mxu0 %v2354
  %3729 = vmatpush1.bf16.msra.mxu0 %v2353
  %3730 = vmatprep.subr.bf16.mxu0 %v2362
  %3731 = vmatpush1.bf16.msra.mxu0 %v2361
  %3732 = vmatprep.subr.bf16.mxu0 %v2370
  %3733 = vmatpush1.bf16.msra.mxu0 %v2369
  %3734 = vmatprep.subr.bf16.mxu0 %v2378
  %3735 = vmatpush1.bf16.msra.mxu0 %v2377
  %3736 = vmatprep.subr.bf16.mxu0 %v2386
  %3737 = vmatpush1.bf16.msra.mxu0 %v2385
  %3738 = vmatprep.subr.bf16.mxu0 %v2394
  %3739 = vmatpush1.bf16.msra.mxu0 %v2393
  %3740 = vmatprep.subr.bf16.mxu0 %v2402
  %3741 = vmatpush1.bf16.msra.mxu0 %v2401
  %3742 = vmatprep.subr.bf16.mxu0 %v2410
  %3743 = vmatpush1.bf16.msra.mxu0 %v2409
  %3744 = vmatprep.mubr.bf16.mxu0 %v606
  %3745 = vmatmul.mubr.bf16.gmra.mrb[0].mxu0 %v605
  %v3746 = vpop.f32.mrb[0].mxu0
  %v3747 = vadd.f32 %v3706, %v3746
  %v3748 = vpop.f32.mrb[0].mxu0
  %v3749 = vadd.f32 %v3708, %v3748
  %v3750 = vpop.f32.mrb[0].mxu0
  %v3751 = vpop.f32.mrb[0].mxu0
  %3752 = vdwg.mxu0
  %3753 = vmatprep.subr.bf16.mxu0 %v2418
  %3754 = vmatpush1.bf16.msra.mxu0 %v2417
  %3755 = vmatprep.subr.bf16.mxu0 %v2426
  %3756 = vmatpush1.bf16.msra.mxu0 %v2425
  %3757 = vmatprep.subr.bf16.mxu0 %v2434
  %3758 = vmatpush1.bf16.msra.mxu0 %v2433
  %3759 = vmatprep.subr.bf16.mxu0 %v2442
  %3760 = vmatpush1.bf16.msra.mxu0 %v2441
  %3761 = vmatprep.subr.bf16.mxu0 %v2450
  %3762 = vmatpush1.bf16.msra.mxu0 %v2449
  %3763 = vmatprep.subr.bf16.mxu0 %v2458
  %3764 = vmatpush1.bf16.msra.mxu0 %v2457
  %3765 = vmatprep.subr.bf16.mxu0 %v2466
  %3766 = vmatpush1.bf16.msra.mxu0 %v2465
  %3767 = vmatprep.subr.bf16.mxu0 %v2474
  %3768 = vmatpush1.bf16.msra.mxu0 %v2473
  %3769 = vmatprep.subr.bf16.mxu0 %v2482
  %3770 = vmatpush1.bf16.msra.mxu0 %v2481
  %3771 = vmatprep.subr.bf16.mxu0 %v2490
  %3772 = vmatpush1.bf16.msra.mxu0 %v2489
  %3773 = vmatprep.subr.bf16.mxu0 %v2498
  %3774 = vmatpush1.bf16.msra.mxu0 %v2497
  %3775 = vmatprep.subr.bf16.mxu0 %v2506
  %3776 = vmatpush1.bf16.msra.mxu0 %v2505
  %3777 = vmatprep.subr.bf16.mxu0 %v2514
  %3778 = vmatpush1.bf16.msra.mxu0 %v2513
  %3779 = vmatprep.subr.bf16.mxu0 %v2522
  %3780 = vmatpush1.bf16.msra.mxu0 %v2521
  %3781 = vmatprep.subr.bf16.mxu0 %v2530
  %3782 = vmatpush1.bf16.msra.mxu0 %v2529
  %3783 = vmatprep.subr.bf16.mxu0 %v2538
  %3784 = vmatpush1.bf16.msra.mxu0 %v2537
  %3785 = vmatprep.mubr.bf16.mxu0 %v608
  %3786 = vmatmul.mubr.bf16.gmra.mrb[0].mxu0 %v607
  %v3787 = vpop.f32.mrb[0].mxu0
  %v3788 = vadd.f32 %v3747, %v3787
  %v3789 = vpop.f32.mrb[0].mxu0
  %v3790 = vadd.f32 %v3749, %v3789
  %v3791 = vpop.f32.mrb[0].mxu0
  %v3792 = vpop.f32.mrb[0].mxu0
  %3793 = vdwg.mxu0
  %3794 = vmatprep.subr.bf16.mxu0 %v2546
  %3795 = vmatpush1.bf16.msra.mxu0 %v2545
  %3796 = vmatprep.subr.bf16.mxu0 %v2554
  %3797 = vmatpush1.bf16.msra.mxu0 %v2553
  %3798 = vmatprep.subr.bf16.mxu0 %v2562
  %3799 = vmatpush1.bf16.msra.mxu0 %v2561
  %3800 = vmatprep.subr.bf16.mxu0 %v2570
  %3801 = vmatpush1.bf16.msra.mxu0 %v2569
  %3802 = vmatprep.subr.bf16.mxu0 %v2578
  %3803 = vmatpush1.bf16.msra.mxu0 %v2577
  %3804 = vmatprep.subr.bf16.mxu0 %v2586
  %3805 = vmatpush1.bf16.msra.mxu0 %v2585
  %3806 = vmatprep.subr.bf16.mxu0 %v2594
  %3807 = vmatpush1.bf16.msra.mxu0 %v2593
  %3808 = vmatprep.subr.bf16.mxu0 %v2602
  %3809 = vmatpush1.bf16.msra.mxu0 %v2601
  %3810 = vmatprep.subr.bf16.mxu0 %v2610
  %3811 = vmatpush1.bf16.msra.mxu0 %v2609
  %3812 = vmatprep.subr.bf16.mxu0 %v2618
  %3813 = vmatpush1.bf16.msra.mxu0 %v2617
  %3814 = vmatprep.subr.bf16.mxu0 %v2626
  %3815 = vmatpush1.bf16.msra.mxu0 %v2625
  %3816 = vmatprep.subr.bf16.mxu0 %v2634
  %3817 = vmatpush1.bf16.msra.mxu0 %v2633
  %3818 = vmatprep.subr.bf16.mxu0 %v2642
  %3819 = vmatpush1.bf16.msra.mxu0 %v2641
  %3820 = vmatprep.subr.bf16.mxu0 %v2650
  %3821 = vmatpush1.bf16.msra.mxu0 %v2649
  %3822 = vmatprep.subr.bf16.mxu0 %v2658
  %3823 = vmatpush1.bf16.msra.mxu0 %v2657
  %3824 = vmatprep.subr.bf16.mxu0 %v2666
  %3825 = vmatpush1.bf16.msra.mxu0 %v2665
  %3826 = vmatprep.mubr.bf16.mxu0 %v610
  %3827 = vmatmul.mubr.bf16.gmra.mrb[0].mxu0 %v609
  %v3828 = vpop.f32.mrb[0].mxu0
  %v3829 = vadd.f32 %v3788, %v3828
  %v3830 = vpop.f32.mrb[0].mxu0
  %v3831 = vadd.f32 %v3790, %v3830
  %v3832 = vpop.f32.mrb[0].mxu0
  %v3833 = vpop.f32.mrb[0].mxu0
  %3834 = vdwg.mxu0
  %v3835 = vmax.f32 %v3337, 0.0
  %v3836 = vmax.f32 %v3339, 0.0
  %v3837 = vmax.f32 %v3501, 0.0
  %v3838 = vmax.f32 %v3503, 0.0
  %v3839 = vmax.f32 %v3665, 0.0
  %v3840 = vmax.f32 %v3667, 0.0
  %v3841 = vmax.f32 %v3829, 0.0
  %v3842 = vmax.f32 %v3831, 0.0
  %v3843 = vpack.c.bf16 %v3835, %v3835
  %v3844 = vpack.c.bf16 %v3836, %v3836
  %v3845 = vpack.c.bf16 %v3837, %v3837
  %v3846 = vpack.c.bf16 %v3838, %v3838
  %v3847 = vpack.c.bf16 %v3839, %v3839
  %v3848 = vpack.c.bf16 %v3840, %v3840
  %v3849 = vpack.c.bf16 %v3841, %v3841
  %v3850 = vpack.c.bf16 %v3842, %v3842
  %v3851 = vld [vmem:[%s3] sm:$0xff]
  %v3852 = vld [vmem:[%s3 + $0x8] sm:$0xff]
  %v3853 = vld [vmem:[%s3 + $0x10] sm:$0xff]
  %v3854 = vld [vmem:[%s3 + $0x18] sm:$0xff]
  %v3855 = vld [vmem:[%s3 + $0x20] sm:$0xff]
  %v3856 = vld [vmem:[%s3 + $0x28] sm:$0xff]
  %v3857 = vld [vmem:[%s3 + $0x30] sm:$0xff]
  %v3858 = vld [vmem:[%s3 + $0x38] sm:$0xff]
  %v3859 = vld [vmem:[%s3 + $0x40] sm:$0xff]
  %v3860 = vld [vmem:[%s3 + $0x48] sm:$0xff]
  %v3861 = vld [vmem:[%s3 + $0x50] sm:$0xff]
  %v3862 = vld [vmem:[%s3 + $0x58] sm:$0xff]
  %v3863 = vld [vmem:[%s3 + $0x60] sm:$0xff]
  %v3864 = vld [vmem:[%s3 + $0x68] sm:$0xff]
  %v3865 = vld [vmem:[%s3 + $0x70] sm:$0xff]
  %v3866 = vld [vmem:[%s3 + $0x78] sm:$0xff]
  %v3867 = vld [vmem:[%s3 + $0x80] sm:$0xff]
  %v3868 = vld [vmem:[%s3 + $0x88] sm:$0xff]
  %v3869 = vld [vmem:[%s3 + $0x90] sm:$0xff]
  %v3870 = vld [vmem:[%s3 + $0x98] sm:$0xff]
  %v3871 = vld [vmem:[%s3 + $0xa0] sm:$0xff]
  %v3872 = vld [vmem:[%s3 + $0xa8] sm:$0xff]
  %v3873 = vld [vmem:[%s3 + $0xb0] sm:$0xff]
  %v3874 = vld [vmem:[%s3 + $0xb8] sm:$0xff]
  %v3875 = vld [vmem:[%s3 + $0xc0] sm:$0xff]
  %v3876 = vld [vmem:[%s3 + $0xc8] sm:$0xff]
  %v3877 = vld [vmem:[%s3 + $0xd0] sm:$0xff]
  %v3878 = vld [vmem:[%s3 + $0xd8] sm:$0xff]
  %v3879 = vld [vmem:[%s3 + $0xe0] sm:$0xff]
  %v3880 = vld [vmem:[%s3 + $0xe8] sm:$0xff]
  %v3881 = vld [vmem:[%s3 + $0xf0] sm:$0xff]
  %v3882 = vld [vmem:[%s3 + $0xf8] sm:$0xff]
  %v3883 = vld [vmem:[%s3 + $0x100] sm:$0xff]
  %v3884 = vld [vmem:[%s3 + $0x108] sm:$0xff]
  %v3885 = vld [vmem:[%s3 + $0x110] sm:$0xff]
  %v3886 = vld [vmem:[%s3 + $0x118] sm:$0xff]
  %v3887 = vld [vmem:[%s3 + $0x120] sm:$0xff]
  %v3888 = vld [vmem:[%s3 + $0x128] sm:$0xff]
  %v3889 = vld [vmem:[%s3 + $0x130] sm:$0xff]
  %v3890 = vld [vmem:[%s3 + $0x138] sm:$0xff]
  %v3891 = vld [vmem:[%s3 + $0x140] sm:$0xff]
  %v3892 = vld [vmem:[%s3 + $0x148] sm:$0xff]
  %v3893 = vld [vmem:[%s3 + $0x150] sm:$0xff]
  %v3894 = vld [vmem:[%s3 + $0x158] sm:$0xff]
  %v3895 = vld [vmem:[%s3 + $0x160] sm:$0xff]
  %v3896 = vld [vmem:[%s3 + $0x168] sm:$0xff]
  %v3897 = vld [vmem:[%s3 + $0x170] sm:$0xff]
  %v3898 = vld [vmem:[%s3 + $0x178] sm:$0xff]
  %v3899 = vld [vmem:[%s3 + $0x180] sm:$0xff]
  %v3900 = vld [vmem:[%s3 + $0x188] sm:$0xff]
  %v3901 = vld [vmem:[%s3 + $0x190] sm:$0xff]
  %v3902 = vld [vmem:[%s3 + $0x198] sm:$0xff]
  %v3903 = vld [vmem:[%s3 + $0x1a0] sm:$0xff]
  %v3904 = vld [vmem:[%s3 + $0x1a8] sm:$0xff]
  %v3905 = vld [vmem:[%s3 + $0x1b0] sm:$0xff]
  %v3906 = vld [vmem:[%s3 + $0x1b8] sm:$0xff]
  %v3907 = vld [vmem:[%s3 + $0x1c0] sm:$0xff]
  %v3908 = vld [vmem:[%s3 + $0x1c8] sm:$0xff]
  %v3909 = vld [vmem:[%s3 + $0x1d0] sm:$0xff]
  %v3910 = vld [vmem:[%s3 + $0x1d8] sm:$0xff]
  %v3911 = vld [vmem:[%s3 + $0x1e0] sm:$0xff]
  %v3912 = vld [vmem:[%s3 + $0x1e8] sm:$0xff]
  %v3913 = vld [vmem:[%s3 + $0x1f0] sm:$0xff]
  %v3914 = vld [vmem:[%s3 + $0x1f8] sm:$0xff]
  %v3915 = vld [vmem:[%s3 + $0x200] sm:$0xff]
  %v3916 = vld [vmem:[%s3 + $0x208] sm:$0xff]
  %v3917 = vld [vmem:[%s3 + $0x210] sm:$0xff]
  %v3918 = vld [vmem:[%s3 + $0x218] sm:$0xff]
  %v3919 = vld [vmem:[%s3 + $0x220] sm:$0xff]
  %v3920 = vld [vmem:[%s3 + $0x228] sm:$0xff]
  %v3921 = vld [vmem:[%s3 + $0x230] sm:$0xff]
  %v3922 = vld [vmem:[%s3 + $0x238] sm:$0xff]
  %v3923 = vld [vmem:[%s3 + $0x240] sm:$0xff]
  %v3924 = vld [vmem:[%s3 + $0x248] sm:$0xff]
  %v3925 = vld [vmem:[%s3 + $0x250] sm:$0xff]
  %v3926 = vld [vmem:[%s3 + $0x258] sm:$0xff]
  %v3927 = vld [vmem:[%s3 + $0x260] sm:$0xff]
  %v3928 = vld [vmem:[%s3 + $0x268] sm:$0xff]
  %v3929 = vld [vmem:[%s3 + $0x270] sm:$0xff]
  %v3930 = vld [vmem:[%s3 + $0x278] sm:$0xff]
  %v3931 = vld [vmem:[%s3 + $0x280] sm:$0xff]
  %v3932 = vld [vmem:[%s3 + $0x288] sm:$0xff]
  %v3933 = vld [vmem:[%s3 + $0x290] sm:$0xff]
  %v3934 = vld [vmem:[%s3 + $0x298] sm:$0xff]
  %v3935 = vld [vmem:[%s3 + $0x2a0] sm:$0xff]
  %v3936 = vld [vmem:[%s3 + $0x2a8] sm:$0xff]
  %v3937 = vld [vmem:[%s3 + $0x2b0] sm:$0xff]
  %v3938 = vld [vmem:[%s3 + $0x2b8] sm:$0xff]
  %v3939 = vld [vmem:[%s3 + $0x2c0] sm:$0xff]
  %v3940 = vld [vmem:[%s3 + $0x2c8] sm:$0xff]
  %v3941 = vld [vmem:[%s3 + $0x2d0] sm:$0xff]
  %v3942 = vld [vmem:[%s3 + $0x2d8] sm:$0xff]
  %v3943 = vld [vmem:[%s3 + $0x2e0] sm:$0xff]
  %v3944 = vld [vmem:[%s3 + $0x2e8] sm:$0xff]
  %v3945 = vld [vmem:[%s3 + $0x2f0] sm:$0xff]
  %v3946 = vld [vmem:[%s3 + $0x2f8] sm:$0xff]
  %v3947 = vld [vmem:[%s3 + $0x300] sm:$0xff]
  %v3948 = vld [vmem:[%s3 + $0x308] sm:$0xff]
  %v3949 = vld [vmem:[%s3 + $0x310] sm:$0xff]
  %v3950 = vld [vmem:[%s3 + $0x318] sm:$0xff]
  %v3951 = vld [vmem:[%s3 + $0x320] sm:$0xff]
  %v3952 = vld [vmem:[%s3 + $0x328] sm:$0xff]
  %v3953 = vld [vmem:[%s3 + $0x330] sm:$0xff]
  %v3954 = vld [vmem:[%s3 + $0x338] sm:$0xff]
  %v3955 = vld [vmem:[%s3 + $0x340] sm:$0xff]
  %v3956 = vld [vmem:[%s3 + $0x348] sm:$0xff]
  %v3957 = vld [vmem:[%s3 + $0x350] sm:$0xff]
  %v3958 = vld [vmem:[%s3 + $0x358] sm:$0xff]
  %v3959 = vld [vmem:[%s3 + $0x360] sm:$0xff]
  %v3960 = vld [vmem:[%s3 + $0x368] sm:$0xff]
  %v3961 = vld [vmem:[%s3 + $0x370] sm:$0xff]
  %v3962 = vld [vmem:[%s3 + $0x378] sm:$0xff]
  %v3963 = vld [vmem:[%s3 + $0x380] sm:$0xff]
  %v3964 = vld [vmem:[%s3 + $0x388] sm:$0xff]
  %v3965 = vld [vmem:[%s3 + $0x390] sm:$0xff]
  %v3966 = vld [vmem:[%s3 + $0x398] sm:$0xff]
  %v3967 = vld [vmem:[%s3 + $0x3a0] sm:$0xff]
  %v3968 = vld [vmem:[%s3 + $0x3a8] sm:$0xff]
  %v3969 = vld [vmem:[%s3 + $0x3b0] sm:$0xff]
  %v3970 = vld [vmem:[%s3 + $0x3b8] sm:$0xff]
  %v3971 = vld [vmem:[%s3 + $0x3c0] sm:$0xff]
  %v3972 = vld [vmem:[%s3 + $0x3c8] sm:$0xff]
  %v3973 = vld [vmem:[%s3 + $0x3d0] sm:$0xff]
  %v3974 = vld [vmem:[%s3 + $0x3d8] sm:$0xff]
  %v3975 = vld [vmem:[%s3 + $0x3e0] sm:$0xff]
  %v3976 = vld [vmem:[%s3 + $0x3e8] sm:$0xff]
  %v3977 = vld [vmem:[%s3 + $0x3f0] sm:$0xff]
  %v3978 = vld [vmem:[%s3 + $0x3f8] sm:$0xff]
  %v3979 = vld [vmem:[%s3 + $0x400] sm:$0xff]
  %v3980 = vld [vmem:[%s3 + $0x408] sm:$0xff]
  %v3981 = vld [vmem:[%s3 + $0x410] sm:$0xff]
  %v3982 = vld [vmem:[%s3 + $0x418] sm:$0xff]
  %v3983 = vld [vmem:[%s3 + $0x420] sm:$0xff]
  %v3984 = vld [vmem:[%s3 + $0x428] sm:$0xff]
  %v3985 = vld [vmem:[%s3 + $0x430] sm:$0xff]
  %v3986 = vld [vmem:[%s3 + $0x438] sm:$0xff]
  %v3987 = vld [vmem:[%s3 + $0x440] sm:$0xff]
  %v3988 = vld [vmem:[%s3 + $0x448] sm:$0xff]
  %v3989 = vld [vmem:[%s3 + $0x450] sm:$0xff]
  %v3990 = vld [vmem:[%s3 + $0x458] sm:$0xff]
  %v3991 = vld [vmem:[%s3 + $0x460] sm:$0xff]
  %v3992 = vld [vmem:[%s3 + $0x468] sm:$0xff]
  %v3993 = vld [vmem:[%s3 + $0x470] sm:$0xff]
  %v3994 = vld [vmem:[%s3 + $0x478] sm:$0xff]
  %v3995 = vld [vmem:[%s3 + $0x480] sm:$0xff]
  %v3996 = vld [vmem:[%s3 + $0x488] sm:$0xff]
  %v3997 = vld [vmem:[%s3 + $0x490] sm:$0xff]
  %v3998 = vld [vmem:[%s3 + $0x498] sm:$0xff]
  %v3999 = vld [vmem:[%s3 + $0x4a0] sm:$0xff]
  %v4000 = vld [vmem:[%s3 + $0x4a8] sm:$0xff]
  %v4001 = vld [vmem:[%s3 + $0x4b0] sm:$0xff]
  %v4002 = vld [vmem:[%s3 + $0x4b8] sm:$0xff]
  %v4003 = vld [vmem:[%s3 + $0x4c0] sm:$0xff]
  %v4004 = vld [vmem:[%s3 + $0x4c8] sm:$0xff]
  %v4005 = vld [vmem:[%s3 + $0x4d0] sm:$0xff]
  %v4006 = vld [vmem:[%s3 + $0x4d8] sm:$0xff]
  %v4007 = vld [vmem:[%s3 + $0x4e0] sm:$0xff]
  %v4008 = vld [vmem:[%s3 + $0x4e8] sm:$0xff]
  %v4009 = vld [vmem:[%s3 + $0x4f0] sm:$0xff]
  %v4010 = vld [vmem:[%s3 + $0x4f8] sm:$0xff]
  %v4011 = vld [vmem:[%s3 + $0x500] sm:$0xff]
  %v4012 = vld [vmem:[%s3 + $0x508] sm:$0xff]
  %v4013 = vld [vmem:[%s3 + $0x510] sm:$0xff]
  %v4014 = vld [vmem:[%s3 + $0x518] sm:$0xff]
  %v4015 = vld [vmem:[%s3 + $0x520] sm:$0xff]
  %v4016 = vld [vmem:[%s3 + $0x528] sm:$0xff]
  %v4017 = vld [vmem:[%s3 + $0x530] sm:$0xff]
  %v4018 = vld [vmem:[%s3 + $0x538] sm:$0xff]
  %v4019 = vld [vmem:[%s3 + $0x540] sm:$0xff]
  %v4020 = vld [vmem:[%s3 + $0x548] sm:$0xff]
  %v4021 = vld [vmem:[%s3 + $0x550] sm:$0xff]
  %v4022 = vld [vmem:[%s3 + $0x558] sm:$0xff]
  %v4023 = vld [vmem:[%s3 + $0x560] sm:$0xff]
  %v4024 = vld [vmem:[%s3 + $0x568] sm:$0xff]
  %v4025 = vld [vmem:[%s3 + $0x570] sm:$0xff]
  %v4026 = vld [vmem:[%s3 + $0x578] sm:$0xff]
  %v4027 = vld [vmem:[%s3 + $0x580] sm:$0xff]
  %v4028 = vld [vmem:[%s3 + $0x588] sm:$0xff]
  %v4029 = vld [vmem:[%s3 + $0x590] sm:$0xff]
  %v4030 = vld [vmem:[%s3 + $0x598] sm:$0xff]
  %v4031 = vld [vmem:[%s3 + $0x5a0] sm:$0xff]
  %v4032 = vld [vmem:[%s3 + $0x5a8] sm:$0xff]
  %v4033 = vld [vmem:[%s3 + $0x5b0] sm:$0xff]
  %v4034 = vld [vmem:[%s3 + $0x5b8] sm:$0xff]
  %v4035 = vld [vmem:[%s3 + $0x5c0] sm:$0xff]
  %v4036 = vld [vmem:[%s3 + $0x5c8] sm:$0xff]
  %v4037 = vld [vmem:[%s3 + $0x5d0] sm:$0xff]
  %v4038 = vld [vmem:[%s3 + $0x5d8] sm:$0xff]
  %v4039 = vld [vmem:[%s3 + $0x5e0] sm:$0xff]
  %v4040 = vld [vmem:[%s3 + $0x5e8] sm:$0xff]
  %v4041 = vld [vmem:[%s3 + $0x5f0] sm:$0xff]
  %v4042 = vld [vmem:[%s3 + $0x5f8] sm:$0xff]
  %v4043 = vld [vmem:[%s3 + $0x600] sm:$0xff]
  %v4044 = vld [vmem:[%s3 + $0x608] sm:$0xff]
  %v4045 = vld [vmem:[%s3 + $0x610] sm:$0xff]
  %v4046 = vld [vmem:[%s3 + $0x618] sm:$0xff]
  %v4047 = vld [vmem:[%s3 + $0x620] sm:$0xff]
  %v4048 = vld [vmem:[%s3 + $0x628] sm:$0xff]
  %v4049 = vld [vmem:[%s3 + $0x630] sm:$0xff]
  %v4050 = vld [vmem:[%s3 + $0x638] sm:$0xff]
  %v4051 = vld [vmem:[%s3 + $0x640] sm:$0xff]
  %v4052 = vld [vmem:[%s3 + $0x648] sm:$0xff]
  %v4053 = vld [vmem:[%s3 + $0x650] sm:$0xff]
  %v4054 = vld [vmem:[%s3 + $0x658] sm:$0xff]
  %v4055 = vld [vmem:[%s3 + $0x660] sm:$0xff]
  %v4056 = vld [vmem:[%s3 + $0x668] sm:$0xff]
  %v4057 = vld [vmem:[%s3 + $0x670] sm:$0xff]
  %v4058 = vld [vmem:[%s3 + $0x678] sm:$0xff]
  %v4059 = vld [vmem:[%s3 + $0x680] sm:$0xff]
  %v4060 = vld [vmem:[%s3 + $0x688] sm:$0xff]
  %v4061 = vld [vmem:[%s3 + $0x690] sm:$0xff]
  %v4062 = vld [vmem:[%s3 + $0x698] sm:$0xff]
  %v4063 = vld [vmem:[%s3 + $0x6a0] sm:$0xff]
  %v4064 = vld [vmem:[%s3 + $0x6a8] sm:$0xff]
  %v4065 = vld [vmem:[%s3 + $0x6b0] sm:$0xff]
  %v4066 = vld [vmem:[%s3 + $0x6b8] sm:$0xff]
  %v4067 = vld [vmem:[%s3 + $0x6c0] sm:$0xff]
  %v4068 = vld [vmem:[%s3 + $0x6c8] sm:$0xff]
  %v4069 = vld [vmem:[%s3 + $0x6d0] sm:$0xff]
  %v4070 = vld [vmem:[%s3 + $0x6d8] sm:$0xff]
  %v4071 = vld [vmem:[%s3 + $0x6e0] sm:$0xff]
  %v4072 = vld [vmem:[%s3 + $0x6e8] sm:$0xff]
  %v4073 = vld [vmem:[%s3 + $0x6f0] sm:$0xff]
  %v4074 = vld [vmem:[%s3 + $0x6f8] sm:$0xff]
  %v4075 = vld [vmem:[%s3 + $0x700] sm:$0xff]
  %v4076 = vld [vmem:[%s3 + $0x708] sm:$0xff]
  %v4077 = vld [vmem:[%s3 + $0x710] sm:$0xff]
  %v4078 = vld [vmem:[%s3 + $0x718] sm:$0xff]
  %v4079 = vld [vmem:[%s3 + $0x720] sm:$0xff]
  %v4080 = vld [vmem:[%s3 + $0x728] sm:$0xff]
  %v4081 = vld [vmem:[%s3 + $0x730] sm:$0xff]
  %v4082 = vld [vmem:[%s3 + $0x738] sm:$0xff]
  %v4083 = vld [vmem:[%s3 + $0x740] sm:$0xff]
  %v4084 = vld [vmem:[%s3 + $0x748] sm:$0xff]
  %v4085 = vld [vmem:[%s3 + $0x750] sm:$0xff]
  %v4086 = vld [vmem:[%s3 + $0x758] sm:$0xff]
  %v4087 = vld [vmem:[%s3 + $0x760] sm:$0xff]
  %v4088 = vld [vmem:[%s3 + $0x768] sm:$0xff]
  %v4089 = vld [vmem:[%s3 + $0x770] sm:$0xff]
  %v4090 = vld [vmem:[%s3 + $0x778] sm:$0xff]
  %v4091 = vld [vmem:[%s3 + $0x780] sm:$0xff]
  %v4092 = vld [vmem:[%s3 + $0x788] sm:$0xff]
  %v4093 = vld [vmem:[%s3 + $0x790] sm:$0xff]
  %v4094 = vld [vmem:[%s3 + $0x798] sm:$0xff]
  %v4095 = vld [vmem:[%s3 + $0x7a0] sm:$0xff]
  %v4096 = vld [vmem:[%s3 + $0x7a8] sm:$0xff]
  %v4097 = vld [vmem:[%s3 + $0x7b0] sm:$0xff]
  %v4098 = vld [vmem:[%s3 + $0x7b8] sm:$0xff]
  %v4099 = vld [vmem:[%s3 + $0x7c0] sm:$0xff]
  %v4100 = vld [vmem:[%s3 + $0x7c8] sm:$0xff]
  %v4101 = vld [vmem:[%s3 + $0x7d0] sm:$0xff]
  %v4102 = vld [vmem:[%s3 + $0x7d8] sm:$0xff]
  %v4103 = vld [vmem:[%s3 + $0x7e0] sm:$0xff]
  %v4104 = vld [vmem:[%s3 + $0x7e8] sm:$0xff]
  %v4105 = vld [vmem:[%s3 + $0x7f0] sm:$0xff]
  %v4106 = vld [vmem:[%s3 + $0x7f8] sm:$0xff]
  %v4107 = vld [vmem:[%s3 + $0x800] sm:$0xff]
  %v4108 = vld [vmem:[%s3 + $0x808] sm:$0xff]
  %v4109 = vld [vmem:[%s3 + $0x810] sm:$0xff]
  %v4110 = vld [vmem:[%s3 + $0x818] sm:$0xff]
  %v4111 = vld [vmem:[%s3 + $0x820] sm:$0xff]
  %v4112 = vld [vmem:[%s3 + $0x828] sm:$0xff]
  %v4113 = vld [vmem:[%s3 + $0x830] sm:$0xff]
  %v4114 = vld [vmem:[%s3 + $0x838] sm:$0xff]
  %v4115 = vld [vmem:[%s3 + $0x840] sm:$0xff]
  %v4116 = vld [vmem:[%s3 + $0x848] sm:$0xff]
  %v4117 = vld [vmem:[%s3 + $0x850] sm:$0xff]
  %v4118 = vld [vmem:[%s3 + $0x858] sm:$0xff]
  %v4119 = vld [vmem:[%s3 + $0x860] sm:$0xff]
  %v4120 = vld [vmem:[%s3 + $0x868] sm:$0xff]
  %v4121 = vld [vmem:[%s3 + $0x870] sm:$0xff]
  %v4122 = vld [vmem:[%s3 + $0x878] sm:$0xff]
  %v4123 = vld [vmem:[%s3 + $0x880] sm:$0xff]
  %v4124 = vld [vmem:[%s3 + $0x888] sm:$0xff]
  %v4125 = vld [vmem:[%s3 + $0x890] sm:$0xff]
  %v4126 = vld [vmem:[%s3 + $0x898] sm:$0xff]
  %v4127 = vld [vmem:[%s3 + $0x8a0] sm:$0xff]
  %v4128 = vld [vmem:[%s3 + $0x8a8] sm:$0xff]
  %v4129 = vld [vmem:[%s3 + $0x8b0] sm:$0xff]
  %v4130 = vld [vmem:[%s3 + $0x8b8] sm:$0xff]
  %v4131 = vld [vmem:[%s3 + $0x8c0] sm:$0xff]
  %v4132 = vld [vmem:[%s3 + $0x8c8] sm:$0xff]
  %v4133 = vld [vmem:[%s3 + $0x8d0] sm:$0xff]
  %v4134 = vld [vmem:[%s3 + $0x8d8] sm:$0xff]
  %v4135 = vld [vmem:[%s3 + $0x8e0] sm:$0xff]
  %v4136 = vld [vmem:[%s3 + $0x8e8] sm:$0xff]
  %v4137 = vld [vmem:[%s3 + $0x8f0] sm:$0xff]
  %v4138 = vld [vmem:[%s3 + $0x8f8] sm:$0xff]
  %v4139 = vld [vmem:[%s3 + $0x900] sm:$0xff]
  %v4140 = vld [vmem:[%s3 + $0x908] sm:$0xff]
  %v4141 = vld [vmem:[%s3 + $0x910] sm:$0xff]
  %v4142 = vld [vmem:[%s3 + $0x918] sm:$0xff]
  %v4143 = vld [vmem:[%s3 + $0x920] sm:$0xff]
  %v4144 = vld [vmem:[%s3 + $0x928] sm:$0xff]
  %v4145 = vld [vmem:[%s3 + $0x930] sm:$0xff]
  %v4146 = vld [vmem:[%s3 + $0x938] sm:$0xff]
  %v4147 = vld [vmem:[%s3 + $0x940] sm:$0xff]
  %v4148 = vld [vmem:[%s3 + $0x948] sm:$0xff]
  %v4149 = vld [vmem:[%s3 + $0x950] sm:$0xff]
  %v4150 = vld [vmem:[%s3 + $0x958] sm:$0xff]
  %v4151 = vld [vmem:[%s3 + $0x960] sm:$0xff]
  %v4152 = vld [vmem:[%s3 + $0x968] sm:$0xff]
  %v4153 = vld [vmem:[%s3 + $0x970] sm:$0xff]
  %v4154 = vld [vmem:[%s3 + $0x978] sm:$0xff]
  %v4155 = vld [vmem:[%s3 + $0x980] sm:$0xff]
  %v4156 = vld [vmem:[%s3 + $0x988] sm:$0xff]
  %v4157 = vld [vmem:[%s3 + $0x990] sm:$0xff]
  %v4158 = vld [vmem:[%s3 + $0x998] sm:$0xff]
  %v4159 = vld [vmem:[%s3 + $0x9a0] sm:$0xff]
  %v4160 = vld [vmem:[%s3 + $0x9a8] sm:$0xff]
  %v4161 = vld [vmem:[%s3 + $0x9b0] sm:$0xff]
  %v4162 = vld [vmem:[%s3 + $0x9b8] sm:$0xff]
  %v4163 = vld [vmem:[%s3 + $0x9c0] sm:$0xff]
  %v4164 = vld [vmem:[%s3 + $0x9c8] sm:$0xff]
  %v4165 = vld [vmem:[%s3 + $0x9d0] sm:$0xff]
  %v4166 = vld [vmem:[%s3 + $0x9d8] sm:$0xff]
  %v4167 = vld [vmem:[%s3 + $0x9e0] sm:$0xff]
  %v4168 = vld [vmem:[%s3 + $0x9e8] sm:$0xff]
  %v4169 = vld [vmem:[%s3 + $0x9f0] sm:$0xff]
  %v4170 = vld [vmem:[%s3 + $0x9f8] sm:$0xff]
  %v4171 = vld [vmem:[%s3 + $0xa00] sm:$0xff]
  %v4172 = vld [vmem:[%s3 + $0xa08] sm:$0xff]
  %v4173 = vld [vmem:[%s3 + $0xa10] sm:$0xff]
  %v4174 = vld [vmem:[%s3 + $0xa18] sm:$0xff]
  %v4175 = vld [vmem:[%s3 + $0xa20] sm:$0xff]
  %v4176 = vld [vmem:[%s3 + $0xa28] sm:$0xff]
  %v4177 = vld [vmem:[%s3 + $0xa30] sm:$0xff]
  %v4178 = vld [vmem:[%s3 + $0xa38] sm:$0xff]
  %v4179 = vld [vmem:[%s3 + $0xa40] sm:$0xff]
  %v4180 = vld [vmem:[%s3 + $0xa48] sm:$0xff]
  %v4181 = vld [vmem:[%s3 + $0xa50] sm:$0xff]
  %v4182 = vld [vmem:[%s3 + $0xa58] sm:$0xff]
  %v4183 = vld [vmem:[%s3 + $0xa60] sm:$0xff]
  %v4184 = vld [vmem:[%s3 + $0xa68] sm:$0xff]
  %v4185 = vld [vmem:[%s3 + $0xa70] sm:$0xff]
  %v4186 = vld [vmem:[%s3 + $0xa78] sm:$0xff]
  %v4187 = vld [vmem:[%s3 + $0xa80] sm:$0xff]
  %v4188 = vld [vmem:[%s3 + $0xa88] sm:$0xff]
  %v4189 = vld [vmem:[%s3 + $0xa90] sm:$0xff]
  %v4190 = vld [vmem:[%s3 + $0xa98] sm:$0xff]
  %v4191 = vld [vmem:[%s3 + $0xaa0] sm:$0xff]
  %v4192 = vld [vmem:[%s3 + $0xaa8] sm:$0xff]
  %v4193 = vld [vmem:[%s3 + $0xab0] sm:$0xff]
  %v4194 = vld [vmem:[%s3 + $0xab8] sm:$0xff]
  %v4195 = vld [vmem:[%s3 + $0xac0] sm:$0xff]
  %v4196 = vld [vmem:[%s3 + $0xac8] sm:$0xff]
  %v4197 = vld [vmem:[%s3 + $0xad0] sm:$0xff]
  %v4198 = vld [vmem:[%s3 + $0xad8] sm:$0xff]
  %v4199 = vld [vmem:[%s3 + $0xae0] sm:$0xff]
  %v4200 = vld [vmem:[%s3 + $0xae8] sm:$0xff]
  %v4201 = vld [vmem:[%s3 + $0xaf0] sm:$0xff]
  %v4202 = vld [vmem:[%s3 + $0xaf8] sm:$0xff]
  %v4203 = vld [vmem:[%s3 + $0xb00] sm:$0xff]
  %v4204 = vld [vmem:[%s3 + $0xb08] sm:$0xff]
  %v4205 = vld [vmem:[%s3 + $0xb10] sm:$0xff]
  %v4206 = vld [vmem:[%s3 + $0xb18] sm:$0xff]
  %v4207 = vld [vmem:[%s3 + $0xb20] sm:$0xff]
  %v4208 = vld [vmem:[%s3 + $0xb28] sm:$0xff]
  %v4209 = vld [vmem:[%s3 + $0xb30] sm:$0xff]
  %v4210 = vld [vmem:[%s3 + $0xb38] sm:$0xff]
  %v4211 = vld [vmem:[%s3 + $0xb40] sm:$0xff]
  %v4212 = vld [vmem:[%s3 + $0xb48] sm:$0xff]
  %v4213 = vld [vmem:[%s3 + $0xb50] sm:$0xff]
  %v4214 = vld [vmem:[%s3 + $0xb58] sm:$0xff]
  %v4215 = vld [vmem:[%s3 + $0xb60] sm:$0xff]
  %v4216 = vld [vmem:[%s3 + $0xb68] sm:$0xff]
  %v4217 = vld [vmem:[%s3 + $0xb70] sm:$0xff]
  %v4218 = vld [vmem:[%s3 + $0xb78] sm:$0xff]
  %v4219 = vld [vmem:[%s3 + $0xb80] sm:$0xff]
  %v4220 = vld [vmem:[%s3 + $0xb88] sm:$0xff]
  %v4221 = vld [vmem:[%s3 + $0xb90] sm:$0xff]
  %v4222 = vld [vmem:[%s3 + $0xb98] sm:$0xff]
  %v4223 = vld [vmem:[%s3 + $0xba0] sm:$0xff]
  %v4224 = vld [vmem:[%s3 + $0xba8] sm:$0xff]
  %v4225 = vld [vmem:[%s3 + $0xbb0] sm:$0xff]
  %v4226 = vld [vmem:[%s3 + $0xbb8] sm:$0xff]
  %v4227 = vld [vmem:[%s3 + $0xbc0] sm:$0xff]
  %v4228 = vld [vmem:[%s3 + $0xbc8] sm:$0xff]
  %v4229 = vld [vmem:[%s3 + $0xbd0] sm:$0xff]
  %v4230 = vld [vmem:[%s3 + $0xbd8] sm:$0xff]
  %v4231 = vld [vmem:[%s3 + $0xbe0] sm:$0xff]
  %v4232 = vld [vmem:[%s3 + $0xbe8] sm:$0xff]
  %v4233 = vld [vmem:[%s3 + $0xbf0] sm:$0xff]
  %v4234 = vld [vmem:[%s3 + $0xbf8] sm:$0xff]
  %v4235 = vld [vmem:[%s3 + $0xc00] sm:$0xff]
  %v4236 = vld [vmem:[%s3 + $0xc08] sm:$0xff]
  %v4237 = vld [vmem:[%s3 + $0xc10] sm:$0xff]
  %v4238 = vld [vmem:[%s3 + $0xc18] sm:$0xff]
  %v4239 = vld [vmem:[%s3 + $0xc20] sm:$0xff]
  %v4240 = vld [vmem:[%s3 + $0xc28] sm:$0xff]
  %v4241 = vld [vmem:[%s3 + $0xc30] sm:$0xff]
  %v4242 = vld [vmem:[%s3 + $0xc38] sm:$0xff]
  %v4243 = vld [vmem:[%s3 + $0xc40] sm:$0xff]
  %v4244 = vld [vmem:[%s3 + $0xc48] sm:$0xff]
  %v4245 = vld [vmem:[%s3 + $0xc50] sm:$0xff]
  %v4246 = vld [vmem:[%s3 + $0xc58] sm:$0xff]
  %v4247 = vld [vmem:[%s3 + $0xc60] sm:$0xff]
  %v4248 = vld [vmem:[%s3 + $0xc68] sm:$0xff]
  %v4249 = vld [vmem:[%s3 + $0xc70] sm:$0xff]
  %v4250 = vld [vmem:[%s3 + $0xc78] sm:$0xff]
  %v4251 = vld [vmem:[%s3 + $0xc80] sm:$0xff]
  %v4252 = vld [vmem:[%s3 + $0xc88] sm:$0xff]
  %v4253 = vld [vmem:[%s3 + $0xc90] sm:$0xff]
  %v4254 = vld [vmem:[%s3 + $0xc98] sm:$0xff]
  %v4255 = vld [vmem:[%s3 + $0xca0] sm:$0xff]
  %v4256 = vld [vmem:[%s3 + $0xca8] sm:$0xff]
  %v4257 = vld [vmem:[%s3 + $0xcb0] sm:$0xff]
  %v4258 = vld [vmem:[%s3 + $0xcb8] sm:$0xff]
  %v4259 = vld [vmem:[%s3 + $0xcc0] sm:$0xff]
  %v4260 = vld [vmem:[%s3 + $0xcc8] sm:$0xff]
  %v4261 = vld [vmem:[%s3 + $0xcd0] sm:$0xff]
  %v4262 = vld [vmem:[%s3 + $0xcd8] sm:$0xff]
  %v4263 = vld [vmem:[%s3 + $0xce0] sm:$0xff]
  %v4264 = vld [vmem:[%s3 + $0xce8] sm:$0xff]
  %v4265 = vld [vmem:[%s3 + $0xcf0] sm:$0xff]
  %v4266 = vld [vmem:[%s3 + $0xcf8] sm:$0xff]
  %v4267 = vld [vmem:[%s3 + $0xd00] sm:$0xff]
  %v4268 = vld [vmem:[%s3 + $0xd08] sm:$0xff]
  %v4269 = vld [vmem:[%s3 + $0xd10] sm:$0xff]
  %v4270 = vld [vmem:[%s3 + $0xd18] sm:$0xff]
  %v4271 = vld [vmem:[%s3 + $0xd20] sm:$0xff]
  %v4272 = vld [vmem:[%s3 + $0xd28] sm:$0xff]
  %v4273 = vld [vmem:[%s3 + $0xd30] sm:$0xff]
  %v4274 = vld [vmem:[%s3 + $0xd38] sm:$0xff]
  %v4275 = vld [vmem:[%s3 + $0xd40] sm:$0xff]
  %v4276 = vld [vmem:[%s3 + $0xd48] sm:$0xff]
  %v4277 = vld [vmem:[%s3 + $0xd50] sm:$0xff]
  %v4278 = vld [vmem:[%s3 + $0xd58] sm:$0xff]
  %v4279 = vld [vmem:[%s3 + $0xd60] sm:$0xff]
  %v4280 = vld [vmem:[%s3 + $0xd68] sm:$0xff]
  %v4281 = vld [vmem:[%s3 + $0xd70] sm:$0xff]
  %v4282 = vld [vmem:[%s3 + $0xd78] sm:$0xff]
  %v4283 = vld [vmem:[%s3 + $0xd80] sm:$0xff]
  %v4284 = vld [vmem:[%s3 + $0xd88] sm:$0xff]
  %v4285 = vld [vmem:[%s3 + $0xd90] sm:$0xff]
  %v4286 = vld [vmem:[%s3 + $0xd98] sm:$0xff]
  %v4287 = vld [vmem:[%s3 + $0xda0] sm:$0xff]
  %v4288 = vld [vmem:[%s3 + $0xda8] sm:$0xff]
  %v4289 = vld [vmem:[%s3 + $0xdb0] sm:$0xff]
  %v4290 = vld [vmem:[%s3 + $0xdb8] sm:$0xff]
  %v4291 = vld [vmem:[%s3 + $0xdc0] sm:$0xff]
  %v4292 = vld [vmem:[%s3 + $0xdc8] sm:$0xff]
  %v4293 = vld [vmem:[%s3 + $0xdd0] sm:$0xff]
  %v4294 = vld [vmem:[%s3 + $0xdd8] sm:$0xff]
  %v4295 = vld [vmem:[%s3 + $0xde0] sm:$0xff]
  %v4296 = vld [vmem:[%s3 + $0xde8] sm:$0xff]
  %v4297 = vld [vmem:[%s3 + $0xdf0] sm:$0xff]
  %v4298 = vld [vmem:[%s3 + $0xdf8] sm:$0xff]
  %v4299 = vld [vmem:[%s3 + $0xe00] sm:$0xff]
  %v4300 = vld [vmem:[%s3 + $0xe08] sm:$0xff]
  %v4301 = vld [vmem:[%s3 + $0xe10] sm:$0xff]
  %v4302 = vld [vmem:[%s3 + $0xe18] sm:$0xff]
  %v4303 = vld [vmem:[%s3 + $0xe20] sm:$0xff]
  %v4304 = vld [vmem:[%s3 + $0xe28] sm:$0xff]
  %v4305 = vld [vmem:[%s3 + $0xe30] sm:$0xff]
  %v4306 = vld [vmem:[%s3 + $0xe38] sm:$0xff]
  %v4307 = vld [vmem:[%s3 + $0xe40] sm:$0xff]
  %v4308 = vld [vmem:[%s3 + $0xe48] sm:$0xff]
  %v4309 = vld [vmem:[%s3 + $0xe50] sm:$0xff]
  %v4310 = vld [vmem:[%s3 + $0xe58] sm:$0xff]
  %v4311 = vld [vmem:[%s3 + $0xe60] sm:$0xff]
  %v4312 = vld [vmem:[%s3 + $0xe68] sm:$0xff]
  %v4313 = vld [vmem:[%s3 + $0xe70] sm:$0xff]
  %v4314 = vld [vmem:[%s3 + $0xe78] sm:$0xff]
  %v4315 = vld [vmem:[%s3 + $0xe80] sm:$0xff]
  %v4316 = vld [vmem:[%s3 + $0xe88] sm:$0xff]
  %v4317 = vld [vmem:[%s3 + $0xe90] sm:$0xff]
  %v4318 = vld [vmem:[%s3 + $0xe98] sm:$0xff]
  %v4319 = vld [vmem:[%s3 + $0xea0] sm:$0xff]
  %v4320 = vld [vmem:[%s3 + $0xea8] sm:$0xff]
  %v4321 = vld [vmem:[%s3 + $0xeb0] sm:$0xff]
  %v4322 = vld [vmem:[%s3 + $0xeb8] sm:$0xff]
  %v4323 = vld [vmem:[%s3 + $0xec0] sm:$0xff]
  %v4324 = vld [vmem:[%s3 + $0xec8] sm:$0xff]
  %v4325 = vld [vmem:[%s3 + $0xed0] sm:$0xff]
  %v4326 = vld [vmem:[%s3 + $0xed8] sm:$0xff]
  %v4327 = vld [vmem:[%s3 + $0xee0] sm:$0xff]
  %v4328 = vld [vmem:[%s3 + $0xee8] sm:$0xff]
  %v4329 = vld [vmem:[%s3 + $0xef0] sm:$0xff]
  %v4330 = vld [vmem:[%s3 + $0xef8] sm:$0xff]
  %v4331 = vld [vmem:[%s3 + $0xf00] sm:$0xff]
  %v4332 = vld [vmem:[%s3 + $0xf08] sm:$0xff]
  %v4333 = vld [vmem:[%s3 + $0xf10] sm:$0xff]
  %v4334 = vld [vmem:[%s3 + $0xf18] sm:$0xff]
  %v4335 = vld [vmem:[%s3 + $0xf20] sm:$0xff]
  %v4336 = vld [vmem:[%s3 + $0xf28] sm:$0xff]
  %v4337 = vld [vmem:[%s3 + $0xf30] sm:$0xff]
  %v4338 = vld [vmem:[%s3 + $0xf38] sm:$0xff]
  %v4339 = vld [vmem:[%s3 + $0xf40] sm:$0xff]
  %v4340 = vld [vmem:[%s3 + $0xf48] sm:$0xff]
  %v4341 = vld [vmem:[%s3 + $0xf50] sm:$0xff]
  %v4342 = vld [vmem:[%s3 + $0xf58] sm:$0xff]
  %v4343 = vld [vmem:[%s3 + $0xf60] sm:$0xff]
  %v4344 = vld [vmem:[%s3 + $0xf68] sm:$0xff]
  %v4345 = vld [vmem:[%s3 + $0xf70] sm:$0xff]
  %v4346 = vld [vmem:[%s3 + $0xf78] sm:$0xff]
  %v4347 = vld [vmem:[%s3 + $0xf80] sm:$0xff]
  %v4348 = vld [vmem:[%s3 + $0xf88] sm:$0xff]
  %v4349 = vld [vmem:[%s3 + $0xf90] sm:$0xff]
  %v4350 = vld [vmem:[%s3 + $0xf98] sm:$0xff]
  %v4351 = vld [vmem:[%s3 + $0xfa0] sm:$0xff]
  %v4352 = vld [vmem:[%s3 + $0xfa8] sm:$0xff]
  %v4353 = vld [vmem:[%s3 + $0xfb0] sm:$0xff]
  %v4354 = vld [vmem:[%s3 + $0xfb8] sm:$0xff]
  %v4355 = vld [vmem:[%s3 + $0xfc0] sm:$0xff]
  %v4356 = vld [vmem:[%s3 + $0xfc8] sm:$0xff]
  %v4357 = vld [vmem:[%s3 + $0xfd0] sm:$0xff]
  %v4358 = vld [vmem:[%s3 + $0xfd8] sm:$0xff]
  %v4359 = vld [vmem:[%s3 + $0xfe0] sm:$0xff]
  %v4360 = vld [vmem:[%s3 + $0xfe8] sm:$0xff]
  %v4361 = vld [vmem:[%s3 + $0xff0] sm:$0xff]
  %v4362 = vld [vmem:[%s3 + $0xff8] sm:$0xff]
  %v4363 = vld [vmem:[%s4] sm:$0xff]
  %v4365 = vlaneseq
  %v4366 = vshrl.u32 %v4365, 7
  %v4367 = vsub.s32 0, %v4366
  %v4368 = vrot.slane %v4363, %v4367
  %v4369 = vlaneseq
  %v4370 = vshrl.u32 %v4369, 7
  %v4371 = vsub.s32 1, %v4370
  %v4372 = vrot.slane %v4363, %v4371
  %v4373 = vlaneseq
  %v4374 = vshrl.u32 %v4373, 7
  %v4375 = vsub.s32 2, %v4374
  %v4376 = vrot.slane %v4363, %v4375
  %v4377 = vlaneseq
  %v4378 = vshrl.u32 %v4377, 7
  %v4379 = vsub.s32 3, %v4378
  %v4380 = vrot.slane %v4363, %v4379
  %v4381 = vlaneseq
  %v4382 = vshrl.u32 %v4381, 7
  %v4383 = vsub.s32 4, %v4382
  %v4384 = vrot.slane %v4363, %v4383
  %v4385 = vlaneseq
  %v4386 = vshrl.u32 %v4385, 7
  %v4387 = vsub.s32 5, %v4386
  %v4388 = vrot.slane %v4363, %v4387
  %v4389 = vlaneseq
  %v4390 = vshrl.u32 %v4389, 7
  %v4391 = vsub.s32 6, %v4390
  %v4392 = vrot.slane %v4363, %v4391
  %v4393 = vlaneseq
  %v4394 = vshrl.u32 %v4393, 7
  %v4395 = vsub.s32 7, %v4394
  %v4396 = vrot.slane %v4363, %v4395
  %v4917 = vunpack.c.l.b16 %v3851
  %v4918 = vunpack.c.h.b16 %v3851
  %v4919 = vunpack.c.l.b16 %v3852
  %v4920 = vunpack.c.h.b16 %v3852
  %v4921 = vunpack.c.l.b16 %v3853
  %v4922 = vunpack.c.h.b16 %v3853
  %v4923 = vunpack.c.l.b16 %v3854
  %v4924 = vunpack.c.h.b16 %v3854
  %v4925 = vunpack.c.l.b16 %v3855
  %v4926 = vunpack.c.h.b16 %v3855
  %v4927 = vunpack.c.l.b16 %v3856
  %v4928 = vunpack.c.h.b16 %v3856
  %v4929 = vunpack.c.l.b16 %v3857
  %v4930 = vunpack.c.h.b16 %v3857
  %v4931 = vunpack.c.l.b16 %v3858
  %v4932 = vunpack.c.h.b16 %v3858
  %v4933 = vunpack.c.l.b16 %v3859
  %v4934 = vunpack.c.h.b16 %v3859
  %v4935 = vunpack.c.l.b16 %v3860
  %v4936 = vunpack.c.h.b16 %v3860
  %v4937 = vunpack.c.l.b16 %v3861
  %v4938 = vunpack.c.h.b16 %v3861
  %v4939 = vunpack.c.l.b16 %v3862
  %v4940 = vunpack.c.h.b16 %v3862
  %v4941 = vunpack.c.l.b16 %v3863
  %v4942 = vunpack.c.h.b16 %v3863
  %v4943 = vunpack.c.l.b16 %v3864
  %v4944 = vunpack.c.h.b16 %v3864
  %v4945 = vunpack.c.l.b16 %v3865
  %v4946 = vunpack.c.h.b16 %v3865
  %v4947 = vunpack.c.l.b16 %v3866
  %v4948 = vunpack.c.h.b16 %v3866
  %v4949 = vunpack.c.l.b16 %v3867
  %v4950 = vunpack.c.h.b16 %v3867
  %v4951 = vunpack.c.l.b16 %v3868
  %v4952 = vunpack.c.h.b16 %v3868
  %v4953 = vunpack.c.l.b16 %v3869
  %v4954 = vunpack.c.h.b16 %v3869
  %v4955 = vunpack.c.l.b16 %v3870
  %v4956 = vunpack.c.h.b16 %v3870
  %v4957 = vunpack.c.l.b16 %v3871
  %v4958 = vunpack.c.h.b16 %v3871
  %v4959 = vunpack.c.l.b16 %v3872
  %v4960 = vunpack.c.h.b16 %v3872
  %v4961 = vunpack.c.l.b16 %v3873
  %v4962 = vunpack.c.h.b16 %v3873
  %v4963 = vunpack.c.l.b16 %v3874
  %v4964 = vunpack.c.h.b16 %v3874
  %v4965 = vunpack.c.l.b16 %v3875
  %v4966 = vunpack.c.h.b16 %v3875
  %v4967 = vunpack.c.l.b16 %v3876
  %v4968 = vunpack.c.h.b16 %v3876
  %v4969 = vunpack.c.l.b16 %v3877
  %v4970 = vunpack.c.h.b16 %v3877
  %v4971 = vunpack.c.l.b16 %v3878
  %v4972 = vunpack.c.h.b16 %v3878
  %v4973 = vunpack.c.l.b16 %v3879
  %v4974 = vunpack.c.h.b16 %v3879
  %v4975 = vunpack.c.l.b16 %v3880
  %v4976 = vunpack.c.h.b16 %v3880
  %v4977 = vunpack.c.l.b16 %v3881
  %v4978 = vunpack.c.h.b16 %v3881
  %v4979 = vunpack.c.l.b16 %v3882
  %v4980 = vunpack.c.h.b16 %v3882
  %v4981 = vunpack.c.l.b16 %v3883
  %v4982 = vunpack.c.h.b16 %v3883
  %v4983 = vunpack.c.l.b16 %v3884
  %v4984 = vunpack.c.h.b16 %v3884
  %v4985 = vunpack.c.l.b16 %v3885
  %v4986 = vunpack.c.h.b16 %v3885
  %v4987 = vunpack.c.l.b16 %v3886
  %v4988 = vunpack.c.h.b16 %v3886
  %v4989 = vunpack.c.l.b16 %v3887
  %v4990 = vunpack.c.h.b16 %v3887
  %v4991 = vunpack.c.l.b16 %v3888
  %v4992 = vunpack.c.h.b16 %v3888
  %v4993 = vunpack.c.l.b16 %v3889
  %v4994 = vunpack.c.h.b16 %v3889
  %v4995 = vunpack.c.l.b16 %v3890
  %v4996 = vunpack.c.h.b16 %v3890
  %v4997 = vunpack.c.l.b16 %v3891
  %v4998 = vunpack.c.h.b16 %v3891
  %v4999 = vunpack.c.l.b16 %v3892
  %v5000 = vunpack.c.h.b16 %v3892
  %v5001 = vunpack.c.l.b16 %v3893
  %v5002 = vunpack.c.h.b16 %v3893
  %v5003 = vunpack.c.l.b16 %v3894
  %v5004 = vunpack.c.h.b16 %v3894
  %v5005 = vunpack.c.l.b16 %v3895
  %v5006 = vunpack.c.h.b16 %v3895
  %v5007 = vunpack.c.l.b16 %v3896
  %v5008 = vunpack.c.h.b16 %v3896
  %v5009 = vunpack.c.l.b16 %v3897
  %v5010 = vunpack.c.h.b16 %v3897
  %v5011 = vunpack.c.l.b16 %v3898
  %v5012 = vunpack.c.h.b16 %v3898
  %v5013 = vunpack.c.l.b16 %v3899
  %v5014 = vunpack.c.h.b16 %v3899
  %v5015 = vunpack.c.l.b16 %v3900
  %v5016 = vunpack.c.h.b16 %v3900
  %v5017 = vunpack.c.l.b16 %v3901
  %v5018 = vunpack.c.h.b16 %v3901
  %v5019 = vunpack.c.l.b16 %v3902
  %v5020 = vunpack.c.h.b16 %v3902
  %v5021 = vunpack.c.l.b16 %v3903
  %v5022 = vunpack.c.h.b16 %v3903
  %v5023 = vunpack.c.l.b16 %v3904
  %v5024 = vunpack.c.h.b16 %v3904
  %v5025 = vunpack.c.l.b16 %v3905
  %v5026 = vunpack.c.h.b16 %v3905
  %v5027 = vunpack.c.l.b16 %v3906
  %v5028 = vunpack.c.h.b16 %v3906
  %v5029 = vunpack.c.l.b16 %v3907
  %v5030 = vunpack.c.h.b16 %v3907
  %v5031 = vunpack.c.l.b16 %v3908
  %v5032 = vunpack.c.h.b16 %v3908
  %v5033 = vunpack.c.l.b16 %v3909
  %v5034 = vunpack.c.h.b16 %v3909
  %v5035 = vunpack.c.l.b16 %v3910
  %v5036 = vunpack.c.h.b16 %v3910
  %v5037 = vunpack.c.l.b16 %v3911
  %v5038 = vunpack.c.h.b16 %v3911
  %v5039 = vunpack.c.l.b16 %v3912
  %v5040 = vunpack.c.h.b16 %v3912
  %v5041 = vunpack.c.l.b16 %v3913
  %v5042 = vunpack.c.h.b16 %v3913
  %v5043 = vunpack.c.l.b16 %v3914
  %v5044 = vunpack.c.h.b16 %v3914
  %v5045 = vunpack.c.l.b16 %v3915
  %v5046 = vunpack.c.h.b16 %v3915
  %v5047 = vunpack.c.l.b16 %v3916
  %v5048 = vunpack.c.h.b16 %v3916
  %v5049 = vunpack.c.l.b16 %v3917
  %v5050 = vunpack.c.h.b16 %v3917
  %v5051 = vunpack.c.l.b16 %v3918
  %v5052 = vunpack.c.h.b16 %v3918
  %v5053 = vunpack.c.l.b16 %v3919
  %v5054 = vunpack.c.h.b16 %v3919
  %v5055 = vunpack.c.l.b16 %v3920
  %v5056 = vunpack.c.h.b16 %v3920
  %v5057 = vunpack.c.l.b16 %v3921
  %v5058 = vunpack.c.h.b16 %v3921
  %v5059 = vunpack.c.l.b16 %v3922
  %v5060 = vunpack.c.h.b16 %v3922
  %v5061 = vunpack.c.l.b16 %v3923
  %v5062 = vunpack.c.h.b16 %v3923
  %v5063 = vunpack.c.l.b16 %v3924
  %v5064 = vunpack.c.h.b16 %v3924
  %v5065 = vunpack.c.l.b16 %v3925
  %v5066 = vunpack.c.h.b16 %v3925
  %v5067 = vunpack.c.l.b16 %v3926
  %v5068 = vunpack.c.h.b16 %v3926
  %v5069 = vunpack.c.l.b16 %v3927
  %v5070 = vunpack.c.h.b16 %v3927
  %v5071 = vunpack.c.l.b16 %v3928
  %v5072 = vunpack.c.h.b16 %v3928
  %v5073 = vunpack.c.l.b16 %v3929
  %v5074 = vunpack.c.h.b16 %v3929
  %v5075 = vunpack.c.l.b16 %v3930
  %v5076 = vunpack.c.h.b16 %v3930
  %v5077 = vunpack.c.l.b16 %v3931
  %v5078 = vunpack.c.h.b16 %v3931
  %v5079 = vunpack.c.l.b16 %v3932
  %v5080 = vunpack.c.h.b16 %v3932
  %v5081 = vunpack.c.l.b16 %v3933
  %v5082 = vunpack.c.h.b16 %v3933
  %v5083 = vunpack.c.l.b16 %v3934
  %v5084 = vunpack.c.h.b16 %v3934
  %v5085 = vunpack.c.l.b16 %v3935
  %v5086 = vunpack.c.h.b16 %v3935
  %v5087 = vunpack.c.l.b16 %v3936
  %v5088 = vunpack.c.h.b16 %v3936
  %v5089 = vunpack.c.l.b16 %v3937
  %v5090 = vunpack.c.h.b16 %v3937
  %v5091 = vunpack.c.l.b16 %v3938
  %v5092 = vunpack.c.h.b16 %v3938
  %v5093 = vunpack.c.l.b16 %v3939
  %v5094 = vunpack.c.h.b16 %v3939
  %v5095 = vunpack.c.l.b16 %v3940
  %v5096 = vunpack.c.h.b16 %v3940
  %v5097 = vunpack.c.l.b16 %v3941
  %v5098 = vunpack.c.h.b16 %v3941
  %v5099 = vunpack.c.l.b16 %v3942
  %v5100 = vunpack.c.h.b16 %v3942
  %v5101 = vunpack.c.l.b16 %v3943
  %v5102 = vunpack.c.h.b16 %v3943
  %v5103 = vunpack.c.l.b16 %v3944
  %v5104 = vunpack.c.h.b16 %v3944
  %v5105 = vunpack.c.l.b16 %v3945
  %v5106 = vunpack.c.h.b16 %v3945
  %v5107 = vunpack.c.l.b16 %v3946
  %v5108 = vunpack.c.h.b16 %v3946
  %v5109 = vunpack.c.l.b16 %v3947
  %v5110 = vunpack.c.h.b16 %v3947
  %v5111 = vunpack.c.l.b16 %v3948
  %v5112 = vunpack.c.h.b16 %v3948
  %v5113 = vunpack.c.l.b16 %v3949
  %v5114 = vunpack.c.h.b16 %v3949
  %v5115 = vunpack.c.l.b16 %v3950
  %v5116 = vunpack.c.h.b16 %v3950
  %v5117 = vunpack.c.l.b16 %v3951
  %v5118 = vunpack.c.h.b16 %v3951
  %v5119 = vunpack.c.l.b16 %v3952
  %v5120 = vunpack.c.h.b16 %v3952
  %v5121 = vunpack.c.l.b16 %v3953
  %v5122 = vunpack.c.h.b16 %v3953
  %v5123 = vunpack.c.l.b16 %v3954
  %v5124 = vunpack.c.h.b16 %v3954
  %v5125 = vunpack.c.l.b16 %v3955
  %v5126 = vunpack.c.h.b16 %v3955
  %v5127 = vunpack.c.l.b16 %v3956
  %v5128 = vunpack.c.h.b16 %v3956
  %v5129 = vunpack.c.l.b16 %v3957
  %v5130 = vunpack.c.h.b16 %v3957
  %v5131 = vunpack.c.l.b16 %v3958
  %v5132 = vunpack.c.h.b16 %v3958
  %v5133 = vunpack.c.l.b16 %v3959
  %v5134 = vunpack.c.h.b16 %v3959
  %v5135 = vunpack.c.l.b16 %v3960
  %v5136 = vunpack.c.h.b16 %v3960
  %v5137 = vunpack.c.l.b16 %v3961
  %v5138 = vunpack.c.h.b16 %v3961
  %v5139 = vunpack.c.l.b16 %v3962
  %v5140 = vunpack.c.h.b16 %v3962
  %v5141 = vunpack.c.l.b16 %v3963
  %v5142 = vunpack.c.h.b16 %v3963
  %v5143 = vunpack.c.l.b16 %v3964
  %v5144 = vunpack.c.h.b16 %v3964
  %v5145 = vunpack.c.l.b16 %v3965
  %v5146 = vunpack.c.h.b16 %v3965
  %v5147 = vunpack.c.l.b16 %v3966
  %v5148 = vunpack.c.h.b16 %v3966
  %v5149 = vunpack.c.l.b16 %v3967
  %v5150 = vunpack.c.h.b16 %v3967
  %v5151 = vunpack.c.l.b16 %v3968
  %v5152 = vunpack.c.h.b16 %v3968
  %v5153 = vunpack.c.l.b16 %v3969
  %v5154 = vunpack.c.h.b16 %v3969
  %v5155 = vunpack.c.l.b16 %v3970
  %v5156 = vunpack.c.h.b16 %v3970
  %v5157 = vunpack.c.l.b16 %v3971
  %v5158 = vunpack.c.h.b16 %v3971
  %v5159 = vunpack.c.l.b16 %v3972
  %v5160 = vunpack.c.h.b16 %v3972
  %v5161 = vunpack.c.l.b16 %v3973
  %v5162 = vunpack.c.h.b16 %v3973
  %v5163 = vunpack.c.l.b16 %v3974
  %v5164 = vunpack.c.h.b16 %v3974
  %v5165 = vunpack.c.l.b16 %v3975
  %v5166 = vunpack.c.h.b16 %v3975
  %v5167 = vunpack.c.l.b16 %v3976
  %v5168 = vunpack.c.h.b16 %v3976
  %v5169 = vunpack.c.l.b16 %v3977
  %v5170 = vunpack.c.h.b16 %v3977
  %v5171 = vunpack.c.l.b16 %v3978
  %v5172 = vunpack.c.h.b16 %v3978
  %v5173 = vunpack.c.l.b16 %v3979
  %v5174 = vunpack.c.h.b16 %v3979
  %v5175 = vunpack.c.l.b16 %v3980
  %v5176 = vunpack.c.h.b16 %v3980
  %v5177 = vunpack.c.l.b16 %v3981
  %v5178 = vunpack.c.h.b16 %v3981
  %v5179 = vunpack.c.l.b16 %v3982
  %v5180 = vunpack.c.h.b16 %v3982
  %v5181 = vunpack.c.l.b16 %v3983
  %v5182 = vunpack.c.h.b16 %v3983
  %v5183 = vunpack.c.l.b16 %v3984
  %v5184 = vunpack.c.h.b16 %v3984
  %v5185 = vunpack.c.l.b16 %v3985
  %v5186 = vunpack.c.h.b16 %v3985
  %v5187 = vunpack.c.l.b16 %v3986
  %v5188 = vunpack.c.h.b16 %v3986
  %v5189 = vunpack.c.l.b16 %v3987
  %v5190 = vunpack.c.h.b16 %v3987
  %v5191 = vunpack.c.l.b16 %v3988
  %v5192 = vunpack.c.h.b16 %v3988
  %v5193 = vunpack.c.l.b16 %v3989
  %v5194 = vunpack.c.h.b16 %v3989
  %v5195 = vunpack.c.l.b16 %v3990
  %v5196 = vunpack.c.h.b16 %v3990
  %v5197 = vunpack.c.l.b16 %v3991
  %v5198 = vunpack.c.h.b16 %v3991
  %v5199 = vunpack.c.l.b16 %v3992
  %v5200 = vunpack.c.h.b16 %v3992
  %v5201 = vunpack.c.l.b16 %v3993
  %v5202 = vunpack.c.h.b16 %v3993
  %v5203 = vunpack.c.l.b16 %v3994
  %v5204 = vunpack.c.h.b16 %v3994
  %v5205 = vunpack.c.l.b16 %v3995
  %v5206 = vunpack.c.h.b16 %v3995
  %v5207 = vunpack.c.l.b16 %v3996
  %v5208 = vunpack.c.h.b16 %v3996
  %v5209 = vunpack.c.l.b16 %v3997
  %v5210 = vunpack.c.h.b16 %v3997
  %v5211 = vunpack.c.l.b16 %v3998
  %v5212 = vunpack.c.h.b16 %v3998
  %v5213 = vunpack.c.l.b16 %v3999
  %v5214 = vunpack.c.h.b16 %v3999
  %v5215 = vunpack.c.l.b16 %v4000
  %v5216 = vunpack.c.h.b16 %v4000
  %v5217 = vunpack.c.l.b16 %v4001
  %v5218 = vunpack.c.h.b16 %v4001
  %v5219 = vunpack.c.l.b16 %v4002
  %v5220 = vunpack.c.h.b16 %v4002
  %v5221 = vunpack.c.l.b16 %v4003
  %v5222 = vunpack.c.h.b16 %v4003
  %v5223 = vunpack.c.l.b16 %v4004
  %v5224 = vunpack.c.h.b16 %v4004
  %v5225 = vunpack.c.l.b16 %v4005
  %v5226 = vunpack.c.h.b16 %v4005
  %v5227 = vunpack.c.l.b16 %v4006
  %v5228 = vunpack.c.h.b16 %v4006
  %v5229 = vunpack.c.l.b16 %v4007
  %v5230 = vunpack.c.h.b16 %v4007
  %v5231 = vunpack.c.l.b16 %v4008
  %v5232 = vunpack.c.h.b16 %v4008
  %v5233 = vunpack.c.l.b16 %v4009
  %v5234 = vunpack.c.h.b16 %v4009
  %v5235 = vunpack.c.l.b16 %v4010
  %v5236 = vunpack.c.h.b16 %v4010
  %v5237 = vunpack.c.l.b16 %v4011
  %v5238 = vunpack.c.h.b16 %v4011
  %v5239 = vunpack.c.l.b16 %v4012
  %v5240 = vunpack.c.h.b16 %v4012
  %v5241 = vunpack.c.l.b16 %v4013
  %v5242 = vunpack.c.h.b16 %v4013
  %v5243 = vunpack.c.l.b16 %v4014
  %v5244 = vunpack.c.h.b16 %v4014
  %v5245 = vunpack.c.l.b16 %v4015
  %v5246 = vunpack.c.h.b16 %v4015
  %v5247 = vunpack.c.l.b16 %v4016
  %v5248 = vunpack.c.h.b16 %v4016
  %v5249 = vunpack.c.l.b16 %v4017
  %v5250 = vunpack.c.h.b16 %v4017
  %v5251 = vunpack.c.l.b16 %v4018
  %v5252 = vunpack.c.h.b16 %v4018
  %v5253 = vunpack.c.l.b16 %v4019
  %v5254 = vunpack.c.h.b16 %v4019
  %v5255 = vunpack.c.l.b16 %v4020
  %v5256 = vunpack.c.h.b16 %v4020
  %v5257 = vunpack.c.l.b16 %v4021
  %v5258 = vunpack.c.h.b16 %v4021
  %v5259 = vunpack.c.l.b16 %v4022
  %v5260 = vunpack.c.h.b16 %v4022
  %v5261 = vunpack.c.l.b16 %v4023
  %v5262 = vunpack.c.h.b16 %v4023
  %v5263 = vunpack.c.l.b16 %v4024
  %v5264 = vunpack.c.h.b16 %v4024
  %v5265 = vunpack.c.l.b16 %v4025
  %v5266 = vunpack.c.h.b16 %v4025
  %v5267 = vunpack.c.l.b16 %v4026
  %v5268 = vunpack.c.h.b16 %v4026
  %v5269 = vunpack.c.l.b16 %v4027
  %v5270 = vunpack.c.h.b16 %v4027
  %v5271 = vunpack.c.l.b16 %v4028
  %v5272 = vunpack.c.h.b16 %v4028
  %v5273 = vunpack.c.l.b16 %v4029
  %v5274 = vunpack.c.h.b16 %v4029
  %v5275 = vunpack.c.l.b16 %v4030
  %v5276 = vunpack.c.h.b16 %v4030
  %v5277 = vunpack.c.l.b16 %v4031
  %v5278 = vunpack.c.h.b16 %v4031
  %v5279 = vunpack.c.l.b16 %v4032
  %v5280 = vunpack.c.h.b16 %v4032
  %v5281 = vunpack.c.l.b16 %v4033
  %v5282 = vunpack.c.h.b16 %v4033
  %v5283 = vunpack.c.l.b16 %v4034
  %v5284 = vunpack.c.h.b16 %v4034
  %v5285 = vunpack.c.l.b16 %v4035
  %v5286 = vunpack.c.h.b16 %v4035
  %v5287 = vunpack.c.l.b16 %v4036
  %v5288 = vunpack.c.h.b16 %v4036
  %v5289 = vunpack.c.l.b16 %v4037
  %v5290 = vunpack.c.h.b16 %v4037
  %v5291 = vunpack.c.l.b16 %v4038
  %v5292 = vunpack.c.h.b16 %v4038
  %v5293 = vunpack.c.l.b16 %v4039
  %v5294 = vunpack.c.h.b16 %v4039
  %v5295 = vunpack.c.l.b16 %v4040
  %v5296 = vunpack.c.h.b16 %v4040
  %v5297 = vunpack.c.l.b16 %v4041
  %v5298 = vunpack.c.h.b16 %v4041
  %v5299 = vunpack.c.l.b16 %v4042
  %v5300 = vunpack.c.h.b16 %v4042
  %v5301 = vunpack.c.l.b16 %v4043
  %v5302 = vunpack.c.h.b16 %v4043
  %v5303 = vunpack.c.l.b16 %v4044
  %v5304 = vunpack.c.h.b16 %v4044
  %v5305 = vunpack.c.l.b16 %v4045
  %v5306 = vunpack.c.h.b16 %v4045
  %v5307 = vunpack.c.l.b16 %v4046
  %v5308 = vunpack.c.h.b16 %v4046
  %v5309 = vunpack.c.l.b16 %v4047
  %v5310 = vunpack.c.h.b16 %v4047
  %v5311 = vunpack.c.l.b16 %v4048
  %v5312 = vunpack.c.h.b16 %v4048
  %v5313 = vunpack.c.l.b16 %v4049
  %v5314 = vunpack.c.h.b16 %v4049
  %v5315 = vunpack.c.l.b16 %v4050
  %v5316 = vunpack.c.h.b16 %v4050
  %v5317 = vunpack.c.l.b16 %v4051
  %v5318 = vunpack.c.h.b16 %v4051
  %v5319 = vunpack.c.l.b16 %v4052
  %v5320 = vunpack.c.h.b16 %v4052
  %v5321 = vunpack.c.l.b16 %v4053
  %v5322 = vunpack.c.h.b16 %v4053
  %v5323 = vunpack.c.l.b16 %v4054
  %v5324 = vunpack.c.h.b16 %v4054
  %v5325 = vunpack.c.l.b16 %v4055
  %v5326 = vunpack.c.h.b16 %v4055
  %v5327 = vunpack.c.l.b16 %v4056
  %v5328 = vunpack.c.h.b16 %v4056
  %v5329 = vunpack.c.l.b16 %v4057
  %v5330 = vunpack.c.h.b16 %v4057
  %v5331 = vunpack.c.l.b16 %v4058
  %v5332 = vunpack.c.h.b16 %v4058
  %v5333 = vunpack.c.l.b16 %v4059
  %v5334 = vunpack.c.h.b16 %v4059
  %v5335 = vunpack.c.l.b16 %v4060
  %v5336 = vunpack.c.h.b16 %v4060
  %v5337 = vunpack.c.l.b16 %v4061
  %v5338 = vunpack.c.h.b16 %v4061
  %v5339 = vunpack.c.l.b16 %v4062
  %v5340 = vunpack.c.h.b16 %v4062
  %v5341 = vunpack.c.l.b16 %v4063
  %v5342 = vunpack.c.h.b16 %v4063
  %v5343 = vunpack.c.l.b16 %v4064
  %v5344 = vunpack.c.h.b16 %v4064
  %v5345 = vunpack.c.l.b16 %v4065
  %v5346 = vunpack.c.h.b16 %v4065
  %v5347 = vunpack.c.l.b16 %v4066
  %v5348 = vunpack.c.h.b16 %v4066
  %v5349 = vunpack.c.l.b16 %v4067
  %v5350 = vunpack.c.h.b16 %v4067
  %v5351 = vunpack.c.l.b16 %v4068
  %v5352 = vunpack.c.h.b16 %v4068
  %v5353 = vunpack.c.l.b16 %v4069
  %v5354 = vunpack.c.h.b16 %v4069
  %v5355 = vunpack.c.l.b16 %v4070
  %v5356 = vunpack.c.h.b16 %v4070
  %v5357 = vunpack.c.l.b16 %v4071
  %v5358 = vunpack.c.h.b16 %v4071
  %v5359 = vunpack.c.l.b16 %v4072
  %v5360 = vunpack.c.h.b16 %v4072
  %v5361 = vunpack.c.l.b16 %v4073
  %v5362 = vunpack.c.h.b16 %v4073
  %v5363 = vunpack.c.l.b16 %v4074
  %v5364 = vunpack.c.h.b16 %v4074
  %v5365 = vunpack.c.l.b16 %v4075
  %v5366 = vunpack.c.h.b16 %v4075
  %v5367 = vunpack.c.l.b16 %v4076
  %v5368 = vunpack.c.h.b16 %v4076
  %v5369 = vunpack.c.l.b16 %v4077
  %v5370 = vunpack.c.h.b16 %v4077
  %v5371 = vunpack.c.l.b16 %v4078
  %v5372 = vunpack.c.h.b16 %v4078
  %v5373 = vunpack.c.l.b16 %v4079
  %v5374 = vunpack.c.h.b16 %v4079
  %v5375 = vunpack.c.l.b16 %v4080
  %v5376 = vunpack.c.h.b16 %v4080
  %v5377 = vunpack.c.l.b16 %v4081
  %v5378 = vunpack.c.h.b16 %v4081
  %v5379 = vunpack.c.l.b16 %v4082
  %v5380 = vunpack.c.h.b16 %v4082
  %v5381 = vunpack.c.l.b16 %v4083
  %v5382 = vunpack.c.h.b16 %v4083
  %v5383 = vunpack.c.l.b16 %v4084
  %v5384 = vunpack.c.h.b16 %v4084
  %v5385 = vunpack.c.l.b16 %v4085
  %v5386 = vunpack.c.h.b16 %v4085
  %v5387 = vunpack.c.l.b16 %v4086
  %v5388 = vunpack.c.h.b16 %v4086
  %v5389 = vunpack.c.l.b16 %v4087
  %v5390 = vunpack.c.h.b16 %v4087
  %v5391 = vunpack.c.l.b16 %v4088
  %v5392 = vunpack.c.h.b16 %v4088
  %v5393 = vunpack.c.l.b16 %v4089
  %v5394 = vunpack.c.h.b16 %v4089
  %v5395 = vunpack.c.l.b16 %v4090
  %v5396 = vunpack.c.h.b16 %v4090
  %v5397 = vunpack.c.l.b16 %v4091
  %v5398 = vunpack.c.h.b16 %v4091
  %v5399 = vunpack.c.l.b16 %v4092
  %v5400 = vunpack.c.h.b16 %v4092
  %v5401 = vunpack.c.l.b16 %v4093
  %v5402 = vunpack.c.h.b16 %v4093
  %v5403 = vunpack.c.l.b16 %v4094
  %v5404 = vunpack.c.h.b16 %v4094
  %v5405 = vunpack.c.l.b16 %v4095
  %v5406 = vunpack.c.h.b16 %v4095
  %v5407 = vunpack.c.l.b16 %v4096
  %v5408 = vunpack.c.h.b16 %v4096
  %v5409 = vunpack.c.l.b16 %v4097
  %v5410 = vunpack.c.h.b16 %v4097
  %v5411 = vunpack.c.l.b16 %v4098
  %v5412 = vunpack.c.h.b16 %v4098
  %v5413 = vunpack.c.l.b16 %v4099
  %v5414 = vunpack.c.h.b16 %v4099
  %v5415 = vunpack.c.l.b16 %v4100
  %v5416 = vunpack.c.h.b16 %v4100
  %v5417 = vunpack.c.l.b16 %v4101
  %v5418 = vunpack.c.h.b16 %v4101
  %v5419 = vunpack.c.l.b16 %v4102
  %v5420 = vunpack.c.h.b16 %v4102
  %v5421 = vunpack.c.l.b16 %v4103
  %v5422 = vunpack.c.h.b16 %v4103
  %v5423 = vunpack.c.l.b16 %v4104
  %v5424 = vunpack.c.h.b16 %v4104
  %v5425 = vunpack.c.l.b16 %v4105
  %v5426 = vunpack.c.h.b16 %v4105
  %v5427 = vunpack.c.l.b16 %v4106
  %v5428 = vunpack.c.h.b16 %v4106
  %v5429 = vunpack.c.l.b16 %v4107
  %v5430 = vunpack.c.h.b16 %v4107
  %v5431 = vunpack.c.l.b16 %v4108
  %v5432 = vunpack.c.h.b16 %v4108
  %v5433 = vunpack.c.l.b16 %v4109
  %v5434 = vunpack.c.h.b16 %v4109
  %v5435 = vunpack.c.l.b16 %v4110
  %v5436 = vunpack.c.h.b16 %v4110
  %v5437 = vunpack.c.l.b16 %v4111
  %v5438 = vunpack.c.h.b16 %v4111
  %v5439 = vunpack.c.l.b16 %v4112
  %v5440 = vunpack.c.h.b16 %v4112
  %v5441 = vunpack.c.l.b16 %v4113
  %v5442 = vunpack.c.h.b16 %v4113
  %v5443 = vunpack.c.l.b16 %v4114
  %v5444 = vunpack.c.h.b16 %v4114
  %v5445 = vunpack.c.l.b16 %v4115
  %v5446 = vunpack.c.h.b16 %v4115
  %v5447 = vunpack.c.l.b16 %v4116
  %v5448 = vunpack.c.h.b16 %v4116
  %v5449 = vunpack.c.l.b16 %v4117
  %v5450 = vunpack.c.h.b16 %v4117
  %v5451 = vunpack.c.l.b16 %v4118
  %v5452 = vunpack.c.h.b16 %v4118
  %v5453 = vunpack.c.l.b16 %v4119
  %v5454 = vunpack.c.h.b16 %v4119
  %v5455 = vunpack.c.l.b16 %v4120
  %v5456 = vunpack.c.h.b16 %v4120
  %v5457 = vunpack.c.l.b16 %v4121
  %v5458 = vunpack.c.h.b16 %v4121
  %v5459 = vunpack.c.l.b16 %v4122
  %v5460 = vunpack.c.h.b16 %v4122
  %v5461 = vunpack.c.l.b16 %v4123
  %v5462 = vunpack.c.h.b16 %v4123
  %v5463 = vunpack.c.l.b16 %v4124
  %v5464 = vunpack.c.h.b16 %v4124
  %v5465 = vunpack.c.l.b16 %v4125
  %v5466 = vunpack.c.h.b16 %v4125
  %v5467 = vunpack.c.l.b16 %v4126
  %v5468 = vunpack.c.h.b16 %v4126
  %v5469 = vunpack.c.l.b16 %v4127
  %v5470 = vunpack.c.h.b16 %v4127
  %v5471 = vunpack.c.l.b16 %v4128
  %v5472 = vunpack.c.h.b16 %v4128
  %v5473 = vunpack.c.l.b16 %v4129
  %v5474 = vunpack.c.h.b16 %v4129
  %v5475 = vunpack.c.l.b16 %v4130
  %v5476 = vunpack.c.h.b16 %v4130
  %v5477 = vunpack.c.l.b16 %v4131
  %v5478 = vunpack.c.h.b16 %v4131
  %v5479 = vunpack.c.l.b16 %v4132
  %v5480 = vunpack.c.h.b16 %v4132
  %v5481 = vunpack.c.l.b16 %v4133
  %v5482 = vunpack.c.h.b16 %v4133
  %v5483 = vunpack.c.l.b16 %v4134
  %v5484 = vunpack.c.h.b16 %v4134
  %v5485 = vunpack.c.l.b16 %v4135
  %v5486 = vunpack.c.h.b16 %v4135
  %v5487 = vunpack.c.l.b16 %v4136
  %v5488 = vunpack.c.h.b16 %v4136
  %v5489 = vunpack.c.l.b16 %v4137
  %v5490 = vunpack.c.h.b16 %v4137
  %v5491 = vunpack.c.l.b16 %v4138
  %v5492 = vunpack.c.h.b16 %v4138
  %v5493 = vunpack.c.l.b16 %v4139
  %v5494 = vunpack.c.h.b16 %v4139
  %v5495 = vunpack.c.l.b16 %v4140
  %v5496 = vunpack.c.h.b16 %v4140
  %v5497 = vunpack.c.l.b16 %v4141
  %v5498 = vunpack.c.h.b16 %v4141
  %v5499 = vunpack.c.l.b16 %v4142
  %v5500 = vunpack.c.h.b16 %v4142
  %v5501 = vunpack.c.l.b16 %v4143
  %v5502 = vunpack.c.h.b16 %v4143
  %v5503 = vunpack.c.l.b16 %v4144
  %v5504 = vunpack.c.h.b16 %v4144
  %v5505 = vunpack.c.l.b16 %v4145
  %v5506 = vunpack.c.h.b16 %v4145
  %v5507 = vunpack.c.l.b16 %v4146
  %v5508 = vunpack.c.h.b16 %v4146
  %v5509 = vunpack.c.l.b16 %v4147
  %v5510 = vunpack.c.h.b16 %v4147
  %v5511 = vunpack.c.l.b16 %v4148
  %v5512 = vunpack.c.h.b16 %v4148
  %v5513 = vunpack.c.l.b16 %v4149
  %v5514 = vunpack.c.h.b16 %v4149
  %v5515 = vunpack.c.l.b16 %v4150
  %v5516 = vunpack.c.h.b16 %v4150
  %v5517 = vunpack.c.l.b16 %v4151
  %v5518 = vunpack.c.h.b16 %v4151
  %v5519 = vunpack.c.l.b16 %v4152
  %v5520 = vunpack.c.h.b16 %v4152
  %v5521 = vunpack.c.l.b16 %v4153
  %v5522 = vunpack.c.h.b16 %v4153
  %v5523 = vunpack.c.l.b16 %v4154
  %v5524 = vunpack.c.h.b16 %v4154
  %v5525 = vunpack.c.l.b16 %v4155
  %v5526 = vunpack.c.h.b16 %v4155
  %v5527 = vunpack.c.l.b16 %v4156
  %v5528 = vunpack.c.h.b16 %v4156
  %v5529 = vunpack.c.l.b16 %v4157
  %v5530 = vunpack.c.h.b16 %v4157
  %v5531 = vunpack.c.l.b16 %v4158
  %v5532 = vunpack.c.h.b16 %v4158
  %v5533 = vunpack.c.l.b16 %v4159
  %v5534 = vunpack.c.h.b16 %v4159
  %v5535 = vunpack.c.l.b16 %v4160
  %v5536 = vunpack.c.h.b16 %v4160
  %v5537 = vunpack.c.l.b16 %v4161
  %v5538 = vunpack.c.h.b16 %v4161
  %v5539 = vunpack.c.l.b16 %v4162
  %v5540 = vunpack.c.h.b16 %v4162
  %v5541 = vunpack.c.l.b16 %v4163
  %v5542 = vunpack.c.h.b16 %v4163
  %v5543 = vunpack.c.l.b16 %v4164
  %v5544 = vunpack.c.h.b16 %v4164
  %v5545 = vunpack.c.l.b16 %v4165
  %v5546 = vunpack.c.h.b16 %v4165
  %v5547 = vunpack.c.l.b16 %v4166
  %v5548 = vunpack.c.h.b16 %v4166
  %v5549 = vunpack.c.l.b16 %v4167
  %v5550 = vunpack.c.h.b16 %v4167
  %v5551 = vunpack.c.l.b16 %v4168
  %v5552 = vunpack.c.h.b16 %v4168
  %v5553 = vunpack.c.l.b16 %v4169
  %v5554 = vunpack.c.h.b16 %v4169
  %v5555 = vunpack.c.l.b16 %v4170
  %v5556 = vunpack.c.h.b16 %v4170
  %v5557 = vunpack.c.l.b16 %v4171
  %v5558 = vunpack.c.h.b16 %v4171
  %v5559 = vunpack.c.l.b16 %v4172
  %v5560 = vunpack.c.h.b16 %v4172
  %v5561 = vunpack.c.l.b16 %v4173
  %v5562 = vunpack.c.h.b16 %v4173
  %v5563 = vunpack.c.l.b16 %v4174
  %v5564 = vunpack.c.h.b16 %v4174
  %v5565 = vunpack.c.l.b16 %v4175
  %v5566 = vunpack.c.h.b16 %v4175
  %v5567 = vunpack.c.l.b16 %v4176
  %v5568 = vunpack.c.h.b16 %v4176
  %v5569 = vunpack.c.l.b16 %v4177
  %v5570 = vunpack.c.h.b16 %v4177
  %v5571 = vunpack.c.l.b16 %v4178
  %v5572 = vunpack.c.h.b16 %v4178
  %v5573 = vunpack.c.l.b16 %v4179
  %v5574 = vunpack.c.h.b16 %v4179
  %v5575 = vunpack.c.l.b16 %v4180
  %v5576 = vunpack.c.h.b16 %v4180
  %v5577 = vunpack.c.l.b16 %v4181
  %v5578 = vunpack.c.h.b16 %v4181
  %v5579 = vunpack.c.l.b16 %v4182
  %v5580 = vunpack.c.h.b16 %v4182
  %v5581 = vunpack.c.l.b16 %v4183
  %v5582 = vunpack.c.h.b16 %v4183
  %v5583 = vunpack.c.l.b16 %v4184
  %v5584 = vunpack.c.h.b16 %v4184
  %v5585 = vunpack.c.l.b16 %v4185
  %v5586 = vunpack.c.h.b16 %v4185
  %v5587 = vunpack.c.l.b16 %v4186
  %v5588 = vunpack.c.h.b16 %v4186
  %v5589 = vunpack.c.l.b16 %v4187
  %v5590 = vunpack.c.h.b16 %v4187
  %v5591 = vunpack.c.l.b16 %v4188
  %v5592 = vunpack.c.h.b16 %v4188
  %v5593 = vunpack.c.l.b16 %v4189
  %v5594 = vunpack.c.h.b16 %v4189
  %v5595 = vunpack.c.l.b16 %v4190
  %v5596 = vunpack.c.h.b16 %v4190
  %v5597 = vunpack.c.l.b16 %v4191
  %v5598 = vunpack.c.h.b16 %v4191
  %v5599 = vunpack.c.l.b16 %v4192
  %v5600 = vunpack.c.h.b16 %v4192
  %v5601 = vunpack.c.l.b16 %v4193
  %v5602 = vunpack.c.h.b16 %v4193
  %v5603 = vunpack.c.l.b16 %v4194
  %v5604 = vunpack.c.h.b16 %v4194
  %v5605 = vunpack.c.l.b16 %v4195
  %v5606 = vunpack.c.h.b16 %v4195
  %v5607 = vunpack.c.l.b16 %v4196
  %v5608 = vunpack.c.h.b16 %v4196
  %v5609 = vunpack.c.l.b16 %v4197
  %v5610 = vunpack.c.h.b16 %v4197
  %v5611 = vunpack.c.l.b16 %v4198
  %v5612 = vunpack.c.h.b16 %v4198
  %v5613 = vunpack.c.l.b16 %v4199
  %v5614 = vunpack.c.h.b16 %v4199
  %v5615 = vunpack.c.l.b16 %v4200
  %v5616 = vunpack.c.h.b16 %v4200
  %v5617 = vunpack.c.l.b16 %v4201
  %v5618 = vunpack.c.h.b16 %v4201
  %v5619 = vunpack.c.l.b16 %v4202
  %v5620 = vunpack.c.h.b16 %v4202
  %v5621 = vunpack.c.l.b16 %v4203
  %v5622 = vunpack.c.h.b16 %v4203
  %v5623 = vunpack.c.l.b16 %v4204
  %v5624 = vunpack.c.h.b16 %v4204
  %v5625 = vunpack.c.l.b16 %v4205
  %v5626 = vunpack.c.h.b16 %v4205
  %v5627 = vunpack.c.l.b16 %v4206
  %v5628 = vunpack.c.h.b16 %v4206
  %v5629 = vunpack.c.l.b16 %v4207
  %v5630 = vunpack.c.h.b16 %v4207
  %v5631 = vunpack.c.l.b16 %v4208
  %v5632 = vunpack.c.h.b16 %v4208
  %v5633 = vunpack.c.l.b16 %v4209
  %v5634 = vunpack.c.h.b16 %v4209
  %v5635 = vunpack.c.l.b16 %v4210
  %v5636 = vunpack.c.h.b16 %v4210
  %v5637 = vunpack.c.l.b16 %v4211
  %v5638 = vunpack.c.h.b16 %v4211
  %v5639 = vunpack.c.l.b16 %v4212
  %v5640 = vunpack.c.h.b16 %v4212
  %v5641 = vunpack.c.l.b16 %v4213
  %v5642 = vunpack.c.h.b16 %v4213
  %v5643 = vunpack.c.l.b16 %v4214
  %v5644 = vunpack.c.h.b16 %v4214
  %v5645 = vunpack.c.l.b16 %v4215
  %v5646 = vunpack.c.h.b16 %v4215
  %v5647 = vunpack.c.l.b16 %v4216
  %v5648 = vunpack.c.h.b16 %v4216
  %v5649 = vunpack.c.l.b16 %v4217
  %v5650 = vunpack.c.h.b16 %v4217
  %v5651 = vunpack.c.l.b16 %v4218
  %v5652 = vunpack.c.h.b16 %v4218
  %v5653 = vunpack.c.l.b16 %v4219
  %v5654 = vunpack.c.h.b16 %v4219
  %v5655 = vunpack.c.l.b16 %v4220
  %v5656 = vunpack.c.h.b16 %v4220
  %v5657 = vunpack.c.l.b16 %v4221
  %v5658 = vunpack.c.h.b16 %v4221
  %v5659 = vunpack.c.l.b16 %v4222
  %v5660 = vunpack.c.h.b16 %v4222
  %v5661 = vunpack.c.l.b16 %v4223
  %v5662 = vunpack.c.h.b16 %v4223
  %v5663 = vunpack.c.l.b16 %v4224
  %v5664 = vunpack.c.h.b16 %v4224
  %v5665 = vunpack.c.l.b16 %v4225
  %v5666 = vunpack.c.h.b16 %v4225
  %v5667 = vunpack.c.l.b16 %v4226
  %v5668 = vunpack.c.h.b16 %v4226
  %v5669 = vunpack.c.l.b16 %v4227
  %v5670 = vunpack.c.h.b16 %v4227
  %v5671 = vunpack.c.l.b16 %v4228
  %v5672 = vunpack.c.h.b16 %v4228
  %v5673 = vunpack.c.l.b16 %v4229
  %v5674 = vunpack.c.h.b16 %v4229
  %v5675 = vunpack.c.l.b16 %v4230
  %v5676 = vunpack.c.h.b16 %v4230
  %v5677 = vunpack.c.l.b16 %v4231
  %v5678 = vunpack.c.h.b16 %v4231
  %v5679 = vunpack.c.l.b16 %v4232
  %v5680 = vunpack.c.h.b16 %v4232
  %v5681 = vunpack.c.l.b16 %v4233
  %v5682 = vunpack.c.h.b16 %v4233
  %v5683 = vunpack.c.l.b16 %v4234
  %v5684 = vunpack.c.h.b16 %v4234
  %v5685 = vunpack.c.l.b16 %v4235
  %v5686 = vunpack.c.h.b16 %v4235
  %v5687 = vunpack.c.l.b16 %v4236
  %v5688 = vunpack.c.h.b16 %v4236
  %v5689 = vunpack.c.l.b16 %v4237
  %v5690 = vunpack.c.h.b16 %v4237
  %v5691 = vunpack.c.l.b16 %v4238
  %v5692 = vunpack.c.h.b16 %v4238
  %v5693 = vunpack.c.l.b16 %v4239
  %v5694 = vunpack.c.h.b16 %v4239
  %v5695 = vunpack.c.l.b16 %v4240
  %v5696 = vunpack.c.h.b16 %v4240
  %v5697 = vunpack.c.l.b16 %v4241
  %v5698 = vunpack.c.h.b16 %v4241
  %v5699 = vunpack.c.l.b16 %v4242
  %v5700 = vunpack.c.h.b16 %v4242
  %v5701 = vunpack.c.l.b16 %v4243
  %v5702 = vunpack.c.h.b16 %v4243
  %v5703 = vunpack.c.l.b16 %v4244
  %v5704 = vunpack.c.h.b16 %v4244
  %v5705 = vunpack.c.l.b16 %v4245
  %v5706 = vunpack.c.h.b16 %v4245
  %v5707 = vunpack.c.l.b16 %v4246
  %v5708 = vunpack.c.h.b16 %v4246
  %v5709 = vunpack.c.l.b16 %v4247
  %v5710 = vunpack.c.h.b16 %v4247
  %v5711 = vunpack.c.l.b16 %v4248
  %v5712 = vunpack.c.h.b16 %v4248
  %v5713 = vunpack.c.l.b16 %v4249
  %v5714 = vunpack.c.h.b16 %v4249
  %v5715 = vunpack.c.l.b16 %v4250
  %v5716 = vunpack.c.h.b16 %v4250
  %v5717 = vunpack.c.l.b16 %v4251
  %v5718 = vunpack.c.h.b16 %v4251
  %v5719 = vunpack.c.l.b16 %v4252
  %v5720 = vunpack.c.h.b16 %v4252
  %v5721 = vunpack.c.l.b16 %v4253
  %v5722 = vunpack.c.h.b16 %v4253
  %v5723 = vunpack.c.l.b16 %v4254
  %v5724 = vunpack.c.h.b16 %v4254
  %v5725 = vunpack.c.l.b16 %v4255
  %v5726 = vunpack.c.h.b16 %v4255
  %v5727 = vunpack.c.l.b16 %v4256
  %v5728 = vunpack.c.h.b16 %v4256
  %v5729 = vunpack.c.l.b16 %v4257
  %v5730 = vunpack.c.h.b16 %v4257
  %v5731 = vunpack.c.l.b16 %v4258
  %v5732 = vunpack.c.h.b16 %v4258
  %v5733 = vunpack.c.l.b16 %v4259
  %v5734 = vunpack.c.h.b16 %v4259
  %v5735 = vunpack.c.l.b16 %v4260
  %v5736 = vunpack.c.h.b16 %v4260
  %v5737 = vunpack.c.l.b16 %v4261
  %v5738 = vunpack.c.h.b16 %v4261
  %v5739 = vunpack.c.l.b16 %v4262
  %v5740 = vunpack.c.h.b16 %v4262
  %v5741 = vunpack.c.l.b16 %v4263
  %v5742 = vunpack.c.h.b16 %v4263
  %v5743 = vunpack.c.l.b16 %v4264
  %v5744 = vunpack.c.h.b16 %v4264
  %v5745 = vunpack.c.l.b16 %v4265
  %v5746 = vunpack.c.h.b16 %v4265
  %v5747 = vunpack.c.l.b16 %v4266
  %v5748 = vunpack.c.h.b16 %v4266
  %v5749 = vunpack.c.l.b16 %v4267
  %v5750 = vunpack.c.h.b16 %v4267
  %v5751 = vunpack.c.l.b16 %v4268
  %v5752 = vunpack.c.h.b16 %v4268
  %v5753 = vunpack.c.l.b16 %v4269
  %v5754 = vunpack.c.h.b16 %v4269
  %v5755 = vunpack.c.l.b16 %v4270
  %v5756 = vunpack.c.h.b16 %v4270
  %v5757 = vunpack.c.l.b16 %v4271
  %v5758 = vunpack.c.h.b16 %v4271
  %v5759 = vunpack.c.l.b16 %v4272
  %v5760 = vunpack.c.h.b16 %v4272
  %v5761 = vunpack.c.l.b16 %v4273
  %v5762 = vunpack.c.h.b16 %v4273
  %v5763 = vunpack.c.l.b16 %v4274
  %v5764 = vunpack.c.h.b16 %v4274
  %v5765 = vunpack.c.l.b16 %v4275
  %v5766 = vunpack.c.h.b16 %v4275
  %v5767 = vunpack.c.l.b16 %v4276
  %v5768 = vunpack.c.h.b16 %v4276
  %v5769 = vunpack.c.l.b16 %v4277
  %v5770 = vunpack.c.h.b16 %v4277
  %v5771 = vunpack.c.l.b16 %v4278
  %v5772 = vunpack.c.h.b16 %v4278
  %v5773 = vunpack.c.l.b16 %v4279
  %v5774 = vunpack.c.h.b16 %v4279
  %v5775 = vunpack.c.l.b16 %v4280
  %v5776 = vunpack.c.h.b16 %v4280
  %v5777 = vunpack.c.l.b16 %v4281
  %v5778 = vunpack.c.h.b16 %v4281
  %v5779 = vunpack.c.l.b16 %v4282
  %v5780 = vunpack.c.h.b16 %v4282
  %v5781 = vunpack.c.l.b16 %v4283
  %v5782 = vunpack.c.h.b16 %v4283
  %v5783 = vunpack.c.l.b16 %v4284
  %v5784 = vunpack.c.h.b16 %v4284
  %v5785 = vunpack.c.l.b16 %v4285
  %v5786 = vunpack.c.h.b16 %v4285
  %v5787 = vunpack.c.l.b16 %v4286
  %v5788 = vunpack.c.h.b16 %v4286
  %v5789 = vunpack.c.l.b16 %v4287
  %v5790 = vunpack.c.h.b16 %v4287
  %v5791 = vunpack.c.l.b16 %v4288
  %v5792 = vunpack.c.h.b16 %v4288
  %v5793 = vunpack.c.l.b16 %v4289
  %v5794 = vunpack.c.h.b16 %v4289
  %v5795 = vunpack.c.l.b16 %v4290
  %v5796 = vunpack.c.h.b16 %v4290
  %v5797 = vunpack.c.l.b16 %v4291
  %v5798 = vunpack.c.h.b16 %v4291
  %v5799 = vunpack.c.l.b16 %v4292
  %v5800 = vunpack.c.h.b16 %v4292
  %v5801 = vunpack.c.l.b16 %v4293
  %v5802 = vunpack.c.h.b16 %v4293
  %v5803 = vunpack.c.l.b16 %v4294
  %v5804 = vunpack.c.h.b16 %v4294
  %v5805 = vunpack.c.l.b16 %v4295
  %v5806 = vunpack.c.h.b16 %v4295
  %v5807 = vunpack.c.l.b16 %v4296
  %v5808 = vunpack.c.h.b16 %v4296
  %v5809 = vunpack.c.l.b16 %v4297
  %v5810 = vunpack.c.h.b16 %v4297
  %v5811 = vunpack.c.l.b16 %v4298
  %v5812 = vunpack.c.h.b16 %v4298
  %v5813 = vunpack.c.l.b16 %v4299
  %v5814 = vunpack.c.h.b16 %v4299
  %v5815 = vunpack.c.l.b16 %v4300
  %v5816 = vunpack.c.h.b16 %v4300
  %v5817 = vunpack.c.l.b16 %v4301
  %v5818 = vunpack.c.h.b16 %v4301
  %v5819 = vunpack.c.l.b16 %v4302
  %v5820 = vunpack.c.h.b16 %v4302
  %v5821 = vunpack.c.l.b16 %v4303
  %v5822 = vunpack.c.h.b16 %v4303
  %v5823 = vunpack.c.l.b16 %v4304
  %v5824 = vunpack.c.h.b16 %v4304
  %v5825 = vunpack.c.l.b16 %v4305
  %v5826 = vunpack.c.h.b16 %v4305
  %v5827 = vunpack.c.l.b16 %v4306
  %v5828 = vunpack.c.h.b16 %v4306
  %v5829 = vunpack.c.l.b16 %v4307
  %v5830 = vunpack.c.h.b16 %v4307
  %v5831 = vunpack.c.l.b16 %v4308
  %v5832 = vunpack.c.h.b16 %v4308
  %v5833 = vunpack.c.l.b16 %v4309
  %v5834 = vunpack.c.h.b16 %v4309
  %v5835 = vunpack.c.l.b16 %v4310
  %v5836 = vunpack.c.h.b16 %v4310
  %v5837 = vunpack.c.l.b16 %v4311
  %v5838 = vunpack.c.h.b16 %v4311
  %v5839 = vunpack.c.l.b16 %v4312
  %v5840 = vunpack.c.h.b16 %v4312
  %v5841 = vunpack.c.l.b16 %v4313
  %v5842 = vunpack.c.h.b16 %v4313
  %v5843 = vunpack.c.l.b16 %v4314
  %v5844 = vunpack.c.h.b16 %v4314
  %v5845 = vunpack.c.l.b16 %v4315
  %v5846 = vunpack.c.h.b16 %v4315
  %v5847 = vunpack.c.l.b16 %v4316
  %v5848 = vunpack.c.h.b16 %v4316
  %v5849 = vunpack.c.l.b16 %v4317
  %v5850 = vunpack.c.h.b16 %v4317
  %v5851 = vunpack.c.l.b16 %v4318
  %v5852 = vunpack.c.h.b16 %v4318
  %v5853 = vunpack.c.l.b16 %v4319
  %v5854 = vunpack.c.h.b16 %v4319
  %v5855 = vunpack.c.l.b16 %v4320
  %v5856 = vunpack.c.h.b16 %v4320
  %v5857 = vunpack.c.l.b16 %v4321
  %v5858 = vunpack.c.h.b16 %v4321
  %v5859 = vunpack.c.l.b16 %v4322
  %v5860 = vunpack.c.h.b16 %v4322
  %v5861 = vunpack.c.l.b16 %v4323
  %v5862 = vunpack.c.h.b16 %v4323
  %v5863 = vunpack.c.l.b16 %v4324
  %v5864 = vunpack.c.h.b16 %v4324
  %v5865 = vunpack.c.l.b16 %v4325
  %v5866 = vunpack.c.h.b16 %v4325
  %v5867 = vunpack.c.l.b16 %v4326
  %v5868 = vunpack.c.h.b16 %v4326
  %v5869 = vunpack.c.l.b16 %v4327
  %v5870 = vunpack.c.h.b16 %v4327
  %v5871 = vunpack.c.l.b16 %v4328
  %v5872 = vunpack.c.h.b16 %v4328
  %v5873 = vunpack.c.l.b16 %v4329
  %v5874 = vunpack.c.h.b16 %v4329
  %v5875 = vunpack.c.l.b16 %v4330
  %v5876 = vunpack.c.h.b16 %v4330
  %v5877 = vunpack.c.l.b16 %v4331
  %v5878 = vunpack.c.h.b16 %v4331
  %v5879 = vunpack.c.l.b16 %v4332
  %v5880 = vunpack.c.h.b16 %v4332
  %v5881 = vunpack.c.l.b16 %v4333
  %v5882 = vunpack.c.h.b16 %v4333
  %v5883 = vunpack.c.l.b16 %v4334
  %v5884 = vunpack.c.h.b16 %v4334
  %v5885 = vunpack.c.l.b16 %v4335
  %v5886 = vunpack.c.h.b16 %v4335
  %v5887 = vunpack.c.l.b16 %v4336
  %v5888 = vunpack.c.h.b16 %v4336
  %v5889 = vunpack.c.l.b16 %v4337
  %v5890 = vunpack.c.h.b16 %v4337
  %v5891 = vunpack.c.l.b16 %v4338
  %v5892 = vunpack.c.h.b16 %v4338
  %v5893 = vunpack.c.l.b16 %v4339
  %v5894 = vunpack.c.h.b16 %v4339
  %v5895 = vunpack.c.l.b16 %v4340
  %v5896 = vunpack.c.h.b16 %v4340
  %v5897 = vunpack.c.l.b16 %v4341
  %v5898 = vunpack.c.h.b16 %v4341
  %v5899 = vunpack.c.l.b16 %v4342
  %v5900 = vunpack.c.h.b16 %v4342
  %v5901 = vunpack.c.l.b16 %v4343
  %v5902 = vunpack.c.h.b16 %v4343
  %v5903 = vunpack.c.l.b16 %v4344
  %v5904 = vunpack.c.h.b16 %v4344
  %v5905 = vunpack.c.l.b16 %v4345
  %v5906 = vunpack.c.h.b16 %v4345
  %v5907 = vunpack.c.l.b16 %v4346
  %v5908 = vunpack.c.h.b16 %v4346
  %v5909 = vunpack.c.l.b16 %v4347
  %v5910 = vunpack.c.h.b16 %v4347
  %v5911 = vunpack.c.l.b16 %v4348
  %v5912 = vunpack.c.h.b16 %v4348
  %v5913 = vunpack.c.l.b16 %v4349
  %v5914 = vunpack.c.h.b16 %v4349
  %v5915 = vunpack.c.l.b16 %v4350
  %v5916 = vunpack.c.h.b16 %v4350
  %v5917 = vunpack.c.l.b16 %v4351
  %v5918 = vunpack.c.h.b16 %v4351
  %v5919 = vunpack.c.l.b16 %v4352
  %v5920 = vunpack.c.h.b16 %v4352
  %v5921 = vunpack.c.l.b16 %v4353
  %v5922 = vunpack.c.h.b16 %v4353
  %v5923 = vunpack.c.l.b16 %v4354
  %v5924 = vunpack.c.h.b16 %v4354
  %v5925 = vunpack.c.l.b16 %v4355
  %v5926 = vunpack.c.h.b16 %v4355
  %v5927 = vunpack.c.l.b16 %v4356
  %v5928 = vunpack.c.h.b16 %v4356
  %v5929 = vunpack.c.l.b16 %v4357
  %v5930 = vunpack.c.h.b16 %v4357
  %v5931 = vunpack.c.l.b16 %v4358
  %v5932 = vunpack.c.h.b16 %v4358
  %v5933 = vunpack.c.l.b16 %v4359
  %v5934 = vunpack.c.h.b16 %v4359
  %v5935 = vunpack.c.l.b16 %v4360
  %v5936 = vunpack.c.h.b16 %v4360
  %v5937 = vunpack.c.l.b16 %v4361
  %v5938 = vunpack.c.h.b16 %v4361
  %v5939 = vunpack.c.l.b16 %v4362
  %v5940 = vunpack.c.h.b16 %v4362
  %v5941 = vpack.c.b16 %v4925, %v4917
  %v5942 = vpack.c.b16 %v4926, %v4918
  %v5943 = vpack.c.b16 %v4927, %v4919
  %v5944 = vpack.c.b16 %v4928, %v4920
  %v5945 = vpack.c.b16 %v4929, %v4921
  %v5946 = vpack.c.b16 %v4930, %v4922
  %v5947 = vpack.c.b16 %v4931, %v4923
  %v5948 = vpack.c.b16 %v4932, %v4924
  %v5949 = vpack.c.b16 %v4941, %v4933
  %v5950 = vpack.c.b16 %v4942, %v4934
  %v5951 = vpack.c.b16 %v4943, %v4935
  %v5952 = vpack.c.b16 %v4944, %v4936
  %v5953 = vpack.c.b16 %v4945, %v4937
  %v5954 = vpack.c.b16 %v4946, %v4938
  %v5955 = vpack.c.b16 %v4947, %v4939
  %v5956 = vpack.c.b16 %v4948, %v4940
  %v5957 = vpack.c.b16 %v4957, %v4949
  %v5958 = vpack.c.b16 %v4958, %v4950
  %v5959 = vpack.c.b16 %v4959, %v4951
  %v5960 = vpack.c.b16 %v4960, %v4952
  %v5961 = vpack.c.b16 %v4961, %v4953
  %v5962 = vpack.c.b16 %v4962, %v4954
  %v5963 = vpack.c.b16 %v4963, %v4955
  %v5964 = vpack.c.b16 %v4964, %v4956
  %v5965 = vpack.c.b16 %v4973, %v4965
  %v5966 = vpack.c.b16 %v4974, %v4966
  %v5967 = vpack.c.b16 %v4975, %v4967
  %v5968 = vpack.c.b16 %v4976, %v4968
  %v5969 = vpack.c.b16 %v4977, %v4969
  %v5970 = vpack.c.b16 %v4978, %v4970
  %v5971 = vpack.c.b16 %v4979, %v4971
  %v5972 = vpack.c.b16 %v4980, %v4972
  %v5973 = vpack.c.b16 %v4989, %v4981
  %v5974 = vpack.c.b16 %v4990, %v4982
  %v5975 = vpack.c.b16 %v4991, %v4983
  %v5976 = vpack.c.b16 %v4992, %v4984
  %v5977 = vpack.c.b16 %v4993, %v4985
  %v5978 = vpack.c.b16 %v4994, %v4986
  %v5979 = vpack.c.b16 %v4995, %v4987
  %v5980 = vpack.c.b16 %v4996, %v4988
  %v5981 = vpack.c.b16 %v5005, %v4997
  %v5982 = vpack.c.b16 %v5006, %v4998
  %v5983 = vpack.c.b16 %v5007, %v4999
  %v5984 = vpack.c.b16 %v5008, %v5000
  %v5985 = vpack.c.b16 %v5009, %v5001
  %v5986 = vpack.c.b16 %v5010, %v5002
  %v5987 = vpack.c.b16 %v5011, %v5003
  %v5988 = vpack.c.b16 %v5012, %v5004
  %v5989 = vpack.c.b16 %v5021, %v5013
  %v5990 = vpack.c.b16 %v5022, %v5014
  %v5991 = vpack.c.b16 %v5023, %v5015
  %v5992 = vpack.c.b16 %v5024, %v5016
  %v5993 = vpack.c.b16 %v5025, %v5017
  %v5994 = vpack.c.b16 %v5026, %v5018
  %v5995 = vpack.c.b16 %v5027, %v5019
  %v5996 = vpack.c.b16 %v5028, %v5020
  %v5997 = vpack.c.b16 %v5037, %v5029
  %v5998 = vpack.c.b16 %v5038, %v5030
  %v5999 = vpack.c.b16 %v5039, %v5031
  %v6000 = vpack.c.b16 %v5040, %v5032
  %v6001 = vpack.c.b16 %v5041, %v5033
  %v6002 = vpack.c.b16 %v5042, %v5034
  %v6003 = vpack.c.b16 %v5043, %v5035
  %v6004 = vpack.c.b16 %v5044, %v5036
  %v6005 = vpack.c.b16 %v5053, %v5045
  %v6006 = vpack.c.b16 %v5054, %v5046
  %v6007 = vpack.c.b16 %v5055, %v5047
  %v6008 = vpack.c.b16 %v5056, %v5048
  %v6009 = vpack.c.b16 %v5057, %v5049
  %v6010 = vpack.c.b16 %v5058, %v5050
  %v6011 = vpack.c.b16 %v5059, %v5051
  %v6012 = vpack.c.b16 %v5060, %v5052
  %v6013 = vpack.c.b16 %v5069, %v5061
  %v6014 = vpack.c.b16 %v5070, %v5062
  %v6015 = vpack.c.b16 %v5071, %v5063
  %v6016 = vpack.c.b16 %v5072, %v5064
  %v6017 = vpack.c.b16 %v5073, %v5065
  %v6018 = vpack.c.b16 %v5074, %v5066
  %v6019 = vpack.c.b16 %v5075, %v5067
  %v6020 = vpack.c.b16 %v5076, %v5068
  %v6021 = vpack.c.b16 %v5085, %v5077
  %v6022 = vpack.c.b16 %v5086, %v5078
  %v6023 = vpack.c.b16 %v5087, %v5079
  %v6024 = vpack.c.b16 %v5088, %v5080
  %v6025 = vpack.c.b16 %v5089, %v5081
  %v6026 = vpack.c.b16 %v5090, %v5082
  %v6027 = vpack.c.b16 %v5091, %v5083
  %v6028 = vpack.c.b16 %v5092, %v5084
  %v6029 = vpack.c.b16 %v5101, %v5093
  %v6030 = vpack.c.b16 %v5102, %v5094
  %v6031 = vpack.c.b16 %v5103, %v5095
  %v6032 = vpack.c.b16 %v5104, %v5096
  %v6033 = vpack.c.b16 %v5105, %v5097
  %v6034 = vpack.c.b16 %v5106, %v5098
  %v6035 = vpack.c.b16 %v5107, %v5099
  %v6036 = vpack.c.b16 %v5108, %v5100
  %v6037 = vpack.c.b16 %v5117, %v5109
  %v6038 = vpack.c.b16 %v5118, %v5110
  %v6039 = vpack.c.b16 %v5119, %v5111
  %v6040 = vpack.c.b16 %v5120, %v5112
  %v6041 = vpack.c.b16 %v5121, %v5113
  %v6042 = vpack.c.b16 %v5122, %v5114
  %v6043 = vpack.c.b16 %v5123, %v5115
  %v6044 = vpack.c.b16 %v5124, %v5116
  %v6045 = vpack.c.b16 %v5133, %v5125
  %v6046 = vpack.c.b16 %v5134, %v5126
  %v6047 = vpack.c.b16 %v5135, %v5127
  %v6048 = vpack.c.b16 %v5136, %v5128
  %v6049 = vpack.c.b16 %v5137, %v5129
  %v6050 = vpack.c.b16 %v5138, %v5130
  %v6051 = vpack.c.b16 %v5139, %v5131
  %v6052 = vpack.c.b16 %v5140, %v5132
  %v6053 = vpack.c.b16 %v5149, %v5141
  %v6054 = vpack.c.b16 %v5150, %v5142
  %v6055 = vpack.c.b16 %v5151, %v5143
  %v6056 = vpack.c.b16 %v5152, %v5144
  %v6057 = vpack.c.b16 %v5153, %v5145
  %v6058 = vpack.c.b16 %v5154, %v5146
  %v6059 = vpack.c.b16 %v5155, %v5147
  %v6060 = vpack.c.b16 %v5156, %v5148
  %v6061 = vpack.c.b16 %v5165, %v5157
  %v6062 = vpack.c.b16 %v5166, %v5158
  %v6063 = vpack.c.b16 %v5167, %v5159
  %v6064 = vpack.c.b16 %v5168, %v5160
  %v6065 = vpack.c.b16 %v5169, %v5161
  %v6066 = vpack.c.b16 %v5170, %v5162
  %v6067 = vpack.c.b16 %v5171, %v5163
  %v6068 = vpack.c.b16 %v5172, %v5164
  %v6069 = vpack.c.b16 %v5181, %v5173
  %v6070 = vpack.c.b16 %v5182, %v5174
  %v6071 = vpack.c.b16 %v5183, %v5175
  %v6072 = vpack.c.b16 %v5184, %v5176
  %v6073 = vpack.c.b16 %v5185, %v5177
  %v6074 = vpack.c.b16 %v5186, %v5178
  %v6075 = vpack.c.b16 %v5187, %v5179
  %v6076 = vpack.c.b16 %v5188, %v5180
  %v6077 = vpack.c.b16 %v5197, %v5189
  %v6078 = vpack.c.b16 %v5198, %v5190
  %v6079 = vpack.c.b16 %v5199, %v5191
  %v6080 = vpack.c.b16 %v5200, %v5192
  %v6081 = vpack.c.b16 %v5201, %v5193
  %v6082 = vpack.c.b16 %v5202, %v5194
  %v6083 = vpack.c.b16 %v5203, %v5195
  %v6084 = vpack.c.b16 %v5204, %v5196
  %v6085 = vpack.c.b16 %v5213, %v5205
  %v6086 = vpack.c.b16 %v5214, %v5206
  %v6087 = vpack.c.b16 %v5215, %v5207
  %v6088 = vpack.c.b16 %v5216, %v5208
  %v6089 = vpack.c.b16 %v5217, %v5209
  %v6090 = vpack.c.b16 %v5218, %v5210
  %v6091 = vpack.c.b16 %v5219, %v5211
  %v6092 = vpack.c.b16 %v5220, %v5212
  %v6093 = vpack.c.b16 %v5229, %v5221
  %v6094 = vpack.c.b16 %v5230, %v5222
  %v6095 = vpack.c.b16 %v5231, %v5223
  %v6096 = vpack.c.b16 %v5232, %v5224
  %v6097 = vpack.c.b16 %v5233, %v5225
  %v6098 = vpack.c.b16 %v5234, %v5226
  %v6099 = vpack.c.b16 %v5235, %v5227
  %v6100 = vpack.c.b16 %v5236, %v5228
  %v6101 = vpack.c.b16 %v5245, %v5237
  %v6102 = vpack.c.b16 %v5246, %v5238
  %v6103 = vpack.c.b16 %v5247, %v5239
  %v6104 = vpack.c.b16 %v5248, %v5240
  %v6105 = vpack.c.b16 %v5249, %v5241
  %v6106 = vpack.c.b16 %v5250, %v5242
  %v6107 = vpack.c.b16 %v5251, %v5243
  %v6108 = vpack.c.b16 %v5252, %v5244
  %v6109 = vpack.c.b16 %v5261, %v5253
  %v6110 = vpack.c.b16 %v5262, %v5254
  %v6111 = vpack.c.b16 %v5263, %v5255
  %v6112 = vpack.c.b16 %v5264, %v5256
  %v6113 = vpack.c.b16 %v5265, %v5257
  %v6114 = vpack.c.b16 %v5266, %v5258
  %v6115 = vpack.c.b16 %v5267, %v5259
  %v6116 = vpack.c.b16 %v5268, %v5260
  %v6117 = vpack.c.b16 %v5277, %v5269
  %v6118 = vpack.c.b16 %v5278, %v5270
  %v6119 = vpack.c.b16 %v5279, %v5271
  %v6120 = vpack.c.b16 %v5280, %v5272
  %v6121 = vpack.c.b16 %v5281, %v5273
  %v6122 = vpack.c.b16 %v5282, %v5274
  %v6123 = vpack.c.b16 %v5283, %v5275
  %v6124 = vpack.c.b16 %v5284, %v5276
  %v6125 = vpack.c.b16 %v5293, %v5285
  %v6126 = vpack.c.b16 %v5294, %v5286
  %v6127 = vpack.c.b16 %v5295, %v5287
  %v6128 = vpack.c.b16 %v5296, %v5288
  %v6129 = vpack.c.b16 %v5297, %v5289
  %v6130 = vpack.c.b16 %v5298, %v5290
  %v6131 = vpack.c.b16 %v5299, %v5291
  %v6132 = vpack.c.b16 %v5300, %v5292
  %v6133 = vpack.c.b16 %v5309, %v5301
  %v6134 = vpack.c.b16 %v5310, %v5302
  %v6135 = vpack.c.b16 %v5311, %v5303
  %v6136 = vpack.c.b16 %v5312, %v5304
  %v6137 = vpack.c.b16 %v5313, %v5305
  %v6138 = vpack.c.b16 %v5314, %v5306
  %v6139 = vpack.c.b16 %v5315, %v5307
  %v6140 = vpack.c.b16 %v5316, %v5308
  %v6141 = vpack.c.b16 %v5325, %v5317
  %v6142 = vpack.c.b16 %v5326, %v5318
  %v6143 = vpack.c.b16 %v5327, %v5319
  %v6144 = vpack.c.b16 %v5328, %v5320
  %v6145 = vpack.c.b16 %v5329, %v5321
  %v6146 = vpack.c.b16 %v5330, %v5322
  %v6147 = vpack.c.b16 %v5331, %v5323
  %v6148 = vpack.c.b16 %v5332, %v5324
  %v6149 = vpack.c.b16 %v5341, %v5333
  %v6150 = vpack.c.b16 %v5342, %v5334
  %v6151 = vpack.c.b16 %v5343, %v5335
  %v6152 = vpack.c.b16 %v5344, %v5336
  %v6153 = vpack.c.b16 %v5345, %v5337
  %v6154 = vpack.c.b16 %v5346, %v5338
  %v6155 = vpack.c.b16 %v5347, %v5339
  %v6156 = vpack.c.b16 %v5348, %v5340
  %v6157 = vpack.c.b16 %v5357, %v5349
  %v6158 = vpack.c.b16 %v5358, %v5350
  %v6159 = vpack.c.b16 %v5359, %v5351
  %v6160 = vpack.c.b16 %v5360, %v5352
  %v6161 = vpack.c.b16 %v5361, %v5353
  %v6162 = vpack.c.b16 %v5362, %v5354
  %v6163 = vpack.c.b16 %v5363, %v5355
  %v6164 = vpack.c.b16 %v5364, %v5356
  %v6165 = vpack.c.b16 %v5373, %v5365
  %v6166 = vpack.c.b16 %v5374, %v5366
  %v6167 = vpack.c.b16 %v5375, %v5367
  %v6168 = vpack.c.b16 %v5376, %v5368
  %v6169 = vpack.c.b16 %v5377, %v5369
  %v6170 = vpack.c.b16 %v5378, %v5370
  %v6171 = vpack.c.b16 %v5379, %v5371
  %v6172 = vpack.c.b16 %v5380, %v5372
  %v6173 = vpack.c.b16 %v5389, %v5381
  %v6174 = vpack.c.b16 %v5390, %v5382
  %v6175 = vpack.c.b16 %v5391, %v5383
  %v6176 = vpack.c.b16 %v5392, %v5384
  %v6177 = vpack.c.b16 %v5393, %v5385
  %v6178 = vpack.c.b16 %v5394, %v5386
  %v6179 = vpack.c.b16 %v5395, %v5387
  %v6180 = vpack.c.b16 %v5396, %v5388
  %v6181 = vpack.c.b16 %v5405, %v5397
  %v6182 = vpack.c.b16 %v5406, %v5398
  %v6183 = vpack.c.b16 %v5407, %v5399
  %v6184 = vpack.c.b16 %v5408, %v5400
  %v6185 = vpack.c.b16 %v5409, %v5401
  %v6186 = vpack.c.b16 %v5410, %v5402
  %v6187 = vpack.c.b16 %v5411, %v5403
  %v6188 = vpack.c.b16 %v5412, %v5404
  %v6189 = vpack.c.b16 %v5421, %v5413
  %v6190 = vpack.c.b16 %v5422, %v5414
  %v6191 = vpack.c.b16 %v5423, %v5415
  %v6192 = vpack.c.b16 %v5424, %v5416
  %v6193 = vpack.c.b16 %v5425, %v5417
  %v6194 = vpack.c.b16 %v5426, %v5418
  %v6195 = vpack.c.b16 %v5427, %v5419
  %v6196 = vpack.c.b16 %v5428, %v5420
  %v6197 = vpack.c.b16 %v5437, %v5429
  %v6198 = vpack.c.b16 %v5438, %v5430
  %v6199 = vpack.c.b16 %v5439, %v5431
  %v6200 = vpack.c.b16 %v5440, %v5432
  %v6201 = vpack.c.b16 %v5441, %v5433
  %v6202 = vpack.c.b16 %v5442, %v5434
  %v6203 = vpack.c.b16 %v5443, %v5435
  %v6204 = vpack.c.b16 %v5444, %v5436
  %v6205 = vpack.c.b16 %v5453, %v5445
  %v6206 = vpack.c.b16 %v5454, %v5446
  %v6207 = vpack.c.b16 %v5455, %v5447
  %v6208 = vpack.c.b16 %v5456, %v5448
  %v6209 = vpack.c.b16 %v5457, %v5449
  %v6210 = vpack.c.b16 %v5458, %v5450
  %v6211 = vpack.c.b16 %v5459, %v5451
  %v6212 = vpack.c.b16 %v5460, %v5452
  %v6213 = vpack.c.b16 %v5469, %v5461
  %v6214 = vpack.c.b16 %v5470, %v5462
  %v6215 = vpack.c.b16 %v5471, %v5463
  %v6216 = vpack.c.b16 %v5472, %v5464
  %v6217 = vpack.c.b16 %v5473, %v5465
  %v6218 = vpack.c.b16 %v5474, %v5466
  %v6219 = vpack.c.b16 %v5475, %v5467
  %v6220 = vpack.c.b16 %v5476, %v5468
  %v6221 = vpack.c.b16 %v5485, %v5477
  %v6222 = vpack.c.b16 %v5486, %v5478
  %v6223 = vpack.c.b16 %v5487, %v5479
  %v6224 = vpack.c.b16 %v5488, %v5480
  %v6225 = vpack.c.b16 %v5489, %v5481
  %v6226 = vpack.c.b16 %v5490, %v5482
  %v6227 = vpack.c.b16 %v5491, %v5483
  %v6228 = vpack.c.b16 %v5492, %v5484
  %v6229 = vpack.c.b16 %v5501, %v5493
  %v6230 = vpack.c.b16 %v5502, %v5494
  %v6231 = vpack.c.b16 %v5503, %v5495
  %v6232 = vpack.c.b16 %v5504, %v5496
  %v6233 = vpack.c.b16 %v5505, %v5497
  %v6234 = vpack.c.b16 %v5506, %v5498
  %v6235 = vpack.c.b16 %v5507, %v5499
  %v6236 = vpack.c.b16 %v5508, %v5500
  %v6237 = vpack.c.b16 %v5517, %v5509
  %v6238 = vpack.c.b16 %v5518, %v5510
  %v6239 = vpack.c.b16 %v5519, %v5511
  %v6240 = vpack.c.b16 %v5520, %v5512
  %v6241 = vpack.c.b16 %v5521, %v5513
  %v6242 = vpack.c.b16 %v5522, %v5514
  %v6243 = vpack.c.b16 %v5523, %v5515
  %v6244 = vpack.c.b16 %v5524, %v5516
  %v6245 = vpack.c.b16 %v5533, %v5525
  %v6246 = vpack.c.b16 %v5534, %v5526
  %v6247 = vpack.c.b16 %v5535, %v5527
  %v6248 = vpack.c.b16 %v5536, %v5528
  %v6249 = vpack.c.b16 %v5537, %v5529
  %v6250 = vpack.c.b16 %v5538, %v5530
  %v6251 = vpack.c.b16 %v5539, %v5531
  %v6252 = vpack.c.b16 %v5540, %v5532
  %v6253 = vpack.c.b16 %v5549, %v5541
  %v6254 = vpack.c.b16 %v5550, %v5542
  %v6255 = vpack.c.b16 %v5551, %v5543
  %v6256 = vpack.c.b16 %v5552, %v5544
  %v6257 = vpack.c.b16 %v5553, %v5545
  %v6258 = vpack.c.b16 %v5554, %v5546
  %v6259 = vpack.c.b16 %v5555, %v5547
  %v6260 = vpack.c.b16 %v5556, %v5548
  %v6261 = vpack.c.b16 %v5565, %v5557
  %v6262 = vpack.c.b16 %v5566, %v5558
  %v6263 = vpack.c.b16 %v5567, %v5559
  %v6264 = vpack.c.b16 %v5568, %v5560
  %v6265 = vpack.c.b16 %v5569, %v5561
  %v6266 = vpack.c.b16 %v5570, %v5562
  %v6267 = vpack.c.b16 %v5571, %v5563
  %v6268 = vpack.c.b16 %v5572, %v5564
  %v6269 = vpack.c.b16 %v5581, %v5573
  %v6270 = vpack.c.b16 %v5582, %v5574
  %v6271 = vpack.c.b16 %v5583, %v5575
  %v6272 = vpack.c.b16 %v5584, %v5576
  %v6273 = vpack.c.b16 %v5585, %v5577
  %v6274 = vpack.c.b16 %v5586, %v5578
  %v6275 = vpack.c.b16 %v5587, %v5579
  %v6276 = vpack.c.b16 %v5588, %v5580
  %v6277 = vpack.c.b16 %v5597, %v5589
  %v6278 = vpack.c.b16 %v5598, %v5590
  %v6279 = vpack.c.b16 %v5599, %v5591
  %v6280 = vpack.c.b16 %v5600, %v5592
  %v6281 = vpack.c.b16 %v5601, %v5593
  %v6282 = vpack.c.b16 %v5602, %v5594
  %v6283 = vpack.c.b16 %v5603, %v5595
  %v6284 = vpack.c.b16 %v5604, %v5596
  %v6285 = vpack.c.b16 %v5613, %v5605
  %v6286 = vpack.c.b16 %v5614, %v5606
  %v6287 = vpack.c.b16 %v5615, %v5607
  %v6288 = vpack.c.b16 %v5616, %v5608
  %v6289 = vpack.c.b16 %v5617, %v5609
  %v6290 = vpack.c.b16 %v5618, %v5610
  %v6291 = vpack.c.b16 %v5619, %v5611
  %v6292 = vpack.c.b16 %v5620, %v5612
  %v6293 = vpack.c.b16 %v5629, %v5621
  %v6294 = vpack.c.b16 %v5630, %v5622
  %v6295 = vpack.c.b16 %v5631, %v5623
  %v6296 = vpack.c.b16 %v5632, %v5624
  %v6297 = vpack.c.b16 %v5633, %v5625
  %v6298 = vpack.c.b16 %v5634, %v5626
  %v6299 = vpack.c.b16 %v5635, %v5627
  %v6300 = vpack.c.b16 %v5636, %v5628
  %v6301 = vpack.c.b16 %v5645, %v5637
  %v6302 = vpack.c.b16 %v5646, %v5638
  %v6303 = vpack.c.b16 %v5647, %v5639
  %v6304 = vpack.c.b16 %v5648, %v5640
  %v6305 = vpack.c.b16 %v5649, %v5641
  %v6306 = vpack.c.b16 %v5650, %v5642
  %v6307 = vpack.c.b16 %v5651, %v5643
  %v6308 = vpack.c.b16 %v5652, %v5644
  %v6309 = vpack.c.b16 %v5661, %v5653
  %v6310 = vpack.c.b16 %v5662, %v5654
  %v6311 = vpack.c.b16 %v5663, %v5655
  %v6312 = vpack.c.b16 %v5664, %v5656
  %v6313 = vpack.c.b16 %v5665, %v5657
  %v6314 = vpack.c.b16 %v5666, %v5658
  %v6315 = vpack.c.b16 %v5667, %v5659
  %v6316 = vpack.c.b16 %v5668, %v5660
  %v6317 = vpack.c.b16 %v5677, %v5669
  %v6318 = vpack.c.b16 %v5678, %v5670
  %v6319 = vpack.c.b16 %v5679, %v5671
  %v6320 = vpack.c.b16 %v5680, %v5672
  %v6321 = vpack.c.b16 %v5681, %v5673
  %v6322 = vpack.c.b16 %v5682, %v5674
  %v6323 = vpack.c.b16 %v5683, %v5675
  %v6324 = vpack.c.b16 %v5684, %v5676
  %v6325 = vpack.c.b16 %v5693, %v5685
  %v6326 = vpack.c.b16 %v5694, %v5686
  %v6327 = vpack.c.b16 %v5695, %v5687
  %v6328 = vpack.c.b16 %v5696, %v5688
  %v6329 = vpack.c.b16 %v5697, %v5689
  %v6330 = vpack.c.b16 %v5698, %v5690
  %v6331 = vpack.c.b16 %v5699, %v5691
  %v6332 = vpack.c.b16 %v5700, %v5692
  %v6333 = vpack.c.b16 %v5709, %v5701
  %v6334 = vpack.c.b16 %v5710, %v5702
  %v6335 = vpack.c.b16 %v5711, %v5703
  %v6336 = vpack.c.b16 %v5712, %v5704
  %v6337 = vpack.c.b16 %v5713, %v5705
  %v6338 = vpack.c.b16 %v5714, %v5706
  %v6339 = vpack.c.b16 %v5715, %v5707
  %v6340 = vpack.c.b16 %v5716, %v5708
  %v6341 = vpack.c.b16 %v5725, %v5717
  %v6342 = vpack.c.b16 %v5726, %v5718
  %v6343 = vpack.c.b16 %v5727, %v5719
  %v6344 = vpack.c.b16 %v5728, %v5720
  %v6345 = vpack.c.b16 %v5729, %v5721
  %v6346 = vpack.c.b16 %v5730, %v5722
  %v6347 = vpack.c.b16 %v5731, %v5723
  %v6348 = vpack.c.b16 %v5732, %v5724
  %v6349 = vpack.c.b16 %v5741, %v5733
  %v6350 = vpack.c.b16 %v5742, %v5734
  %v6351 = vpack.c.b16 %v5743, %v5735
  %v6352 = vpack.c.b16 %v5744, %v5736
  %v6353 = vpack.c.b16 %v5745, %v5737
  %v6354 = vpack.c.b16 %v5746, %v5738
  %v6355 = vpack.c.b16 %v5747, %v5739
  %v6356 = vpack.c.b16 %v5748, %v5740
  %v6357 = vpack.c.b16 %v5757, %v5749
  %v6358 = vpack.c.b16 %v5758, %v5750
  %v6359 = vpack.c.b16 %v5759, %v5751
  %v6360 = vpack.c.b16 %v5760, %v5752
  %v6361 = vpack.c.b16 %v5761, %v5753
  %v6362 = vpack.c.b16 %v5762, %v5754
  %v6363 = vpack.c.b16 %v5763, %v5755
  %v6364 = vpack.c.b16 %v5764, %v5756
  %v6365 = vpack.c.b16 %v5773, %v5765
  %v6366 = vpack.c.b16 %v5774, %v5766
  %v6367 = vpack.c.b16 %v5775, %v5767
  %v6368 = vpack.c.b16 %v5776, %v5768
  %v6369 = vpack.c.b16 %v5777, %v5769
  %v6370 = vpack.c.b16 %v5778, %v5770
  %v6371 = vpack.c.b16 %v5779, %v5771
  %v6372 = vpack.c.b16 %v5780, %v5772
  %v6373 = vpack.c.b16 %v5789, %v5781
  %v6374 = vpack.c.b16 %v5790, %v5782
  %v6375 = vpack.c.b16 %v5791, %v5783
  %v6376 = vpack.c.b16 %v5792, %v5784
  %v6377 = vpack.c.b16 %v5793, %v5785
  %v6378 = vpack.c.b16 %v5794, %v5786
  %v6379 = vpack.c.b16 %v5795, %v5787
  %v6380 = vpack.c.b16 %v5796, %v5788
  %v6381 = vpack.c.b16 %v5805, %v5797
  %v6382 = vpack.c.b16 %v5806, %v5798
  %v6383 = vpack.c.b16 %v5807, %v5799
  %v6384 = vpack.c.b16 %v5808, %v5800
  %v6385 = vpack.c.b16 %v5809, %v5801
  %v6386 = vpack.c.b16 %v5810, %v5802
  %v6387 = vpack.c.b16 %v5811, %v5803
  %v6388 = vpack.c.b16 %v5812, %v5804
  %v6389 = vpack.c.b16 %v5821, %v5813
  %v6390 = vpack.c.b16 %v5822, %v5814
  %v6391 = vpack.c.b16 %v5823, %v5815
  %v6392 = vpack.c.b16 %v5824, %v5816
  %v6393 = vpack.c.b16 %v5825, %v5817
  %v6394 = vpack.c.b16 %v5826, %v5818
  %v6395 = vpack.c.b16 %v5827, %v5819
  %v6396 = vpack.c.b16 %v5828, %v5820
  %v6397 = vpack.c.b16 %v5837, %v5829
  %v6398 = vpack.c.b16 %v5838, %v5830
  %v6399 = vpack.c.b16 %v5839, %v5831
  %v6400 = vpack.c.b16 %v5840, %v5832
  %v6401 = vpack.c.b16 %v5841, %v5833
  %v6402 = vpack.c.b16 %v5842, %v5834
  %v6403 = vpack.c.b16 %v5843, %v5835
  %v6404 = vpack.c.b16 %v5844, %v5836
  %v6405 = vpack.c.b16 %v5853, %v5845
  %v6406 = vpack.c.b16 %v5854, %v5846
  %v6407 = vpack.c.b16 %v5855, %v5847
  %v6408 = vpack.c.b16 %v5856, %v5848
  %v6409 = vpack.c.b16 %v5857, %v5849
  %v6410 = vpack.c.b16 %v5858, %v5850
  %v6411 = vpack.c.b16 %v5859, %v5851
  %v6412 = vpack.c.b16 %v5860, %v5852
  %v6413 = vpack.c.b16 %v5869, %v5861
  %v6414 = vpack.c.b16 %v5870, %v5862
  %v6415 = vpack.c.b16 %v5871, %v5863
  %v6416 = vpack.c.b16 %v5872, %v5864
  %v6417 = vpack.c.b16 %v5873, %v5865
  %v6418 = vpack.c.b16 %v5874, %v5866
  %v6419 = vpack.c.b16 %v5875, %v5867
  %v6420 = vpack.c.b16 %v5876, %v5868
  %v6421 = vpack.c.b16 %v5885, %v5877
  %v6422 = vpack.c.b16 %v5886, %v5878
  %v6423 = vpack.c.b16 %v5887, %v5879
  %v6424 = vpack.c.b16 %v5888, %v5880
  %v6425 = vpack.c.b16 %v5889, %v5881
  %v6426 = vpack.c.b16 %v5890, %v5882
  %v6427 = vpack.c.b16 %v5891, %v5883
  %v6428 = vpack.c.b16 %v5892, %v5884
  %v6429 = vpack.c.b16 %v5901, %v5893
  %v6430 = vpack.c.b16 %v5902, %v5894
  %v6431 = vpack.c.b16 %v5903, %v5895
  %v6432 = vpack.c.b16 %v5904, %v5896
  %v6433 = vpack.c.b16 %v5905, %v5897
  %v6434 = vpack.c.b16 %v5906, %v5898
  %v6435 = vpack.c.b16 %v5907, %v5899
  %v6436 = vpack.c.b16 %v5908, %v5900
  %v6437 = vpack.c.b16 %v5917, %v5909
  %v6438 = vpack.c.b16 %v5918, %v5910
  %v6439 = vpack.c.b16 %v5919, %v5911
  %v6440 = vpack.c.b16 %v5920, %v5912
  %v6441 = vpack.c.b16 %v5921, %v5913
  %v6442 = vpack.c.b16 %v5922, %v5914
  %v6443 = vpack.c.b16 %v5923, %v5915
  %v6444 = vpack.c.b16 %v5924, %v5916
  %v6445 = vpack.c.b16 %v5933, %v5925
  %v6446 = vpack.c.b16 %v5934, %v5926
  %v6447 = vpack.c.b16 %v5935, %v5927
  %v6448 = vpack.c.b16 %v5936, %v5928
  %v6449 = vpack.c.b16 %v5937, %v5929
  %v6450 = vpack.c.b16 %v5938, %v5930
  %v6451 = vpack.c.b16 %v5939, %v5931
  %v6452 = vpack.c.b16 %v5940, %v5932
  %6965 = vmatprep.subr.bf16.mxu0 %v5942
  %6966 = vmatpush1.bf16.msra.mxu0 %v5941
  %6967 = vmatprep.subr.bf16.mxu0 %v5950
  %6968 = vmatpush1.bf16.msra.mxu0 %v5949
  %6969 = vmatprep.subr.bf16.mxu0 %v5958
  %6970 = vmatpush1.bf16.msra.mxu0 %v5957
  %6971 = vmatprep.subr.bf16.mxu0 %v5966
  %6972 = vmatpush1.bf16.msra.mxu0 %v5965
  %6973 = vmatprep.subr.bf16.mxu0 %v5974
  %6974 = vmatpush1.bf16.msra.mxu0 %v5973
  %6975 = vmatprep.subr.bf16.mxu0 %v5982
  %6976 = vmatpush1.bf16.msra.mxu0 %v5981
  %6977 = vmatprep.subr.bf16.mxu0 %v5990
  %6978 = vmatpush1.bf16.msra.mxu0 %v5989
  %6979 = vmatprep.subr.bf16.mxu0 %v5998
  %6980 = vmatpush1.bf16.msra.mxu0 %v5997
  %6981 = vmatprep.subr.bf16.mxu0 %v6006
  %6982 = vmatpush1.bf16.msra.mxu0 %v6005
  %6983 = vmatprep.subr.bf16.mxu0 %v6014
  %6984 = vmatpush1.bf16.msra.mxu0 %v6013
  %6985 = vmatprep.subr.bf16.mxu0 %v6022
  %6986 = vmatpush1.bf16.msra.mxu0 %v6021
  %6987 = vmatprep.subr.bf16.mxu0 %v6030
  %6988 = vmatpush1.bf16.msra.mxu0 %v6029
  %6989 = vmatprep.subr.bf16.mxu0 %v6038
  %6990 = vmatpush1.bf16.msra.mxu0 %v6037
  %6991 = vmatprep.subr.bf16.mxu0 %v6046
  %6992 = vmatpush1.bf16.msra.mxu0 %v6045
  %6993 = vmatprep.subr.bf16.mxu0 %v6054
  %6994 = vmatpush1.bf16.msra.mxu0 %v6053
  %6995 = vmatprep.subr.bf16.mxu0 %v6062
  %6996 = vmatpush1.bf16.msra.mxu0 %v6061
  %6997 = vmatprep.mubr.bf16.mxu0 %v3844
  %6998 = vmatmul.mubr.bf16.gmra.mrb[0].mxu0 %v3843
  %v6999 = vpop.f32.mrb[0].mxu0
  %v7000 = vadd.f32 %v4368, %v6999
  %v7001 = vpop.f32.mrb[0].mxu0
  %v7002 = vadd.f32 %v4372, %v7001
  %v7003 = vpop.f32.mrb[0].mxu0
  %v7004 = vpop.f32.mrb[0].mxu0
  %7005 = vdwg.mxu0
  %7006 = vmatprep.subr.bf16.mxu0 %v6070
  %7007 = vmatpush1.bf16.msra.mxu0 %v6069
  %7008 = vmatprep.subr.bf16.mxu0 %v6078
  %7009 = vmatpush1.bf16.msra.mxu0 %v6077
  %7010 = vmatprep.subr.bf16.mxu0 %v6086
  %7011 = vmatpush1.bf16.msra.mxu0 %v6085
  %7012 = vmatprep.subr.bf16.mxu0 %v6094
  %7013 = vmatpush1.bf16.msra.mxu0 %v6093
  %7014 = vmatprep.subr.bf16.mxu0 %v6102
  %7015 = vmatpush1.bf16.msra.mxu0 %v6101
  %7016 = vmatprep.subr.bf16.mxu0 %v6110
  %7017 = vmatpush1.bf16.msra.mxu0 %v6109
  %7018 = vmatprep.subr.bf16.mxu0 %v6118
  %7019 = vmatpush1.bf16.msra.mxu0 %v6117
  %7020 = vmatprep.subr.bf16.mxu0 %v6126
  %7021 = vmatpush1.bf16.msra.mxu0 %v6125
  %7022 = vmatprep.subr.bf16.mxu0 %v6134
  %7023 = vmatpush1.bf16.msra.mxu0 %v6133
  %7024 = vmatprep.subr.bf16.mxu0 %v6142
  %7025 = vmatpush1.bf16.msra.mxu0 %v6141
  %7026 = vmatprep.subr.bf16.mxu0 %v6150
  %7027 = vmatpush1.bf16.msra.mxu0 %v6149
  %7028 = vmatprep.subr.bf16.mxu0 %v6158
  %7029 = vmatpush1.bf16.msra.mxu0 %v6157
  %7030 = vmatprep.subr.bf16.mxu0 %v6166
  %7031 = vmatpush1.bf16.msra.mxu0 %v6165
  %7032 = vmatprep.subr.bf16.mxu0 %v6174
  %7033 = vmatpush1.bf16.msra.mxu0 %v6173
  %7034 = vmatprep.subr.bf16.mxu0 %v6182
  %7035 = vmatpush1.bf16.msra.mxu0 %v6181
  %7036 = vmatprep.subr.bf16.mxu0 %v6190
  %7037 = vmatpush1.bf16.msra.mxu0 %v6189
  %7038 = vmatprep.mubr.bf16.mxu0 %v3846
  %7039 = vmatmul.mubr.bf16.gmra.mrb[0].mxu0 %v3845
  %v7040 = vpop.f32.mrb[0].mxu0
  %v7041 = vadd.f32 %v7000, %v7040
  %v7042 = vpop.f32.mrb[0].mxu0
  %v7043 = vadd.f32 %v7002, %v7042
  %v7044 = vpop.f32.mrb[0].mxu0
  %v7045 = vpop.f32.mrb[0].mxu0
  %7046 = vdwg.mxu0
  %7047 = vmatprep.subr.bf16.mxu0 %v6198
  %7048 = vmatpush1.bf16.msra.mxu0 %v6197
  %7049 = vmatprep.subr.bf16.mxu0 %v6206
  %7050 = vmatpush1.bf16.msra.mxu0 %v6205
  %7051 = vmatprep.subr.bf16.mxu0 %v6214
  %7052 = vmatpush1.bf16.msra.mxu0 %v6213
  %7053 = vmatprep.subr.bf16.mxu0 %v6222
  %7054 = vmatpush1.bf16.msra.mxu0 %v6221
  %7055 = vmatprep.subr.bf16.mxu0 %v6230
  %7056 = vmatpush1.bf16.msra.mxu0 %v6229
  %7057 = vmatprep.subr.bf16.mxu0 %v6238
  %7058 = vmatpush1.bf16.msra.mxu0 %v6237
  %7059 = vmatprep.subr.bf16.mxu0 %v6246
  %7060 = vmatpush1.bf16.msra.mxu0 %v6245
  %7061 = vmatprep.subr.bf16.mxu0 %v6254
  %7062 = vmatpush1.bf16.msra.mxu0 %v6253
  %7063 = vmatprep.subr.bf16.mxu0 %v6262
  %7064 = vmatpush1.bf16.msra.mxu0 %v6261
  %7065 = vmatprep.subr.bf16.mxu0 %v6270
  %7066 = vmatpush1.bf16.msra.mxu0 %v6269
  %7067 = vmatprep.subr.bf16.mxu0 %v6278
  %7068 = vmatpush1.bf16.msra.mxu0 %v6277
  %7069 = vmatprep.subr.bf16.mxu0 %v6286
  %7070 = vmatpush1.bf16.msra.mxu0 %v6285
  %7071 = vmatprep.subr.bf16.mxu0 %v6294
  %7072 = vmatpush1.bf16.msra.mxu0 %v6293
  %7073 = vmatprep.subr.bf16.mxu0 %v6302
  %7074 = vmatpush1.bf16.msra.mxu0 %v6301
  %7075 = vmatprep.subr.bf16.mxu0 %v6310
  %7076 = vmatpush1.bf16.msra.mxu0 %v6309
  %7077 = vmatprep.subr.bf16.mxu0 %v6318
  %7078 = vmatpush1.bf16.msra.mxu0 %v6317
  %7079 = vmatprep.mubr.bf16.mxu0 %v3848
  %7080 = vmatmul.mubr.bf16.gmra.mrb[0].mxu0 %v3847
  %v7081 = vpop.f32.mrb[0].mxu0
  %v7082 = vadd.f32 %v7041, %v7081
  %v7083 = vpop.f32.mrb[0].mxu0
  %v7084 = vadd.f32 %v7043, %v7083
  %v7085 = vpop.f32.mrb[0].mxu0
  %v7086 = vpop.f32.mrb[0].mxu0
  %7087 = vdwg.mxu0
  %7088 = vmatprep.subr.bf16.mxu0 %v6326
  %7089 = vmatpush1.bf16.msra.mxu0 %v6325
  %7090 = vmatprep.subr.bf16.mxu0 %v6334
  %7091 = vmatpush1.bf16.msra.mxu0 %v6333
  %7092 = vmatprep.subr.bf16.mxu0 %v6342
  %7093 = vmatpush1.bf16.msra.mxu0 %v6341
  %7094 = vmatprep.subr.bf16.mxu0 %v6350
  %7095 = vmatpush1.bf16.msra.mxu0 %v6349
  %7096 = vmatprep.subr.bf16.mxu0 %v6358
  %7097 = vmatpush1.bf16.msra.mxu0 %v6357
  %7098 = vmatprep.subr.bf16.mxu0 %v6366
  %7099 = vmatpush1.bf16.msra.mxu0 %v6365
  %7100 = vmatprep.subr.bf16.mxu0 %v6374
  %7101 = vmatpush1.bf16.msra.mxu0 %v6373
  %7102 = vmatprep.subr.bf16.mxu0 %v6382
  %7103 = vmatpush1.bf16.msra.mxu0 %v6381
  %7104 = vmatprep.subr.bf16.mxu0 %v6390
  %7105 = vmatpush1.bf16.msra.mxu0 %v6389
  %7106 = vmatprep.subr.bf16.mxu0 %v6398
  %7107 = vmatpush1.bf16.msra.mxu0 %v6397
  %7108 = vmatprep.subr.bf16.mxu0 %v6406
  %7109 = vmatpush1.bf16.msra.mxu0 %v6405
  %7110 = vmatprep.subr.bf16.mxu0 %v6414
  %7111 = vmatpush1.bf16.msra.mxu0 %v6413
  %7112 = vmatprep.subr.bf16.mxu0 %v6422
  %7113 = vmatpush1.bf16.msra.mxu0 %v6421
  %7114 = vmatprep.subr.bf16.mxu0 %v6430
  %7115 = vmatpush1.bf16.msra.mxu0 %v6429
  %7116 = vmatprep.subr.bf16.mxu0 %v6438
  %7117 = vmatpush1.bf16.msra.mxu0 %v6437
  %7118 = vmatprep.subr.bf16.mxu0 %v6446
  %7119 = vmatpush1.bf16.msra.mxu0 %v6445
  %7120 = vmatprep.mubr.bf16.mxu0 %v3850
  %7121 = vmatmul.mubr.bf16.gmra.mrb[0].mxu0 %v3849
  %v7122 = vpop.f32.mrb[0].mxu0
  %v7123 = vadd.f32 %v7082, %v7122
  %v7124 = vpop.f32.mrb[0].mxu0
  %v7125 = vadd.f32 %v7084, %v7124
  %v7126 = vpop.f32.mrb[0].mxu0
  %v7127 = vpop.f32.mrb[0].mxu0
  %7128 = vdwg.mxu0
  %7129 = vmatprep.subr.bf16.mxu0 %v5944
  %7130 = vmatpush1.bf16.msra.mxu0 %v5943
  %7131 = vmatprep.subr.bf16.mxu0 %v5952
  %7132 = vmatpush1.bf16.msra.mxu0 %v5951
  %7133 = vmatprep.subr.bf16.mxu0 %v5960
  %7134 = vmatpush1.bf16.msra.mxu0 %v5959
  %7135 = vmatprep.subr.bf16.mxu0 %v5968
  %7136 = vmatpush1.bf16.msra.mxu0 %v5967
  %7137 = vmatprep.subr.bf16.mxu0 %v5976
  %7138 = vmatpush1.bf16.msra.mxu0 %v5975
  %7139 = vmatprep.subr.bf16.mxu0 %v5984
  %7140 = vmatpush1.bf16.msra.mxu0 %v5983
  %7141 = vmatprep.subr.bf16.mxu0 %v5992
  %7142 = vmatpush1.bf16.msra.mxu0 %v5991
  %7143 = vmatprep.subr.bf16.mxu0 %v6000
  %7144 = vmatpush1.bf16.msra.mxu0 %v5999
  %7145 = vmatprep.subr.bf16.mxu0 %v6008
  %7146 = vmatpush1.bf16.msra.mxu0 %v6007
  %7147 = vmatprep.subr.bf16.mxu0 %v6016
  %7148 = vmatpush1.bf16.msra.mxu0 %v6015
  %7149 = vmatprep.subr.bf16.mxu0 %v6024
  %7150 = vmatpush1.bf16.msra.mxu0 %v6023
  %7151 = vmatprep.subr.bf16.mxu0 %v6032
  %7152 = vmatpush1.bf16.msra.mxu0 %v6031
  %7153 = vmatprep.subr.bf16.mxu0 %v6040
  %7154 = vmatpush1.bf16.msra.mxu0 %v6039
  %7155 = vmatprep.subr.bf16.mxu0 %v6048
  %7156 = vmatpush1.bf16.msra.mxu0 %v6047
  %7157 = vmatprep.subr.bf16.mxu0 %v6056
  %7158 = vmatpush1.bf16.msra.mxu0 %v6055
  %7159 = vmatprep.subr.bf16.mxu0 %v6064
  %7160 = vmatpush1.bf16.msra.mxu0 %v6063
  %7161 = vmatprep.mubr.bf16.mxu0 %v3844
  %7162 = vmatmul.mubr.bf16.gmra.mrb[0].mxu0 %v3843
  %v7163 = vpop.f32.mrb[0].mxu0
  %v7164 = vadd.f32 %v4376, %v7163
  %v7165 = vpop.f32.mrb[0].mxu0
  %v7166 = vadd.f32 %v4380, %v7165
  %v7167 = vpop.f32.mrb[0].mxu0
  %v7168 = vpop.f32.mrb[0].mxu0
  %7169 = vdwg.mxu0
  %7170 = vmatprep.subr.bf16.mxu0 %v6072
  %7171 = vmatpush1.bf16.msra.mxu0 %v6071
  %7172 = vmatprep.subr.bf16.mxu0 %v6080
  %7173 = vmatpush1.bf16.msra.mxu0 %v6079
  %7174 = vmatprep.subr.bf16.mxu0 %v6088
  %7175 = vmatpush1.bf16.msra.mxu0 %v6087
  %7176 = vmatprep.subr.bf16.mxu0 %v6096
  %7177 = vmatpush1.bf16.msra.mxu0 %v6095
  %7178 = vmatprep.subr.bf16.mxu0 %v6104
  %7179 = vmatpush1.bf16.msra.mxu0 %v6103
  %7180 = vmatprep.subr.bf16.mxu0 %v6112
  %7181 = vmatpush1.bf16.msra.mxu0 %v6111
  %7182 = vmatprep.subr.bf16.mxu0 %v6120
  %7183 = vmatpush1.bf16.msra.mxu0 %v6119
  %7184 = vmatprep.subr.bf16.mxu0 %v6128
  %7185 = vmatpush1.bf16.msra.mxu0 %v6127
  %7186 = vmatprep.subr.bf16.mxu0 %v6136
  %7187 = vmatpush1.bf16.msra.mxu0 %v6135
  %7188 = vmatprep.subr.bf16.mxu0 %v6144
  %7189 = vmatpush1.bf16.msra.mxu0 %v6143
  %7190 = vmatprep.subr.bf16.mxu0 %v6152
  %7191 = vmatpush1.bf16.msra.mxu0 %v6151
  %7192 = vmatprep.subr.bf16.mxu0 %v6160
  %7193 = vmatpush1.bf16.msra.mxu0 %v6159
  %7194 = vmatprep.subr.bf16.mxu0 %v6168
  %7195 = vmatpush1.bf16.msra.mxu0 %v6167
  %7196 = vmatprep.subr.bf16.mxu0 %v6176
  %7197 = vmatpush1.bf16.msra.mxu0 %v6175
  %7198 = vmatprep.subr.bf16.mxu0 %v6184
  %7199 = vmatpush1.bf16.msra.mxu0 %v6183
  %7200 = vmatprep.subr.bf16.mxu0 %v6192
  %7201 = vmatpush1.bf16.msra.mxu0 %v6191
  %7202 = vmatprep.mubr.bf16.mxu0 %v3846
  %7203 = vmatmul.mubr.bf16.gmra.mrb[0].mxu0 %v3845
  %v7204 = vpop.f32.mrb[0].mxu0
  %v7205 = vadd.f32 %v7164, %v7204
  %v7206 = vpop.f32.mrb[0].mxu0
  %v7207 = vadd.f32 %v7166, %v7206
  %v7208 = vpop.f32.mrb[0].mxu0
  %v7209 = vpop.f32.mrb[0].mxu0
  %7210 = vdwg.mxu0
  %7211 = vmatprep.subr.bf16.mxu0 %v6200
  %7212 = vmatpush1.bf16.msra.mxu0 %v6199
  %7213 = vmatprep.subr.bf16.mxu0 %v6208
  %7214 = vmatpush1.bf16.msra.mxu0 %v6207
  %7215 = vmatprep.subr.bf16.mxu0 %v6216
  %7216 = vmatpush1.bf16.msra.mxu0 %v6215
  %7217 = vmatprep.subr.bf16.mxu0 %v6224
  %7218 = vmatpush1.bf16.msra.mxu0 %v6223
  %7219 = vmatprep.subr.bf16.mxu0 %v6232
  %7220 = vmatpush1.bf16.msra.mxu0 %v6231
  %7221 = vmatprep.subr.bf16.mxu0 %v6240
  %7222 = vmatpush1.bf16.msra.mxu0 %v6239
  %7223 = vmatprep.subr.bf16.mxu0 %v6248
  %7224 = vmatpush1.bf16.msra.mxu0 %v6247
  %7225 = vmatprep.subr.bf16.mxu0 %v6256
  %7226 = vmatpush1.bf16.msra.mxu0 %v6255
  %7227 = vmatprep.subr.bf16.mxu0 %v6264
  %7228 = vmatpush1.bf16.msra.mxu0 %v6263
  %7229 = vmatprep.subr.bf16.mxu0 %v6272
  %7230 = vmatpush1.bf16.msra.mxu0 %v6271
  %7231 = vmatprep.subr.bf16.mxu0 %v6280
  %7232 = vmatpush1.bf16.msra.mxu0 %v6279
  %7233 = vmatprep.subr.bf16.mxu0 %v6288
  %7234 = vmatpush1.bf16.msra.mxu0 %v6287
  %7235 = vmatprep.subr.bf16.mxu0 %v6296
  %7236 = vmatpush1.bf16.msra.mxu0 %v6295
  %7237 = vmatprep.subr.bf16.mxu0 %v6304
  %7238 = vmatpush1.bf16.msra.mxu0 %v6303
  %7239 = vmatprep.subr.bf16.mxu0 %v6312
  %7240 = vmatpush1.bf16.msra.mxu0 %v6311
  %7241 = vmatprep.subr.bf16.mxu0 %v6320
  %7242 = vmatpush1.bf16.msra.mxu0 %v6319
  %7243 = vmatprep.mubr.bf16.mxu0 %v3848
  %7244 = vmatmul.mubr.bf16.gmra.mrb[0].mxu0 %v3847
  %v7245 = vpop.f32.mrb[0].mxu0
  %v7246 = vadd.f32 %v7205, %v7245
  %v7247 = vpop.f32.mrb[0].mxu0
  %v7248 = vadd.f32 %v7207, %v7247
  %v7249 = vpop.f32.mrb[0].mxu0
  %v7250 = vpop.f32.mrb[0].mxu0
  %7251 = vdwg.mxu0
  %7252 = vmatprep.subr.bf16.mxu0 %v6328
  %7253 = vmatpush1.bf16.msra.mxu0 %v6327
  %7254 = vmatprep.subr.bf16.mxu0 %v6336
  %7255 = vmatpush1.bf16.msra.mxu0 %v6335
  %7256 = vmatprep.subr.bf16.mxu0 %v6344
  %7257 = vmatpush1.bf16.msra.mxu0 %v6343
  %7258 = vmatprep.subr.bf16.mxu0 %v6352
  %7259 = vmatpush1.bf16.msra.mxu0 %v6351
  %7260 = vmatprep.subr.bf16.mxu0 %v6360
  %7261 = vmatpush1.bf16.msra.mxu0 %v6359
  %7262 = vmatprep.subr.bf16.mxu0 %v6368
  %7263 = vmatpush1.bf16.msra.mxu0 %v6367
  %7264 = vmatprep.subr.bf16.mxu0 %v6376
  %7265 = vmatpush1.bf16.msra.mxu0 %v6375
  %7266 = vmatprep.subr.bf16.mxu0 %v6384
  %7267 = vmatpush1.bf16.msra.mxu0 %v6383
  %7268 = vmatprep.subr.bf16.mxu0 %v6392
  %7269 = vmatpush1.bf16.msra.mxu0 %v6391
  %7270 = vmatprep.subr.bf16.mxu0 %v6400
  %7271 = vmatpush1.bf16.msra.mxu0 %v6399
  %7272 = vmatprep.subr.bf16.mxu0 %v6408
  %7273 = vmatpush1.bf16.msra.mxu0 %v6407
  %7274 = vmatprep.subr.bf16.mxu0 %v6416
  %7275 = vmatpush1.bf16.msra.mxu0 %v6415
  %7276 = vmatprep.subr.bf16.mxu0 %v6424
  %7277 = vmatpush1.bf16.msra.mxu0 %v6423
  %7278 = vmatprep.subr.bf16.mxu0 %v6432
  %7279 = vmatpush1.bf16.msra.mxu0 %v6431
  %7280 = vmatprep.subr.bf16.mxu0 %v6440
  %7281 = vmatpush1.bf16.msra.mxu0 %v6439
  %7282 = vmatprep.subr.bf16.mxu0 %v6448
  %7283 = vmatpush1.bf16.msra.mxu0 %v6447
  %7284 = vmatprep.mubr.bf16.mxu0 %v3850
  %7285 = vmatmul.mubr.bf16.gmra.mrb[0].mxu0 %v3849
  %v7286 = vpop.f32.mrb[0].mxu0
  %v7287 = vadd.f32 %v7246, %v7286
  %v7288 = vpop.f32.mrb[0].mxu0
  %v7289 = vadd.f32 %v7248, %v7288
  %v7290 = vpop.f32.mrb[0].mxu0
  %v7291 = vpop.f32.mrb[0].mxu0
  %7292 = vdwg.mxu0
  %7293 = vmatprep.subr.bf16.mxu0 %v5946
  %7294 = vmatpush1.bf16.msra.mxu0 %v5945
  %7295 = vmatprep.subr.bf16.mxu0 %v5954
  %7296 = vmatpush1.bf16.msra.mxu0 %v5953
  %7297 = vmatprep.subr.bf16.mxu0 %v5962
  %7298 = vmatpush1.bf16.msra.mxu0 %v5961
  %7299 = vmatprep.subr.bf16.mxu0 %v5970
  %7300 = vmatpush1.bf16.msra.mxu0 %v5969
  %7301 = vmatprep.subr.bf16.mxu0 %v5978
  %7302 = vmatpush1.bf16.msra.mxu0 %v5977
  %7303 = vmatprep.subr.bf16.mxu0 %v5986
  %7304 = vmatpush1.bf16.msra.mxu0 %v5985
  %7305 = vmatprep.subr.bf16.mxu0 %v5994
  %7306 = vmatpush1.bf16.msra.mxu0 %v5993
  %7307 = vmatprep.subr.bf16.mxu0 %v6002
  %7308 = vmatpush1.bf16.msra.mxu0 %v6001
  %7309 = vmatprep.subr.bf16.mxu0 %v6010
  %7310 = vmatpush1.bf16.msra.mxu0 %v6009
  %7311 = vmatprep.subr.bf16.mxu0 %v6018
  %7312 = vmatpush1.bf16.msra.mxu0 %v6017
  %7313 = vmatprep.subr.bf16.mxu0 %v6026
  %7314 = vmatpush1.bf16.msra.mxu0 %v6025
  %7315 = vmatprep.subr.bf16.mxu0 %v6034
  %7316 = vmatpush1.bf16.msra.mxu0 %v6033
  %7317 = vmatprep.subr.bf16.mxu0 %v6042
  %7318 = vmatpush1.bf16.msra.mxu0 %v6041
  %7319 = vmatprep.subr.bf16.mxu0 %v6050
  %7320 = vmatpush1.bf16.msra.mxu0 %v6049
  %7321 = vmatprep.subr.bf16.mxu0 %v6058
  %7322 = vmatpush1.bf16.msra.mxu0 %v6057
  %7323 = vmatprep.subr.bf16.mxu0 %v6066
  %7324 = vmatpush1.bf16.msra.mxu0 %v6065
  %7325 = vmatprep.mubr.bf16.mxu0 %v3844
  %7326 = vmatmul.mubr.bf16.gmra.mrb[0].mxu0 %v3843
  %v7327 = vpop.f32.mrb[0].mxu0
  %v7328 = vadd.f32 %v4384, %v7327
  %v7329 = vpop.f32.mrb[0].mxu0
  %v7330 = vadd.f32 %v4388, %v7329
  %v7331 = vpop.f32.mrb[0].mxu0
  %v7332 = vpop.f32.mrb[0].mxu0
  %7333 = vdwg.mxu0
  %7334 = vmatprep.subr.bf16.mxu0 %v6074
  %7335 = vmatpush1.bf16.msra.mxu0 %v6073
  %7336 = vmatprep.subr.bf16.mxu0 %v6082
  %7337 = vmatpush1.bf16.msra.mxu0 %v6081
  %7338 = vmatprep.subr.bf16.mxu0 %v6090
  %7339 = vmatpush1.bf16.msra.mxu0 %v6089
  %7340 = vmatprep.subr.bf16.mxu0 %v6098
  %7341 = vmatpush1.bf16.msra.mxu0 %v6097
  %7342 = vmatprep.subr.bf16.mxu0 %v6106
  %7343 = vmatpush1.bf16.msra.mxu0 %v6105
  %7344 = vmatprep.subr.bf16.mxu0 %v6114
  %7345 = vmatpush1.bf16.msra.mxu0 %v6113
  %7346 = vmatprep.subr.bf16.mxu0 %v6122
  %7347 = vmatpush1.bf16.msra.mxu0 %v6121
  %7348 = vmatprep.subr.bf16.mxu0 %v6130
  %7349 = vmatpush1.bf16.msra.mxu0 %v6129
  %7350 = vmatprep.subr.bf16.mxu0 %v6138
  %7351 = vmatpush1.bf16.msra.mxu0 %v6137
  %7352 = vmatprep.subr.bf16.mxu0 %v6146
  %7353 = vmatpush1.bf16.msra.mxu0 %v6145
  %7354 = vmatprep.subr.bf16.mxu0 %v6154
  %7355 = vmatpush1.bf16.msra.mxu0 %v6153
  %7356 = vmatprep.subr.bf16.mxu0 %v6162
  %7357 = vmatpush1.bf16.msra.mxu0 %v6161
  %7358 = vmatprep.subr.bf16.mxu0 %v6170
  %7359 = vmatpush1.bf16.msra.mxu0 %v6169
  %7360 = vmatprep.subr.bf16.mxu0 %v6178
  %7361 = vmatpush1.bf16.msra.mxu0 %v6177
  %7362 = vmatprep.subr.bf16.mxu0 %v6186
  %7363 = vmatpush1.bf16.msra.mxu0 %v6185
  %7364 = vmatprep.subr.bf16.mxu0 %v6194
  %7365 = vmatpush1.bf16.msra.mxu0 %v6193
  %7366 = vmatprep.mubr.bf16.mxu0 %v3846
  %7367 = vmatmul.mubr.bf16.gmra.mrb[0].mxu0 %v3845
  %v7368 = vpop.f32.mrb[0].mxu0
  %v7369 = vadd.f32 %v7328, %v7368
  %v7370 = vpop.f32.mrb[0].mxu0
  %v7371 = vadd.f32 %v7330, %v7370
  %v7372 = vpop.f32.mrb[0].mxu0
  %v7373 = vpop.f32.mrb[0].mxu0
  %7374 = vdwg.mxu0
  %7375 = vmatprep.subr.bf16.mxu0 %v6202
  %7376 = vmatpush1.bf16.msra.mxu0 %v6201
  %7377 = vmatprep.subr.bf16.mxu0 %v6210
  %7378 = vmatpush1.bf16.msra.mxu0 %v6209
  %7379 = vmatprep.subr.bf16.mxu0 %v6218
  %7380 = vmatpush1.bf16.msra.mxu0 %v6217
  %7381 = vmatprep.subr.bf16.mxu0 %v6226
  %7382 = vmatpush1.bf16.msra.mxu0 %v6225
  %7383 = vmatprep.subr.bf16.mxu0 %v6234
  %7384 = vmatpush1.bf16.msra.mxu0 %v6233
  %7385 = vmatprep.subr.bf16.mxu0 %v6242
  %7386 = vmatpush1.bf16.msra.mxu0 %v6241
  %7387 = vmatprep.subr.bf16.mxu0 %v6250
  %7388 = vmatpush1.bf16.msra.mxu0 %v6249
  %7389 = vmatprep.subr.bf16.mxu0 %v6258
  %7390 = vmatpush1.bf16.msra.mxu0 %v6257
  %7391 = vmatprep.subr.bf16.mxu0 %v6266
  %7392 = vmatpush1.bf16.msra.mxu0 %v6265
  %7393 = vmatprep.subr.bf16.mxu0 %v6274
  %7394 = vmatpush1.bf16.msra.mxu0 %v6273
  %7395 = vmatprep.subr.bf16.mxu0 %v6282
  %7396 = vmatpush1.bf16.msra.mxu0 %v6281
  %7397 = vmatprep.subr.bf16.mxu0 %v6290
  %7398 = vmatpush1.bf16.msra.mxu0 %v6289
  %7399 = vmatprep.subr.bf16.mxu0 %v6298
  %7400 = vmatpush1.bf16.msra.mxu0 %v6297
  %7401 = vmatprep.subr.bf16.mxu0 %v6306
  %7402 = vmatpush1.bf16.msra.mxu0 %v6305
  %7403 = vmatprep.subr.bf16.mxu0 %v6314
  %7404 = vmatpush1.bf16.msra.mxu0 %v6313
  %7405 = vmatprep.subr.bf16.mxu0 %v6322
  %7406 = vmatpush1.bf16.msra.mxu0 %v6321
  %7407 = vmatprep.mubr.bf16.mxu0 %v3848
  %7408 = vmatmul.mubr.bf16.gmra.mrb[0].mxu0 %v3847
  %v7409 = vpop.f32.mrb[0].mxu0
  %v7410 = vadd.f32 %v7369, %v7409
  %v7411 = vpop.f32.mrb[0].mxu0
  %v7412 = vadd.f32 %v7371, %v7411
  %v7413 = vpop.f32.mrb[0].mxu0
  %v7414 = vpop.f32.mrb[0].mxu0
  %7415 = vdwg.mxu0
  %7416 = vmatprep.subr.bf16.mxu0 %v6330
  %7417 = vmatpush1.bf16.msra.mxu0 %v6329
  %7418 = vmatprep.subr.bf16.mxu0 %v6338
  %7419 = vmatpush1.bf16.msra.mxu0 %v6337
  %7420 = vmatprep.subr.bf16.mxu0 %v6346
  %7421 = vmatpush1.bf16.msra.mxu0 %v6345
  %7422 = vmatprep.subr.bf16.mxu0 %v6354
  %7423 = vmatpush1.bf16.msra.mxu0 %v6353
  %7424 = vmatprep.subr.bf16.mxu0 %v6362
  %7425 = vmatpush1.bf16.msra.mxu0 %v6361
  %7426 = vmatprep.subr.bf16.mxu0 %v6370
  %7427 = vmatpush1.bf16.msra.mxu0 %v6369
  %7428 = vmatprep.subr.bf16.mxu0 %v6378
  %7429 = vmatpush1.bf16.msra.mxu0 %v6377
  %7430 = vmatprep.subr.bf16.mxu0 %v6386
  %7431 = vmatpush1.bf16.msra.mxu0 %v6385
  %7432 = vmatprep.subr.bf16.mxu0 %v6394
  %7433 = vmatpush1.bf16.msra.mxu0 %v6393
  %7434 = vmatprep.subr.bf16.mxu0 %v6402
  %7435 = vmatpush1.bf16.msra.mxu0 %v6401
  %7436 = vmatprep.subr.bf16.mxu0 %v6410
  %7437 = vmatpush1.bf16.msra.mxu0 %v6409
  %7438 = vmatprep.subr.bf16.mxu0 %v6418
  %7439 = vmatpush1.bf16.msra.mxu0 %v6417
  %7440 = vmatprep.subr.bf16.mxu0 %v6426
  %7441 = vmatpush1.bf16.msra.mxu0 %v6425
  %7442 = vmatprep.subr.bf16.mxu0 %v6434
  %7443 = vmatpush1.bf16.msra.mxu0 %v6433
  %7444 = vmatprep.subr.bf16.mxu0 %v6442
  %7445 = vmatpush1.bf16.msra.mxu0 %v6441
  %7446 = vmatprep.subr.bf16.mxu0 %v6450
  %7447 = vmatpush1.bf16.msra.mxu0 %v6449
  %7448 = vmatprep.mubr.bf16.mxu0 %v3850
  %7449 = vmatmul.mubr.bf16.gmra.mrb[0].mxu0 %v3849
  %v7450 = vpop.f32.mrb[0].mxu0
  %v7451 = vadd.f32 %v7410, %v7450
  %v7452 = vpop.f32.mrb[0].mxu0
  %v7453 = vadd.f32 %v7412, %v7452
  %v7454 = vpop.f32.mrb[0].mxu0
  %v7455 = vpop.f32.mrb[0].mxu0
  %7456 = vdwg.mxu0
  %7457 = vmatprep.subr.bf16.mxu0 %v5948
  %7458 = vmatpush1.bf16.msra.mxu0 %v5947
  %7459 = vmatprep.subr.bf16.mxu0 %v5956
  %7460 = vmatpush1.bf16.msra.mxu0 %v5955
  %7461 = vmatprep.subr.bf16.mxu0 %v5964
  %7462 = vmatpush1.bf16.msra.mxu0 %v5963
  %7463 = vmatprep.subr.bf16.mxu0 %v5972
  %7464 = vmatpush1.bf16.msra.mxu0 %v5971
  %7465 = vmatprep.subr.bf16.mxu0 %v5980
  %7466 = vmatpush1.bf16.msra.mxu0 %v5979
  %7467 = vmatprep.subr.bf16.mxu0 %v5988
  %7468 = vmatpush1.bf16.msra.mxu0 %v5987
  %7469 = vmatprep.subr.bf16.mxu0 %v5996
  %7470 = vmatpush1.bf16.msra.mxu0 %v5995
  %7471 = vmatprep.subr.bf16.mxu0 %v6004
  %7472 = vmatpush1.bf16.msra.mxu0 %v6003
  %7473 = vmatprep.subr.bf16.mxu0 %v6012
  %7474 = vmatpush1.bf16.msra.mxu0 %v6011
  %7475 = vmatprep.subr.bf16.mxu0 %v6020
  %7476 = vmatpush1.bf16.msra.mxu0 %v6019
  %7477 = vmatprep.subr.bf16.mxu0 %v6028
  %7478 = vmatpush1.bf16.msra.mxu0 %v6027
  %7479 = vmatprep.subr.bf16.mxu0 %v6036
  %7480 = vmatpush1.bf16.msra.mxu0 %v6035
  %7481 = vmatprep.subr.bf16.mxu0 %v6044
  %7482 = vmatpush1.bf16.msra.mxu0 %v6043
  %7483 = vmatprep.subr.bf16.mxu0 %v6052
  %7484 = vmatpush1.bf16.msra.mxu0 %v6051
  %7485 = vmatprep.subr.bf16.mxu0 %v6060
  %7486 = vmatpush1.bf16.msra.mxu0 %v6059
  %7487 = vmatprep.subr.bf16.mxu0 %v6068
  %7488 = vmatpush1.bf16.msra.mxu0 %v6067
  %7489 = vmatprep.mubr.bf16.mxu0 %v3844
  %7490 = vmatmul.mubr.bf16.gmra.mrb[0].mxu0 %v3843
  %v7491 = vpop.f32.mrb[0].mxu0
  %v7492 = vadd.f32 %v4392, %v7491
  %v7493 = vpop.f32.mrb[0].mxu0
  %v7494 = vadd.f32 %v4396, %v7493
  %v7495 = vpop.f32.mrb[0].mxu0
  %v7496 = vpop.f32.mrb[0].mxu0
  %7497 = vdwg.mxu0
  %7498 = vmatprep.subr.bf16.mxu0 %v6076
  %7499 = vmatpush1.bf16.msra.mxu0 %v6075
  %7500 = vmatprep.subr.bf16.mxu0 %v6084
  %7501 = vmatpush1.bf16.msra.mxu0 %v6083
  %7502 = vmatprep.subr.bf16.mxu0 %v6092
  %7503 = vmatpush1.bf16.msra.mxu0 %v6091
  %7504 = vmatprep.subr.bf16.mxu0 %v6100
  %7505 = vmatpush1.bf16.msra.mxu0 %v6099
  %7506 = vmatprep.subr.bf16.mxu0 %v6108
  %7507 = vmatpush1.bf16.msra.mxu0 %v6107
  %7508 = vmatprep.subr.bf16.mxu0 %v6116
  %7509 = vmatpush1.bf16.msra.mxu0 %v6115
  %7510 = vmatprep.subr.bf16.mxu0 %v6124
  %7511 = vmatpush1.bf16.msra.mxu0 %v6123
  %7512 = vmatprep.subr.bf16.mxu0 %v6132
  %7513 = vmatpush1.bf16.msra.mxu0 %v6131
  %7514 = vmatprep.subr.bf16.mxu0 %v6140
  %7515 = vmatpush1.bf16.msra.mxu0 %v6139
  %7516 = vmatprep.subr.bf16.mxu0 %v6148
  %7517 = vmatpush1.bf16.msra.mxu0 %v6147
  %7518 = vmatprep.subr.bf16.mxu0 %v6156
  %7519 = vmatpush1.bf16.msra.mxu0 %v6155
  %7520 = vmatprep.subr.bf16.mxu0 %v6164
  %7521 = vmatpush1.bf16.msra.mxu0 %v6163
  %7522 = vmatprep.subr.bf16.mxu0 %v6172
  %7523 = vmatpush1.bf16.msra.mxu0 %v6171
  %7524 = vmatprep.subr.bf16.mxu0 %v6180
  %7525 = vmatpush1.bf16.msra.mxu0 %v6179
  %7526 = vmatprep.subr.bf16.mxu0 %v6188
  %7527 = vmatpush1.bf16.msra.mxu0 %v6187
  %7528 = vmatprep.subr.bf16.mxu0 %v6196
  %7529 = vmatpush1.bf16.msra.mxu0 %v6195
  %7530 = vmatprep.mubr.bf16.mxu0 %v3846
  %7531 = vmatmul.mubr.bf16.gmra.mrb[0].mxu0 %v3845
  %v7532 = vpop.f32.mrb[0].mxu0
  %v7533 = vadd.f32 %v7492, %v7532
  %v7534 = vpop.f32.mrb[0].mxu0
  %v7535 = vadd.f32 %v7494, %v7534
  %v7536 = vpop.f32.mrb[0].mxu0
  %v7537 = vpop.f32.mrb[0].mxu0
  %7538 = vdwg.mxu0
  %7539 = vmatprep.subr.bf16.mxu0 %v6204
  %7540 = vmatpush1.bf16.msra.mxu0 %v6203
  %7541 = vmatprep.subr.bf16.mxu0 %v6212
  %7542 = vmatpush1.bf16.msra.mxu0 %v6211
  %7543 = vmatprep.subr.bf16.mxu0 %v6220
  %7544 = vmatpush1.bf16.msra.mxu0 %v6219
  %7545 = vmatprep.subr.bf16.mxu0 %v6228
  %7546 = vmatpush1.bf16.msra.mxu0 %v6227
  %7547 = vmatprep.subr.bf16.mxu0 %v6236
  %7548 = vmatpush1.bf16.msra.mxu0 %v6235
  %7549 = vmatprep.subr.bf16.mxu0 %v6244
  %7550 = vmatpush1.bf16.msra.mxu0 %v6243
  %7551 = vmatprep.subr.bf16.mxu0 %v6252
  %7552 = vmatpush1.bf16.msra.mxu0 %v6251
  %7553 = vmatprep.subr.bf16.mxu0 %v6260
  %7554 = vmatpush1.bf16.msra.mxu0 %v6259
  %7555 = vmatprep.subr.bf16.mxu0 %v6268
  %7556 = vmatpush1.bf16.msra.mxu0 %v6267
  %7557 = vmatprep.subr.bf16.mxu0 %v6276
  %7558 = vmatpush1.bf16.msra.mxu0 %v6275
  %7559 = vmatprep.subr.bf16.mxu0 %v6284
  %7560 = vmatpush1.bf16.msra.mxu0 %v6283
  %7561 = vmatprep.subr.bf16.mxu0 %v6292
  %7562 = vmatpush1.bf16.msra.mxu0 %v6291
  %7563 = vmatprep.subr.bf16.mxu0 %v6300
  %7564 = vmatpush1.bf16.msra.mxu0 %v6299
  %7565 = vmatprep.subr.bf16.mxu0 %v6308
  %7566 = vmatpush1.bf16.msra.mxu0 %v6307
  %7567 = vmatprep.subr.bf16.mxu0 %v6316
  %7568 = vmatpush1.bf16.msra.mxu0 %v6315
  %7569 = vmatprep.subr.bf16.mxu0 %v6324
  %7570 = vmatpush1.bf16.msra.mxu0 %v6323
  %7571 = vmatprep.mubr.bf16.mxu0 %v3848
  %7572 = vmatmul.mubr.bf16.gmra.mrb[0].mxu0 %v3847
  %v7573 = vpop.f32.mrb[0].mxu0
  %v7574 = vadd.f32 %v7533, %v7573
  %v7575 = vpop.f32.mrb[0].mxu0
  %v7576 = vadd.f32 %v7535, %v7575
  %v7577 = vpop.f32.mrb[0].mxu0
  %v7578 = vpop.f32.mrb[0].mxu0
  %7579 = vdwg.mxu0
  %7580 = vmatprep.subr.bf16.mxu0 %v6332
  %7581 = vmatpush1.bf16.msra.mxu0 %v6331
  %7582 = vmatprep.subr.bf16.mxu0 %v6340
  %7583 = vmatpush1.bf16.msra.mxu0 %v6339
  %7584 = vmatprep.subr.bf16.mxu0 %v6348
  %7585 = vmatpush1.bf16.msra.mxu0 %v6347
  %7586 = vmatprep.subr.bf16.mxu0 %v6356
  %7587 = vmatpush1.bf16.msra.mxu0 %v6355
  %7588 = vmatprep.subr.bf16.mxu0 %v6364
  %7589 = vmatpush1.bf16.msra.mxu0 %v6363
  %7590 = vmatprep.subr.bf16.mxu0 %v6372
  %7591 = vmatpush1.bf16.msra.mxu0 %v6371
  %7592 = vmatprep.subr.bf16.mxu0 %v6380
  %7593 = vmatpush1.bf16.msra.mxu0 %v6379
  %7594 = vmatprep.subr.bf16.mxu0 %v6388
  %7595 = vmatpush1.bf16.msra.mxu0 %v6387
  %7596 = vmatprep.subr.bf16.mxu0 %v6396
  %7597 = vmatpush1.bf16.msra.mxu0 %v6395
  %7598 = vmatprep.subr.bf16.mxu0 %v6404
  %7599 = vmatpush1.bf16.msra.mxu0 %v6403
  %7600 = vmatprep.subr.bf16.mxu0 %v6412
  %7601 = vmatpush1.bf16.msra.mxu0 %v6411
  %7602 = vmatprep.subr.bf16.mxu0 %v6420
  %7603 = vmatpush1.bf16.msra.mxu0 %v6419
  %7604 = vmatprep.subr.bf16.mxu0 %v6428
  %7605 = vmatpush1.bf16.msra.mxu0 %v6427
  %7606 = vmatprep.subr.bf16.mxu0 %v6436
  %7607 = vmatpush1.bf16.msra.mxu0 %v6435
  %7608 = vmatprep.subr.bf16.mxu0 %v6444
  %7609 = vmatpush1.bf16.msra.mxu0 %v6443
  %7610 = vmatprep.subr.bf16.mxu0 %v6452
  %7611 = vmatpush1.bf16.msra.mxu0 %v6451
  %7612 = vmatprep.mubr.bf16.mxu0 %v3850
  %7613 = vmatmul.mubr.bf16.gmra.mrb[0].mxu0 %v3849
  %v7614 = vpop.f32.mrb[0].mxu0
  %v7615 = vadd.f32 %v7574, %v7614
  %v7616 = vpop.f32.mrb[0].mxu0
  %v7617 = vadd.f32 %v7576, %v7616
  %v7618 = vpop.f32.mrb[0].mxu0
  %v7619 = vpop.f32.mrb[0].mxu0
  %7620 = vdwg.mxu0
  %v7621 = vmax.f32 %v7123, 0.0
  %v7622 = vmax.f32 %v7125, 0.0
  %v7623 = vmax.f32 %v7287, 0.0
  %v7624 = vmax.f32 %v7289, 0.0
  %v7625 = vmax.f32 %v7451, 0.0
  %v7626 = vmax.f32 %v7453, 0.0
  %v7627 = vmax.f32 %v7615, 0.0
  %v7628 = vmax.f32 %v7617, 0.0
  %v7629 = vpack.c.bf16 %v7621, %v7621
  %v7630 = vpack.c.bf16 %v7622, %v7622
  %v7631 = vpack.c.bf16 %v7623, %v7623
  %v7632 = vpack.c.bf16 %v7624, %v7624
  %v7633 = vpack.c.bf16 %v7625, %v7625
  %v7634 = vpack.c.bf16 %v7626, %v7626
  %v7635 = vpack.c.bf16 %v7627, %v7627
  %v7636 = vpack.c.bf16 %v7628, %v7628
  %v7637 = vld [vmem:[%s5] sm:$0xf]
  %v7638 = vld [vmem:[%s5 + $0x4] sm:$0xf]
  %v7639 = vld [vmem:[%s5 + $0x8] sm:$0xf]
  %v7640 = vld [vmem:[%s5 + $0xc] sm:$0xf]
  %v7641 = vld [vmem:[%s5 + $0x10] sm:$0xf]
  %v7642 = vld [vmem:[%s5 + $0x14] sm:$0xf]
  %v7643 = vld [vmem:[%s5 + $0x18] sm:$0xf]
  %v7644 = vld [vmem:[%s5 + $0x1c] sm:$0xf]
  %v7645 = vld [vmem:[%s5 + $0x20] sm:$0xf]
  %v7646 = vld [vmem:[%s5 + $0x24] sm:$0xf]
  %v7647 = vld [vmem:[%s5 + $0x28] sm:$0xf]
  %v7648 = vld [vmem:[%s5 + $0x2c] sm:$0xf]
  %v7649 = vld [vmem:[%s5 + $0x30] sm:$0xf]
  %v7650 = vld [vmem:[%s5 + $0x34] sm:$0xf]
  %v7651 = vld [vmem:[%s5 + $0x38] sm:$0xf]
  %v7652 = vld [vmem:[%s5 + $0x3c] sm:$0xf]
  %v7653 = vld [vmem:[%s5 + $0x40] sm:$0xf]
  %v7654 = vld [vmem:[%s5 + $0x44] sm:$0xf]
  %v7655 = vld [vmem:[%s5 + $0x48] sm:$0xf]
  %v7656 = vld [vmem:[%s5 + $0x4c] sm:$0xf]
  %v7657 = vld [vmem:[%s5 + $0x50] sm:$0xf]
  %v7658 = vld [vmem:[%s5 + $0x54] sm:$0xf]
  %v7659 = vld [vmem:[%s5 + $0x58] sm:$0xf]
  %v7660 = vld [vmem:[%s5 + $0x5c] sm:$0xf]
  %v7661 = vld [vmem:[%s5 + $0x60] sm:$0xf]
  %v7662 = vld [vmem:[%s5 + $0x64] sm:$0xf]
  %v7663 = vld [vmem:[%s5 + $0x68] sm:$0xf]
  %v7664 = vld [vmem:[%s5 + $0x6c] sm:$0xf]
  %v7665 = vld [vmem:[%s5 + $0x70] sm:$0xf]
  %v7666 = vld [vmem:[%s5 + $0x74] sm:$0xf]
  %v7667 = vld [vmem:[%s5 + $0x78] sm:$0xf]
  %v7668 = vld [vmem:[%s5 + $0x7c] sm:$0xf]
  %v7669 = vld [vmem:[%s5 + $0x80] sm:$0xf]
  %v7670 = vld [vmem:[%s5 + $0x84] sm:$0xf]
  %v7671 = vld [vmem:[%s5 + $0x88] sm:$0xf]
  %v7672 = vld [vmem:[%s5 + $0x8c] sm:$0xf]
  %v7673 = vld [vmem:[%s5 + $0x90] sm:$0xf]
  %v7674 = vld [vmem:[%s5 + $0x94] sm:$0xf]
  %v7675 = vld [vmem:[%s5 + $0x98] sm:$0xf]
  %v7676 = vld [vmem:[%s5 + $0x9c] sm:$0xf]
  %v7677 = vld [vmem:[%s5 + $0xa0] sm:$0xf]
  %v7678 = vld [vmem:[%s5 + $0xa4] sm:$0xf]
  %v7679 = vld [vmem:[%s5 + $0xa8] sm:$0xf]
  %v7680 = vld [vmem:[%s5 + $0xac] sm:$0xf]
  %v7681 = vld [vmem:[%s5 + $0xb0] sm:$0xf]
  %v7682 = vld [vmem:[%s5 + $0xb4] sm:$0xf]
  %v7683 = vld [vmem:[%s5 + $0xb8] sm:$0xf]
  %v7684 = vld [vmem:[%s5 + $0xbc] sm:$0xf]
  %v7685 = vld [vmem:[%s5 + $0xc0] sm:$0xf]
  %v7686 = vld [vmem:[%s5 + $0xc4] sm:$0xf]
  %v7687 = vld [vmem:[%s5 + $0xc8] sm:$0xf]
  %v7688 = vld [vmem:[%s5 + $0xcc] sm:$0xf]
  %v7689 = vld [vmem:[%s5 + $0xd0] sm:$0xf]
  %v7690 = vld [vmem:[%s5 + $0xd4] sm:$0xf]
  %v7691 = vld [vmem:[%s5 + $0xd8] sm:$0xf]
  %v7692 = vld [vmem:[%s5 + $0xdc] sm:$0xf]
  %v7693 = vld [vmem:[%s5 + $0xe0] sm:$0xf]
  %v7694 = vld [vmem:[%s5 + $0xe4] sm:$0xf]
  %v7695 = vld [vmem:[%s5 + $0xe8] sm:$0xf]
  %v7696 = vld [vmem:[%s5 + $0xec] sm:$0xf]
  %v7697 = vld [vmem:[%s5 + $0xf0] sm:$0xf]
  %v7698 = vld [vmem:[%s5 + $0xf4] sm:$0xf]
  %v7699 = vld [vmem:[%s5 + $0xf8] sm:$0xf]
  %v7700 = vld [vmem:[%s5 + $0xfc] sm:$0xf]
  %v7701 = vld [vmem:[%s5 + $0x100] sm:$0xf]
  %v7702 = vld [vmem:[%s5 + $0x104] sm:$0xf]
  %v7703 = vld [vmem:[%s5 + $0x108] sm:$0xf]
  %v7704 = vld [vmem:[%s5 + $0x10c] sm:$0xf]
  %v7705 = vld [vmem:[%s5 + $0x110] sm:$0xf]
  %v7706 = vld [vmem:[%s5 + $0x114] sm:$0xf]
  %v7707 = vld [vmem:[%s5 + $0x118] sm:$0xf]
  %v7708 = vld [vmem:[%s5 + $0x11c] sm:$0xf]
  %v7709 = vld [vmem:[%s5 + $0x120] sm:$0xf]
  %v7710 = vld [vmem:[%s5 + $0x124] sm:$0xf]
  %v7711 = vld [vmem:[%s5 + $0x128] sm:$0xf]
  %v7712 = vld [vmem:[%s5 + $0x12c] sm:$0xf]
  %v7713 = vld [vmem:[%s5 + $0x130] sm:$0xf]
  %v7714 = vld [vmem:[%s5 + $0x134] sm:$0xf]
  %v7715 = vld [vmem:[%s5 + $0x138] sm:$0xf]
  %v7716 = vld [vmem:[%s5 + $0x13c] sm:$0xf]
  %v7717 = vld [vmem:[%s5 + $0x140] sm:$0xf]
  %v7718 = vld [vmem:[%s5 + $0x144] sm:$0xf]
  %v7719 = vld [vmem:[%s5 + $0x148] sm:$0xf]
  %v7720 = vld [vmem:[%s5 + $0x14c] sm:$0xf]
  %v7721 = vld [vmem:[%s5 + $0x150] sm:$0xf]
  %v7722 = vld [vmem:[%s5 + $0x154] sm:$0xf]
  %v7723 = vld [vmem:[%s5 + $0x158] sm:$0xf]
  %v7724 = vld [vmem:[%s5 + $0x15c] sm:$0xf]
  %v7725 = vld [vmem:[%s5 + $0x160] sm:$0xf]
  %v7726 = vld [vmem:[%s5 + $0x164] sm:$0xf]
  %v7727 = vld [vmem:[%s5 + $0x168] sm:$0xf]
  %v7728 = vld [vmem:[%s5 + $0x16c] sm:$0xf]
  %v7729 = vld [vmem:[%s5 + $0x170] sm:$0xf]
  %v7730 = vld [vmem:[%s5 + $0x174] sm:$0xf]
  %v7731 = vld [vmem:[%s5 + $0x178] sm:$0xf]
  %v7732 = vld [vmem:[%s5 + $0x17c] sm:$0xf]
  %v7733 = vld [vmem:[%s5 + $0x180] sm:$0xf]
  %v7734 = vld [vmem:[%s5 + $0x184] sm:$0xf]
  %v7735 = vld [vmem:[%s5 + $0x188] sm:$0xf]
  %v7736 = vld [vmem:[%s5 + $0x18c] sm:$0xf]
  %v7737 = vld [vmem:[%s5 + $0x190] sm:$0xf]
  %v7738 = vld [vmem:[%s5 + $0x194] sm:$0xf]
  %v7739 = vld [vmem:[%s5 + $0x198] sm:$0xf]
  %v7740 = vld [vmem:[%s5 + $0x19c] sm:$0xf]
  %v7741 = vld [vmem:[%s5 + $0x1a0] sm:$0xf]
  %v7742 = vld [vmem:[%s5 + $0x1a4] sm:$0xf]
  %v7743 = vld [vmem:[%s5 + $0x1a8] sm:$0xf]
  %v7744 = vld [vmem:[%s5 + $0x1ac] sm:$0xf]
  %v7745 = vld [vmem:[%s5 + $0x1b0] sm:$0xf]
  %v7746 = vld [vmem:[%s5 + $0x1b4] sm:$0xf]
  %v7747 = vld [vmem:[%s5 + $0x1b8] sm:$0xf]
  %v7748 = vld [vmem:[%s5 + $0x1bc] sm:$0xf]
  %v7749 = vld [vmem:[%s5 + $0x1c0] sm:$0xf]
  %v7750 = vld [vmem:[%s5 + $0x1c4] sm:$0xf]
  %v7751 = vld [vmem:[%s5 + $0x1c8] sm:$0xf]
  %v7752 = vld [vmem:[%s5 + $0x1cc] sm:$0xf]
  %v7753 = vld [vmem:[%s5 + $0x1d0] sm:$0xf]
  %v7754 = vld [vmem:[%s5 + $0x1d4] sm:$0xf]
  %v7755 = vld [vmem:[%s5 + $0x1d8] sm:$0xf]
  %v7756 = vld [vmem:[%s5 + $0x1dc] sm:$0xf]
  %v7757 = vld [vmem:[%s5 + $0x1e0] sm:$0xf]
  %v7758 = vld [vmem:[%s5 + $0x1e4] sm:$0xf]
  %v7759 = vld [vmem:[%s5 + $0x1e8] sm:$0xf]
  %v7760 = vld [vmem:[%s5 + $0x1ec] sm:$0xf]
  %v7761 = vld [vmem:[%s5 + $0x1f0] sm:$0xf]
  %v7762 = vld [vmem:[%s5 + $0x1f4] sm:$0xf]
  %v7763 = vld [vmem:[%s5 + $0x1f8] sm:$0xf]
  %v7764 = vld [vmem:[%s5 + $0x1fc] sm:$0xf]
  %v7765 = vld [vmem:[%s6] sm:$0x1]
  %v7767 = vlaneseq
  %v7768 = vshrl.u32 %v7767, 7
  %v7769 = vsub.s32 0, %v7768
  %v7770 = vrot.slane %v7765, %v7769
  %v7900 = vunpack.c.l.b16 %v7637
  %v7901 = vunpack.c.l.b16 %v7638
  %v7902 = vunpack.c.l.b16 %v7639
  %v7903 = vunpack.c.l.b16 %v7640
  %v7904 = vunpack.c.l.b16 %v7641
  %v7905 = vunpack.c.l.b16 %v7642
  %v7906 = vunpack.c.l.b16 %v7643
  %v7907 = vunpack.c.l.b16 %v7644
  %v7908 = vunpack.c.l.b16 %v7645
  %v7909 = vunpack.c.l.b16 %v7646
  %v7910 = vunpack.c.l.b16 %v7647
  %v7911 = vunpack.c.l.b16 %v7648
  %v7912 = vunpack.c.l.b16 %v7649
  %v7913 = vunpack.c.l.b16 %v7650
  %v7914 = vunpack.c.l.b16 %v7651
  %v7915 = vunpack.c.l.b16 %v7652
  %v7916 = vunpack.c.l.b16 %v7653
  %v7917 = vunpack.c.l.b16 %v7654
  %v7918 = vunpack.c.l.b16 %v7655
  %v7919 = vunpack.c.l.b16 %v7656
  %v7920 = vunpack.c.l.b16 %v7657
  %v7921 = vunpack.c.l.b16 %v7658
  %v7922 = vunpack.c.l.b16 %v7659
  %v7923 = vunpack.c.l.b16 %v7660
  %v7924 = vunpack.c.l.b16 %v7661
  %v7925 = vunpack.c.l.b16 %v7662
  %v7926 = vunpack.c.l.b16 %v7663
  %v7927 = vunpack.c.l.b16 %v7664
  %v7928 = vunpack.c.l.b16 %v7665
  %v7929 = vunpack.c.l.b16 %v7666
  %v7930 = vunpack.c.l.b16 %v7667
  %v7931 = vunpack.c.l.b16 %v7668
  %v7932 = vunpack.c.l.b16 %v7669
  %v7933 = vunpack.c.l.b16 %v7670
  %v7934 = vunpack.c.l.b16 %v7671
  %v7935 = vunpack.c.l.b16 %v7672
  %v7936 = vunpack.c.l.b16 %v7673
  %v7937 = vunpack.c.l.b16 %v7674
  %v7938 = vunpack.c.l.b16 %v7675
  %v7939 = vunpack.c.l.b16 %v7676
  %v7940 = vunpack.c.l.b16 %v7677
  %v7941 = vunpack.c.l.b16 %v7678
  %v7942 = vunpack.c.l.b16 %v7679
  %v7943 = vunpack.c.l.b16 %v7680
  %v7944 = vunpack.c.l.b16 %v7681
  %v7945 = vunpack.c.l.b16 %v7682
  %v7946 = vunpack.c.l.b16 %v7683
  %v7947 = vunpack.c.l.b16 %v7684
  %v7948 = vunpack.c.l.b16 %v7685
  %v7949 = vunpack.c.l.b16 %v7686
  %v7950 = vunpack.c.l.b16 %v7687
  %v7951 = vunpack.c.l.b16 %v7688
  %v7952 = vunpack.c.l.b16 %v7689
  %v7953 = vunpack.c.l.b16 %v7690
  %v7954 = vunpack.c.l.b16 %v7691
  %v7955 = vunpack.c.l.b16 %v7692
  %v7956 = vunpack.c.l.b16 %v7693
  %v7957 = vunpack.c.l.b16 %v7694
  %v7958 = vunpack.c.l.b16 %v7695
  %v7959 = vunpack.c.l.b16 %v7696
  %v7960 = vunpack.c.l.b16 %v7697
  %v7961 = vunpack.c.l.b16 %v7698
  %v7962 = vunpack.c.l.b16 %v7699
  %v7963 = vunpack.c.l.b16 %v7700
  %v7964 = vunpack.c.l.b16 %v7701
  %v7965 = vunpack.c.l.b16 %v7702
  %v7966 = vunpack.c.l.b16 %v7703
  %v7967 = vunpack.c.l.b16 %v7704
  %v7968 = vunpack.c.l.b16 %v7705
  %v7969 = vunpack.c.l.b16 %v7706
  %v7970 = vunpack.c.l.b16 %v7707
  %v7971 = vunpack.c.l.b16 %v7708
  %v7972 = vunpack.c.l.b16 %v7709
  %v7973 = vunpack.c.l.b16 %v7710
  %v7974 = vunpack.c.l.b16 %v7711
  %v7975 = vunpack.c.l.b16 %v7712
  %v7976 = vunpack.c.l.b16 %v7713
  %v7977 = vunpack.c.l.b16 %v7714
  %v7978 = vunpack.c.l.b16 %v7715
  %v7979 = vunpack.c.l.b16 %v7716
  %v7980 = vunpack.c.l.b16 %v7717
  %v7981 = vunpack.c.l.b16 %v7718
  %v7982 = vunpack.c.l.b16 %v7719
  %v7983 = vunpack.c.l.b16 %v7720
  %v7984 = vunpack.c.l.b16 %v7721
  %v7985 = vunpack.c.l.b16 %v7722
  %v7986 = vunpack.c.l.b16 %v7723
  %v7987 = vunpack.c.l.b16 %v7724
  %v7988 = vunpack.c.l.b16 %v7725
  %v7989 = vunpack.c.l.b16 %v7726
  %v7990 = vunpack.c.l.b16 %v7727
  %v7991 = vunpack.c.l.b16 %v7728
  %v7992 = vunpack.c.l.b16 %v7729
  %v7993 = vunpack.c.l.b16 %v7730
  %v7994 = vunpack.c.l.b16 %v7731
  %v7995 = vunpack.c.l.b16 %v7732
  %v7996 = vunpack.c.l.b16 %v7733
  %v7997 = vunpack.c.l.b16 %v7734
  %v7998 = vunpack.c.l.b16 %v7735
  %v7999 = vunpack.c.l.b16 %v7736
  %v8000 = vunpack.c.l.b16 %v7737
  %v8001 = vunpack.c.l.b16 %v7738
  %v8002 = vunpack.c.l.b16 %v7739
  %v8003 = vunpack.c.l.b16 %v7740
  %v8004 = vunpack.c.l.b16 %v7741
  %v8005 = vunpack.c.l.b16 %v7742
  %v8006 = vunpack.c.l.b16 %v7743
  %v8007 = vunpack.c.l.b16 %v7744
  %v8008 = vunpack.c.l.b16 %v7745
  %v8009 = vunpack.c.l.b16 %v7746
  %v8010 = vunpack.c.l.b16 %v7747
  %v8011 = vunpack.c.l.b16 %v7748
  %v8012 = vunpack.c.l.b16 %v7749
  %v8013 = vunpack.c.l.b16 %v7750
  %v8014 = vunpack.c.l.b16 %v7751
  %v8015 = vunpack.c.l.b16 %v7752
  %v8016 = vunpack.c.l.b16 %v7753
  %v8017 = vunpack.c.l.b16 %v7754
  %v8018 = vunpack.c.l.b16 %v7755
  %v8019 = vunpack.c.l.b16 %v7756
  %v8020 = vunpack.c.l.b16 %v7757
  %v8021 = vunpack.c.l.b16 %v7758
  %v8022 = vunpack.c.l.b16 %v7759
  %v8023 = vunpack.c.l.b16 %v7760
  %v8024 = vunpack.c.l.b16 %v7761
  %v8025 = vunpack.c.l.b16 %v7762
  %v8026 = vunpack.c.l.b16 %v7763
  %v8027 = vunpack.c.l.b16 %v7764
  %v8028 = vpack.c.b16 %v7901, %v7900
  %v8029 = vpack.c.b16 %v7903, %v7902
  %v8030 = vpack.c.b16 %v7905, %v7904
  %v8031 = vpack.c.b16 %v7907, %v7906
  %v8032 = vpack.c.b16 %v7909, %v7908
  %v8033 = vpack.c.b16 %v7911, %v7910
  %v8034 = vpack.c.b16 %v7913, %v7912
  %v8035 = vpack.c.b16 %v7915, %v7914
  %v8036 = vpack.c.b16 %v7917, %v7916
  %v8037 = vpack.c.b16 %v7919, %v7918
  %v8038 = vpack.c.b16 %v7921, %v7920
  %v8039 = vpack.c.b16 %v7923, %v7922
  %v8040 = vpack.c.b16 %v7925, %v7924
  %v8041 = vpack.c.b16 %v7927, %v7926
  %v8042 = vpack.c.b16 %v7929, %v7928
  %v8043 = vpack.c.b16 %v7931, %v7930
  %v8044 = vpack.c.b16 %v7933, %v7932
  %v8045 = vpack.c.b16 %v7935, %v7934
  %v8046 = vpack.c.b16 %v7937, %v7936
  %v8047 = vpack.c.b16 %v7939, %v7938
  %v8048 = vpack.c.b16 %v7941, %v7940
  %v8049 = vpack.c.b16 %v7943, %v7942
  %v8050 = vpack.c.b16 %v7945, %v7944
  %v8051 = vpack.c.b16 %v7947, %v7946
  %v8052 = vpack.c.b16 %v7949, %v7948
  %v8053 = vpack.c.b16 %v7951, %v7950
  %v8054 = vpack.c.b16 %v7953, %v7952
  %v8055 = vpack.c.b16 %v7955, %v7954
  %v8056 = vpack.c.b16 %v7957, %v7956
  %v8057 = vpack.c.b16 %v7959, %v7958
  %v8058 = vpack.c.b16 %v7961, %v7960
  %v8059 = vpack.c.b16 %v7963, %v7962
  %v8060 = vpack.c.b16 %v7965, %v7964
  %v8061 = vpack.c.b16 %v7967, %v7966
  %v8062 = vpack.c.b16 %v7969, %v7968
  %v8063 = vpack.c.b16 %v7971, %v7970
  %v8064 = vpack.c.b16 %v7973, %v7972
  %v8065 = vpack.c.b16 %v7975, %v7974
  %v8066 = vpack.c.b16 %v7977, %v7976
  %v8067 = vpack.c.b16 %v7979, %v7978
  %v8068 = vpack.c.b16 %v7981, %v7980
  %v8069 = vpack.c.b16 %v7983, %v7982
  %v8070 = vpack.c.b16 %v7985, %v7984
  %v8071 = vpack.c.b16 %v7987, %v7986
  %v8072 = vpack.c.b16 %v7989, %v7988
  %v8073 = vpack.c.b16 %v7991, %v7990
  %v8074 = vpack.c.b16 %v7993, %v7992
  %v8075 = vpack.c.b16 %v7995, %v7994
  %v8076 = vpack.c.b16 %v7997, %v7996
  %v8077 = vpack.c.b16 %v7999, %v7998
  %v8078 = vpack.c.b16 %v8001, %v8000
  %v8079 = vpack.c.b16 %v8003, %v8002
  %v8080 = vpack.c.b16 %v8005, %v8004
  %v8081 = vpack.c.b16 %v8007, %v8006
  %v8082 = vpack.c.b16 %v8009, %v8008
  %v8083 = vpack.c.b16 %v8011, %v8010
  %v8084 = vpack.c.b16 %v8013, %v8012
  %v8085 = vpack.c.b16 %v8015, %v8014
  %v8086 = vpack.c.b16 %v8017, %v8016
  %v8087 = vpack.c.b16 %v8019, %v8018
  %v8088 = vpack.c.b16 %v8021, %v8020
  %v8089 = vpack.c.b16 %v8023, %v8022
  %v8090 = vpack.c.b16 %v8025, %v8024
  %v8091 = vpack.c.b16 %v8027, %v8026
  %8156 = vmatprep.subr.bf16.mxu0 0
  %8157 = vmatpush1.bf16.msra.mxu0 %v8028
  %8158 = vmatprep.subr.bf16.mxu0 0
  %8159 = vmatpush1.bf16.msra.mxu0 %v8029
  %8160 = vmatprep.subr.bf16.mxu0 0
  %8161 = vmatpush1.bf16.msra.mxu0 %v8030
  %8162 = vmatprep.subr.bf16.mxu0 0
  %8163 = vmatpush1.bf16.msra.mxu0 %v8031
  %8164 = vmatprep.subr.bf16.mxu0 0
  %8165 = vmatpush1.bf16.msra.mxu0 %v8032
  %8166 = vmatprep.subr.bf16.mxu0 0
  %8167 = vmatpush1.bf16.msra.mxu0 %v8033
  %8168 = vmatprep.subr.bf16.mxu0 0
  %8169 = vmatpush1.bf16.msra.mxu0 %v8034
  %8170 = vmatprep.subr.bf16.mxu0 0
  %8171 = vmatpush1.bf16.msra.mxu0 %v8035
  %8172 = vmatprep.subr.bf16.mxu0 0
  %8173 = vmatpush1.bf16.msra.mxu0 %v8036
  %8174 = vmatprep.subr.bf16.mxu0 0
  %8175 = vmatpush1.bf16.msra.mxu0 %v8037
  %8176 = vmatprep.subr.bf16.mxu0 0
  %8177 = vmatpush1.bf16.msra.mxu0 %v8038
  %8178 = vmatprep.subr.bf16.mxu0 0
  %8179 = vmatpush1.bf16.msra.mxu0 %v8039
  %8180 = vmatprep.subr.bf16.mxu0 0
  %8181 = vmatpush1.bf16.msra.mxu0 %v8040
  %8182 = vmatprep.subr.bf16.mxu0 0
  %8183 = vmatpush1.bf16.msra.mxu0 %v8041
  %8184 = vmatprep.subr.bf16.mxu0 0
  %8185 = vmatpush1.bf16.msra.mxu0 %v8042
  %8186 = vmatprep.subr.bf16.mxu0 0
  %8187 = vmatpush1.bf16.msra.mxu0 %v8043
  %8188 = vmatprep.mubr.bf16.mxu0 %v7630
  %8189 = vmatmul.mubr.bf16.gmra.mrb[0].mxu0 %v7629
  %v8190 = vpop.f32.mrb[0].mxu0
  %v8191 = vadd.f32 %v7770, %v8190
  %v8192 = vpop.f32.mrb[0].mxu0
  %v8193 = vpop.f32.mrb[0].mxu0
  %v8194 = vpop.f32.mrb[0].mxu0
  %8195 = vdwg.mxu0
  %8196 = vmatprep.subr.bf16.mxu0 0
  %8197 = vmatpush1.bf16.msra.mxu0 %v8044
  %8198 = vmatprep.subr.bf16.mxu0 0
  %8199 = vmatpush1.bf16.msra.mxu0 %v8045
  %8200 = vmatprep.subr.bf16.mxu0 0
  %8201 = vmatpush1.bf16.msra.mxu0 %v8046
  %8202 = vmatprep.subr.bf16.mxu0 0
  %8203 = vmatpush1.bf16.msra.mxu0 %v8047
  %8204 = vmatprep.subr.bf16.mxu0 0
  %8205 = vmatpush1.bf16.msra.mxu0 %v8048
  %8206 = vmatprep.subr.bf16.mxu0 0
  %8207 = vmatpush1.bf16.msra.mxu0 %v8049
  %8208 = vmatprep.subr.bf16.mxu0 0
  %8209 = vmatpush1.bf16.msra.mxu0 %v8050
  %8210 = vmatprep.subr.bf16.mxu0 0
  %8211 = vmatpush1.bf16.msra.mxu0 %v8051
  %8212 = vmatprep.subr.bf16.mxu0 0
  %8213 = vmatpush1.bf16.msra.mxu0 %v8052
  %8214 = vmatprep.subr.bf16.mxu0 0
  %8215 = vmatpush1.bf16.msra.mxu0 %v8053
  %8216 = vmatprep.subr.bf16.mxu0 0
  %8217 = vmatpush1.bf16.msra.mxu0 %v8054
  %8218 = vmatprep.subr.bf16.mxu0 0
  %8219 = vmatpush1.bf16.msra.mxu0 %v8055
  %8220 = vmatprep.subr.bf16.mxu0 0
  %8221 = vmatpush1.bf16.msra.mxu0 %v8056
  %8222 = vmatprep.subr.bf16.mxu0 0
  %8223 = vmatpush1.bf16.msra.mxu0 %v8057
  %8224 = vmatprep.subr.bf16.mxu0 0
  %8225 = vmatpush1.bf16.msra.mxu0 %v8058
  %8226 = vmatprep.subr.bf16.mxu0 0
  %8227 = vmatpush1.bf16.msra.mxu0 %v8059
  %8228 = vmatprep.mubr.bf16.mxu0 %v7632
  %8229 = vmatmul.mubr.bf16.gmra.mrb[0].mxu0 %v7631
  %v8230 = vpop.f32.mrb[0].mxu0
  %v8231 = vadd.f32 %v8191, %v8230
  %v8232 = vpop.f32.mrb[0].mxu0
  %v8233 = vpop.f32.mrb[0].mxu0
  %v8234 = vpop.f32.mrb[0].mxu0
  %8235 = vdwg.mxu0
  %8236 = vmatprep.subr.bf16.mxu0 0
  %8237 = vmatpush1.bf16.msra.mxu0 %v8060
  %8238 = vmatprep.subr.bf16.mxu0 0
  %8239 = vmatpush1.bf16.msra.mxu0 %v8061
  %8240 = vmatprep.subr.bf16.mxu0 0
  %8241 = vmatpush1.bf16.msra.mxu0 %v8062
  %8242 = vmatprep.subr.bf16.mxu0 0
  %8243 = vmatpush1.bf16.msra.mxu0 %v8063
  %8244 = vmatprep.subr.bf16.mxu0 0
  %8245 = vmatpush1.bf16.msra.mxu0 %v8064
  %8246 = vmatprep.subr.bf16.mxu0 0
  %8247 = vmatpush1.bf16.msra.mxu0 %v8065
  %8248 = vmatprep.subr.bf16.mxu0 0
  %8249 = vmatpush1.bf16.msra.mxu0 %v8066
  %8250 = vmatprep.subr.bf16.mxu0 0
  %8251 = vmatpush1.bf16.msra.mxu0 %v8067
  %8252 = vmatprep.subr.bf16.mxu0 0
  %8253 = vmatpush1.bf16.msra.mxu0 %v8068
  %8254 = vmatprep.subr.bf16.mxu0 0
  %8255 = vmatpush1.bf16.msra.mxu0 %v8069
  %8256 = vmatprep.subr.bf16.mxu0 0
  %8257 = vmatpush1.bf16.msra.mxu0 %v8070
  %8258 = vmatprep.subr.bf16.mxu0 0
  %8259 = vmatpush1.bf16.msra.mxu0 %v8071
  %8260 = vmatprep.subr.bf16.mxu0 0
  %8261 = vmatpush1.bf16.msra.mxu0 %v8072
  %8262 = vmatprep.subr.bf16.mxu0 0
  %8263 = vmatpush1.bf16.msra.mxu0 %v8073
  %8264 = vmatprep.subr.bf16.mxu0 0
  %8265 = vmatpush1.bf16.msra.mxu0 %v8074
  %8266 = vmatprep.subr.bf16.mxu0 0
  %8267 = vmatpush1.bf16.msra.mxu0 %v8075
  %8268 = vmatprep.mubr.bf16.mxu0 %v7634
  %8269 = vmatmul.mubr.bf16.gmra.mrb[0].mxu0 %v7633
  %v8270 = vpop.f32.mrb[0].mxu0
  %v8271 = vadd.f32 %v8231, %v8270
  %v8272 = vpop.f32.mrb[0].mxu0
  %v8273 = vpop.f32.mrb[0].mxu0
  %v8274 = vpop.f32.mrb[0].mxu0
  %8275 = vdwg.mxu0
  %8276 = vmatprep.subr.bf16.mxu0 0
  %8277 = vmatpush1.bf16.msra.mxu0 %v8076
  %8278 = vmatprep.subr.bf16.mxu0 0
  %8279 = vmatpush1.bf16.msra.mxu0 %v8077
  %8280 = vmatprep.subr.bf16.mxu0 0
  %8281 = vmatpush1.bf16.msra.mxu0 %v8078
  %8282 = vmatprep.subr.bf16.mxu0 0
  %8283 = vmatpush1.bf16.msra.mxu0 %v8079
  %8284 = vmatprep.subr.bf16.mxu0 0
  %8285 = vmatpush1.bf16.msra.mxu0 %v8080
  %8286 = vmatprep.subr.bf16.mxu0 0
  %8287 = vmatpush1.bf16.msra.mxu0 %v8081
  %8288 = vmatprep.subr.bf16.mxu0 0
  %8289 = vmatpush1.bf16.msra.mxu0 %v8082
  %8290 = vmatprep.subr.bf16.mxu0 0
  %8291 = vmatpush1.bf16.msra.mxu0 %v8083
  %8292 = vmatprep.subr.bf16.mxu0 0
  %8293 = vmatpush1.bf16.msra.mxu0 %v8084
  %8294 = vmatprep.subr.bf16.mxu0 0
  %8295 = vmatpush1.bf16.msra.mxu0 %v8085
  %8296 = vmatprep.subr.bf16.mxu0 0
  %8297 = vmatpush1.bf16.msra.mxu0 %v8086
  %8298 = vmatprep.subr.bf16.mxu0 0
  %8299 = vmatpush1.bf16.msra.mxu0 %v8087
  %8300 = vmatprep.subr.bf16.mxu0 0
  %8301 = vmatpush1.bf16.msra.mxu0 %v8088
  %8302 = vmatprep.subr.bf16.mxu0 0
  %8303 = vmatpush1.bf16.msra.mxu0 %v8089
  %8304 = vmatprep.subr.bf16.mxu0 0
  %8305 = vmatpush1.bf16.msra.mxu0 %v8090
  %8306 = vmatprep.subr.bf16.mxu0 0
  %8307 = vmatpush1.bf16.msra.mxu0 %v8091
  %8308 = vmatprep.mubr.bf16.mxu0 %v7636
  %8309 = vmatmul.mubr.bf16.gmra.mrb[0].mxu0 %v7635
  %v8310 = vpop.f32.mrb[0].mxu0
  %v8311 = vadd.f32 %v8271, %v8310
  %v8312 = vpop.f32.mrb[0].mxu0
  %v8313 = vpop.f32.mrb[0].mxu0
  %v8314 = vpop.f32.mrb[0].mxu0
  %8315 = vdwg.mxu0
  %v8316 = vmax.f32 %v8311, 0.0
  %v8317 = vpack.c.bf16 %v8316, %v8316
  %v8318 = vld [vmem:[%s7] sm:$0xf]
  %v8319 = vld [vmem:[%s7 + $0x4] sm:$0xf]
  %v8320 = vld [vmem:[%s7 + $0x8] sm:$0xf]
  %v8321 = vld [vmem:[%s7 + $0xc] sm:$0xf]
  %v8322 = vld [vmem:[%s7 + $0x10] sm:$0xf]
  %v8323 = vld [vmem:[%s7 + $0x14] sm:$0xf]
  %v8324 = vld [vmem:[%s7 + $0x18] sm:$0xf]
  %v8325 = vld [vmem:[%s7 + $0x1c] sm:$0xf]
  %v8326 = vld [vmem:[%s7 + $0x20] sm:$0xf]
  %v8327 = vld [vmem:[%s7 + $0x24] sm:$0xf]
  %v8328 = vld [vmem:[%s7 + $0x28] sm:$0xf]
  %v8329 = vld [vmem:[%s7 + $0x2c] sm:$0xf]
  %v8330 = vld [vmem:[%s7 + $0x30] sm:$0xf]
  %v8331 = vld [vmem:[%s7 + $0x34] sm:$0xf]
  %v8332 = vld [vmem:[%s7 + $0x38] sm:$0xf]
  %v8333 = vld [vmem:[%s7 + $0x3c] sm:$0xf]
  %v8334 = vld [vmem:[%s8] sm:$0x1]
  %v8336 = vlaneseq
  %v8337 = vshrl.u32 %v8336, 7
  %v8338 = vsub.s32 0, %v8337
  %v8339 = vrot.slane %v8334, %v8338
  %v8357 = vunpack.c.l.b16 %v8318
  %v8358 = vunpack.c.l.b16 %v8319
  %v8359 = vunpack.c.l.b16 %v8320
  %v8360 = vunpack.c.l.b16 %v8321
  %v8361 = vunpack.c.l.b16 %v8322
  %v8362 = vunpack.c.l.b16 %v8323
  %v8363 = vunpack.c.l.b16 %v8324
  %v8364 = vunpack.c.l.b16 %v8325
  %v8365 = vunpack.c.l.b16 %v8326
  %v8366 = vunpack.c.l.b16 %v8327
  %v8367 = vunpack.c.l.b16 %v8328
  %v8368 = vunpack.c.l.b16 %v8329
  %v8369 = vunpack.c.l.b16 %v8330
  %v8370 = vunpack.c.l.b16 %v8331
  %v8371 = vunpack.c.l.b16 %v8332
  %v8372 = vunpack.c.l.b16 %v8333
  %v8373 = vpack.c.b16 %v8358, %v8357
  %v8374 = vpack.c.b16 %v8360, %v8359
  %v8375 = vpack.c.b16 %v8362, %v8361
  %v8376 = vpack.c.b16 %v8364, %v8363
  %v8377 = vpack.c.b16 %v8366, %v8365
  %v8378 = vpack.c.b16 %v8368, %v8367
  %v8379 = vpack.c.b16 %v8370, %v8369
  %v8380 = vpack.c.b16 %v8372, %v8371
  %8389 = vmatprep.subr.bf16.mxu0 0
  %8390 = vmatpush1.bf16.msra.mxu0 %v8373
  %8391 = vmatprep.subr.bf16.mxu0 0
  %8392 = vmatpush1.bf16.msra.mxu0 %v8374
  %8393 = vmatprep.subr.bf16.mxu0 0
  %8394 = vmatpush1.bf16.msra.mxu0 %v8375
  %8395 = vmatprep.subr.bf16.mxu0 0
  %8396 = vmatpush1.bf16.msra.mxu0 %v8376
  %8397 = vmatprep.subr.bf16.mxu0 0
  %8398 = vmatpush1.bf16.msra.mxu0 %v8377
  %8399 = vmatprep.subr.bf16.mxu0 0
  %8400 = vmatpush1.bf16.msra.mxu0 %v8378
  %8401 = vmatprep.subr.bf16.mxu0 0
  %8402 = vmatpush1.bf16.msra.mxu0 %v8379
  %8403 = vmatprep.subr.bf16.mxu0 0
  %8404 = vmatpush1.bf16.msra.mxu0 %v8380
  %8405 = vmatprep.subr.bf16.mxu0 0
  %8406 = vmatpush1.bf16.msra.mxu0 0
  %8407 = vmatprep.subr.bf16.mxu0 0
  %8408 = vmatpush1.bf16.msra.mxu0 0
  %8409 = vmatprep.subr.bf16.mxu0 0
  %8410 = vmatpush1.bf16.msra.mxu0 0
  %8411 = vmatprep.subr.bf16.mxu0 0
  %8412 = vmatpush1.bf16.msra.mxu0 0
  %8413 = vmatprep.subr.bf16.mxu0 0
  %8414 = vmatpush1.bf16.msra.mxu0 0
  %8415 = vmatprep.subr.bf16.mxu0 0
  %8416 = vmatpush1.bf16.msra.mxu0 0
  %8417 = vmatprep.subr.bf16.mxu0 0
  %8418 = vmatpush1.bf16.msra.mxu0 0
  %8419 = vmatprep.subr.bf16.mxu0 0
  %8420 = vmatpush1.bf16.msra.mxu0 0
  %8421 = vmatprep.mubr.bf16.mxu0 0
  %8422 = vmatmul.mubr.bf16.gmra.mrb[0].mxu0 %v8317
  %v8423 = vpop.f32.mrb[0].mxu0
  %v8424 = vadd.f32 %v8339, %v8423
  %v8425 = vpop.f32.mrb[0].mxu0
  %v8426 = vpop.f32.mrb[0].mxu0
  %v8427 = vpop.f32.mrb[0].mxu0
  %8428 = vdwg.mxu0
  %8429 = vst [vmem:[%s9] sm:$0xff] %v8424
  // Predicated region
  $region38: #{_lambda_.7} parent=0 // pred_check
    _
  $region39: #{_lambda_.7} parent=0 // pred_check_branch
    %8431 = sbr.rel (0) target = $region41
  $region40: #{_lambda_.7} parent=0 // pred_region
    _
  $region41: #{_lambda_.7} parent=0 // pred_fallthru
    _
  // Predicated region
  $region42: #{_lambda_.7} parent=0 // pred_check
    _
  $region43: #{_lambda_.7} parent=0 // pred_check_branch
    %8433 = sbr.rel (0) target = $region45
  $region44: #{_lambda_.7} parent=0 // pred_region
    _
  $region45: #{_lambda_.7} parent=0 // pred_fallthru
    _

</llo_original>
